<compile_context>
chip_gen: v7x
topology: tpu7x:2x2x1
jax: 0.10.0
libtpu: 0.0.40
codegen_flags: <defaults>
</compile_context>

<pallas_src>
import functools

import jax
import jax.numpy as jnp
from jax import lax
from jax.experimental import pallas as pl
from jax.experimental.pallas import tpu as pltpu

LANES = 128


def _residual_block_kernel(xflat_ref, w1_ref, t1_ref, w2_ref, t2_ref,
                           out_ref, slab_scr, hpad_scr, *, H, W):
    # xflat_ref: (1, nrows, Cp)  flat zero-padded NHWC input (rows = (H+2)*(W+2)+pad)
    # w1_ref:    (9*Cp, Cp)      conv1 weights (taps stacked along K, BN1 scale folded)
    # t1_ref:    (1, Cp)         folded BN1 shift
    # w2_ref:    (9*Cp, Cp)      conv2 weights (BN2 scale folded)
    # t2_ref:    (1, Cp)         folded BN2 shift
    # out_ref:   (1, H*(W+2), Cp) lane-dense output slab (junk cols sliced in wrapper)
    # slab_scr:  (H*(W+2), 9*Cp) im2col slab scratch (reused by both convs)
    # hpad_scr:  (nrows, Cp)     flat zero-padded conv1 output
    Wp = W + 2
    M = H * Wp
    nrows, Cp = hpad_scr.shape
    offs = tuple(ky * Wp + kx for ky in range(3) for kx in range(3))

    # ---- conv1: build im2col slab from contiguous row-slices, single matmul
    for k, o in enumerate(offs):
        slab_scr[:, k * Cp:(k + 1) * Cp] = xflat_ref[0, o:o + M, :]
    h = jnp.dot(slab_scr[...], w1_ref[...], preferred_element_type=jnp.float32)
    h = jnp.maximum(h + t1_ref[0], 0.0)

    # Zero the junk columns (flat rows whose x-coordinate >= W).  With these
    # zeroed, the single shifted store below also writes the left/right halo
    # columns of the padded intermediate as zeros.
    r = lax.broadcasted_iota(jnp.int32, (M, 1), 0)
    h = jnp.where((r % Wp) < W, h, 0.0)

    # ---- padded intermediate: only the top/bottom halo rows are zeroed -----
    hpad_scr[0:Wp + 1, :] = jnp.zeros((Wp + 1, Cp), jnp.float32)
    hpad_scr[Wp + 1:Wp + 1 + M, :] = h
    hpad_scr[Wp + 1 + M:nrows, :] = jnp.zeros((nrows - (Wp + 1 + M), Cp),
                                              jnp.float32)

    # ---- conv2: same im2col trick on the padded intermediate ---------------
    for k, o in enumerate(offs):
        slab_scr[:, k * Cp:(k + 1) * Cp] = hpad_scr[o:o + M, :]
    o2 = jnp.dot(slab_scr[...], w2_ref[...], preferred_element_type=jnp.float32)
    o2 = o2 + t2_ref[0]

    # ---- residual add (center window of the flat padded input) + ReLU ------
    res = xflat_ref[0, Wp + 1:Wp + 1 + M, :]
    out_ref[...] = jnp.maximum(o2 + res, 0.0)[None, :, :]


def _fold_conv_bn(w, b, gamma, beta, mean, var, cin_p, cout_p, eps=1e-5):
    """Fold conv bias + eval-mode BN into the weights (scale) and a shift."""
    cout, cin = w.shape[0], w.shape[1]
    scale = gamma / jnp.sqrt(var + eps)
    shift = (b - mean) * scale + beta
    # (Cout, Cin, 3, 3) -> (ky, kx, Cin, Cout), fold BN scale into Cout axis.
    w_r = jnp.transpose(w, (2, 3, 1, 0)) * scale[None, None, None, :]
    # Pad channels to lane-dense widths.
    w_r = jnp.pad(w_r, ((0, 0), (0, 0), (0, cin_p - cin), (0, cout_p - cout)))
    w_flat = w_r.reshape(9 * cin_p, cout_p)
    shift_p = jnp.pad(shift, (0, cout_p - cout))
    return w_flat.astype(jnp.float32), shift_p[None, :].astype(jnp.float32)


def residual_block_forward(x_nchw, params, eps=1e-5):
    B, C, H, W = x_nchw.shape
    cout = params["w1"].shape[0]
    if cout != C:
        # Residual path adds the raw input: only valid for downsample=None.
        raise ValueError("kernel requires in_channels == out_channels, "
                         "stride=1 (downsample=None)")

    Cp = max(LANES, ((C + LANES - 1) // LANES) * LANES)
    Hp, Wp = H + 2, W + 2
    M = H * Wp                                   # output-slab rows per batch
    nrows = ((Hp * Wp + 2 + 7) // 8) * 8         # flat rows, sublane-aligned

    # NCHW -> NHWC, pad channels to Cp, zero-pad spatial by 1, flatten (H, W).
    x = jnp.transpose(x_nchw, (0, 2, 3, 1)).astype(jnp.float32)
    x = jnp.pad(x, ((0, 0), (1, 1), (1, 1), (0, Cp - C)))
    xflat = x.reshape(B, Hp * Wp, Cp)
    xflat = jnp.pad(xflat, ((0, 0), (0, nrows - Hp * Wp), (0, 0)))

    w1, t1 = _fold_conv_bn(params["w1"], params["b1"], params["g1"],
                           params["be1"], params["m1"], params["v1"],
                           Cp, Cp, eps)
    w2, t2 = _fold_conv_bn(params["w2"], params["b2"], params["g2"],
                           params["be2"], params["m2"], params["v2"],
                           Cp, Cp, eps)

    kernel = functools.partial(_residual_block_kernel, H=H, W=W)

    out_flat = pl.pallas_call(
        kernel,
        out_shape=jax.ShapeDtypeStruct((B, M, Cp), jnp.float32),
        grid_spec=pltpu.PrefetchScalarGridSpec(
            num_scalar_prefetch=0,
            grid=(B,),
            in_specs=[
                pl.BlockSpec((1, nrows, Cp), lambda b: (b, 0, 0)),
                pl.BlockSpec((9 * Cp, Cp), lambda b: (0, 0)),
                pl.BlockSpec((1, Cp), lambda b: (0, 0)),
                pl.BlockSpec((9 * Cp, Cp), lambda b: (0, 0)),
                pl.BlockSpec((1, Cp), lambda b: (0, 0)),
            ],
            out_specs=pl.BlockSpec((1, M, Cp), lambda b: (b, 0, 0)),
            scratch_shapes=[
                pltpu.VMEM((M, 9 * Cp), jnp.float32),   # im2col slab (reused)
                pltpu.VMEM((nrows, Cp), jnp.float32),   # padded conv1 output
            ],
        ),
        compiler_params=pltpu.CompilerParams(
            dimension_semantics=("parallel",),
            vmem_limit_bytes=32 * 1024 * 1024),
    )(xflat, w1, t1, w2, t2)

    # (B, H*Wp, Cp) -> (B, H, Wp, Cp), drop junk columns / padded channels.
    out = out_flat.reshape(B, H, Wp, Cp)[:, :, :W, :C]
    return jnp.transpose(out, (0, 3, 1, 2))     # NHWC -> NCHW


def reference_forward(x, params, eps=1e-5):
    """Pure-JAX reference (eval-mode BN), NCHW."""
    def conv_bn(h, w, b, gamma, beta, mean, var):
        y = lax.conv_general_dilated(
            h, w, window_strides=(1, 1), padding=((1, 1), (1, 1)),
            dimension_numbers=("NCHW", "OIHW", "NCHW"))
        y = y + b[None, :, None, None]
        y = (y - mean[None, :, None, None]) / jnp.sqrt(
            var[None, :, None, None] + eps)
        return y * gamma[None, :, None, None] + beta[None, :, None, None]

    out = jax.nn.relu(conv_bn(x, params["w1"], params["b1"], params["g1"],
                              params["be1"], params["m1"], params["v1"]))
    out = conv_bn(out, params["w2"], params["b2"], params["g2"],
                  params["be2"], params["m2"], params["v2"])
    return jax.nn.relu(out + x)


def make_params(key, cin, cout):
    ks = jax.random.split(key, 12)
    return {
        "w1": 0.1 * jax.random.normal(ks[0], (cout, cin, 3, 3), jnp.float32),
        "b1": 0.1 * jax.random.normal(ks[1], (cout,), jnp.float32),
        "g1": 1.0 + 0.1 * jax.random.normal(ks[2], (cout,), jnp.float32),
        "be1": 0.1 * jax.random.normal(ks[3], (cout,), jnp.float32),
        "m1": 0.1 * jax.random.normal(ks[4], (cout,), jnp.float32),
        "v1": 0.5 + jax.random.uniform(ks[5], (cout,), jnp.float32),
        "w2": 0.1 * jax.random.normal(ks[6], (cout, cout, 3, 3), jnp.float32),
        "b2": 0.1 * jax.random.normal(ks[7], (cout,), jnp.float32),
        "g2": 1.0 + 0.1 * jax.random.normal(ks[8], (cout,), jnp.float32),
        "be2": 0.1 * jax.random.normal(ks[9], (cout,), jnp.float32),
        "m2": 0.1 * jax.random.normal(ks[10], (cout,), jnp.float32),
        "v2": 0.5 + jax.random.uniform(ks[11], (cout,), jnp.float32),
    }


if __name__ == "__main__":
    key = jax.random.PRNGKey(0)
    k_x, k_p = jax.random.split(key)

    B, C, H, W = 2, 4, 16, 16            # in_channels == out_channels, stride=1
    x = jax.random.normal(k_x, (B, C, H, W), jnp.float32)
    params = make_params(k_p, C, C)

    out = residual_block_forward(x, params)
    out = jax.block_until_ready(out)

    ref = reference_forward(x, params)
    assert out.shape == ref.shape == (B, C, H, W)
    assert jnp.allclose(out, ref, atol=1e-4, rtol=1e-4), (
        float(jnp.max(jnp.abs(out - ref))))

    print("KERNEL_OK")
</pallas_src>

<mosaic_0001>
module attributes {stable_mosaic.version = 11 : i64} {
  func.func @_residual_block_kernel(%arg0: i32, %arg1: memref<1x328x128xf32, #tpu.memory_space<vmem>>, %arg2: memref<1152x128xf32, #tpu.memory_space<vmem>>, %arg3: memref<1x128xf32, #tpu.memory_space<vmem>>, %arg4: memref<1152x128xf32, #tpu.memory_space<vmem>>, %arg5: memref<1x128xf32, #tpu.memory_space<vmem>>, %arg6: memref<1x288x128xf32, #tpu.memory_space<vmem>>, %arg7: memref<288x1152xf32, #tpu.memory_space<vmem>>, %arg8: memref<328x128xf32, #tpu.memory_space<vmem>>) attributes {dimension_semantics = [#tpu.dimension_semantics<parallel>], iteration_bounds = array<i64: 2>, scalar_prefetch = 0 : i64, scratch_operands = 2 : i64, tpu.core_type = #tpu.core_type<tc>, window_params = [{transform_indices = @transform_0, window_bounds = array<i64: 1, 328, 128>}, {pipeline_mode = #tpu.pipeline_mode<synchronous>, transform_indices = @transform_1, window_bounds = array<i64: 1152, 128>}, {pipeline_mode = #tpu.pipeline_mode<synchronous>, transform_indices = @transform_2, window_bounds = array<i64: 1, 128>}, {pipeline_mode = #tpu.pipeline_mode<synchronous>, transform_indices = @transform_3, window_bounds = array<i64: 1152, 128>}, {pipeline_mode = #tpu.pipeline_mode<synchronous>, transform_indices = @transform_4, window_bounds = array<i64: 1, 128>}, {transform_indices = @transform_5, window_bounds = array<i64: 1, 288, 128>}]} {
    %c0 = arith.constant 0 : index
    %c0_0 = arith.constant 0 : index
    %c0_1 = arith.constant 0 : index
    %0 = vector.load %arg1[%c0, %c0_0, %c0_1] : memref<1x328x128xf32, #tpu.memory_space<vmem>>, vector<1x288x128xf32>
    %1 = vector.shape_cast %0 : vector<1x288x128xf32> to vector<288x128xf32>
    %c0_2 = arith.constant 0 : index
    %c0_3 = arith.constant 0 : index
    %2 = vector.load %arg7[%c0_2, %c0_3] : memref<288x1152xf32, #tpu.memory_space<vmem>>, vector<288x128xf32>
    tpu.vector_store %arg7[%c0_2, %c0_3], %1 {strides = array<i32>} : memref<288x1152xf32, #tpu.memory_space<vmem>>, vector<288x128xf32>,
    %c0_4 = arith.constant 0 : index
    %c1 = arith.constant 1 : index
    %c0_5 = arith.constant 0 : index
    %3 = vector.load %arg1[%c0_4, %c1, %c0_5] : memref<1x328x128xf32, #tpu.memory_space<vmem>>, vector<1x288x128xf32>
    %4 = vector.shape_cast %3 : vector<1x288x128xf32> to vector<288x128xf32>
    %c0_6 = arith.constant 0 : index
    %c128 = arith.constant 128 : index
    %5 = vector.load %arg7[%c0_6, %c128] : memref<288x1152xf32, #tpu.memory_space<vmem>>, vector<288x128xf32>
    tpu.vector_store %arg7[%c0_6, %c128], %4 {strides = array<i32>} : memref<288x1152xf32, #tpu.memory_space<vmem>>, vector<288x128xf32>,
    %c0_7 = arith.constant 0 : index
    %c2 = arith.constant 2 : index
    %c0_8 = arith.constant 0 : index
    %6 = vector.load %arg1[%c0_7, %c2, %c0_8] : memref<1x328x128xf32, #tpu.memory_space<vmem>>, vector<1x288x128xf32>
    %7 = vector.shape_cast %6 : vector<1x288x128xf32> to vector<288x128xf32>
    %c0_9 = arith.constant 0 : index
    %c256 = arith.constant 256 : index
    %8 = vector.load %arg7[%c0_9, %c256] : memref<288x1152xf32, #tpu.memory_space<vmem>>, vector<288x128xf32>
    tpu.vector_store %arg7[%c0_9, %c256], %7 {strides = array<i32>} : memref<288x1152xf32, #tpu.memory_space<vmem>>, vector<288x128xf32>,
    %c0_10 = arith.constant 0 : index
    %c18 = arith.constant 18 : index
    %c0_11 = arith.constant 0 : index
    %9 = vector.load %arg1[%c0_10, %c18, %c0_11] : memref<1x328x128xf32, #tpu.memory_space<vmem>>, vector<1x288x128xf32>
    %10 = vector.shape_cast %9 : vector<1x288x128xf32> to vector<288x128xf32>
    %c0_12 = arith.constant 0 : index
    %c384 = arith.constant 384 : index
    %11 = vector.load %arg7[%c0_12, %c384] : memref<288x1152xf32, #tpu.memory_space<vmem>>, vector<288x128xf32>
    tpu.vector_store %arg7[%c0_12, %c384], %10 {strides = array<i32>} : memref<288x1152xf32, #tpu.memory_space<vmem>>, vector<288x128xf32>,
    %c0_13 = arith.constant 0 : index
    %c19 = arith.constant 19 : index
    %c0_14 = arith.constant 0 : index
    %12 = vector.load %arg1[%c0_13, %c19, %c0_14] : memref<1x328x128xf32, #tpu.memory_space<vmem>>, vector<1x288x128xf32>
    %13 = vector.shape_cast %12 : vector<1x288x128xf32> to vector<288x128xf32>
    %c0_15 = arith.constant 0 : index
    %c512 = arith.constant 512 : index
    %14 = vector.load %arg7[%c0_15, %c512] : memref<288x1152xf32, #tpu.memory_space<vmem>>, vector<288x128xf32>
    tpu.vector_store %arg7[%c0_15, %c512], %13 {strides = array<i32>} : memref<288x1152xf32, #tpu.memory_space<vmem>>, vector<288x128xf32>,
    %c0_16 = arith.constant 0 : index
    %c20 = arith.constant 20 : index
    %c0_17 = arith.constant 0 : index
    %15 = vector.load %arg1[%c0_16, %c20, %c0_17] : memref<1x328x128xf32, #tpu.memory_space<vmem>>, vector<1x288x128xf32>
    %16 = vector.shape_cast %15 : vector<1x288x128xf32> to vector<288x128xf32>
    %c0_18 = arith.constant 0 : index
    %c640 = arith.constant 640 : index
    %17 = vector.load %arg7[%c0_18, %c640] : memref<288x1152xf32, #tpu.memory_space<vmem>>, vector<288x128xf32>
    tpu.vector_store %arg7[%c0_18, %c640], %16 {strides = array<i32>} : memref<288x1152xf32, #tpu.memory_space<vmem>>, vector<288x128xf32>,
    %c0_19 = arith.constant 0 : index
    %c36 = arith.constant 36 : index
    %c0_20 = arith.constant 0 : index
    %18 = vector.load %arg1[%c0_19, %c36, %c0_20] : memref<1x328x128xf32, #tpu.memory_space<vmem>>, vector<1x288x128xf32>
    %19 = vector.shape_cast %18 : vector<1x288x128xf32> to vector<288x128xf32>
    %c0_21 = arith.constant 0 : index
    %c768 = arith.constant 768 : index
    %20 = vector.load %arg7[%c0_21, %c768] : memref<288x1152xf32, #tpu.memory_space<vmem>>, vector<288x128xf32>
    tpu.vector_store %arg7[%c0_21, %c768], %19 {strides = array<i32>} : memref<288x1152xf32, #tpu.memory_space<vmem>>, vector<288x128xf32>,
    %c0_22 = arith.constant 0 : index
    %c37 = arith.constant 37 : index
    %c0_23 = arith.constant 0 : index
    %21 = vector.load %arg1[%c0_22, %c37, %c0_23] : memref<1x328x128xf32, #tpu.memory_space<vmem>>, vector<1x288x128xf32>
    %22 = vector.shape_cast %21 : vector<1x288x128xf32> to vector<288x128xf32>
    %c0_24 = arith.constant 0 : index
    %c896 = arith.constant 896 : index
    %23 = vector.load %arg7[%c0_24, %c896] : memref<288x1152xf32, #tpu.memory_space<vmem>>, vector<288x128xf32>
    tpu.vector_store %arg7[%c0_24, %c896], %22 {strides = array<i32>} : memref<288x1152xf32, #tpu.memory_space<vmem>>, vector<288x128xf32>,
    %c0_25 = arith.constant 0 : index
    %c38 = arith.constant 38 : index
    %c0_26 = arith.constant 0 : index
    %24 = vector.load %arg1[%c0_25, %c38, %c0_26] : memref<1x328x128xf32, #tpu.memory_space<vmem>>, vector<1x288x128xf32>
    %25 = vector.shape_cast %24 : vector<1x288x128xf32> to vector<288x128xf32>
    %c0_27 = arith.constant 0 : index
    %c1024 = arith.constant 1024 : index
    %26 = vector.load %arg7[%c0_27, %c1024] : memref<288x1152xf32, #tpu.memory_space<vmem>>, vector<288x128xf32>
    tpu.vector_store %arg7[%c0_27, %c1024], %25 {strides = array<i32>} : memref<288x1152xf32, #tpu.memory_space<vmem>>, vector<288x128xf32>,
    %c0_28 = arith.constant 0 : index
    %c0_29 = arith.constant 0 : index
    %27 = vector.load %arg7[%c0_28, %c0_29] : memref<288x1152xf32, #tpu.memory_space<vmem>>, vector<288x1152xf32>
    %c0_30 = arith.constant 0 : index
    %c0_31 = arith.constant 0 : index
    %28 = vector.load %arg2[%c0_30, %c0_31] : memref<1152x128xf32, #tpu.memory_space<vmem>>, vector<1152x128xf32>
    %cst = arith.constant dense<0.000000e+00> : vector<288x128xf32>
    %29 = tpu.matmul %27, %28, %cst {dimension_numbers = #tpu.dot_dimension_numbers<[1], [0], [0], [1], [0, 0, 1, 1], [], []>} : vector<288x1152xf32>, vector<1152x128xf32>, vector<288x128xf32> -> vector<288x128xf32>
    %c0_32 = arith.constant 0 : index
    %c0_33 = arith.constant 0 : index
    %30 = vector.load %arg3[%c0_32, %c0_33] : memref<1x128xf32, #tpu.memory_space<vmem>>, vector<1x128xf32>
    %31 = vector.shape_cast %30 : vector<1x128xf32> to vector<128xf32>
    %32 = vector.shape_cast %31 : vector<128xf32> to vector<1x128xf32>
    %33 = vector.broadcast %32 : vector<1x128xf32> to vector<288x128xf32>
    %34 = arith.addf %29, %33 : vector<288x128xf32>
    %cst_34 = arith.constant 0.000000e+00 : f32
    %35 = vector.broadcast %cst_34 : f32 to vector<288x128xf32>
    %36 = arith.maximumf %34, %35 : vector<288x128xf32>
    %37 = tpu.iota {dimensions = array<i32: 0>} : vector<288x1xi32>
    %c18_i32 = arith.constant 18 : i32
    %c0_i32 = arith.constant 0 : i32
    %38 = arith.cmpi eq, %c18_i32, %c0_i32 : i32
    %c1_i32 = arith.constant 1 : i32
    %39 = arith.select %38, %c1_i32, %c18_i32 : i32
    %40 = vector.broadcast %39 : i32 to vector<288x1xi32>
    %41 = arith.remsi %37, %40 : vector<288x1xi32>
    %c0_i32_35 = arith.constant 0 : i32
    %42 = vector.broadcast %c0_i32_35 : i32 to vector<288x1xi32>
    %43 = arith.cmpi ne, %41, %42 : vector<288x1xi32>
    %c0_i32_36 = arith.constant 0 : i32
    %44 = vector.broadcast %c0_i32_36 : i32 to vector<288x1xi32>
    %45 = arith.cmpi slt, %41, %44 : vector<288x1xi32>
    %c0_i32_37 = arith.constant 0 : i32
    %46 = arith.cmpi slt, %39, %c0_i32_37 : i32
    %47 = vector.broadcast %46 : i1 to vector<288x1xi1>
    %48 = vector.broadcast %47 : vector<288x1xi1> to vector<288x1xi1>
    %49 = arith.xori %45, %48 : vector<288x1xi1>
    %50 = arith.andi %49, %43 : vector<288x1xi1>
    %51 = vector.broadcast %39 : i32 to vector<288x1xi32>
    %52 = arith.addi %41, %51 : vector<288x1xi32>
    %53 = arith.select %50, %52, %41 : vector<288x1xi1>, vector<288x1xi32>
    %c16_i32 = arith.constant 16 : i32
    %54 = vector.broadcast %c16_i32 : i32 to vector<288x1xi32>
    %55 = arith.cmpi slt, %53, %54 : vector<288x1xi32>
    %cst_38 = arith.constant 0.000000e+00 : f32
    %56 = vector.shape_cast %55 : vector<288x1xi1> to vector<288x1xi1>
    %57 = vector.broadcast %56 : vector<288x1xi1> to vector<288x128xi1>
    %58 = vector.broadcast %cst_38 : f32 to vector<288x128xf32>
    %59 = arith.select %57, %36, %58 : vector<288x128xi1>, vector<288x128xf32>
    %cst_39 = arith.constant 0.000000e+00 : f32
    %60 = vector.broadcast %cst_39 : f32 to vector<19x128xf32>
    %c0_40 = arith.constant 0 : index
    %c0_41 = arith.constant 0 : index
    %61 = vector.load %arg8[%c0_40, %c0_41] : memref<328x128xf32, #tpu.memory_space<vmem>>, vector<19x128xf32>
    tpu.vector_store %arg8[%c0_40, %c0_41], %60 {strides = array<i32>} : memref<328x128xf32, #tpu.memory_space<vmem>>, vector<19x128xf32>,
    %c19_42 = arith.constant 19 : index
    %c0_43 = arith.constant 0 : index
    %62 = vector.load %arg8[%c19_42, %c0_43] : memref<328x128xf32, #tpu.memory_space<vmem>>, vector<288x128xf32>
    tpu.vector_store %arg8[%c19_42, %c0_43], %59 {strides = array<i32>} : memref<328x128xf32, #tpu.memory_space<vmem>>, vector<288x128xf32>,
    %cst_44 = arith.constant 0.000000e+00 : f32
    %63 = vector.broadcast %cst_44 : f32 to vector<21x128xf32>
    %c307 = arith.constant 307 : index
    %c0_45 = arith.constant 0 : index
    %64 = vector.load %arg8[%c307, %c0_45] : memref<328x128xf32, #tpu.memory_space<vmem>>, vector<21x128xf32>
    tpu.vector_store %arg8[%c307, %c0_45], %63 {strides = array<i32>} : memref<328x128xf32, #tpu.memory_space<vmem>>, vector<21x128xf32>,
    %c0_46 = arith.constant 0 : index
    %c0_47 = arith.constant 0 : index
    %65 = vector.load %arg8[%c0_46, %c0_47] : memref<328x128xf32, #tpu.memory_space<vmem>>, vector<288x128xf32>
    %c0_48 = arith.constant 0 : index
    %c0_49 = arith.constant 0 : index
    %66 = vector.load %arg7[%c0_48, %c0_49] : memref<288x1152xf32, #tpu.memory_space<vmem>>, vector<288x128xf32>
    tpu.vector_store %arg7[%c0_48, %c0_49], %65 {strides = array<i32>} : memref<288x1152xf32, #tpu.memory_space<vmem>>, vector<288x128xf32>,
    %c1_50 = arith.constant 1 : index
    %c0_51 = arith.constant 0 : index
    %67 = vector.load %arg8[%c1_50, %c0_51] : memref<328x128xf32, #tpu.memory_space<vmem>>, vector<288x128xf32>
    %c0_52 = arith.constant 0 : index
    %c128_53 = arith.constant 128 : index
    %68 = vector.load %arg7[%c0_52, %c128_53] : memref<288x1152xf32, #tpu.memory_space<vmem>>, vector<288x128xf32>
    tpu.vector_store %arg7[%c0_52, %c128_53], %67 {strides = array<i32>} : memref<288x1152xf32, #tpu.memory_space<vmem>>, vector<288x128xf32>,
    %c2_54 = arith.constant 2 : index
    %c0_55 = arith.constant 0 : index
    %69 = vector.load %arg8[%c2_54, %c0_55] : memref<328x128xf32, #tpu.memory_space<vmem>>, vector<288x128xf32>
    %c0_56 = arith.constant 0 : index
    %c256_57 = arith.constant 256 : index
    %70 = vector.load %arg7[%c0_56, %c256_57] : memref<288x1152xf32, #tpu.memory_space<vmem>>, vector<288x128xf32>
    tpu.vector_store %arg7[%c0_56, %c256_57], %69 {strides = array<i32>} : memref<288x1152xf32, #tpu.memory_space<vmem>>, vector<288x128xf32>,
    %c18_58 = arith.constant 18 : index
    %c0_59 = arith.constant 0 : index
    %71 = vector.load %arg8[%c18_58, %c0_59] : memref<328x128xf32, #tpu.memory_space<vmem>>, vector<288x128xf32>
    %c0_60 = arith.constant 0 : index
    %c384_61 = arith.constant 384 : index
    %72 = vector.load %arg7[%c0_60, %c384_61] : memref<288x1152xf32, #tpu.memory_space<vmem>>, vector<288x128xf32>
    tpu.vector_store %arg7[%c0_60, %c384_61], %71 {strides = array<i32>} : memref<288x1152xf32, #tpu.memory_space<vmem>>, vector<288x128xf32>,
    %c19_62 = arith.constant 19 : index
    %c0_63 = arith.constant 0 : index
    %73 = vector.load %arg8[%c19_62, %c0_63] : memref<328x128xf32, #tpu.memory_space<vmem>>, vector<288x128xf32>
    %c0_64 = arith.constant 0 : index
    %c512_65 = arith.constant 512 : index
    %74 = vector.load %arg7[%c0_64, %c512_65] : memref<288x1152xf32, #tpu.memory_space<vmem>>, vector<288x128xf32>
    tpu.vector_store %arg7[%c0_64, %c512_65], %73 {strides = array<i32>} : memref<288x1152xf32, #tpu.memory_space<vmem>>, vector<288x128xf32>,
    %c20_66 = arith.constant 20 : index
    %c0_67 = arith.constant 0 : index
    %75 = vector.load %arg8[%c20_66, %c0_67] : memref<328x128xf32, #tpu.memory_space<vmem>>, vector<288x128xf32>
    %c0_68 = arith.constant 0 : index
    %c640_69 = arith.constant 640 : index
    %76 = vector.load %arg7[%c0_68, %c640_69] : memref<288x1152xf32, #tpu.memory_space<vmem>>, vector<288x128xf32>
    tpu.vector_store %arg7[%c0_68, %c640_69], %75 {strides = array<i32>} : memref<288x1152xf32, #tpu.memory_space<vmem>>, vector<288x128xf32>,
    %c36_70 = arith.constant 36 : index
    %c0_71 = arith.constant 0 : index
    %77 = vector.load %arg8[%c36_70, %c0_71] : memref<328x128xf32, #tpu.memory_space<vmem>>, vector<288x128xf32>
    %c0_72 = arith.constant 0 : index
    %c768_73 = arith.constant 768 : index
    %78 = vector.load %arg7[%c0_72, %c768_73] : memref<288x1152xf32, #tpu.memory_space<vmem>>, vector<288x128xf32>
    tpu.vector_store %arg7[%c0_72, %c768_73], %77 {strides = array<i32>} : memref<288x1152xf32, #tpu.memory_space<vmem>>, vector<288x128xf32>,
    %c37_74 = arith.constant 37 : index
    %c0_75 = arith.constant 0 : index
    %79 = vector.load %arg8[%c37_74, %c0_75] : memref<328x128xf32, #tpu.memory_space<vmem>>, vector<288x128xf32>
    %c0_76 = arith.constant 0 : index
    %c896_77 = arith.constant 896 : index
    %80 = vector.load %arg7[%c0_76, %c896_77] : memref<288x1152xf32, #tpu.memory_space<vmem>>, vector<288x128xf32>
    tpu.vector_store %arg7[%c0_76, %c896_77], %79 {strides = array<i32>} : memref<288x1152xf32, #tpu.memory_space<vmem>>, vector<288x128xf32>,
    %c38_78 = arith.constant 38 : index
    %c0_79 = arith.constant 0 : index
    %81 = vector.load %arg8[%c38_78, %c0_79] : memref<328x128xf32, #tpu.memory_space<vmem>>, vector<288x128xf32>
    %c0_80 = arith.constant 0 : index
    %c1024_81 = arith.constant 1024 : index
    %82 = vector.load %arg7[%c0_80, %c1024_81] : memref<288x1152xf32, #tpu.memory_space<vmem>>, vector<288x128xf32>
    tpu.vector_store %arg7[%c0_80, %c1024_81], %81 {strides = array<i32>} : memref<288x1152xf32, #tpu.memory_space<vmem>>, vector<288x128xf32>,
    %c0_82 = arith.constant 0 : index
    %c0_83 = arith.constant 0 : index
    %83 = vector.load %arg7[%c0_82, %c0_83] : memref<288x1152xf32, #tpu.memory_space<vmem>>, vector<288x1152xf32>
    %c0_84 = arith.constant 0 : index
    %c0_85 = arith.constant 0 : index
    %84 = vector.load %arg4[%c0_84, %c0_85] : memref<1152x128xf32, #tpu.memory_space<vmem>>, vector<1152x128xf32>
    %cst_86 = arith.constant dense<0.000000e+00> : vector<288x128xf32>
    %85 = tpu.matmul %83, %84, %cst_86 {dimension_numbers = #tpu.dot_dimension_numbers<[1], [0], [0], [1], [0, 0, 1, 1], [], []>} : vector<288x1152xf32>, vector<1152x128xf32>, vector<288x128xf32> -> vector<288x128xf32>
    %c0_87 = arith.constant 0 : index
    %c0_88 = arith.constant 0 : index
    %86 = vector.load %arg5[%c0_87, %c0_88] : memref<1x128xf32, #tpu.memory_space<vmem>>, vector<1x128xf32>
    %87 = vector.shape_cast %86 : vector<1x128xf32> to vector<128xf32>
    %88 = vector.shape_cast %87 : vector<128xf32> to vector<1x128xf32>
    %89 = vector.broadcast %88 : vector<1x128xf32> to vector<288x128xf32>
    %90 = arith.addf %85, %89 : vector<288x128xf32>
    %c0_89 = arith.constant 0 : index
    %c19_90 = arith.constant 19 : index
    %c0_91 = arith.constant 0 : index
    %91 = vector.load %arg1[%c0_89, %c19_90, %c0_91] : memref<1x328x128xf32, #tpu.memory_space<vmem>>, vector<1x288x128xf32>
    %92 = vector.shape_cast %91 : vector<1x288x128xf32> to vector<288x128xf32>
    %93 = arith.addf %90, %92 : vector<288x128xf32>
    %cst_92 = arith.constant 0.000000e+00 : f32
    %94 = vector.broadcast %cst_92 : f32 to vector<288x128xf32>
    %95 = arith.maximumf %93, %94 : vector<288x128xf32>
    %96 = vector.shape_cast %95 : vector<288x128xf32> to vector<1x288x128xf32>
    %c0_93 = arith.constant 0 : index
    %c0_94 = arith.constant 0 : index
    %c0_95 = arith.constant 0 : index
    %97 = vector.load %arg6[%c0_93, %c0_94, %c0_95] : memref<1x288x128xf32, #tpu.memory_space<vmem>>, vector<1x288x128xf32>
    tpu.vector_store %arg6[%c0_93, %c0_94, %c0_95], %96 {strides = array<i32>} : memref<1x288x128xf32, #tpu.memory_space<vmem>>, vector<1x288x128xf32>,
    return
  }
  func.func @transform_0(%arg0: i32) -> (i32, i32, i32) {
    %c0_i32 = arith.constant 0 : i32
    %c0_i32_0 = arith.constant 0 : i32
    %c0_i32_1 = arith.constant 0 : i32
    return %arg0, %c0_i32, %c0_i32_0 : i32, i32, i32
  }
  func.func @transform_1(%arg0: i32) -> (i32, i32) {
    %c0_i32 = arith.constant 0 : i32
    %c0_i32_0 = arith.constant 0 : i32
    %c0_i32_1 = arith.constant 0 : i32
    return %c0_i32, %c0_i32_0 : i32, i32
  }
  func.func @transform_2(%arg0: i32) -> (i32, i32) {
    %c0_i32 = arith.constant 0 : i32
    %c0_i32_0 = arith.constant 0 : i32
    %c0_i32_1 = arith.constant 0 : i32
    return %c0_i32, %c0_i32_0 : i32, i32
  }
  func.func @transform_3(%arg0: i32) -> (i32, i32) {
    %c0_i32 = arith.constant 0 : i32
    %c0_i32_0 = arith.constant 0 : i32
    %c0_i32_1 = arith.constant 0 : i32
    return %c0_i32, %c0_i32_0 : i32, i32
  }
  func.func @transform_4(%arg0: i32) -> (i32, i32) {
    %c0_i32 = arith.constant 0 : i32
    %c0_i32_0 = arith.constant 0 : i32
    %c0_i32_1 = arith.constant 0 : i32
    return %c0_i32, %c0_i32_0 : i32, i32
  }
  func.func @transform_5(%arg0: i32) -> (i32, i32, i32) {
    %c0_i32 = arith.constant 0 : i32
    %c0_i32_0 = arith.constant 0 : i32
    %c0_i32_1 = arith.constant 0 : i32
    return %arg0, %c0_i32, %c0_i32_0 : i32, i32, i32
  }
}

</mosaic_0001>

<llo_original>
// kernel: tpu_custom_call.1
$region0: #{tpu_custom_call.1}
  #allocation0 [shape = 'u32[]', space=smem, size = 0x4, offset = 0x4, fixed_abs, tag = 'smem constant byte address 0x4 - core index']
  #allocation1 [shape = 'u32[144,128]{1,0:T(1,128)}', space=vmem, size = 0x12000, scoped, tag = 'internal scratch']
  #allocation2 [shape = 'f32[288,1152]{1,0:T(8,128)}', space=vmem, size = 0x144000, scoped, tag = 'scratch operand']
  #allocation3 [shape = 'f32[328,128]{1,0:T(8,128)}', space=vmem, size = 0x29000, scoped, tag = 'scratch operand']
  %s0 = inlined_call_operand.hbm [shape: f32[2,328,128], index: 0, kind: input, shape index: {}]
  %s1 = inlined_call_operand.hbm [shape: f32[1152,128], index: 1, kind: input, shape index: {}]
  %s2 = inlined_call_operand.vmem [shape: f32[1,128], index: 2, kind: input, shape index: {}]
  %s3 = inlined_call_operand.hbm [shape: f32[1152,128], index: 3, kind: input, shape index: {}]
  %s4 = inlined_call_operand.vmem [shape: f32[1,128], index: 4, kind: input, shape index: {}]
  %s5 = inlined_call_operand.hbm [shape: f32[2,288,128], index: 5, kind: output, shape index: {}]
  %s6 = sld [smem:[#allocation0]]
  $region65: #{tpu_custom_call.1} parent=0
    _
  %s8 = ssub.s32 1, %s6
  %s9 = scalar_select 0, %s8, %s6
  $region1: #{tpu_custom_call.1} parent=0
    #allocation4 [shape = 'u8[335872]{0}', space=vmem, size = 0x52000, scoped, tag = 'input window, operand 0']
    #allocation5 [shape = 's32[2]{0}', space=sflag, size = 0x8, scoped, tag = 'scoped memory for tpu_custom_call.1']
    #allocation6 [shape = 's32[2]{0}', space=sflag, size = 0x8, scoped, tag = 'scoped memory for tpu_custom_call.1']
    #allocation7 [shape = 'u8[589824]{0}', space=vmem, size = 0x90000, scoped, tag = 'input window, operand 1, single buffered']
    #allocation8 [shape = 's32[1]{0}', space=sflag, size = 0x4, scoped, tag = 'scoped memory for tpu_custom_call.1']
    #allocation9 [shape = 'u8[589824]{0}', space=vmem, size = 0x90000, scoped, tag = 'input window, operand 3, single buffered']
    #allocation10 [shape = 'u8[294912]{0}', space=vmem, size = 0x48000, scoped, tag = 'output window, operand 0']
    %10 = vsyncpa [#allocation5], 0
    %s11 = scalar_lea.sflag [#allocation5], 1
    %12 = vsyncpa %s11, 0
    %13 = vsyncpa [#allocation8], 0
    %14 = vsyncpa [#allocation6], 0
    %s15 = scalar_lea.sflag [#allocation6], 1
    %16 = vsyncpa %s15, 0
    loop: start=0, step=1, limit=4
    $region2: #{tpu_custom_call.1} parent=1 // loop_pre_header
      _
    $region3: #{tpu_custom_call.1} parent=1 // loop_header
      %s18 = sphi 0, %s22
      %p19 = scmp.ge.s32.totalorder %s18, 4
      %s28 = sphi 0, %s30
      %s31 = sphi 0, %s28
      %s32 = sphi 0, %s31
      %s48 = sphi 0, %s32
      %s52 = sphi 0, %s52
      %s54 = sphi 0, %s52
      %s55 = sphi 0, %s54
      %s69 = sphi 0, %s55
      %s73 = sphi 0, %s73
      %s75 = sphi 0, %s73
      %s76 = sphi 0, %s75
      %s90 = sphi 0, %s76
      %s94 = sphi 0, %s94
      %s96 = sphi 0, %s94
      %s97 = sphi 0, %s96
      %s111 = sphi 0, %s97
      %s115 = sphi 0, %s115
      %s117 = sphi 0, %s115
      %s118 = sphi 0, %s117
      %s132 = sphi 0, %s118
      %s138 = sphi 0, %s140
      %s141 = sphi 0, %s138
      %s142 = sphi 0, %s141
      %s158 = sphi 0, %s142
    $region4: #{tpu_custom_call.1} parent=1 // loop_header_branch
      %21 = sbr.rel (%p19) target = $region8
    $region5: #{tpu_custom_call.1} parent=1 // loop_body
      %s23 = ssub.s32 %s18, 1
      %s24 = ssub.s32 %s18, 2
      %s25 = sadd.s32 %s18, 1
      %s26 = ssub.s32 %s18, %s25
      %p27 = scmp.eq.s32.totalorder %s26, 0
      %s29 = sadd.s32 %s28, 1
      %s30 = scalar_select %p27, %s28, %s29
      %p33 = pneg %p27
      %p34 = scmp.eq.s32.totalorder %s18, 1
      %p35 = por %p33, %p34
      %p36 = scmp.ne.s32.totalorder %s28, %s31
      %p37 = scmp.eq.s32.totalorder %s18, 0
      %p38 = por %p36, %p37
      %p39 = scmp.ne.s32.totalorder %s28, %s31
      %p40 = scmp.eq.s32.totalorder %s23, 1
      %p41 = por %p39, %p40
      %p42 = scmp.ne.s32.totalorder %s31, %s32
      %p43 = scmp.eq.s32.totalorder %s23, 0
      %p44 = por %p42, %p43
      %p45 = scmp.ne.s32.totalorder %s31, %s32
      %p46 = scmp.eq.s32.totalorder %s24, 1
      %p47 = por %p45, %p46
      %p49 = scmp.ne.s32.totalorder %s32, %s48
      %p50 = scmp.eq.s32.totalorder %s24, 0
      %p51 = por %p49, %p50
      %s53 = sadd.s32 %s52, 1
      %p56 = scmp.eq.s32.totalorder %s18, 1
      %p57 = scmp.ne.s32.totalorder %s52, %s54
      %p58 = scmp.eq.s32.totalorder %s18, 0
      %p59 = por %p57, %p58
      %p60 = scmp.ne.s32.totalorder %s52, %s54
      %p61 = scmp.eq.s32.totalorder %s23, 1
      %p62 = por %p60, %p61
      %p63 = scmp.ne.s32.totalorder %s54, %s55
      %p64 = scmp.eq.s32.totalorder %s23, 0
      %p65 = por %p63, %p64
      %p66 = scmp.ne.s32.totalorder %s54, %s55
      %p67 = scmp.eq.s32.totalorder %s24, 1
      %p68 = por %p66, %p67
      %p70 = scmp.ne.s32.totalorder %s55, %s69
      %p71 = scmp.eq.s32.totalorder %s24, 0
      %p72 = por %p70, %p71
      %s74 = sadd.s32 %s73, 1
      %p77 = scmp.eq.s32.totalorder %s18, 1
      %p78 = scmp.ne.s32.totalorder %s73, %s75
      %p79 = scmp.eq.s32.totalorder %s18, 0
      %p80 = por %p78, %p79
      %p81 = scmp.ne.s32.totalorder %s73, %s75
      %p82 = scmp.eq.s32.totalorder %s23, 1
      %p83 = por %p81, %p82
      %p84 = scmp.ne.s32.totalorder %s75, %s76
      %p85 = scmp.eq.s32.totalorder %s23, 0
      %p86 = por %p84, %p85
      %p87 = scmp.ne.s32.totalorder %s75, %s76
      %p88 = scmp.eq.s32.totalorder %s24, 1
      %p89 = por %p87, %p88
      %p91 = scmp.ne.s32.totalorder %s76, %s90
      %p92 = scmp.eq.s32.totalorder %s24, 0
      %p93 = por %p91, %p92
      %s95 = sadd.s32 %s94, 1
      %p98 = scmp.eq.s32.totalorder %s18, 1
      %p99 = scmp.ne.s32.totalorder %s94, %s96
      %p100 = scmp.eq.s32.totalorder %s18, 0
      %p101 = por %p99, %p100
      %p102 = scmp.ne.s32.totalorder %s94, %s96
      %p103 = scmp.eq.s32.totalorder %s23, 1
      %p104 = por %p102, %p103
      %p105 = scmp.ne.s32.totalorder %s96, %s97
      %p106 = scmp.eq.s32.totalorder %s23, 0
      %p107 = por %p105, %p106
      %p108 = scmp.ne.s32.totalorder %s96, %s97
      %p109 = scmp.eq.s32.totalorder %s24, 1
      %p110 = por %p108, %p109
      %p112 = scmp.ne.s32.totalorder %s97, %s111
      %p113 = scmp.eq.s32.totalorder %s24, 0
      %p114 = por %p112, %p113
      %s116 = sadd.s32 %s115, 1
      %p119 = scmp.eq.s32.totalorder %s18, 1
      %p120 = scmp.ne.s32.totalorder %s115, %s117
      %p121 = scmp.eq.s32.totalorder %s18, 0
      %p122 = por %p120, %p121
      %p123 = scmp.ne.s32.totalorder %s115, %s117
      %p124 = scmp.eq.s32.totalorder %s23, 1
      %p125 = por %p123, %p124
      %p126 = scmp.ne.s32.totalorder %s117, %s118
      %p127 = scmp.eq.s32.totalorder %s23, 0
      %p128 = por %p126, %p127
      %p129 = scmp.ne.s32.totalorder %s117, %s118
      %p130 = scmp.eq.s32.totalorder %s24, 1
      %p131 = por %p129, %p130
      %p133 = scmp.ne.s32.totalorder %s118, %s132
      %p134 = scmp.eq.s32.totalorder %s24, 0
      %p135 = por %p133, %p134
      %s136 = ssub.s32 %s18, %s25
      %p137 = scmp.eq.s32.totalorder %s136, 0
      %s139 = sadd.s32 %s138, 1
      %s140 = scalar_select %p137, %s138, %s139
      %p143 = pneg %p137
      %p144 = scmp.eq.s32.totalorder %s18, 1
      %p145 = por %p143, %p144
      %p146 = scmp.ne.s32.totalorder %s138, %s141
      %p147 = scmp.eq.s32.totalorder %s18, 0
      %p148 = por %p146, %p147
      %p149 = scmp.ne.s32.totalorder %s138, %s141
      %p150 = scmp.eq.s32.totalorder %s23, 1
      %p151 = por %p149, %p150
      %p152 = scmp.ne.s32.totalorder %s141, %s142
      %p153 = scmp.eq.s32.totalorder %s23, 0
      %p154 = por %p152, %p153
      %p155 = scmp.ne.s32.totalorder %s141, %s142
      %p156 = scmp.eq.s32.totalorder %s24, 1
      %p157 = por %p155, %p156
      %p159 = scmp.ne.s32.totalorder %s142, %s158
      %p160 = scmp.eq.s32.totalorder %s24, 0
      %p161 = por %p159, %p160
      %p162 = scmp.le.s32.totalorder 1, %s18
      %p163 = scmp.lt.s32.totalorder %s18, 3
      %p164 = pnand %p162, %p163
      %p165 = pneg %p164
      // Predicated region
      $region9: #{tpu_custom_call.1} parent=5 // pred_check
        _
      $region10: #{tpu_custom_call.1} parent=5 // pred_check_branch
        %167 = sbr.rel (%p164) target = $region12
      $region11: #{tpu_custom_call.1} parent=5 // pred_region
        %s168 = ssub.s32 %s18, 1
        // Predicated region
        $region13: #{tpu_custom_call.1} parent=11 // pred_check
          %p169 = pneg %p65
        $region14: #{tpu_custom_call.1} parent=11 // pred_check_branch
          %171 = sbr.rel (%p169) target = $region16
        $region15: #{tpu_custom_call.1} parent=11 // pred_region
          %s173 = ssub.s32 18432, 18432
          %174 = vsyncadd [#allocation8], %s173
          %s175 = sshll.u32 [#allocation7], 4
          %s176 = int_to_ptr.vmem [resolvable:$true] %s175
          %181 = dma.hbm_to_vmem [thread:$0]  %s1, 18432, %s176, [#allocation8], 128, 128, 8
        $region16: #{tpu_custom_call.1} parent=11 // pred_fallthru
          _
        // Predicated region
        $region17: #{tpu_custom_call.1} parent=11 // pred_check
          %p182 = pneg %p86
        $region18: #{tpu_custom_call.1} parent=11 // pred_check_branch
          %184 = sbr.rel (%p182) target = $region20
        $region19: #{tpu_custom_call.1} parent=11 // pred_region
          _
        $region20: #{tpu_custom_call.1} parent=11 // pred_fallthru
          _
        // Predicated region
        $region21: #{tpu_custom_call.1} parent=11 // pred_check
          %p185 = pneg %p107
        $region22: #{tpu_custom_call.1} parent=11 // pred_check_branch
          %187 = sbr.rel (%p185) target = $region24
        $region23: #{tpu_custom_call.1} parent=11 // pred_region
          %s189 = ssub.s32 18432, 18432
          %190 = vsyncadd [#allocation8], %s189
          %s191 = sshll.u32 [#allocation9], 4
          %s192 = int_to_ptr.vmem [resolvable:$true] %s191
          %197 = dma.hbm_to_vmem [thread:$0]  %s3, 18432, %s192, [#allocation8], 128, 128, 8
        $region24: #{tpu_custom_call.1} parent=11 // pred_fallthru
          _
        // Predicated region
        $region25: #{tpu_custom_call.1} parent=11 // pred_check
          %p198 = pneg %p128
        $region26: #{tpu_custom_call.1} parent=11 // pred_check_branch
          %200 = sbr.rel (%p198) target = $region28
        $region27: #{tpu_custom_call.1} parent=11 // pred_region
          _
        $region28: #{tpu_custom_call.1} parent=11 // pred_fallthru
          _
      $region12: #{tpu_custom_call.1} parent=5 // pred_fallthru
        _
      %p201 = scmp.lt.s32.totalorder %s18, 2
      // Predicated region
      $region29: #{tpu_custom_call.1} parent=5 // pred_check
        %p202 = pneg %p201
      $region30: #{tpu_custom_call.1} parent=5 // pred_check_branch
        %204 = sbr.rel (%p202) target = $region32
      $region31: #{tpu_custom_call.1} parent=5 // pred_region
        // Predicated region
        $region33: #{tpu_custom_call.1} parent=31 // pred_check
          %p205 = pneg %p38
        $region34: #{tpu_custom_call.1} parent=31 // pred_check_branch
          %207 = sbr.rel (%p205) target = $region36
        $region35: #{tpu_custom_call.1} parent=31 // pred_region
          %s208 = sand.u32 %s28, 1
          %s209 = scalar_lea.sflag [#allocation5], %s208
          %s210 = sand.u32 %s28, 1
          %s211 = smul.addr %s210, 328
          %s212 = scalar_lea.vmem [#allocation4], %s211
          %s214 = ssub.s32 5248, 5248
          %215 = vsyncadd %s209, %s214
          %s216 = smul.addr %s18, 41
          %s217 = smul.addr %s216, 128
          %s218 = scalar_lea.hbm %s0, %s217
          %s219 = sshll.u32 %s212, 4
          %s220 = int_to_ptr.vmem [resolvable:$true] %s219
          %225 = dma.hbm_to_vmem [thread:$0]  %s218, 5248, %s220, %s209, 128, 128, 8
        $region36: #{tpu_custom_call.1} parent=31 // pred_fallthru
          _
      $region32: #{tpu_custom_call.1} parent=5 // pred_fallthru
        _
      %p226 = scmp.le.s32.totalorder 1, %s18
      %p227 = scmp.lt.s32.totalorder %s18, 3
      %p228 = pnand %p226, %p227
      %p229 = pneg %p228
      // Predicated region
      $region37: #{tpu_custom_call.1} parent=5 // pred_check
        _
      $region38: #{tpu_custom_call.1} parent=5 // pred_check_branch
        %231 = sbr.rel (%p228) target = $region40
      $region39: #{tpu_custom_call.1} parent=5 // pred_region
        %s232 = ssub.s32 %s18, 1
        %s233 = sand.u32 %s31, 1
        %s234 = scalar_lea.sflag [#allocation5], %s233
        %s235 = sand.u32 %s31, 1
        %s236 = smul.addr %s235, 328
        %s237 = scalar_lea.vmem [#allocation4], %s236
        // Predicated region
        $region41: #{tpu_custom_call.1} parent=39 // pred_check
          %p238 = pneg %p44
        $region42: #{tpu_custom_call.1} parent=39 // pred_check_branch
          %240 = sbr.rel (%p238) target = $region44
        $region43: #{tpu_custom_call.1} parent=39 // pred_region
          %241 = dma.done %s234, 5248
        $region44: #{tpu_custom_call.1} parent=39 // pred_fallthru
          _
        // Predicated region
        $region45: #{tpu_custom_call.1} parent=39 // pred_check
          %p242 = pneg %p65
        $region46: #{tpu_custom_call.1} parent=39 // pred_check_branch
          %244 = sbr.rel (%p242) target = $region48
        $region47: #{tpu_custom_call.1} parent=39 // pred_region
          %245 = dma.done [#allocation8], 18432
        $region48: #{tpu_custom_call.1} parent=39 // pred_fallthru
          _
        // Predicated region
        $region49: #{tpu_custom_call.1} parent=39 // pred_check
          %p246 = pneg %p107
        $region50: #{tpu_custom_call.1} parent=39 // pred_check_branch
          %248 = sbr.rel (%p246) target = $region52
        $region51: #{tpu_custom_call.1} parent=39 // pred_region
          %249 = dma.done [#allocation8], 18432
        $region52: #{tpu_custom_call.1} parent=39 // pred_fallthru
          _
        %s250 = sand.u32 %s31, 1
        %s251 = scalar_lea.sflag [#allocation5], %s250
        %s252 = sand.u32 %s31, 1
        %s253 = smul.addr %s252, 328
        %s254 = scalar_lea.vmem [#allocation4], %s253
        %p255 = pneg %p44
        %p256 = pneg %p41
        %p257 = pneg %p65
        %p258 = pneg %p62
        %p259 = pneg %p86
        %p260 = pneg %p83
        %p261 = pneg %p107
        %p262 = pneg %p104
        %p263 = pneg %p128
        %p264 = pneg %p125
        %p265 = pneg %p154
        %p266 = pneg %p151
        %s267 = sand.u32 %s141, 1
        %s268 = scalar_lea.sflag [#allocation6], %s267
        %s269 = sand.u32 %s141, 1
        %s270 = smul.addr %s269, 288
        %s271 = scalar_lea.vmem [#allocation10], %s270
        %v272 = vld [vmem:[%s237] sm:$0xff]
        %v273 = vld [vmem:[%s237 + $0x8] sm:$0xff]
        %v274 = vld [vmem:[%s237 + $0x10] sm:$0xff]
        %v275 = vld [vmem:[%s237 + $0x18] sm:$0xff]
        %v276 = vld [vmem:[%s237 + $0x20] sm:$0xff]
        %v277 = vld [vmem:[%s237 + $0x28] sm:$0xff]
        %v278 = vld [vmem:[%s237 + $0x30] sm:$0xff]
        %v279 = vld [vmem:[%s237 + $0x38] sm:$0xff]
        %v280 = vld [vmem:[%s237 + $0x40] sm:$0xff]
        %v281 = vld [vmem:[%s237 + $0x48] sm:$0xff]
        %v282 = vld [vmem:[%s237 + $0x50] sm:$0xff]
        %v283 = vld [vmem:[%s237 + $0x58] sm:$0xff]
        %v284 = vld [vmem:[%s237 + $0x60] sm:$0xff]
        %v285 = vld [vmem:[%s237 + $0x68] sm:$0xff]
        %v286 = vld [vmem:[%s237 + $0x70] sm:$0xff]
        %v287 = vld [vmem:[%s237 + $0x78] sm:$0xff]
        %v288 = vld [vmem:[%s237 + $0x80] sm:$0xff]
        %v289 = vld [vmem:[%s237 + $0x88] sm:$0xff]
        %v290 = vld [vmem:[%s237 + $0x90] sm:$0xff]
        %v291 = vld [vmem:[%s237 + $0x98] sm:$0xff]
        %v292 = vld [vmem:[%s237 + $0xa0] sm:$0xff]
        %v293 = vld [vmem:[%s237 + $0xa8] sm:$0xff]
        %v294 = vld [vmem:[%s237 + $0xb0] sm:$0xff]
        %v295 = vld [vmem:[%s237 + $0xb8] sm:$0xff]
        %v296 = vld [vmem:[%s237 + $0xc0] sm:$0xff]
        %v297 = vld [vmem:[%s237 + $0xc8] sm:$0xff]
        %v298 = vld [vmem:[%s237 + $0xd0] sm:$0xff]
        %v299 = vld [vmem:[%s237 + $0xd8] sm:$0xff]
        %v300 = vld [vmem:[%s237 + $0xe0] sm:$0xff]
        %v301 = vld [vmem:[%s237 + $0xe8] sm:$0xff]
        %v302 = vld [vmem:[%s237 + $0xf0] sm:$0xff]
        %v303 = vld [vmem:[%s237 + $0xf8] sm:$0xff]
        %v304 = vld [vmem:[%s237 + $0x100] sm:$0xff]
        %v305 = vld [vmem:[%s237 + $0x108] sm:$0xff]
        %v306 = vld [vmem:[%s237 + $0x110] sm:$0xff]
        %v307 = vld [vmem:[%s237 + $0x118] sm:$0xff]
        %308 = vst [vmem:[#allocation2] sm:$0xff] %v272
        %309 = vst [vmem:[#allocation2 + $0x48] sm:$0xff] %v273
        %310 = vst [vmem:[#allocation2 + $0x90] sm:$0xff] %v274
        %311 = vst [vmem:[#allocation2 + $0xd8] sm:$0xff] %v275
        %312 = vst [vmem:[#allocation2 + $0x120] sm:$0xff] %v276
        %313 = vst [vmem:[#allocation2 + $0x168] sm:$0xff] %v277
        %314 = vst [vmem:[#allocation2 + $0x1b0] sm:$0xff] %v278
        %315 = vst [vmem:[#allocation2 + $0x1f8] sm:$0xff] %v279
        %316 = vst [vmem:[#allocation2 + $0x240] sm:$0xff] %v280
        %317 = vst [vmem:[#allocation2 + $0x288] sm:$0xff] %v281
        %318 = vst [vmem:[#allocation2 + $0x2d0] sm:$0xff] %v282
        %319 = vst [vmem:[#allocation2 + $0x318] sm:$0xff] %v283
        %320 = vst [vmem:[#allocation2 + $0x360] sm:$0xff] %v284
        %321 = vst [vmem:[#allocation2 + $0x3a8] sm:$0xff] %v285
        %322 = vst [vmem:[#allocation2 + $0x3f0] sm:$0xff] %v286
        %323 = vst [vmem:[#allocation2 + $0x438] sm:$0xff] %v287
        %324 = vst [vmem:[#allocation2 + $0x480] sm:$0xff] %v288
        %325 = vst [vmem:[#allocation2 + $0x4c8] sm:$0xff] %v289
        %326 = vst [vmem:[#allocation2 + $0x510] sm:$0xff] %v290
        %327 = vst [vmem:[#allocation2 + $0x558] sm:$0xff] %v291
        %328 = vst [vmem:[#allocation2 + $0x5a0] sm:$0xff] %v292
        %329 = vst [vmem:[#allocation2 + $0x5e8] sm:$0xff] %v293
        %330 = vst [vmem:[#allocation2 + $0x630] sm:$0xff] %v294
        %331 = vst [vmem:[#allocation2 + $0x678] sm:$0xff] %v295
        %332 = vst [vmem:[#allocation2 + $0x6c0] sm:$0xff] %v296
        %333 = vst [vmem:[#allocation2 + $0x708] sm:$0xff] %v297
        %334 = vst [vmem:[#allocation2 + $0x750] sm:$0xff] %v298
        %335 = vst [vmem:[#allocation2 + $0x798] sm:$0xff] %v299
        %336 = vst [vmem:[#allocation2 + $0x7e0] sm:$0xff] %v300
        %337 = vst [vmem:[#allocation2 + $0x828] sm:$0xff] %v301
        %338 = vst [vmem:[#allocation2 + $0x870] sm:$0xff] %v302
        %339 = vst [vmem:[#allocation2 + $0x8b8] sm:$0xff] %v303
        %340 = vst [vmem:[#allocation2 + $0x900] sm:$0xff] %v304
        %341 = vst [vmem:[#allocation2 + $0x948] sm:$0xff] %v305
        %342 = vst [vmem:[#allocation2 + $0x990] sm:$0xff] %v306
        %343 = vst [vmem:[#allocation2 + $0x9d8] sm:$0xff] %v307
        %v344 = vld [vmem:[%s237 + $0x1] sm:$0xff]
        %v345 = vld [vmem:[%s237 + $0x9] sm:$0xff]
        %v346 = vld [vmem:[%s237 + $0x11] sm:$0xff]
        %v347 = vld [vmem:[%s237 + $0x19] sm:$0xff]
        %v348 = vld [vmem:[%s237 + $0x21] sm:$0xff]
        %v349 = vld [vmem:[%s237 + $0x29] sm:$0xff]
        %v350 = vld [vmem:[%s237 + $0x31] sm:$0xff]
        %v351 = vld [vmem:[%s237 + $0x39] sm:$0xff]
        %v352 = vld [vmem:[%s237 + $0x41] sm:$0xff]
        %v353 = vld [vmem:[%s237 + $0x49] sm:$0xff]
        %v354 = vld [vmem:[%s237 + $0x51] sm:$0xff]
        %v355 = vld [vmem:[%s237 + $0x59] sm:$0xff]
        %v356 = vld [vmem:[%s237 + $0x61] sm:$0xff]
        %v357 = vld [vmem:[%s237 + $0x69] sm:$0xff]
        %v358 = vld [vmem:[%s237 + $0x71] sm:$0xff]
        %v359 = vld [vmem:[%s237 + $0x79] sm:$0xff]
        %v360 = vld [vmem:[%s237 + $0x81] sm:$0xff]
        %v361 = vld [vmem:[%s237 + $0x89] sm:$0xff]
        %v362 = vld [vmem:[%s237 + $0x91] sm:$0xff]
        %v363 = vld [vmem:[%s237 + $0x99] sm:$0xff]
        %v364 = vld [vmem:[%s237 + $0xa1] sm:$0xff]
        %v365 = vld [vmem:[%s237 + $0xa9] sm:$0xff]
        %v366 = vld [vmem:[%s237 + $0xb1] sm:$0xff]
        %v367 = vld [vmem:[%s237 + $0xb9] sm:$0xff]
        %v368 = vld [vmem:[%s237 + $0xc1] sm:$0xff]
        %v369 = vld [vmem:[%s237 + $0xc9] sm:$0xff]
        %v370 = vld [vmem:[%s237 + $0xd1] sm:$0xff]
        %v371 = vld [vmem:[%s237 + $0xd9] sm:$0xff]
        %v372 = vld [vmem:[%s237 + $0xe1] sm:$0xff]
        %v373 = vld [vmem:[%s237 + $0xe9] sm:$0xff]
        %v374 = vld [vmem:[%s237 + $0xf1] sm:$0xff]
        %v375 = vld [vmem:[%s237 + $0xf9] sm:$0xff]
        %v376 = vld [vmem:[%s237 + $0x101] sm:$0xff]
        %v377 = vld [vmem:[%s237 + $0x109] sm:$0xff]
        %v378 = vld [vmem:[%s237 + $0x111] sm:$0xff]
        %v379 = vld [vmem:[%s237 + $0x119] sm:$0xff]
        %380 = vst [vmem:[#allocation2 + $0x8] sm:$0xff] %v344
        %381 = vst [vmem:[#allocation2 + $0x50] sm:$0xff] %v345
        %382 = vst [vmem:[#allocation2 + $0x98] sm:$0xff] %v346
        %383 = vst [vmem:[#allocation2 + $0xe0] sm:$0xff] %v347
        %384 = vst [vmem:[#allocation2 + $0x128] sm:$0xff] %v348
        %385 = vst [vmem:[#allocation2 + $0x170] sm:$0xff] %v349
        %386 = vst [vmem:[#allocation2 + $0x1b8] sm:$0xff] %v350
        %387 = vst [vmem:[#allocation2 + $0x200] sm:$0xff] %v351
        %388 = vst [vmem:[#allocation2 + $0x248] sm:$0xff] %v352
        %389 = vst [vmem:[#allocation2 + $0x290] sm:$0xff] %v353
        %390 = vst [vmem:[#allocation2 + $0x2d8] sm:$0xff] %v354
        %391 = vst [vmem:[#allocation2 + $0x320] sm:$0xff] %v355
        %392 = vst [vmem:[#allocation2 + $0x368] sm:$0xff] %v356
        %393 = vst [vmem:[#allocation2 + $0x3b0] sm:$0xff] %v357
        %394 = vst [vmem:[#allocation2 + $0x3f8] sm:$0xff] %v358
        %395 = vst [vmem:[#allocation2 + $0x440] sm:$0xff] %v359
        %396 = vst [vmem:[#allocation2 + $0x488] sm:$0xff] %v360
        %397 = vst [vmem:[#allocation2 + $0x4d0] sm:$0xff] %v361
        %398 = vst [vmem:[#allocation2 + $0x518] sm:$0xff] %v362
        %399 = vst [vmem:[#allocation2 + $0x560] sm:$0xff] %v363
        %400 = vst [vmem:[#allocation2 + $0x5a8] sm:$0xff] %v364
        %401 = vst [vmem:[#allocation2 + $0x5f0] sm:$0xff] %v365
        %402 = vst [vmem:[#allocation2 + $0x638] sm:$0xff] %v366
        %403 = vst [vmem:[#allocation2 + $0x680] sm:$0xff] %v367
        %404 = vst [vmem:[#allocation2 + $0x6c8] sm:$0xff] %v368
        %405 = vst [vmem:[#allocation2 + $0x710] sm:$0xff] %v369
        %406 = vst [vmem:[#allocation2 + $0x758] sm:$0xff] %v370
        %407 = vst [vmem:[#allocation2 + $0x7a0] sm:$0xff] %v371
        %408 = vst [vmem:[#allocation2 + $0x7e8] sm:$0xff] %v372
        %409 = vst [vmem:[#allocation2 + $0x830] sm:$0xff] %v373
        %410 = vst [vmem:[#allocation2 + $0x878] sm:$0xff] %v374
        %411 = vst [vmem:[#allocation2 + $0x8c0] sm:$0xff] %v375
        %412 = vst [vmem:[#allocation2 + $0x908] sm:$0xff] %v376
        %413 = vst [vmem:[#allocation2 + $0x950] sm:$0xff] %v377
        %414 = vst [vmem:[#allocation2 + $0x998] sm:$0xff] %v378
        %415 = vst [vmem:[#allocation2 + $0x9e0] sm:$0xff] %v379
        %v416 = vld [vmem:[%s237 + $0x2] sm:$0xff]
        %v417 = vld [vmem:[%s237 + $0xa] sm:$0xff]
        %v418 = vld [vmem:[%s237 + $0x12] sm:$0xff]
        %v419 = vld [vmem:[%s237 + $0x1a] sm:$0xff]
        %v420 = vld [vmem:[%s237 + $0x22] sm:$0xff]
        %v421 = vld [vmem:[%s237 + $0x2a] sm:$0xff]
        %v422 = vld [vmem:[%s237 + $0x32] sm:$0xff]
        %v423 = vld [vmem:[%s237 + $0x3a] sm:$0xff]
        %v424 = vld [vmem:[%s237 + $0x42] sm:$0xff]
        %v425 = vld [vmem:[%s237 + $0x4a] sm:$0xff]
        %v426 = vld [vmem:[%s237 + $0x52] sm:$0xff]
        %v427 = vld [vmem:[%s237 + $0x5a] sm:$0xff]
        %v428 = vld [vmem:[%s237 + $0x62] sm:$0xff]
        %v429 = vld [vmem:[%s237 + $0x6a] sm:$0xff]
        %v430 = vld [vmem:[%s237 + $0x72] sm:$0xff]
        %v431 = vld [vmem:[%s237 + $0x7a] sm:$0xff]
        %v432 = vld [vmem:[%s237 + $0x82] sm:$0xff]
        %v433 = vld [vmem:[%s237 + $0x8a] sm:$0xff]
        %v434 = vld [vmem:[%s237 + $0x92] sm:$0xff]
        %v435 = vld [vmem:[%s237 + $0x9a] sm:$0xff]
        %v436 = vld [vmem:[%s237 + $0xa2] sm:$0xff]
        %v437 = vld [vmem:[%s237 + $0xaa] sm:$0xff]
        %v438 = vld [vmem:[%s237 + $0xb2] sm:$0xff]
        %v439 = vld [vmem:[%s237 + $0xba] sm:$0xff]
        %v440 = vld [vmem:[%s237 + $0xc2] sm:$0xff]
        %v441 = vld [vmem:[%s237 + $0xca] sm:$0xff]
        %v442 = vld [vmem:[%s237 + $0xd2] sm:$0xff]
        %v443 = vld [vmem:[%s237 + $0xda] sm:$0xff]
        %v444 = vld [vmem:[%s237 + $0xe2] sm:$0xff]
        %v445 = vld [vmem:[%s237 + $0xea] sm:$0xff]
        %v446 = vld [vmem:[%s237 + $0xf2] sm:$0xff]
        %v447 = vld [vmem:[%s237 + $0xfa] sm:$0xff]
        %v448 = vld [vmem:[%s237 + $0x102] sm:$0xff]
        %v449 = vld [vmem:[%s237 + $0x10a] sm:$0xff]
        %v450 = vld [vmem:[%s237 + $0x112] sm:$0xff]
        %v451 = vld [vmem:[%s237 + $0x11a] sm:$0xff]
        %452 = vst [vmem:[#allocation2 + $0x10] sm:$0xff] %v416
        %453 = vst [vmem:[#allocation2 + $0x58] sm:$0xff] %v417
        %454 = vst [vmem:[#allocation2 + $0xa0] sm:$0xff] %v418
        %455 = vst [vmem:[#allocation2 + $0xe8] sm:$0xff] %v419
        %456 = vst [vmem:[#allocation2 + $0x130] sm:$0xff] %v420
        %457 = vst [vmem:[#allocation2 + $0x178] sm:$0xff] %v421
        %458 = vst [vmem:[#allocation2 + $0x1c0] sm:$0xff] %v422
        %459 = vst [vmem:[#allocation2 + $0x208] sm:$0xff] %v423
        %460 = vst [vmem:[#allocation2 + $0x250] sm:$0xff] %v424
        %461 = vst [vmem:[#allocation2 + $0x298] sm:$0xff] %v425
        %462 = vst [vmem:[#allocation2 + $0x2e0] sm:$0xff] %v426
        %463 = vst [vmem:[#allocation2 + $0x328] sm:$0xff] %v427
        %464 = vst [vmem:[#allocation2 + $0x370] sm:$0xff] %v428
        %465 = vst [vmem:[#allocation2 + $0x3b8] sm:$0xff] %v429
        %466 = vst [vmem:[#allocation2 + $0x400] sm:$0xff] %v430
        %467 = vst [vmem:[#allocation2 + $0x448] sm:$0xff] %v431
        %468 = vst [vmem:[#allocation2 + $0x490] sm:$0xff] %v432
        %469 = vst [vmem:[#allocation2 + $0x4d8] sm:$0xff] %v433
        %470 = vst [vmem:[#allocation2 + $0x520] sm:$0xff] %v434
        %471 = vst [vmem:[#allocation2 + $0x568] sm:$0xff] %v435
        %472 = vst [vmem:[#allocation2 + $0x5b0] sm:$0xff] %v436
        %473 = vst [vmem:[#allocation2 + $0x5f8] sm:$0xff] %v437
        %474 = vst [vmem:[#allocation2 + $0x640] sm:$0xff] %v438
        %475 = vst [vmem:[#allocation2 + $0x688] sm:$0xff] %v439
        %476 = vst [vmem:[#allocation2 + $0x6d0] sm:$0xff] %v440
        %477 = vst [vmem:[#allocation2 + $0x718] sm:$0xff] %v441
        %478 = vst [vmem:[#allocation2 + $0x760] sm:$0xff] %v442
        %479 = vst [vmem:[#allocation2 + $0x7a8] sm:$0xff] %v443
        %480 = vst [vmem:[#allocation2 + $0x7f0] sm:$0xff] %v444
        %481 = vst [vmem:[#allocation2 + $0x838] sm:$0xff] %v445
        %482 = vst [vmem:[#allocation2 + $0x880] sm:$0xff] %v446
        %483 = vst [vmem:[#allocation2 + $0x8c8] sm:$0xff] %v447
        %484 = vst [vmem:[#allocation2 + $0x910] sm:$0xff] %v448
        %485 = vst [vmem:[#allocation2 + $0x958] sm:$0xff] %v449
        %486 = vst [vmem:[#allocation2 + $0x9a0] sm:$0xff] %v450
        %487 = vst [vmem:[#allocation2 + $0x9e8] sm:$0xff] %v451
        %v488 = vld [vmem:[%s237 + $0x12] sm:$0xff]
        %v489 = vld [vmem:[%s237 + $0x1a] sm:$0xff]
        %v490 = vld [vmem:[%s237 + $0x22] sm:$0xff]
        %v491 = vld [vmem:[%s237 + $0x2a] sm:$0xff]
        %v492 = vld [vmem:[%s237 + $0x32] sm:$0xff]
        %v493 = vld [vmem:[%s237 + $0x3a] sm:$0xff]
        %v494 = vld [vmem:[%s237 + $0x42] sm:$0xff]
        %v495 = vld [vmem:[%s237 + $0x4a] sm:$0xff]
        %v496 = vld [vmem:[%s237 + $0x52] sm:$0xff]
        %v497 = vld [vmem:[%s237 + $0x5a] sm:$0xff]
        %v498 = vld [vmem:[%s237 + $0x62] sm:$0xff]
        %v499 = vld [vmem:[%s237 + $0x6a] sm:$0xff]
        %v500 = vld [vmem:[%s237 + $0x72] sm:$0xff]
        %v501 = vld [vmem:[%s237 + $0x7a] sm:$0xff]
        %v502 = vld [vmem:[%s237 + $0x82] sm:$0xff]
        %v503 = vld [vmem:[%s237 + $0x8a] sm:$0xff]
        %v504 = vld [vmem:[%s237 + $0x92] sm:$0xff]
        %v505 = vld [vmem:[%s237 + $0x9a] sm:$0xff]
        %v506 = vld [vmem:[%s237 + $0xa2] sm:$0xff]
        %v507 = vld [vmem:[%s237 + $0xaa] sm:$0xff]
        %v508 = vld [vmem:[%s237 + $0xb2] sm:$0xff]
        %v509 = vld [vmem:[%s237 + $0xba] sm:$0xff]
        %v510 = vld [vmem:[%s237 + $0xc2] sm:$0xff]
        %v511 = vld [vmem:[%s237 + $0xca] sm:$0xff]
        %v512 = vld [vmem:[%s237 + $0xd2] sm:$0xff]
        %v513 = vld [vmem:[%s237 + $0xda] sm:$0xff]
        %v514 = vld [vmem:[%s237 + $0xe2] sm:$0xff]
        %v515 = vld [vmem:[%s237 + $0xea] sm:$0xff]
        %v516 = vld [vmem:[%s237 + $0xf2] sm:$0xff]
        %v517 = vld [vmem:[%s237 + $0xfa] sm:$0xff]
        %v518 = vld [vmem:[%s237 + $0x102] sm:$0xff]
        %v519 = vld [vmem:[%s237 + $0x10a] sm:$0xff]
        %v520 = vld [vmem:[%s237 + $0x112] sm:$0xff]
        %v521 = vld [vmem:[%s237 + $0x11a] sm:$0xff]
        %v522 = vld [vmem:[%s237 + $0x122] sm:$0xff]
        %v523 = vld [vmem:[%s237 + $0x12a] sm:$0xff]
        %524 = vst [vmem:[#allocation2 + $0x18] sm:$0xff] %v488
        %525 = vst [vmem:[#allocation2 + $0x60] sm:$0xff] %v489
        %526 = vst [vmem:[#allocation2 + $0xa8] sm:$0xff] %v490
        %527 = vst [vmem:[#allocation2 + $0xf0] sm:$0xff] %v491
        %528 = vst [vmem:[#allocation2 + $0x138] sm:$0xff] %v492
        %529 = vst [vmem:[#allocation2 + $0x180] sm:$0xff] %v493
        %530 = vst [vmem:[#allocation2 + $0x1c8] sm:$0xff] %v494
        %531 = vst [vmem:[#allocation2 + $0x210] sm:$0xff] %v495
        %532 = vst [vmem:[#allocation2 + $0x258] sm:$0xff] %v496
        %533 = vst [vmem:[#allocation2 + $0x2a0] sm:$0xff] %v497
        %534 = vst [vmem:[#allocation2 + $0x2e8] sm:$0xff] %v498
        %535 = vst [vmem:[#allocation2 + $0x330] sm:$0xff] %v499
        %536 = vst [vmem:[#allocation2 + $0x378] sm:$0xff] %v500
        %537 = vst [vmem:[#allocation2 + $0x3c0] sm:$0xff] %v501
        %538 = vst [vmem:[#allocation2 + $0x408] sm:$0xff] %v502
        %539 = vst [vmem:[#allocation2 + $0x450] sm:$0xff] %v503
        %540 = vst [vmem:[#allocation2 + $0x498] sm:$0xff] %v504
        %541 = vst [vmem:[#allocation2 + $0x4e0] sm:$0xff] %v505
        %542 = vst [vmem:[#allocation2 + $0x528] sm:$0xff] %v506
        %543 = vst [vmem:[#allocation2 + $0x570] sm:$0xff] %v507
        %544 = vst [vmem:[#allocation2 + $0x5b8] sm:$0xff] %v508
        %545 = vst [vmem:[#allocation2 + $0x600] sm:$0xff] %v509
        %546 = vst [vmem:[#allocation2 + $0x648] sm:$0xff] %v510
        %547 = vst [vmem:[#allocation2 + $0x690] sm:$0xff] %v511
        %548 = vst [vmem:[#allocation2 + $0x6d8] sm:$0xff] %v512
        %549 = vst [vmem:[#allocation2 + $0x720] sm:$0xff] %v513
        %550 = vst [vmem:[#allocation2 + $0x768] sm:$0xff] %v514
        %551 = vst [vmem:[#allocation2 + $0x7b0] sm:$0xff] %v515
        %552 = vst [vmem:[#allocation2 + $0x7f8] sm:$0xff] %v516
        %553 = vst [vmem:[#allocation2 + $0x840] sm:$0xff] %v517
        %554 = vst [vmem:[#allocation2 + $0x888] sm:$0xff] %v518
        %555 = vst [vmem:[#allocation2 + $0x8d0] sm:$0xff] %v519
        %556 = vst [vmem:[#allocation2 + $0x918] sm:$0xff] %v520
        %557 = vst [vmem:[#allocation2 + $0x960] sm:$0xff] %v521
        %558 = vst [vmem:[#allocation2 + $0x9a8] sm:$0xff] %v522
        %559 = vst [vmem:[#allocation2 + $0x9f0] sm:$0xff] %v523
        %v560 = vld [vmem:[%s237 + $0x13] sm:$0xff]
        %v561 = vld [vmem:[%s237 + $0x1b] sm:$0xff]
        %v562 = vld [vmem:[%s237 + $0x23] sm:$0xff]
        %v563 = vld [vmem:[%s237 + $0x2b] sm:$0xff]
        %v564 = vld [vmem:[%s237 + $0x33] sm:$0xff]
        %v565 = vld [vmem:[%s237 + $0x3b] sm:$0xff]
        %v566 = vld [vmem:[%s237 + $0x43] sm:$0xff]
        %v567 = vld [vmem:[%s237 + $0x4b] sm:$0xff]
        %v568 = vld [vmem:[%s237 + $0x53] sm:$0xff]
        %v569 = vld [vmem:[%s237 + $0x5b] sm:$0xff]
        %v570 = vld [vmem:[%s237 + $0x63] sm:$0xff]
        %v571 = vld [vmem:[%s237 + $0x6b] sm:$0xff]
        %v572 = vld [vmem:[%s237 + $0x73] sm:$0xff]
        %v573 = vld [vmem:[%s237 + $0x7b] sm:$0xff]
        %v574 = vld [vmem:[%s237 + $0x83] sm:$0xff]
        %v575 = vld [vmem:[%s237 + $0x8b] sm:$0xff]
        %v576 = vld [vmem:[%s237 + $0x93] sm:$0xff]
        %v577 = vld [vmem:[%s237 + $0x9b] sm:$0xff]
        %v578 = vld [vmem:[%s237 + $0xa3] sm:$0xff]
        %v579 = vld [vmem:[%s237 + $0xab] sm:$0xff]
        %v580 = vld [vmem:[%s237 + $0xb3] sm:$0xff]
        %v581 = vld [vmem:[%s237 + $0xbb] sm:$0xff]
        %v582 = vld [vmem:[%s237 + $0xc3] sm:$0xff]
        %v583 = vld [vmem:[%s237 + $0xcb] sm:$0xff]
        %v584 = vld [vmem:[%s237 + $0xd3] sm:$0xff]
        %v585 = vld [vmem:[%s237 + $0xdb] sm:$0xff]
        %v586 = vld [vmem:[%s237 + $0xe3] sm:$0xff]
        %v587 = vld [vmem:[%s237 + $0xeb] sm:$0xff]
        %v588 = vld [vmem:[%s237 + $0xf3] sm:$0xff]
        %v589 = vld [vmem:[%s237 + $0xfb] sm:$0xff]
        %v590 = vld [vmem:[%s237 + $0x103] sm:$0xff]
        %v591 = vld [vmem:[%s237 + $0x10b] sm:$0xff]
        %v592 = vld [vmem:[%s237 + $0x113] sm:$0xff]
        %v593 = vld [vmem:[%s237 + $0x11b] sm:$0xff]
        %v594 = vld [vmem:[%s237 + $0x123] sm:$0xff]
        %v595 = vld [vmem:[%s237 + $0x12b] sm:$0xff]
        %596 = vst [vmem:[#allocation2 + $0x20] sm:$0xff] %v560
        %597 = vst [vmem:[#allocation2 + $0x68] sm:$0xff] %v561
        %598 = vst [vmem:[#allocation2 + $0xb0] sm:$0xff] %v562
        %599 = vst [vmem:[#allocation2 + $0xf8] sm:$0xff] %v563
        %600 = vst [vmem:[#allocation2 + $0x140] sm:$0xff] %v564
        %601 = vst [vmem:[#allocation2 + $0x188] sm:$0xff] %v565
        %602 = vst [vmem:[#allocation2 + $0x1d0] sm:$0xff] %v566
        %603 = vst [vmem:[#allocation2 + $0x218] sm:$0xff] %v567
        %604 = vst [vmem:[#allocation2 + $0x260] sm:$0xff] %v568
        %605 = vst [vmem:[#allocation2 + $0x2a8] sm:$0xff] %v569
        %606 = vst [vmem:[#allocation2 + $0x2f0] sm:$0xff] %v570
        %607 = vst [vmem:[#allocation2 + $0x338] sm:$0xff] %v571
        %608 = vst [vmem:[#allocation2 + $0x380] sm:$0xff] %v572
        %609 = vst [vmem:[#allocation2 + $0x3c8] sm:$0xff] %v573
        %610 = vst [vmem:[#allocation2 + $0x410] sm:$0xff] %v574
        %611 = vst [vmem:[#allocation2 + $0x458] sm:$0xff] %v575
        %612 = vst [vmem:[#allocation2 + $0x4a0] sm:$0xff] %v576
        %613 = vst [vmem:[#allocation2 + $0x4e8] sm:$0xff] %v577
        %614 = vst [vmem:[#allocation2 + $0x530] sm:$0xff] %v578
        %615 = vst [vmem:[#allocation2 + $0x578] sm:$0xff] %v579
        %616 = vst [vmem:[#allocation2 + $0x5c0] sm:$0xff] %v580
        %617 = vst [vmem:[#allocation2 + $0x608] sm:$0xff] %v581
        %618 = vst [vmem:[#allocation2 + $0x650] sm:$0xff] %v582
        %619 = vst [vmem:[#allocation2 + $0x698] sm:$0xff] %v583
        %620 = vst [vmem:[#allocation2 + $0x6e0] sm:$0xff] %v584
        %621 = vst [vmem:[#allocation2 + $0x728] sm:$0xff] %v585
        %622 = vst [vmem:[#allocation2 + $0x770] sm:$0xff] %v586
        %623 = vst [vmem:[#allocation2 + $0x7b8] sm:$0xff] %v587
        %624 = vst [vmem:[#allocation2 + $0x800] sm:$0xff] %v588
        %625 = vst [vmem:[#allocation2 + $0x848] sm:$0xff] %v589
        %626 = vst [vmem:[#allocation2 + $0x890] sm:$0xff] %v590
        %627 = vst [vmem:[#allocation2 + $0x8d8] sm:$0xff] %v591
        %628 = vst [vmem:[#allocation2 + $0x920] sm:$0xff] %v592
        %629 = vst [vmem:[#allocation2 + $0x968] sm:$0xff] %v593
        %630 = vst [vmem:[#allocation2 + $0x9b0] sm:$0xff] %v594
        %631 = vst [vmem:[#allocation2 + $0x9f8] sm:$0xff] %v595
        %v632 = vld [vmem:[%s237 + $0x14] sm:$0xff]
        %v633 = vld [vmem:[%s237 + $0x1c] sm:$0xff]
        %v634 = vld [vmem:[%s237 + $0x24] sm:$0xff]
        %v635 = vld [vmem:[%s237 + $0x2c] sm:$0xff]
        %v636 = vld [vmem:[%s237 + $0x34] sm:$0xff]
        %v637 = vld [vmem:[%s237 + $0x3c] sm:$0xff]
        %v638 = vld [vmem:[%s237 + $0x44] sm:$0xff]
        %v639 = vld [vmem:[%s237 + $0x4c] sm:$0xff]
        %v640 = vld [vmem:[%s237 + $0x54] sm:$0xff]
        %v641 = vld [vmem:[%s237 + $0x5c] sm:$0xff]
        %v642 = vld [vmem:[%s237 + $0x64] sm:$0xff]
        %v643 = vld [vmem:[%s237 + $0x6c] sm:$0xff]
        %v644 = vld [vmem:[%s237 + $0x74] sm:$0xff]
        %v645 = vld [vmem:[%s237 + $0x7c] sm:$0xff]
        %v646 = vld [vmem:[%s237 + $0x84] sm:$0xff]
        %v647 = vld [vmem:[%s237 + $0x8c] sm:$0xff]
        %v648 = vld [vmem:[%s237 + $0x94] sm:$0xff]
        %v649 = vld [vmem:[%s237 + $0x9c] sm:$0xff]
        %v650 = vld [vmem:[%s237 + $0xa4] sm:$0xff]
        %v651 = vld [vmem:[%s237 + $0xac] sm:$0xff]
        %v652 = vld [vmem:[%s237 + $0xb4] sm:$0xff]
        %v653 = vld [vmem:[%s237 + $0xbc] sm:$0xff]
        %v654 = vld [vmem:[%s237 + $0xc4] sm:$0xff]
        %v655 = vld [vmem:[%s237 + $0xcc] sm:$0xff]
        %v656 = vld [vmem:[%s237 + $0xd4] sm:$0xff]
        %v657 = vld [vmem:[%s237 + $0xdc] sm:$0xff]
        %v658 = vld [vmem:[%s237 + $0xe4] sm:$0xff]
        %v659 = vld [vmem:[%s237 + $0xec] sm:$0xff]
        %v660 = vld [vmem:[%s237 + $0xf4] sm:$0xff]
        %v661 = vld [vmem:[%s237 + $0xfc] sm:$0xff]
        %v662 = vld [vmem:[%s237 + $0x104] sm:$0xff]
        %v663 = vld [vmem:[%s237 + $0x10c] sm:$0xff]
        %v664 = vld [vmem:[%s237 + $0x114] sm:$0xff]
        %v665 = vld [vmem:[%s237 + $0x11c] sm:$0xff]
        %v666 = vld [vmem:[%s237 + $0x124] sm:$0xff]
        %v667 = vld [vmem:[%s237 + $0x12c] sm:$0xff]
        %668 = vst [vmem:[#allocation2 + $0x28] sm:$0xff] %v632
        %669 = vst [vmem:[#allocation2 + $0x70] sm:$0xff] %v633
        %670 = vst [vmem:[#allocation2 + $0xb8] sm:$0xff] %v634
        %671 = vst [vmem:[#allocation2 + $0x100] sm:$0xff] %v635
        %672 = vst [vmem:[#allocation2 + $0x148] sm:$0xff] %v636
        %673 = vst [vmem:[#allocation2 + $0x190] sm:$0xff] %v637
        %674 = vst [vmem:[#allocation2 + $0x1d8] sm:$0xff] %v638
        %675 = vst [vmem:[#allocation2 + $0x220] sm:$0xff] %v639
        %676 = vst [vmem:[#allocation2 + $0x268] sm:$0xff] %v640
        %677 = vst [vmem:[#allocation2 + $0x2b0] sm:$0xff] %v641
        %678 = vst [vmem:[#allocation2 + $0x2f8] sm:$0xff] %v642
        %679 = vst [vmem:[#allocation2 + $0x340] sm:$0xff] %v643
        %680 = vst [vmem:[#allocation2 + $0x388] sm:$0xff] %v644
        %681 = vst [vmem:[#allocation2 + $0x3d0] sm:$0xff] %v645
        %682 = vst [vmem:[#allocation2 + $0x418] sm:$0xff] %v646
        %683 = vst [vmem:[#allocation2 + $0x460] sm:$0xff] %v647
        %684 = vst [vmem:[#allocation2 + $0x4a8] sm:$0xff] %v648
        %685 = vst [vmem:[#allocation2 + $0x4f0] sm:$0xff] %v649
        %686 = vst [vmem:[#allocation2 + $0x538] sm:$0xff] %v650
        %687 = vst [vmem:[#allocation2 + $0x580] sm:$0xff] %v651
        %688 = vst [vmem:[#allocation2 + $0x5c8] sm:$0xff] %v652
        %689 = vst [vmem:[#allocation2 + $0x610] sm:$0xff] %v653
        %690 = vst [vmem:[#allocation2 + $0x658] sm:$0xff] %v654
        %691 = vst [vmem:[#allocation2 + $0x6a0] sm:$0xff] %v655
        %692 = vst [vmem:[#allocation2 + $0x6e8] sm:$0xff] %v656
        %693 = vst [vmem:[#allocation2 + $0x730] sm:$0xff] %v657
        %694 = vst [vmem:[#allocation2 + $0x778] sm:$0xff] %v658
        %695 = vst [vmem:[#allocation2 + $0x7c0] sm:$0xff] %v659
        %696 = vst [vmem:[#allocation2 + $0x808] sm:$0xff] %v660
        %697 = vst [vmem:[#allocation2 + $0x850] sm:$0xff] %v661
        %698 = vst [vmem:[#allocation2 + $0x898] sm:$0xff] %v662
        %699 = vst [vmem:[#allocation2 + $0x8e0] sm:$0xff] %v663
        %700 = vst [vmem:[#allocation2 + $0x928] sm:$0xff] %v664
        %701 = vst [vmem:[#allocation2 + $0x970] sm:$0xff] %v665
        %702 = vst [vmem:[#allocation2 + $0x9b8] sm:$0xff] %v666
        %703 = vst [vmem:[#allocation2 + $0xa00] sm:$0xff] %v667
        %v704 = vld [vmem:[%s237 + $0x24] sm:$0xff]
        %v705 = vld [vmem:[%s237 + $0x2c] sm:$0xff]
        %v706 = vld [vmem:[%s237 + $0x34] sm:$0xff]
        %v707 = vld [vmem:[%s237 + $0x3c] sm:$0xff]
        %v708 = vld [vmem:[%s237 + $0x44] sm:$0xff]
        %v709 = vld [vmem:[%s237 + $0x4c] sm:$0xff]
        %v710 = vld [vmem:[%s237 + $0x54] sm:$0xff]
        %v711 = vld [vmem:[%s237 + $0x5c] sm:$0xff]
        %v712 = vld [vmem:[%s237 + $0x64] sm:$0xff]
        %v713 = vld [vmem:[%s237 + $0x6c] sm:$0xff]
        %v714 = vld [vmem:[%s237 + $0x74] sm:$0xff]
        %v715 = vld [vmem:[%s237 + $0x7c] sm:$0xff]
        %v716 = vld [vmem:[%s237 + $0x84] sm:$0xff]
        %v717 = vld [vmem:[%s237 + $0x8c] sm:$0xff]
        %v718 = vld [vmem:[%s237 + $0x94] sm:$0xff]
        %v719 = vld [vmem:[%s237 + $0x9c] sm:$0xff]
        %v720 = vld [vmem:[%s237 + $0xa4] sm:$0xff]
        %v721 = vld [vmem:[%s237 + $0xac] sm:$0xff]
        %v722 = vld [vmem:[%s237 + $0xb4] sm:$0xff]
        %v723 = vld [vmem:[%s237 + $0xbc] sm:$0xff]
        %v724 = vld [vmem:[%s237 + $0xc4] sm:$0xff]
        %v725 = vld [vmem:[%s237 + $0xcc] sm:$0xff]
        %v726 = vld [vmem:[%s237 + $0xd4] sm:$0xff]
        %v727 = vld [vmem:[%s237 + $0xdc] sm:$0xff]
        %v728 = vld [vmem:[%s237 + $0xe4] sm:$0xff]
        %v729 = vld [vmem:[%s237 + $0xec] sm:$0xff]
        %v730 = vld [vmem:[%s237 + $0xf4] sm:$0xff]
        %v731 = vld [vmem:[%s237 + $0xfc] sm:$0xff]
        %v732 = vld [vmem:[%s237 + $0x104] sm:$0xff]
        %v733 = vld [vmem:[%s237 + $0x10c] sm:$0xff]
        %v734 = vld [vmem:[%s237 + $0x114] sm:$0xff]
        %v735 = vld [vmem:[%s237 + $0x11c] sm:$0xff]
        %v736 = vld [vmem:[%s237 + $0x124] sm:$0xff]
        %v737 = vld [vmem:[%s237 + $0x12c] sm:$0xff]
        %v738 = vld [vmem:[%s237 + $0x134] sm:$0xff]
        %v739 = vld [vmem:[%s237 + $0x13c] sm:$0xff]
        %740 = vst [vmem:[#allocation2 + $0x30] sm:$0xff] %v704
        %741 = vst [vmem:[#allocation2 + $0x78] sm:$0xff] %v705
        %742 = vst [vmem:[#allocation2 + $0xc0] sm:$0xff] %v706
        %743 = vst [vmem:[#allocation2 + $0x108] sm:$0xff] %v707
        %744 = vst [vmem:[#allocation2 + $0x150] sm:$0xff] %v708
        %745 = vst [vmem:[#allocation2 + $0x198] sm:$0xff] %v709
        %746 = vst [vmem:[#allocation2 + $0x1e0] sm:$0xff] %v710
        %747 = vst [vmem:[#allocation2 + $0x228] sm:$0xff] %v711
        %748 = vst [vmem:[#allocation2 + $0x270] sm:$0xff] %v712
        %749 = vst [vmem:[#allocation2 + $0x2b8] sm:$0xff] %v713
        %750 = vst [vmem:[#allocation2 + $0x300] sm:$0xff] %v714
        %751 = vst [vmem:[#allocation2 + $0x348] sm:$0xff] %v715
        %752 = vst [vmem:[#allocation2 + $0x390] sm:$0xff] %v716
        %753 = vst [vmem:[#allocation2 + $0x3d8] sm:$0xff] %v717
        %754 = vst [vmem:[#allocation2 + $0x420] sm:$0xff] %v718
        %755 = vst [vmem:[#allocation2 + $0x468] sm:$0xff] %v719
        %756 = vst [vmem:[#allocation2 + $0x4b0] sm:$0xff] %v720
        %757 = vst [vmem:[#allocation2 + $0x4f8] sm:$0xff] %v721
        %758 = vst [vmem:[#allocation2 + $0x540] sm:$0xff] %v722
        %759 = vst [vmem:[#allocation2 + $0x588] sm:$0xff] %v723
        %760 = vst [vmem:[#allocation2 + $0x5d0] sm:$0xff] %v724
        %761 = vst [vmem:[#allocation2 + $0x618] sm:$0xff] %v725
        %762 = vst [vmem:[#allocation2 + $0x660] sm:$0xff] %v726
        %763 = vst [vmem:[#allocation2 + $0x6a8] sm:$0xff] %v727
        %764 = vst [vmem:[#allocation2 + $0x6f0] sm:$0xff] %v728
        %765 = vst [vmem:[#allocation2 + $0x738] sm:$0xff] %v729
        %766 = vst [vmem:[#allocation2 + $0x780] sm:$0xff] %v730
        %767 = vst [vmem:[#allocation2 + $0x7c8] sm:$0xff] %v731
        %768 = vst [vmem:[#allocation2 + $0x810] sm:$0xff] %v732
        %769 = vst [vmem:[#allocation2 + $0x858] sm:$0xff] %v733
        %770 = vst [vmem:[#allocation2 + $0x8a0] sm:$0xff] %v734
        %771 = vst [vmem:[#allocation2 + $0x8e8] sm:$0xff] %v735
        %772 = vst [vmem:[#allocation2 + $0x930] sm:$0xff] %v736
        %773 = vst [vmem:[#allocation2 + $0x978] sm:$0xff] %v737
        %774 = vst [vmem:[#allocation2 + $0x9c0] sm:$0xff] %v738
        %775 = vst [vmem:[#allocation2 + $0xa08] sm:$0xff] %v739
        %v776 = vld [vmem:[%s237 + $0x25] sm:$0xff]
        %v777 = vld [vmem:[%s237 + $0x2d] sm:$0xff]
        %v778 = vld [vmem:[%s237 + $0x35] sm:$0xff]
        %v779 = vld [vmem:[%s237 + $0x3d] sm:$0xff]
        %v780 = vld [vmem:[%s237 + $0x45] sm:$0xff]
        %v781 = vld [vmem:[%s237 + $0x4d] sm:$0xff]
        %v782 = vld [vmem:[%s237 + $0x55] sm:$0xff]
        %v783 = vld [vmem:[%s237 + $0x5d] sm:$0xff]
        %v784 = vld [vmem:[%s237 + $0x65] sm:$0xff]
        %v785 = vld [vmem:[%s237 + $0x6d] sm:$0xff]
        %v786 = vld [vmem:[%s237 + $0x75] sm:$0xff]
        %v787 = vld [vmem:[%s237 + $0x7d] sm:$0xff]
        %v788 = vld [vmem:[%s237 + $0x85] sm:$0xff]
        %v789 = vld [vmem:[%s237 + $0x8d] sm:$0xff]
        %v790 = vld [vmem:[%s237 + $0x95] sm:$0xff]
        %v791 = vld [vmem:[%s237 + $0x9d] sm:$0xff]
        %v792 = vld [vmem:[%s237 + $0xa5] sm:$0xff]
        %v793 = vld [vmem:[%s237 + $0xad] sm:$0xff]
        %v794 = vld [vmem:[%s237 + $0xb5] sm:$0xff]
        %v795 = vld [vmem:[%s237 + $0xbd] sm:$0xff]
        %v796 = vld [vmem:[%s237 + $0xc5] sm:$0xff]
        %v797 = vld [vmem:[%s237 + $0xcd] sm:$0xff]
        %v798 = vld [vmem:[%s237 + $0xd5] sm:$0xff]
        %v799 = vld [vmem:[%s237 + $0xdd] sm:$0xff]
        %v800 = vld [vmem:[%s237 + $0xe5] sm:$0xff]
        %v801 = vld [vmem:[%s237 + $0xed] sm:$0xff]
        %v802 = vld [vmem:[%s237 + $0xf5] sm:$0xff]
        %v803 = vld [vmem:[%s237 + $0xfd] sm:$0xff]
        %v804 = vld [vmem:[%s237 + $0x105] sm:$0xff]
        %v805 = vld [vmem:[%s237 + $0x10d] sm:$0xff]
        %v806 = vld [vmem:[%s237 + $0x115] sm:$0xff]
        %v807 = vld [vmem:[%s237 + $0x11d] sm:$0xff]
        %v808 = vld [vmem:[%s237 + $0x125] sm:$0xff]
        %v809 = vld [vmem:[%s237 + $0x12d] sm:$0xff]
        %v810 = vld [vmem:[%s237 + $0x135] sm:$0xff]
        %v811 = vld [vmem:[%s237 + $0x13d] sm:$0xff]
        %812 = vst [vmem:[#allocation2 + $0x38] sm:$0xff] %v776
        %813 = vst [vmem:[#allocation2 + $0x80] sm:$0xff] %v777
        %814 = vst [vmem:[#allocation2 + $0xc8] sm:$0xff] %v778
        %815 = vst [vmem:[#allocation2 + $0x110] sm:$0xff] %v779
        %816 = vst [vmem:[#allocation2 + $0x158] sm:$0xff] %v780
        %817 = vst [vmem:[#allocation2 + $0x1a0] sm:$0xff] %v781
        %818 = vst [vmem:[#allocation2 + $0x1e8] sm:$0xff] %v782
        %819 = vst [vmem:[#allocation2 + $0x230] sm:$0xff] %v783
        %820 = vst [vmem:[#allocation2 + $0x278] sm:$0xff] %v784
        %821 = vst [vmem:[#allocation2 + $0x2c0] sm:$0xff] %v785
        %822 = vst [vmem:[#allocation2 + $0x308] sm:$0xff] %v786
        %823 = vst [vmem:[#allocation2 + $0x350] sm:$0xff] %v787
        %824 = vst [vmem:[#allocation2 + $0x398] sm:$0xff] %v788
        %825 = vst [vmem:[#allocation2 + $0x3e0] sm:$0xff] %v789
        %826 = vst [vmem:[#allocation2 + $0x428] sm:$0xff] %v790
        %827 = vst [vmem:[#allocation2 + $0x470] sm:$0xff] %v791
        %828 = vst [vmem:[#allocation2 + $0x4b8] sm:$0xff] %v792
        %829 = vst [vmem:[#allocation2 + $0x500] sm:$0xff] %v793
        %830 = vst [vmem:[#allocation2 + $0x548] sm:$0xff] %v794
        %831 = vst [vmem:[#allocation2 + $0x590] sm:$0xff] %v795
        %832 = vst [vmem:[#allocation2 + $0x5d8] sm:$0xff] %v796
        %833 = vst [vmem:[#allocation2 + $0x620] sm:$0xff] %v797
        %834 = vst [vmem:[#allocation2 + $0x668] sm:$0xff] %v798
        %835 = vst [vmem:[#allocation2 + $0x6b0] sm:$0xff] %v799
        %836 = vst [vmem:[#allocation2 + $0x6f8] sm:$0xff] %v800
        %837 = vst [vmem:[#allocation2 + $0x740] sm:$0xff] %v801
        %838 = vst [vmem:[#allocation2 + $0x788] sm:$0xff] %v802
        %839 = vst [vmem:[#allocation2 + $0x7d0] sm:$0xff] %v803
        %840 = vst [vmem:[#allocation2 + $0x818] sm:$0xff] %v804
        %841 = vst [vmem:[#allocation2 + $0x860] sm:$0xff] %v805
        %842 = vst [vmem:[#allocation2 + $0x8a8] sm:$0xff] %v806
        %843 = vst [vmem:[#allocation2 + $0x8f0] sm:$0xff] %v807
        %844 = vst [vmem:[#allocation2 + $0x938] sm:$0xff] %v808
        %845 = vst [vmem:[#allocation2 + $0x980] sm:$0xff] %v809
        %846 = vst [vmem:[#allocation2 + $0x9c8] sm:$0xff] %v810
        %847 = vst [vmem:[#allocation2 + $0xa10] sm:$0xff] %v811
        %v848 = vld [vmem:[%s237 + $0x26] sm:$0xff]
        %v849 = vld [vmem:[%s237 + $0x2e] sm:$0xff]
        %v850 = vld [vmem:[%s237 + $0x36] sm:$0xff]
        %v851 = vld [vmem:[%s237 + $0x3e] sm:$0xff]
        %v852 = vld [vmem:[%s237 + $0x46] sm:$0xff]
        %v853 = vld [vmem:[%s237 + $0x4e] sm:$0xff]
        %v854 = vld [vmem:[%s237 + $0x56] sm:$0xff]
        %v855 = vld [vmem:[%s237 + $0x5e] sm:$0xff]
        %v856 = vld [vmem:[%s237 + $0x66] sm:$0xff]
        %v857 = vld [vmem:[%s237 + $0x6e] sm:$0xff]
        %v858 = vld [vmem:[%s237 + $0x76] sm:$0xff]
        %v859 = vld [vmem:[%s237 + $0x7e] sm:$0xff]
        %v860 = vld [vmem:[%s237 + $0x86] sm:$0xff]
        %v861 = vld [vmem:[%s237 + $0x8e] sm:$0xff]
        %v862 = vld [vmem:[%s237 + $0x96] sm:$0xff]
        %v863 = vld [vmem:[%s237 + $0x9e] sm:$0xff]
        %v864 = vld [vmem:[%s237 + $0xa6] sm:$0xff]
        %v865 = vld [vmem:[%s237 + $0xae] sm:$0xff]
        %v866 = vld [vmem:[%s237 + $0xb6] sm:$0xff]
        %v867 = vld [vmem:[%s237 + $0xbe] sm:$0xff]
        %v868 = vld [vmem:[%s237 + $0xc6] sm:$0xff]
        %v869 = vld [vmem:[%s237 + $0xce] sm:$0xff]
        %v870 = vld [vmem:[%s237 + $0xd6] sm:$0xff]
        %v871 = vld [vmem:[%s237 + $0xde] sm:$0xff]
        %v872 = vld [vmem:[%s237 + $0xe6] sm:$0xff]
        %v873 = vld [vmem:[%s237 + $0xee] sm:$0xff]
        %v874 = vld [vmem:[%s237 + $0xf6] sm:$0xff]
        %v875 = vld [vmem:[%s237 + $0xfe] sm:$0xff]
        %v876 = vld [vmem:[%s237 + $0x106] sm:$0xff]
        %v877 = vld [vmem:[%s237 + $0x10e] sm:$0xff]
        %v878 = vld [vmem:[%s237 + $0x116] sm:$0xff]
        %v879 = vld [vmem:[%s237 + $0x11e] sm:$0xff]
        %v880 = vld [vmem:[%s237 + $0x126] sm:$0xff]
        %v881 = vld [vmem:[%s237 + $0x12e] sm:$0xff]
        %v882 = vld [vmem:[%s237 + $0x136] sm:$0xff]
        %v883 = vld [vmem:[%s237 + $0x13e] sm:$0xff]
        %884 = vst [vmem:[#allocation2 + $0x40] sm:$0xff] %v848
        %885 = vst [vmem:[#allocation2 + $0x88] sm:$0xff] %v849
        %886 = vst [vmem:[#allocation2 + $0xd0] sm:$0xff] %v850
        %887 = vst [vmem:[#allocation2 + $0x118] sm:$0xff] %v851
        %888 = vst [vmem:[#allocation2 + $0x160] sm:$0xff] %v852
        %889 = vst [vmem:[#allocation2 + $0x1a8] sm:$0xff] %v853
        %890 = vst [vmem:[#allocation2 + $0x1f0] sm:$0xff] %v854
        %891 = vst [vmem:[#allocation2 + $0x238] sm:$0xff] %v855
        %892 = vst [vmem:[#allocation2 + $0x280] sm:$0xff] %v856
        %893 = vst [vmem:[#allocation2 + $0x2c8] sm:$0xff] %v857
        %894 = vst [vmem:[#allocation2 + $0x310] sm:$0xff] %v858
        %895 = vst [vmem:[#allocation2 + $0x358] sm:$0xff] %v859
        %896 = vst [vmem:[#allocation2 + $0x3a0] sm:$0xff] %v860
        %897 = vst [vmem:[#allocation2 + $0x3e8] sm:$0xff] %v861
        %898 = vst [vmem:[#allocation2 + $0x430] sm:$0xff] %v862
        %899 = vst [vmem:[#allocation2 + $0x478] sm:$0xff] %v863
        %900 = vst [vmem:[#allocation2 + $0x4c0] sm:$0xff] %v864
        %901 = vst [vmem:[#allocation2 + $0x508] sm:$0xff] %v865
        %902 = vst [vmem:[#allocation2 + $0x550] sm:$0xff] %v866
        %903 = vst [vmem:[#allocation2 + $0x598] sm:$0xff] %v867
        %904 = vst [vmem:[#allocation2 + $0x5e0] sm:$0xff] %v868
        %905 = vst [vmem:[#allocation2 + $0x628] sm:$0xff] %v869
        %906 = vst [vmem:[#allocation2 + $0x670] sm:$0xff] %v870
        %907 = vst [vmem:[#allocation2 + $0x6b8] sm:$0xff] %v871
        %908 = vst [vmem:[#allocation2 + $0x700] sm:$0xff] %v872
        %909 = vst [vmem:[#allocation2 + $0x748] sm:$0xff] %v873
        %910 = vst [vmem:[#allocation2 + $0x790] sm:$0xff] %v874
        %911 = vst [vmem:[#allocation2 + $0x7d8] sm:$0xff] %v875
        %912 = vst [vmem:[#allocation2 + $0x820] sm:$0xff] %v876
        %913 = vst [vmem:[#allocation2 + $0x868] sm:$0xff] %v877
        %914 = vst [vmem:[#allocation2 + $0x8b0] sm:$0xff] %v878
        %915 = vst [vmem:[#allocation2 + $0x8f8] sm:$0xff] %v879
        %916 = vst [vmem:[#allocation2 + $0x940] sm:$0xff] %v880
        %917 = vst [vmem:[#allocation2 + $0x988] sm:$0xff] %v881
        %918 = vst [vmem:[#allocation2 + $0x9d0] sm:$0xff] %v882
        %919 = vst [vmem:[#allocation2 + $0xa18] sm:$0xff] %v883
        %v920 = vld [vmem:[#allocation2] sm:$0xff]
        %v921 = vld [vmem:[#allocation2 + $0x8] sm:$0xff]
        %v922 = vld [vmem:[#allocation2 + $0x10] sm:$0xff]
        %v923 = vld [vmem:[#allocation2 + $0x18] sm:$0xff]
        %v924 = vld [vmem:[#allocation2 + $0x20] sm:$0xff]
        %v925 = vld [vmem:[#allocation2 + $0x28] sm:$0xff]
        %v926 = vld [vmem:[#allocation2 + $0x30] sm:$0xff]
        %v927 = vld [vmem:[#allocation2 + $0x38] sm:$0xff]
        %v928 = vld [vmem:[#allocation2 + $0x40] sm:$0xff]
        %v929 = vld [vmem:[#allocation2 + $0x48] sm:$0xff]
        %v930 = vld [vmem:[#allocation2 + $0x50] sm:$0xff]
        %v931 = vld [vmem:[#allocation2 + $0x58] sm:$0xff]
        %v932 = vld [vmem:[#allocation2 + $0x60] sm:$0xff]
        %v933 = vld [vmem:[#allocation2 + $0x68] sm:$0xff]
        %v934 = vld [vmem:[#allocation2 + $0x70] sm:$0xff]
        %v935 = vld [vmem:[#allocation2 + $0x78] sm:$0xff]
        %v936 = vld [vmem:[#allocation2 + $0x80] sm:$0xff]
        %v937 = vld [vmem:[#allocation2 + $0x88] sm:$0xff]
        %v938 = vld [vmem:[#allocation2 + $0x90] sm:$0xff]
        %v939 = vld [vmem:[#allocation2 + $0x98] sm:$0xff]
        %v940 = vld [vmem:[#allocation2 + $0xa0] sm:$0xff]
        %v941 = vld [vmem:[#allocation2 + $0xa8] sm:$0xff]
        %v942 = vld [vmem:[#allocation2 + $0xb0] sm:$0xff]
        %v943 = vld [vmem:[#allocation2 + $0xb8] sm:$0xff]
        %v944 = vld [vmem:[#allocation2 + $0xc0] sm:$0xff]
        %v945 = vld [vmem:[#allocation2 + $0xc8] sm:$0xff]
        %v946 = vld [vmem:[#allocation2 + $0xd0] sm:$0xff]
        %v947 = vld [vmem:[#allocation2 + $0xd8] sm:$0xff]
        %v948 = vld [vmem:[#allocation2 + $0xe0] sm:$0xff]
        %v949 = vld [vmem:[#allocation2 + $0xe8] sm:$0xff]
        %v950 = vld [vmem:[#allocation2 + $0xf0] sm:$0xff]
        %v951 = vld [vmem:[#allocation2 + $0xf8] sm:$0xff]
        %v952 = vld [vmem:[#allocation2 + $0x100] sm:$0xff]
        %v953 = vld [vmem:[#allocation2 + $0x108] sm:$0xff]
        %v954 = vld [vmem:[#allocation2 + $0x110] sm:$0xff]
        %v955 = vld [vmem:[#allocation2 + $0x118] sm:$0xff]
        %v956 = vld [vmem:[#allocation2 + $0x120] sm:$0xff]
        %v957 = vld [vmem:[#allocation2 + $0x128] sm:$0xff]
        %v958 = vld [vmem:[#allocation2 + $0x130] sm:$0xff]
        %v959 = vld [vmem:[#allocation2 + $0x138] sm:$0xff]
        %v960 = vld [vmem:[#allocation2 + $0x140] sm:$0xff]
        %v961 = vld [vmem:[#allocation2 + $0x148] sm:$0xff]
        %v962 = vld [vmem:[#allocation2 + $0x150] sm:$0xff]
        %v963 = vld [vmem:[#allocation2 + $0x158] sm:$0xff]
        %v964 = vld [vmem:[#allocation2 + $0x160] sm:$0xff]
        %v965 = vld [vmem:[#allocation2 + $0x168] sm:$0xff]
        %v966 = vld [vmem:[#allocation2 + $0x170] sm:$0xff]
        %v967 = vld [vmem:[#allocation2 + $0x178] sm:$0xff]
        %v968 = vld [vmem:[#allocation2 + $0x180] sm:$0xff]
        %v969 = vld [vmem:[#allocation2 + $0x188] sm:$0xff]
        %v970 = vld [vmem:[#allocation2 + $0x190] sm:$0xff]
        %v971 = vld [vmem:[#allocation2 + $0x198] sm:$0xff]
        %v972 = vld [vmem:[#allocation2 + $0x1a0] sm:$0xff]
        %v973 = vld [vmem:[#allocation2 + $0x1a8] sm:$0xff]
        %v974 = vld [vmem:[#allocation2 + $0x1b0] sm:$0xff]
        %v975 = vld [vmem:[#allocation2 + $0x1b8] sm:$0xff]
        %v976 = vld [vmem:[#allocation2 + $0x1c0] sm:$0xff]
        %v977 = vld [vmem:[#allocation2 + $0x1c8] sm:$0xff]
        %v978 = vld [vmem:[#allocation2 + $0x1d0] sm:$0xff]
        %v979 = vld [vmem:[#allocation2 + $0x1d8] sm:$0xff]
        %v980 = vld [vmem:[#allocation2 + $0x1e0] sm:$0xff]
        %v981 = vld [vmem:[#allocation2 + $0x1e8] sm:$0xff]
        %v982 = vld [vmem:[#allocation2 + $0x1f0] sm:$0xff]
        %v983 = vld [vmem:[#allocation2 + $0x1f8] sm:$0xff]
        %v984 = vld [vmem:[#allocation2 + $0x200] sm:$0xff]
        %v985 = vld [vmem:[#allocation2 + $0x208] sm:$0xff]
        %v986 = vld [vmem:[#allocation2 + $0x210] sm:$0xff]
        %v987 = vld [vmem:[#allocation2 + $0x218] sm:$0xff]
        %v988 = vld [vmem:[#allocation2 + $0x220] sm:$0xff]
        %v989 = vld [vmem:[#allocation2 + $0x228] sm:$0xff]
        %v990 = vld [vmem:[#allocation2 + $0x230] sm:$0xff]
        %v991 = vld [vmem:[#allocation2 + $0x238] sm:$0xff]
        %v992 = vld [vmem:[#allocation2 + $0x240] sm:$0xff]
        %v993 = vld [vmem:[#allocation2 + $0x248] sm:$0xff]
        %v994 = vld [vmem:[#allocation2 + $0x250] sm:$0xff]
        %v995 = vld [vmem:[#allocation2 + $0x258] sm:$0xff]
        %v996 = vld [vmem:[#allocation2 + $0x260] sm:$0xff]
        %v997 = vld [vmem:[#allocation2 + $0x268] sm:$0xff]
        %v998 = vld [vmem:[#allocation2 + $0x270] sm:$0xff]
        %v999 = vld [vmem:[#allocation2 + $0x278] sm:$0xff]
        %v1000 = vld [vmem:[#allocation2 + $0x280] sm:$0xff]
        %v1001 = vld [vmem:[#allocation2 + $0x288] sm:$0xff]
        %v1002 = vld [vmem:[#allocation2 + $0x290] sm:$0xff]
        %v1003 = vld [vmem:[#allocation2 + $0x298] sm:$0xff]
        %v1004 = vld [vmem:[#allocation2 + $0x2a0] sm:$0xff]
        %v1005 = vld [vmem:[#allocation2 + $0x2a8] sm:$0xff]
        %v1006 = vld [vmem:[#allocation2 + $0x2b0] sm:$0xff]
        %v1007 = vld [vmem:[#allocation2 + $0x2b8] sm:$0xff]
        %v1008 = vld [vmem:[#allocation2 + $0x2c0] sm:$0xff]
        %v1009 = vld [vmem:[#allocation2 + $0x2c8] sm:$0xff]
        %v1010 = vld [vmem:[#allocation2 + $0x2d0] sm:$0xff]
        %v1011 = vld [vmem:[#allocation2 + $0x2d8] sm:$0xff]
        %v1012 = vld [vmem:[#allocation2 + $0x2e0] sm:$0xff]
        %v1013 = vld [vmem:[#allocation2 + $0x2e8] sm:$0xff]
        %v1014 = vld [vmem:[#allocation2 + $0x2f0] sm:$0xff]
        %v1015 = vld [vmem:[#allocation2 + $0x2f8] sm:$0xff]
        %v1016 = vld [vmem:[#allocation2 + $0x300] sm:$0xff]
        %v1017 = vld [vmem:[#allocation2 + $0x308] sm:$0xff]
        %v1018 = vld [vmem:[#allocation2 + $0x310] sm:$0xff]
        %v1019 = vld [vmem:[#allocation2 + $0x318] sm:$0xff]
        %v1020 = vld [vmem:[#allocation2 + $0x320] sm:$0xff]
        %v1021 = vld [vmem:[#allocation2 + $0x328] sm:$0xff]
        %v1022 = vld [vmem:[#allocation2 + $0x330] sm:$0xff]
        %v1023 = vld [vmem:[#allocation2 + $0x338] sm:$0xff]
        %v1024 = vld [vmem:[#allocation2 + $0x340] sm:$0xff]
        %v1025 = vld [vmem:[#allocation2 + $0x348] sm:$0xff]
        %v1026 = vld [vmem:[#allocation2 + $0x350] sm:$0xff]
        %v1027 = vld [vmem:[#allocation2 + $0x358] sm:$0xff]
        %v1028 = vld [vmem:[#allocation2 + $0x360] sm:$0xff]
        %v1029 = vld [vmem:[#allocation2 + $0x368] sm:$0xff]
        %v1030 = vld [vmem:[#allocation2 + $0x370] sm:$0xff]
        %v1031 = vld [vmem:[#allocation2 + $0x378] sm:$0xff]
        %v1032 = vld [vmem:[#allocation2 + $0x380] sm:$0xff]
        %v1033 = vld [vmem:[#allocation2 + $0x388] sm:$0xff]
        %v1034 = vld [vmem:[#allocation2 + $0x390] sm:$0xff]
        %v1035 = vld [vmem:[#allocation2 + $0x398] sm:$0xff]
        %v1036 = vld [vmem:[#allocation2 + $0x3a0] sm:$0xff]
        %v1037 = vld [vmem:[#allocation2 + $0x3a8] sm:$0xff]
        %v1038 = vld [vmem:[#allocation2 + $0x3b0] sm:$0xff]
        %v1039 = vld [vmem:[#allocation2 + $0x3b8] sm:$0xff]
        %v1040 = vld [vmem:[#allocation2 + $0x3c0] sm:$0xff]
        %v1041 = vld [vmem:[#allocation2 + $0x3c8] sm:$0xff]
        %v1042 = vld [vmem:[#allocation2 + $0x3d0] sm:$0xff]
        %v1043 = vld [vmem:[#allocation2 + $0x3d8] sm:$0xff]
        %v1044 = vld [vmem:[#allocation2 + $0x3e0] sm:$0xff]
        %v1045 = vld [vmem:[#allocation2 + $0x3e8] sm:$0xff]
        %v1046 = vld [vmem:[#allocation2 + $0x3f0] sm:$0xff]
        %v1047 = vld [vmem:[#allocation2 + $0x3f8] sm:$0xff]
        %v1048 = vld [vmem:[#allocation2 + $0x400] sm:$0xff]
        %v1049 = vld [vmem:[#allocation2 + $0x408] sm:$0xff]
        %v1050 = vld [vmem:[#allocation2 + $0x410] sm:$0xff]
        %v1051 = vld [vmem:[#allocation2 + $0x418] sm:$0xff]
        %v1052 = vld [vmem:[#allocation2 + $0x420] sm:$0xff]
        %v1053 = vld [vmem:[#allocation2 + $0x428] sm:$0xff]
        %v1054 = vld [vmem:[#allocation2 + $0x430] sm:$0xff]
        %v1055 = vld [vmem:[#allocation2 + $0x438] sm:$0xff]
        %v1056 = vld [vmem:[#allocation2 + $0x440] sm:$0xff]
        %v1057 = vld [vmem:[#allocation2 + $0x448] sm:$0xff]
        %v1058 = vld [vmem:[#allocation2 + $0x450] sm:$0xff]
        %v1059 = vld [vmem:[#allocation2 + $0x458] sm:$0xff]
        %v1060 = vld [vmem:[#allocation2 + $0x460] sm:$0xff]
        %v1061 = vld [vmem:[#allocation2 + $0x468] sm:$0xff]
        %v1062 = vld [vmem:[#allocation2 + $0x470] sm:$0xff]
        %v1063 = vld [vmem:[#allocation2 + $0x478] sm:$0xff]
        %v1064 = vld [vmem:[#allocation2 + $0x480] sm:$0xff]
        %v1065 = vld [vmem:[#allocation2 + $0x488] sm:$0xff]
        %v1066 = vld [vmem:[#allocation2 + $0x490] sm:$0xff]
        %v1067 = vld [vmem:[#allocation2 + $0x498] sm:$0xff]
        %v1068 = vld [vmem:[#allocation2 + $0x4a0] sm:$0xff]
        %v1069 = vld [vmem:[#allocation2 + $0x4a8] sm:$0xff]
        %v1070 = vld [vmem:[#allocation2 + $0x4b0] sm:$0xff]
        %v1071 = vld [vmem:[#allocation2 + $0x4b8] sm:$0xff]
        %v1072 = vld [vmem:[#allocation2 + $0x4c0] sm:$0xff]
        %v1073 = vld [vmem:[#allocation2 + $0x4c8] sm:$0xff]
        %v1074 = vld [vmem:[#allocation2 + $0x4d0] sm:$0xff]
        %v1075 = vld [vmem:[#allocation2 + $0x4d8] sm:$0xff]
        %v1076 = vld [vmem:[#allocation2 + $0x4e0] sm:$0xff]
        %v1077 = vld [vmem:[#allocation2 + $0x4e8] sm:$0xff]
        %v1078 = vld [vmem:[#allocation2 + $0x4f0] sm:$0xff]
        %v1079 = vld [vmem:[#allocation2 + $0x4f8] sm:$0xff]
        %v1080 = vld [vmem:[#allocation2 + $0x500] sm:$0xff]
        %v1081 = vld [vmem:[#allocation2 + $0x508] sm:$0xff]
        %v1082 = vld [vmem:[#allocation2 + $0x510] sm:$0xff]
        %v1083 = vld [vmem:[#allocation2 + $0x518] sm:$0xff]
        %v1084 = vld [vmem:[#allocation2 + $0x520] sm:$0xff]
        %v1085 = vld [vmem:[#allocation2 + $0x528] sm:$0xff]
        %v1086 = vld [vmem:[#allocation2 + $0x530] sm:$0xff]
        %v1087 = vld [vmem:[#allocation2 + $0x538] sm:$0xff]
        %v1088 = vld [vmem:[#allocation2 + $0x540] sm:$0xff]
        %v1089 = vld [vmem:[#allocation2 + $0x548] sm:$0xff]
        %v1090 = vld [vmem:[#allocation2 + $0x550] sm:$0xff]
        %v1091 = vld [vmem:[#allocation2 + $0x558] sm:$0xff]
        %v1092 = vld [vmem:[#allocation2 + $0x560] sm:$0xff]
        %v1093 = vld [vmem:[#allocation2 + $0x568] sm:$0xff]
        %v1094 = vld [vmem:[#allocation2 + $0x570] sm:$0xff]
        %v1095 = vld [vmem:[#allocation2 + $0x578] sm:$0xff]
        %v1096 = vld [vmem:[#allocation2 + $0x580] sm:$0xff]
        %v1097 = vld [vmem:[#allocation2 + $0x588] sm:$0xff]
        %v1098 = vld [vmem:[#allocation2 + $0x590] sm:$0xff]
        %v1099 = vld [vmem:[#allocation2 + $0x598] sm:$0xff]
        %v1100 = vld [vmem:[#allocation2 + $0x5a0] sm:$0xff]
        %v1101 = vld [vmem:[#allocation2 + $0x5a8] sm:$0xff]
        %v1102 = vld [vmem:[#allocation2 + $0x5b0] sm:$0xff]
        %v1103 = vld [vmem:[#allocation2 + $0x5b8] sm:$0xff]
        %v1104 = vld [vmem:[#allocation2 + $0x5c0] sm:$0xff]
        %v1105 = vld [vmem:[#allocation2 + $0x5c8] sm:$0xff]
        %v1106 = vld [vmem:[#allocation2 + $0x5d0] sm:$0xff]
        %v1107 = vld [vmem:[#allocation2 + $0x5d8] sm:$0xff]
        %v1108 = vld [vmem:[#allocation2 + $0x5e0] sm:$0xff]
        %v1109 = vld [vmem:[#allocation2 + $0x5e8] sm:$0xff]
        %v1110 = vld [vmem:[#allocation2 + $0x5f0] sm:$0xff]
        %v1111 = vld [vmem:[#allocation2 + $0x5f8] sm:$0xff]
        %v1112 = vld [vmem:[#allocation2 + $0x600] sm:$0xff]
        %v1113 = vld [vmem:[#allocation2 + $0x608] sm:$0xff]
        %v1114 = vld [vmem:[#allocation2 + $0x610] sm:$0xff]
        %v1115 = vld [vmem:[#allocation2 + $0x618] sm:$0xff]
        %v1116 = vld [vmem:[#allocation2 + $0x620] sm:$0xff]
        %v1117 = vld [vmem:[#allocation2 + $0x628] sm:$0xff]
        %v1118 = vld [vmem:[#allocation2 + $0x630] sm:$0xff]
        %v1119 = vld [vmem:[#allocation2 + $0x638] sm:$0xff]
        %v1120 = vld [vmem:[#allocation2 + $0x640] sm:$0xff]
        %v1121 = vld [vmem:[#allocation2 + $0x648] sm:$0xff]
        %v1122 = vld [vmem:[#allocation2 + $0x650] sm:$0xff]
        %v1123 = vld [vmem:[#allocation2 + $0x658] sm:$0xff]
        %v1124 = vld [vmem:[#allocation2 + $0x660] sm:$0xff]
        %v1125 = vld [vmem:[#allocation2 + $0x668] sm:$0xff]
        %v1126 = vld [vmem:[#allocation2 + $0x670] sm:$0xff]
        %v1127 = vld [vmem:[#allocation2 + $0x678] sm:$0xff]
        %v1128 = vld [vmem:[#allocation2 + $0x680] sm:$0xff]
        %v1129 = vld [vmem:[#allocation2 + $0x688] sm:$0xff]
        %v1130 = vld [vmem:[#allocation2 + $0x690] sm:$0xff]
        %v1131 = vld [vmem:[#allocation2 + $0x698] sm:$0xff]
        %v1132 = vld [vmem:[#allocation2 + $0x6a0] sm:$0xff]
        %v1133 = vld [vmem:[#allocation2 + $0x6a8] sm:$0xff]
        %v1134 = vld [vmem:[#allocation2 + $0x6b0] sm:$0xff]
        %v1135 = vld [vmem:[#allocation2 + $0x6b8] sm:$0xff]
        %v1136 = vld [vmem:[#allocation2 + $0x6c0] sm:$0xff]
        %v1137 = vld [vmem:[#allocation2 + $0x6c8] sm:$0xff]
        %v1138 = vld [vmem:[#allocation2 + $0x6d0] sm:$0xff]
        %v1139 = vld [vmem:[#allocation2 + $0x6d8] sm:$0xff]
        %v1140 = vld [vmem:[#allocation2 + $0x6e0] sm:$0xff]
        %v1141 = vld [vmem:[#allocation2 + $0x6e8] sm:$0xff]
        %v1142 = vld [vmem:[#allocation2 + $0x6f0] sm:$0xff]
        %v1143 = vld [vmem:[#allocation2 + $0x6f8] sm:$0xff]
        %v1144 = vld [vmem:[#allocation2 + $0x700] sm:$0xff]
        %v1145 = vld [vmem:[#allocation2 + $0x708] sm:$0xff]
        %v1146 = vld [vmem:[#allocation2 + $0x710] sm:$0xff]
        %v1147 = vld [vmem:[#allocation2 + $0x718] sm:$0xff]
        %v1148 = vld [vmem:[#allocation2 + $0x720] sm:$0xff]
        %v1149 = vld [vmem:[#allocation2 + $0x728] sm:$0xff]
        %v1150 = vld [vmem:[#allocation2 + $0x730] sm:$0xff]
        %v1151 = vld [vmem:[#allocation2 + $0x738] sm:$0xff]
        %v1152 = vld [vmem:[#allocation2 + $0x740] sm:$0xff]
        %v1153 = vld [vmem:[#allocation2 + $0x748] sm:$0xff]
        %v1154 = vld [vmem:[#allocation2 + $0x750] sm:$0xff]
        %v1155 = vld [vmem:[#allocation2 + $0x758] sm:$0xff]
        %v1156 = vld [vmem:[#allocation2 + $0x760] sm:$0xff]
        %v1157 = vld [vmem:[#allocation2 + $0x768] sm:$0xff]
        %v1158 = vld [vmem:[#allocation2 + $0x770] sm:$0xff]
        %v1159 = vld [vmem:[#allocation2 + $0x778] sm:$0xff]
        %v1160 = vld [vmem:[#allocation2 + $0x780] sm:$0xff]
        %v1161 = vld [vmem:[#allocation2 + $0x788] sm:$0xff]
        %v1162 = vld [vmem:[#allocation2 + $0x790] sm:$0xff]
        %v1163 = vld [vmem:[#allocation2 + $0x798] sm:$0xff]
        %v1164 = vld [vmem:[#allocation2 + $0x7a0] sm:$0xff]
        %v1165 = vld [vmem:[#allocation2 + $0x7a8] sm:$0xff]
        %v1166 = vld [vmem:[#allocation2 + $0x7b0] sm:$0xff]
        %v1167 = vld [vmem:[#allocation2 + $0x7b8] sm:$0xff]
        %v1168 = vld [vmem:[#allocation2 + $0x7c0] sm:$0xff]
        %v1169 = vld [vmem:[#allocation2 + $0x7c8] sm:$0xff]
        %v1170 = vld [vmem:[#allocation2 + $0x7d0] sm:$0xff]
        %v1171 = vld [vmem:[#allocation2 + $0x7d8] sm:$0xff]
        %v1172 = vld [vmem:[#allocation2 + $0x7e0] sm:$0xff]
        %v1173 = vld [vmem:[#allocation2 + $0x7e8] sm:$0xff]
        %v1174 = vld [vmem:[#allocation2 + $0x7f0] sm:$0xff]
        %v1175 = vld [vmem:[#allocation2 + $0x7f8] sm:$0xff]
        %v1176 = vld [vmem:[#allocation2 + $0x800] sm:$0xff]
        %v1177 = vld [vmem:[#allocation2 + $0x808] sm:$0xff]
        %v1178 = vld [vmem:[#allocation2 + $0x810] sm:$0xff]
        %v1179 = vld [vmem:[#allocation2 + $0x818] sm:$0xff]
        %v1180 = vld [vmem:[#allocation2 + $0x820] sm:$0xff]
        %v1181 = vld [vmem:[#allocation2 + $0x828] sm:$0xff]
        %v1182 = vld [vmem:[#allocation2 + $0x830] sm:$0xff]
        %v1183 = vld [vmem:[#allocation2 + $0x838] sm:$0xff]
        %v1184 = vld [vmem:[#allocation2 + $0x840] sm:$0xff]
        %v1185 = vld [vmem:[#allocation2 + $0x848] sm:$0xff]
        %v1186 = vld [vmem:[#allocation2 + $0x850] sm:$0xff]
        %v1187 = vld [vmem:[#allocation2 + $0x858] sm:$0xff]
        %v1188 = vld [vmem:[#allocation2 + $0x860] sm:$0xff]
        %v1189 = vld [vmem:[#allocation2 + $0x868] sm:$0xff]
        %v1190 = vld [vmem:[#allocation2 + $0x870] sm:$0xff]
        %v1191 = vld [vmem:[#allocation2 + $0x878] sm:$0xff]
        %v1192 = vld [vmem:[#allocation2 + $0x880] sm:$0xff]
        %v1193 = vld [vmem:[#allocation2 + $0x888] sm:$0xff]
        %v1194 = vld [vmem:[#allocation2 + $0x890] sm:$0xff]
        %v1195 = vld [vmem:[#allocation2 + $0x898] sm:$0xff]
        %v1196 = vld [vmem:[#allocation2 + $0x8a0] sm:$0xff]
        %v1197 = vld [vmem:[#allocation2 + $0x8a8] sm:$0xff]
        %v1198 = vld [vmem:[#allocation2 + $0x8b0] sm:$0xff]
        %v1199 = vld [vmem:[#allocation2 + $0x8b8] sm:$0xff]
        %v1200 = vld [vmem:[#allocation2 + $0x8c0] sm:$0xff]
        %v1201 = vld [vmem:[#allocation2 + $0x8c8] sm:$0xff]
        %v1202 = vld [vmem:[#allocation2 + $0x8d0] sm:$0xff]
        %v1203 = vld [vmem:[#allocation2 + $0x8d8] sm:$0xff]
        %v1204 = vld [vmem:[#allocation2 + $0x8e0] sm:$0xff]
        %v1205 = vld [vmem:[#allocation2 + $0x8e8] sm:$0xff]
        %v1206 = vld [vmem:[#allocation2 + $0x8f0] sm:$0xff]
        %v1207 = vld [vmem:[#allocation2 + $0x8f8] sm:$0xff]
        %v1208 = vld [vmem:[#allocation2 + $0x900] sm:$0xff]
        %v1209 = vld [vmem:[#allocation2 + $0x908] sm:$0xff]
        %v1210 = vld [vmem:[#allocation2 + $0x910] sm:$0xff]
        %v1211 = vld [vmem:[#allocation2 + $0x918] sm:$0xff]
        %v1212 = vld [vmem:[#allocation2 + $0x920] sm:$0xff]
        %v1213 = vld [vmem:[#allocation2 + $0x928] sm:$0xff]
        %v1214 = vld [vmem:[#allocation2 + $0x930] sm:$0xff]
        %v1215 = vld [vmem:[#allocation2 + $0x938] sm:$0xff]
        %v1216 = vld [vmem:[#allocation2 + $0x940] sm:$0xff]
        %v1217 = vld [vmem:[#allocation2 + $0x948] sm:$0xff]
        %v1218 = vld [vmem:[#allocation2 + $0x950] sm:$0xff]
        %v1219 = vld [vmem:[#allocation2 + $0x958] sm:$0xff]
        %v1220 = vld [vmem:[#allocation2 + $0x960] sm:$0xff]
        %v1221 = vld [vmem:[#allocation2 + $0x968] sm:$0xff]
        %v1222 = vld [vmem:[#allocation2 + $0x970] sm:$0xff]
        %v1223 = vld [vmem:[#allocation2 + $0x978] sm:$0xff]
        %v1224 = vld [vmem:[#allocation2 + $0x980] sm:$0xff]
        %v1225 = vld [vmem:[#allocation2 + $0x988] sm:$0xff]
        %v1226 = vld [vmem:[#allocation2 + $0x990] sm:$0xff]
        %v1227 = vld [vmem:[#allocation2 + $0x998] sm:$0xff]
        %v1228 = vld [vmem:[#allocation2 + $0x9a0] sm:$0xff]
        %v1229 = vld [vmem:[#allocation2 + $0x9a8] sm:$0xff]
        %v1230 = vld [vmem:[#allocation2 + $0x9b0] sm:$0xff]
        %v1231 = vld [vmem:[#allocation2 + $0x9b8] sm:$0xff]
        %v1232 = vld [vmem:[#allocation2 + $0x9c0] sm:$0xff]
        %v1233 = vld [vmem:[#allocation2 + $0x9c8] sm:$0xff]
        %v1234 = vld [vmem:[#allocation2 + $0x9d0] sm:$0xff]
        %v1235 = vld [vmem:[#allocation2 + $0x9d8] sm:$0xff]
        %v1236 = vld [vmem:[#allocation2 + $0x9e0] sm:$0xff]
        %v1237 = vld [vmem:[#allocation2 + $0x9e8] sm:$0xff]
        %v1238 = vld [vmem:[#allocation2 + $0x9f0] sm:$0xff]
        %v1239 = vld [vmem:[#allocation2 + $0x9f8] sm:$0xff]
        %v1240 = vld [vmem:[#allocation2 + $0xa00] sm:$0xff]
        %v1241 = vld [vmem:[#allocation2 + $0xa08] sm:$0xff]
        %v1242 = vld [vmem:[#allocation2 + $0xa10] sm:$0xff]
        %v1243 = vld [vmem:[#allocation2 + $0xa18] sm:$0xff]
        %v1244 = vld [vmem:[#allocation7] sm:$0xff]
        %v1245 = vld [vmem:[#allocation7 + $0x8] sm:$0xff]
        %v1246 = vld [vmem:[#allocation7 + $0x10] sm:$0xff]
        %v1247 = vld [vmem:[#allocation7 + $0x18] sm:$0xff]
        %v1248 = vld [vmem:[#allocation7 + $0x20] sm:$0xff]
        %v1249 = vld [vmem:[#allocation7 + $0x28] sm:$0xff]
        %v1250 = vld [vmem:[#allocation7 + $0x30] sm:$0xff]
        %v1251 = vld [vmem:[#allocation7 + $0x38] sm:$0xff]
        %v1252 = vld [vmem:[#allocation7 + $0x40] sm:$0xff]
        %v1253 = vld [vmem:[#allocation7 + $0x48] sm:$0xff]
        %v1254 = vld [vmem:[#allocation7 + $0x50] sm:$0xff]
        %v1255 = vld [vmem:[#allocation7 + $0x58] sm:$0xff]
        %v1256 = vld [vmem:[#allocation7 + $0x60] sm:$0xff]
        %v1257 = vld [vmem:[#allocation7 + $0x68] sm:$0xff]
        %v1258 = vld [vmem:[#allocation7 + $0x70] sm:$0xff]
        %v1259 = vld [vmem:[#allocation7 + $0x78] sm:$0xff]
        %v1260 = vld [vmem:[#allocation7 + $0x80] sm:$0xff]
        %v1261 = vld [vmem:[#allocation7 + $0x88] sm:$0xff]
        %v1262 = vld [vmem:[#allocation7 + $0x90] sm:$0xff]
        %v1263 = vld [vmem:[#allocation7 + $0x98] sm:$0xff]
        %v1264 = vld [vmem:[#allocation7 + $0xa0] sm:$0xff]
        %v1265 = vld [vmem:[#allocation7 + $0xa8] sm:$0xff]
        %v1266 = vld [vmem:[#allocation7 + $0xb0] sm:$0xff]
        %v1267 = vld [vmem:[#allocation7 + $0xb8] sm:$0xff]
        %v1268 = vld [vmem:[#allocation7 + $0xc0] sm:$0xff]
        %v1269 = vld [vmem:[#allocation7 + $0xc8] sm:$0xff]
        %v1270 = vld [vmem:[#allocation7 + $0xd0] sm:$0xff]
        %v1271 = vld [vmem:[#allocation7 + $0xd8] sm:$0xff]
        %v1272 = vld [vmem:[#allocation7 + $0xe0] sm:$0xff]
        %v1273 = vld [vmem:[#allocation7 + $0xe8] sm:$0xff]
        %v1274 = vld [vmem:[#allocation7 + $0xf0] sm:$0xff]
        %v1275 = vld [vmem:[#allocation7 + $0xf8] sm:$0xff]
        %v1276 = vld [vmem:[#allocation7 + $0x100] sm:$0xff]
        %v1277 = vld [vmem:[#allocation7 + $0x108] sm:$0xff]
        %v1278 = vld [vmem:[#allocation7 + $0x110] sm:$0xff]
        %v1279 = vld [vmem:[#allocation7 + $0x118] sm:$0xff]
        %v1280 = vld [vmem:[#allocation7 + $0x120] sm:$0xff]
        %v1281 = vld [vmem:[#allocation7 + $0x128] sm:$0xff]
        %v1282 = vld [vmem:[#allocation7 + $0x130] sm:$0xff]
        %v1283 = vld [vmem:[#allocation7 + $0x138] sm:$0xff]
        %v1284 = vld [vmem:[#allocation7 + $0x140] sm:$0xff]
        %v1285 = vld [vmem:[#allocation7 + $0x148] sm:$0xff]
        %v1286 = vld [vmem:[#allocation7 + $0x150] sm:$0xff]
        %v1287 = vld [vmem:[#allocation7 + $0x158] sm:$0xff]
        %v1288 = vld [vmem:[#allocation7 + $0x160] sm:$0xff]
        %v1289 = vld [vmem:[#allocation7 + $0x168] sm:$0xff]
        %v1290 = vld [vmem:[#allocation7 + $0x170] sm:$0xff]
        %v1291 = vld [vmem:[#allocation7 + $0x178] sm:$0xff]
        %v1292 = vld [vmem:[#allocation7 + $0x180] sm:$0xff]
        %v1293 = vld [vmem:[#allocation7 + $0x188] sm:$0xff]
        %v1294 = vld [vmem:[#allocation7 + $0x190] sm:$0xff]
        %v1295 = vld [vmem:[#allocation7 + $0x198] sm:$0xff]
        %v1296 = vld [vmem:[#allocation7 + $0x1a0] sm:$0xff]
        %v1297 = vld [vmem:[#allocation7 + $0x1a8] sm:$0xff]
        %v1298 = vld [vmem:[#allocation7 + $0x1b0] sm:$0xff]
        %v1299 = vld [vmem:[#allocation7 + $0x1b8] sm:$0xff]
        %v1300 = vld [vmem:[#allocation7 + $0x1c0] sm:$0xff]
        %v1301 = vld [vmem:[#allocation7 + $0x1c8] sm:$0xff]
        %v1302 = vld [vmem:[#allocation7 + $0x1d0] sm:$0xff]
        %v1303 = vld [vmem:[#allocation7 + $0x1d8] sm:$0xff]
        %v1304 = vld [vmem:[#allocation7 + $0x1e0] sm:$0xff]
        %v1305 = vld [vmem:[#allocation7 + $0x1e8] sm:$0xff]
        %v1306 = vld [vmem:[#allocation7 + $0x1f0] sm:$0xff]
        %v1307 = vld [vmem:[#allocation7 + $0x1f8] sm:$0xff]
        %v1308 = vld [vmem:[#allocation7 + $0x200] sm:$0xff]
        %v1309 = vld [vmem:[#allocation7 + $0x208] sm:$0xff]
        %v1310 = vld [vmem:[#allocation7 + $0x210] sm:$0xff]
        %v1311 = vld [vmem:[#allocation7 + $0x218] sm:$0xff]
        %v1312 = vld [vmem:[#allocation7 + $0x220] sm:$0xff]
        %v1313 = vld [vmem:[#allocation7 + $0x228] sm:$0xff]
        %v1314 = vld [vmem:[#allocation7 + $0x230] sm:$0xff]
        %v1315 = vld [vmem:[#allocation7 + $0x238] sm:$0xff]
        %v1316 = vld [vmem:[#allocation7 + $0x240] sm:$0xff]
        %v1317 = vld [vmem:[#allocation7 + $0x248] sm:$0xff]
        %v1318 = vld [vmem:[#allocation7 + $0x250] sm:$0xff]
        %v1319 = vld [vmem:[#allocation7 + $0x258] sm:$0xff]
        %v1320 = vld [vmem:[#allocation7 + $0x260] sm:$0xff]
        %v1321 = vld [vmem:[#allocation7 + $0x268] sm:$0xff]
        %v1322 = vld [vmem:[#allocation7 + $0x270] sm:$0xff]
        %v1323 = vld [vmem:[#allocation7 + $0x278] sm:$0xff]
        %v1324 = vld [vmem:[#allocation7 + $0x280] sm:$0xff]
        %v1325 = vld [vmem:[#allocation7 + $0x288] sm:$0xff]
        %v1326 = vld [vmem:[#allocation7 + $0x290] sm:$0xff]
        %v1327 = vld [vmem:[#allocation7 + $0x298] sm:$0xff]
        %v1328 = vld [vmem:[#allocation7 + $0x2a0] sm:$0xff]
        %v1329 = vld [vmem:[#allocation7 + $0x2a8] sm:$0xff]
        %v1330 = vld [vmem:[#allocation7 + $0x2b0] sm:$0xff]
        %v1331 = vld [vmem:[#allocation7 + $0x2b8] sm:$0xff]
        %v1332 = vld [vmem:[#allocation7 + $0x2c0] sm:$0xff]
        %v1333 = vld [vmem:[#allocation7 + $0x2c8] sm:$0xff]
        %v1334 = vld [vmem:[#allocation7 + $0x2d0] sm:$0xff]
        %v1335 = vld [vmem:[#allocation7 + $0x2d8] sm:$0xff]
        %v1336 = vld [vmem:[#allocation7 + $0x2e0] sm:$0xff]
        %v1337 = vld [vmem:[#allocation7 + $0x2e8] sm:$0xff]
        %v1338 = vld [vmem:[#allocation7 + $0x2f0] sm:$0xff]
        %v1339 = vld [vmem:[#allocation7 + $0x2f8] sm:$0xff]
        %v1340 = vld [vmem:[#allocation7 + $0x300] sm:$0xff]
        %v1341 = vld [vmem:[#allocation7 + $0x308] sm:$0xff]
        %v1342 = vld [vmem:[#allocation7 + $0x310] sm:$0xff]
        %v1343 = vld [vmem:[#allocation7 + $0x318] sm:$0xff]
        %v1344 = vld [vmem:[#allocation7 + $0x320] sm:$0xff]
        %v1345 = vld [vmem:[#allocation7 + $0x328] sm:$0xff]
        %v1346 = vld [vmem:[#allocation7 + $0x330] sm:$0xff]
        %v1347 = vld [vmem:[#allocation7 + $0x338] sm:$0xff]
        %v1348 = vld [vmem:[#allocation7 + $0x340] sm:$0xff]
        %v1349 = vld [vmem:[#allocation7 + $0x348] sm:$0xff]
        %v1350 = vld [vmem:[#allocation7 + $0x350] sm:$0xff]
        %v1351 = vld [vmem:[#allocation7 + $0x358] sm:$0xff]
        %v1352 = vld [vmem:[#allocation7 + $0x360] sm:$0xff]
        %v1353 = vld [vmem:[#allocation7 + $0x368] sm:$0xff]
        %v1354 = vld [vmem:[#allocation7 + $0x370] sm:$0xff]
        %v1355 = vld [vmem:[#allocation7 + $0x378] sm:$0xff]
        %v1356 = vld [vmem:[#allocation7 + $0x380] sm:$0xff]
        %v1357 = vld [vmem:[#allocation7 + $0x388] sm:$0xff]
        %v1358 = vld [vmem:[#allocation7 + $0x390] sm:$0xff]
        %v1359 = vld [vmem:[#allocation7 + $0x398] sm:$0xff]
        %v1360 = vld [vmem:[#allocation7 + $0x3a0] sm:$0xff]
        %v1361 = vld [vmem:[#allocation7 + $0x3a8] sm:$0xff]
        %v1362 = vld [vmem:[#allocation7 + $0x3b0] sm:$0xff]
        %v1363 = vld [vmem:[#allocation7 + $0x3b8] sm:$0xff]
        %v1364 = vld [vmem:[#allocation7 + $0x3c0] sm:$0xff]
        %v1365 = vld [vmem:[#allocation7 + $0x3c8] sm:$0xff]
        %v1366 = vld [vmem:[#allocation7 + $0x3d0] sm:$0xff]
        %v1367 = vld [vmem:[#allocation7 + $0x3d8] sm:$0xff]
        %v1368 = vld [vmem:[#allocation7 + $0x3e0] sm:$0xff]
        %v1369 = vld [vmem:[#allocation7 + $0x3e8] sm:$0xff]
        %v1370 = vld [vmem:[#allocation7 + $0x3f0] sm:$0xff]
        %v1371 = vld [vmem:[#allocation7 + $0x3f8] sm:$0xff]
        %v1372 = vld [vmem:[#allocation7 + $0x400] sm:$0xff]
        %v1373 = vld [vmem:[#allocation7 + $0x408] sm:$0xff]
        %v1374 = vld [vmem:[#allocation7 + $0x410] sm:$0xff]
        %v1375 = vld [vmem:[#allocation7 + $0x418] sm:$0xff]
        %v1376 = vld [vmem:[#allocation7 + $0x420] sm:$0xff]
        %v1377 = vld [vmem:[#allocation7 + $0x428] sm:$0xff]
        %v1378 = vld [vmem:[#allocation7 + $0x430] sm:$0xff]
        %v1379 = vld [vmem:[#allocation7 + $0x438] sm:$0xff]
        %v1380 = vld [vmem:[#allocation7 + $0x440] sm:$0xff]
        %v1381 = vld [vmem:[#allocation7 + $0x448] sm:$0xff]
        %v1382 = vld [vmem:[#allocation7 + $0x450] sm:$0xff]
        %v1383 = vld [vmem:[#allocation7 + $0x458] sm:$0xff]
        %v1384 = vld [vmem:[#allocation7 + $0x460] sm:$0xff]
        %v1385 = vld [vmem:[#allocation7 + $0x468] sm:$0xff]
        %v1386 = vld [vmem:[#allocation7 + $0x470] sm:$0xff]
        %v1387 = vld [vmem:[#allocation7 + $0x478] sm:$0xff]
        %v1388 = vld [vmem:[%s2] sm:$0x1]
        %v1390 = vlaneseq
        %v1391 = vshrl.u32 %v1390, 7
        %v1392 = vsub.s32 0, %v1391
        %v1393 = vrot.slane %v1388, %v1392
        %1395 = vmatprep.subr.mxu0 0.0
        %1396 = vmatpush1.msra.mxu0 %v1244
        %1397 = vmatprep.subr.mxu0 0.0
        %1398 = vmatpush1.msra.mxu0 %v1245
        %1399 = vmatprep.subr.mxu0 0.0
        %1400 = vmatpush1.msra.mxu0 %v1246
        %1401 = vmatprep.subr.mxu0 0.0
        %1402 = vmatpush1.msra.mxu0 %v1247
        %1403 = vmatprep.subr.mxu0 0.0
        %1404 = vmatpush1.msra.mxu0 %v1248
        %1405 = vmatprep.subr.mxu0 0.0
        %1406 = vmatpush1.msra.mxu0 %v1249
        %1407 = vmatprep.subr.mxu0 0.0
        %1408 = vmatpush1.msra.mxu0 %v1250
        %1409 = vmatprep.subr.mxu0 0.0
        %1410 = vmatpush1.msra.mxu0 %v1251
        %1411 = vmatprep.subr.mxu0 0.0
        %1412 = vmatpush1.msra.mxu0 %v1252
        %1413 = vmatprep.subr.mxu0 0.0
        %1414 = vmatpush1.msra.mxu0 %v1253
        %1415 = vmatprep.subr.mxu0 0.0
        %1416 = vmatpush1.msra.mxu0 %v1254
        %1417 = vmatprep.subr.mxu0 0.0
        %1418 = vmatpush1.msra.mxu0 %v1255
        %1419 = vmatprep.subr.mxu0 0.0
        %1420 = vmatpush1.msra.mxu0 %v1256
        %1421 = vmatprep.subr.mxu0 0.0
        %1422 = vmatpush1.msra.mxu0 %v1257
        %1423 = vmatprep.subr.mxu0 0.0
        %1424 = vmatpush1.msra.mxu0 %v1258
        %1425 = vmatprep.subr.mxu0 0.0
        %1426 = vmatpush1.msra.mxu0 %v1259
        %1427 = vmatprep.subr.mxu0 0.0
        %1428 = vmatpush1.msra.mxu0 %v1260
        %1429 = vmatprep.subr.mxu0 0.0
        %1430 = vmatpush1.msra.mxu0 %v1261
        %1431 = vmatprep.subr.mxu0 0.0
        %1432 = vmatpush1.msra.mxu0 %v1262
        %1433 = vmatprep.subr.mxu0 0.0
        %1434 = vmatpush1.msra.mxu0 %v1263
        %1435 = vmatprep.subr.mxu0 0.0
        %1436 = vmatpush1.msra.mxu0 %v1264
        %1437 = vmatprep.subr.mxu0 0.0
        %1438 = vmatpush1.msra.mxu0 %v1265
        %1439 = vmatprep.subr.mxu0 0.0
        %1440 = vmatpush1.msra.mxu0 %v1266
        %1441 = vmatprep.subr.mxu0 0.0
        %1442 = vmatpush1.msra.mxu0 %v1267
        %1443 = vmatprep.subr.mxu0 0.0
        %1444 = vmatpush1.msra.mxu0 %v1268
        %1445 = vmatprep.subr.mxu0 0.0
        %1446 = vmatpush1.msra.mxu0 %v1269
        %1447 = vmatprep.subr.mxu0 0.0
        %1448 = vmatpush1.msra.mxu0 %v1270
        %1449 = vmatprep.subr.mxu0 0.0
        %1450 = vmatpush1.msra.mxu0 %v1271
        %1451 = vmatprep.subr.mxu0 0.0
        %1452 = vmatpush1.msra.mxu0 %v1272
        %1453 = vmatprep.subr.mxu0 0.0
        %1454 = vmatpush1.msra.mxu0 %v1273
        %1455 = vmatprep.subr.mxu0 0.0
        %1456 = vmatpush1.msra.mxu0 %v1274
        %1457 = vmatprep.subr.mxu0 0.0
        %1458 = vmatpush1.msra.mxu0 %v1275
        %1459 = vmatprep.mubr.f32.mxu0 %v921
        %1460 = vmatmul.mubr.f32.gmra.mrb[0].mxu0 %v920
        %v1461 = vpop.f32.mrb[0].mxu0
        %v1462 = vadd.f32 %v1393, %v1461
        %v1463 = vpop.f32.mrb[0].mxu0
        %1464 = vmatprep.mubr.f32.mxu0 %v930
        %1465 = vmatmul.mubr.f32.gmra.mrb[0].mxu0 %v929
        %v1466 = vpop.f32.mrb[0].mxu0
        %v1467 = vadd.f32 %v1393, %v1466
        %v1468 = vpop.f32.mrb[0].mxu0
        %1469 = vmatprep.mubr.f32.mxu0 %v939
        %1470 = vmatmul.mubr.f32.gmra.mrb[0].mxu0 %v938
        %v1471 = vpop.f32.mrb[0].mxu0
        %v1472 = vadd.f32 %v1393, %v1471
        %v1473 = vpop.f32.mrb[0].mxu0
        %1474 = vmatprep.mubr.f32.mxu0 %v948
        %1475 = vmatmul.mubr.f32.gmra.mrb[0].mxu0 %v947
        %v1476 = vpop.f32.mrb[0].mxu0
        %v1477 = vadd.f32 %v1393, %v1476
        %v1478 = vpop.f32.mrb[0].mxu0
        %1479 = vmatprep.mubr.f32.mxu0 %v957
        %1480 = vmatmul.mubr.f32.gmra.mrb[0].mxu0 %v956
        %v1481 = vpop.f32.mrb[0].mxu0
        %v1482 = vadd.f32 %v1393, %v1481
        %v1483 = vpop.f32.mrb[0].mxu0
        %1484 = vmatprep.mubr.f32.mxu0 %v966
        %1485 = vmatmul.mubr.f32.gmra.mrb[0].mxu0 %v965
        %v1486 = vpop.f32.mrb[0].mxu0
        %v1487 = vadd.f32 %v1393, %v1486
        %v1488 = vpop.f32.mrb[0].mxu0
        %1489 = vmatprep.mubr.f32.mxu0 %v975
        %1490 = vmatmul.mubr.f32.gmra.mrb[0].mxu0 %v974
        %v1491 = vpop.f32.mrb[0].mxu0
        %v1492 = vadd.f32 %v1393, %v1491
        %v1493 = vpop.f32.mrb[0].mxu0
        %1494 = vmatprep.mubr.f32.mxu0 %v984
        %1495 = vmatmul.mubr.f32.gmra.mrb[0].mxu0 %v983
        %v1496 = vpop.f32.mrb[0].mxu0
        %v1497 = vadd.f32 %v1393, %v1496
        %v1498 = vpop.f32.mrb[0].mxu0
        %1499 = vmatprep.mubr.f32.mxu0 %v993
        %1500 = vmatmul.mubr.f32.gmra.mrb[0].mxu0 %v992
        %v1501 = vpop.f32.mrb[0].mxu0
        %v1502 = vadd.f32 %v1393, %v1501
        %v1503 = vpop.f32.mrb[0].mxu0
        %1504 = vmatprep.mubr.f32.mxu0 %v1002
        %1505 = vmatmul.mubr.f32.gmra.mrb[0].mxu0 %v1001
        %v1506 = vpop.f32.mrb[0].mxu0
        %v1507 = vadd.f32 %v1393, %v1506
        %v1508 = vpop.f32.mrb[0].mxu0
        %1509 = vmatprep.mubr.f32.mxu0 %v1011
        %1510 = vmatmul.mubr.f32.gmra.mrb[0].mxu0 %v1010
        %v1511 = vpop.f32.mrb[0].mxu0
        %v1512 = vadd.f32 %v1393, %v1511
        %v1513 = vpop.f32.mrb[0].mxu0
        %1514 = vmatprep.mubr.f32.mxu0 %v1020
        %1515 = vmatmul.mubr.f32.gmra.mrb[0].mxu0 %v1019
        %v1516 = vpop.f32.mrb[0].mxu0
        %v1517 = vadd.f32 %v1393, %v1516
        %v1518 = vpop.f32.mrb[0].mxu0
        %1519 = vmatprep.mubr.f32.mxu0 %v1029
        %1520 = vmatmul.mubr.f32.gmra.mrb[0].mxu0 %v1028
        %v1521 = vpop.f32.mrb[0].mxu0
        %v1522 = vadd.f32 %v1393, %v1521
        %v1523 = vpop.f32.mrb[0].mxu0
        %1524 = vmatprep.mubr.f32.mxu0 %v1038
        %1525 = vmatmul.mubr.f32.gmra.mrb[0].mxu0 %v1037
        %v1526 = vpop.f32.mrb[0].mxu0
        %v1527 = vadd.f32 %v1393, %v1526
        %v1528 = vpop.f32.mrb[0].mxu0
        %1529 = vmatprep.mubr.f32.mxu0 %v1047
        %1530 = vmatmul.mubr.f32.gmra.mrb[0].mxu0 %v1046
        %v1531 = vpop.f32.mrb[0].mxu0
        %v1532 = vadd.f32 %v1393, %v1531
        %v1533 = vpop.f32.mrb[0].mxu0
        %1534 = vmatprep.mubr.f32.mxu0 %v1056
        %1535 = vmatmul.mubr.f32.gmra.mrb[0].mxu0 %v1055
        %v1536 = vpop.f32.mrb[0].mxu0
        %v1537 = vadd.f32 %v1393, %v1536
        %v1538 = vpop.f32.mrb[0].mxu0
        %1539 = vmatprep.mubr.f32.mxu0 %v1065
        %1540 = vmatmul.mubr.f32.gmra.mrb[0].mxu0 %v1064
        %v1541 = vpop.f32.mrb[0].mxu0
        %v1542 = vadd.f32 %v1393, %v1541
        %v1543 = vpop.f32.mrb[0].mxu0
        %1544 = vmatprep.mubr.f32.mxu0 %v1074
        %1545 = vmatmul.mubr.f32.gmra.mrb[0].mxu0 %v1073
        %v1546 = vpop.f32.mrb[0].mxu0
        %v1547 = vadd.f32 %v1393, %v1546
        %v1548 = vpop.f32.mrb[0].mxu0
        %1549 = vmatprep.mubr.f32.mxu0 %v1083
        %1550 = vmatmul.mubr.f32.gmra.mrb[0].mxu0 %v1082
        %v1551 = vpop.f32.mrb[0].mxu0
        %v1552 = vadd.f32 %v1393, %v1551
        %v1553 = vpop.f32.mrb[0].mxu0
        %1554 = vmatprep.mubr.f32.mxu0 %v1092
        %1555 = vmatmul.mubr.f32.gmra.mrb[0].mxu0 %v1091
        %v1556 = vpop.f32.mrb[0].mxu0
        %v1557 = vadd.f32 %v1393, %v1556
        %v1558 = vpop.f32.mrb[0].mxu0
        %1559 = vmatprep.mubr.f32.mxu0 %v1101
        %1560 = vmatmul.mubr.f32.gmra.mrb[0].mxu0 %v1100
        %v1561 = vpop.f32.mrb[0].mxu0
        %v1562 = vadd.f32 %v1393, %v1561
        %v1563 = vpop.f32.mrb[0].mxu0
        %1564 = vmatprep.mubr.f32.mxu0 %v1110
        %1565 = vmatmul.mubr.f32.gmra.mrb[0].mxu0 %v1109
        %v1566 = vpop.f32.mrb[0].mxu0
        %v1567 = vadd.f32 %v1393, %v1566
        %v1568 = vpop.f32.mrb[0].mxu0
        %1569 = vmatprep.mubr.f32.mxu0 %v1119
        %1570 = vmatmul.mubr.f32.gmra.mrb[0].mxu0 %v1118
        %v1571 = vpop.f32.mrb[0].mxu0
        %v1572 = vadd.f32 %v1393, %v1571
        %v1573 = vpop.f32.mrb[0].mxu0
        %1574 = vmatprep.mubr.f32.mxu0 %v1128
        %1575 = vmatmul.mubr.f32.gmra.mrb[0].mxu0 %v1127
        %v1576 = vpop.f32.mrb[0].mxu0
        %v1577 = vadd.f32 %v1393, %v1576
        %v1578 = vpop.f32.mrb[0].mxu0
        %1579 = vmatprep.mubr.f32.mxu0 %v1137
        %1580 = vmatmul.mubr.f32.gmra.mrb[0].mxu0 %v1136
        %v1581 = vpop.f32.mrb[0].mxu0
        %v1582 = vadd.f32 %v1393, %v1581
        %v1583 = vpop.f32.mrb[0].mxu0
        %1584 = vmatprep.mubr.f32.mxu0 %v1146
        %1585 = vmatmul.mubr.f32.gmra.mrb[0].mxu0 %v1145
        %v1586 = vpop.f32.mrb[0].mxu0
        %v1587 = vadd.f32 %v1393, %v1586
        %v1588 = vpop.f32.mrb[0].mxu0
        %1589 = vmatprep.mubr.f32.mxu0 %v1155
        %1590 = vmatmul.mubr.f32.gmra.mrb[0].mxu0 %v1154
        %v1591 = vpop.f32.mrb[0].mxu0
        %v1592 = vadd.f32 %v1393, %v1591
        %v1593 = vpop.f32.mrb[0].mxu0
        %1594 = vmatprep.mubr.f32.mxu0 %v1164
        %1595 = vmatmul.mubr.f32.gmra.mrb[0].mxu0 %v1163
        %v1596 = vpop.f32.mrb[0].mxu0
        %v1597 = vadd.f32 %v1393, %v1596
        %v1598 = vpop.f32.mrb[0].mxu0
        %1599 = vmatprep.mubr.f32.mxu0 %v1173
        %1600 = vmatmul.mubr.f32.gmra.mrb[0].mxu0 %v1172
        %v1601 = vpop.f32.mrb[0].mxu0
        %v1602 = vadd.f32 %v1393, %v1601
        %v1603 = vpop.f32.mrb[0].mxu0
        %1604 = vmatprep.mubr.f32.mxu0 %v1182
        %1605 = vmatmul.mubr.f32.gmra.mrb[0].mxu0 %v1181
        %v1606 = vpop.f32.mrb[0].mxu0
        %v1607 = vadd.f32 %v1393, %v1606
        %v1608 = vpop.f32.mrb[0].mxu0
        %1609 = vmatprep.mubr.f32.mxu0 %v1191
        %1610 = vmatmul.mubr.f32.gmra.mrb[0].mxu0 %v1190
        %v1611 = vpop.f32.mrb[0].mxu0
        %v1612 = vadd.f32 %v1393, %v1611
        %v1613 = vpop.f32.mrb[0].mxu0
        %1614 = vmatprep.mubr.f32.mxu0 %v1200
        %1615 = vmatmul.mubr.f32.gmra.mrb[0].mxu0 %v1199
        %v1616 = vpop.f32.mrb[0].mxu0
        %v1617 = vadd.f32 %v1393, %v1616
        %v1618 = vpop.f32.mrb[0].mxu0
        %1619 = vmatprep.mubr.f32.mxu0 %v1209
        %1620 = vmatmul.mubr.f32.gmra.mrb[0].mxu0 %v1208
        %v1621 = vpop.f32.mrb[0].mxu0
        %v1622 = vadd.f32 %v1393, %v1621
        %v1623 = vpop.f32.mrb[0].mxu0
        %1624 = vmatprep.mubr.f32.mxu0 %v1218
        %1625 = vmatmul.mubr.f32.gmra.mrb[0].mxu0 %v1217
        %v1626 = vpop.f32.mrb[0].mxu0
        %v1627 = vadd.f32 %v1393, %v1626
        %v1628 = vpop.f32.mrb[0].mxu0
        %1629 = vmatprep.mubr.f32.mxu0 %v1227
        %1630 = vmatmul.mubr.f32.gmra.mrb[0].mxu0 %v1226
        %v1631 = vpop.f32.mrb[0].mxu0
        %v1632 = vadd.f32 %v1393, %v1631
        %v1633 = vpop.f32.mrb[0].mxu0
        %1634 = vmatprep.mubr.f32.mxu0 %v1236
        %1635 = vmatmul.mubr.f32.gmra.mrb[0].mxu0 %v1235
        %v1636 = vpop.f32.mrb[0].mxu0
        %v1637 = vadd.f32 %v1393, %v1636
        %v1638 = vpop.f32.mrb[0].mxu0
        %1639 = vdwg.mxu0
        %1640 = vmatprep.subr.mxu0 0.0
        %1641 = vmatpush1.msra.mxu0 %v1276
        %1642 = vmatprep.subr.mxu0 0.0
        %1643 = vmatpush1.msra.mxu0 %v1277
        %1644 = vmatprep.subr.mxu0 0.0
        %1645 = vmatpush1.msra.mxu0 %v1278
        %1646 = vmatprep.subr.mxu0 0.0
        %1647 = vmatpush1.msra.mxu0 %v1279
        %1648 = vmatprep.subr.mxu0 0.0
        %1649 = vmatpush1.msra.mxu0 %v1280
        %1650 = vmatprep.subr.mxu0 0.0
        %1651 = vmatpush1.msra.mxu0 %v1281
        %1652 = vmatprep.subr.mxu0 0.0
        %1653 = vmatpush1.msra.mxu0 %v1282
        %1654 = vmatprep.subr.mxu0 0.0
        %1655 = vmatpush1.msra.mxu0 %v1283
        %1656 = vmatprep.subr.mxu0 0.0
        %1657 = vmatpush1.msra.mxu0 %v1284
        %1658 = vmatprep.subr.mxu0 0.0
        %1659 = vmatpush1.msra.mxu0 %v1285
        %1660 = vmatprep.subr.mxu0 0.0
        %1661 = vmatpush1.msra.mxu0 %v1286
        %1662 = vmatprep.subr.mxu0 0.0
        %1663 = vmatpush1.msra.mxu0 %v1287
        %1664 = vmatprep.subr.mxu0 0.0
        %1665 = vmatpush1.msra.mxu0 %v1288
        %1666 = vmatprep.subr.mxu0 0.0
        %1667 = vmatpush1.msra.mxu0 %v1289
        %1668 = vmatprep.subr.mxu0 0.0
        %1669 = vmatpush1.msra.mxu0 %v1290
        %1670 = vmatprep.subr.mxu0 0.0
        %1671 = vmatpush1.msra.mxu0 %v1291
        %1672 = vmatprep.subr.mxu0 0.0
        %1673 = vmatpush1.msra.mxu0 %v1292
        %1674 = vmatprep.subr.mxu0 0.0
        %1675 = vmatpush1.msra.mxu0 %v1293
        %1676 = vmatprep.subr.mxu0 0.0
        %1677 = vmatpush1.msra.mxu0 %v1294
        %1678 = vmatprep.subr.mxu0 0.0
        %1679 = vmatpush1.msra.mxu0 %v1295
        %1680 = vmatprep.subr.mxu0 0.0
        %1681 = vmatpush1.msra.mxu0 %v1296
        %1682 = vmatprep.subr.mxu0 0.0
        %1683 = vmatpush1.msra.mxu0 %v1297
        %1684 = vmatprep.subr.mxu0 0.0
        %1685 = vmatpush1.msra.mxu0 %v1298
        %1686 = vmatprep.subr.mxu0 0.0
        %1687 = vmatpush1.msra.mxu0 %v1299
        %1688 = vmatprep.subr.mxu0 0.0
        %1689 = vmatpush1.msra.mxu0 %v1300
        %1690 = vmatprep.subr.mxu0 0.0
        %1691 = vmatpush1.msra.mxu0 %v1301
        %1692 = vmatprep.subr.mxu0 0.0
        %1693 = vmatpush1.msra.mxu0 %v1302
        %1694 = vmatprep.subr.mxu0 0.0
        %1695 = vmatpush1.msra.mxu0 %v1303
        %1696 = vmatprep.subr.mxu0 0.0
        %1697 = vmatpush1.msra.mxu0 %v1304
        %1698 = vmatprep.subr.mxu0 0.0
        %1699 = vmatpush1.msra.mxu0 %v1305
        %1700 = vmatprep.subr.mxu0 0.0
        %1701 = vmatpush1.msra.mxu0 %v1306
        %1702 = vmatprep.subr.mxu0 0.0
        %1703 = vmatpush1.msra.mxu0 %v1307
        %1704 = vmatprep.mubr.f32.mxu0 %v923
        %1705 = vmatmul.mubr.f32.gmra.mrb[0].mxu0 %v922
        %v1706 = vpop.f32.mrb[0].mxu0
        %v1707 = vadd.f32 %v1462, %v1706
        %v1708 = vpop.f32.mrb[0].mxu0
        %1709 = vmatprep.mubr.f32.mxu0 %v932
        %1710 = vmatmul.mubr.f32.gmra.mrb[0].mxu0 %v931
        %v1711 = vpop.f32.mrb[0].mxu0
        %v1712 = vadd.f32 %v1467, %v1711
        %v1713 = vpop.f32.mrb[0].mxu0
        %1714 = vmatprep.mubr.f32.mxu0 %v941
        %1715 = vmatmul.mubr.f32.gmra.mrb[0].mxu0 %v940
        %v1716 = vpop.f32.mrb[0].mxu0
        %v1717 = vadd.f32 %v1472, %v1716
        %v1718 = vpop.f32.mrb[0].mxu0
        %1719 = vmatprep.mubr.f32.mxu0 %v950
        %1720 = vmatmul.mubr.f32.gmra.mrb[0].mxu0 %v949
        %v1721 = vpop.f32.mrb[0].mxu0
        %v1722 = vadd.f32 %v1477, %v1721
        %v1723 = vpop.f32.mrb[0].mxu0
        %1724 = vmatprep.mubr.f32.mxu0 %v959
        %1725 = vmatmul.mubr.f32.gmra.mrb[0].mxu0 %v958
        %v1726 = vpop.f32.mrb[0].mxu0
        %v1727 = vadd.f32 %v1482, %v1726
        %v1728 = vpop.f32.mrb[0].mxu0
        %1729 = vmatprep.mubr.f32.mxu0 %v968
        %1730 = vmatmul.mubr.f32.gmra.mrb[0].mxu0 %v967
        %v1731 = vpop.f32.mrb[0].mxu0
        %v1732 = vadd.f32 %v1487, %v1731
        %v1733 = vpop.f32.mrb[0].mxu0
        %1734 = vmatprep.mubr.f32.mxu0 %v977
        %1735 = vmatmul.mubr.f32.gmra.mrb[0].mxu0 %v976
        %v1736 = vpop.f32.mrb[0].mxu0
        %v1737 = vadd.f32 %v1492, %v1736
        %v1738 = vpop.f32.mrb[0].mxu0
        %1739 = vmatprep.mubr.f32.mxu0 %v986
        %1740 = vmatmul.mubr.f32.gmra.mrb[0].mxu0 %v985
        %v1741 = vpop.f32.mrb[0].mxu0
        %v1742 = vadd.f32 %v1497, %v1741
        %v1743 = vpop.f32.mrb[0].mxu0
        %1744 = vmatprep.mubr.f32.mxu0 %v995
        %1745 = vmatmul.mubr.f32.gmra.mrb[0].mxu0 %v994
        %v1746 = vpop.f32.mrb[0].mxu0
        %v1747 = vadd.f32 %v1502, %v1746
        %v1748 = vpop.f32.mrb[0].mxu0
        %1749 = vmatprep.mubr.f32.mxu0 %v1004
        %1750 = vmatmul.mubr.f32.gmra.mrb[0].mxu0 %v1003
        %v1751 = vpop.f32.mrb[0].mxu0
        %v1752 = vadd.f32 %v1507, %v1751
        %v1753 = vpop.f32.mrb[0].mxu0
        %1754 = vmatprep.mubr.f32.mxu0 %v1013
        %1755 = vmatmul.mubr.f32.gmra.mrb[0].mxu0 %v1012
        %v1756 = vpop.f32.mrb[0].mxu0
        %v1757 = vadd.f32 %v1512, %v1756
        %v1758 = vpop.f32.mrb[0].mxu0
        %1759 = vmatprep.mubr.f32.mxu0 %v1022
        %1760 = vmatmul.mubr.f32.gmra.mrb[0].mxu0 %v1021
        %v1761 = vpop.f32.mrb[0].mxu0
        %v1762 = vadd.f32 %v1517, %v1761
        %v1763 = vpop.f32.mrb[0].mxu0
        %1764 = vmatprep.mubr.f32.mxu0 %v1031
        %1765 = vmatmul.mubr.f32.gmra.mrb[0].mxu0 %v1030
        %v1766 = vpop.f32.mrb[0].mxu0
        %v1767 = vadd.f32 %v1522, %v1766
        %v1768 = vpop.f32.mrb[0].mxu0
        %1769 = vmatprep.mubr.f32.mxu0 %v1040
        %1770 = vmatmul.mubr.f32.gmra.mrb[0].mxu0 %v1039
        %v1771 = vpop.f32.mrb[0].mxu0
        %v1772 = vadd.f32 %v1527, %v1771
        %v1773 = vpop.f32.mrb[0].mxu0
        %1774 = vmatprep.mubr.f32.mxu0 %v1049
        %1775 = vmatmul.mubr.f32.gmra.mrb[0].mxu0 %v1048
        %v1776 = vpop.f32.mrb[0].mxu0
        %v1777 = vadd.f32 %v1532, %v1776
        %v1778 = vpop.f32.mrb[0].mxu0
        %1779 = vmatprep.mubr.f32.mxu0 %v1058
        %1780 = vmatmul.mubr.f32.gmra.mrb[0].mxu0 %v1057
        %v1781 = vpop.f32.mrb[0].mxu0
        %v1782 = vadd.f32 %v1537, %v1781
        %v1783 = vpop.f32.mrb[0].mxu0
        %1784 = vmatprep.mubr.f32.mxu0 %v1067
        %1785 = vmatmul.mubr.f32.gmra.mrb[0].mxu0 %v1066
        %v1786 = vpop.f32.mrb[0].mxu0
        %v1787 = vadd.f32 %v1542, %v1786
        %v1788 = vpop.f32.mrb[0].mxu0
        %1789 = vmatprep.mubr.f32.mxu0 %v1076
        %1790 = vmatmul.mubr.f32.gmra.mrb[0].mxu0 %v1075
        %v1791 = vpop.f32.mrb[0].mxu0
        %v1792 = vadd.f32 %v1547, %v1791
        %v1793 = vpop.f32.mrb[0].mxu0
        %1794 = vmatprep.mubr.f32.mxu0 %v1085
        %1795 = vmatmul.mubr.f32.gmra.mrb[0].mxu0 %v1084
        %v1796 = vpop.f32.mrb[0].mxu0
        %v1797 = vadd.f32 %v1552, %v1796
        %v1798 = vpop.f32.mrb[0].mxu0
        %1799 = vmatprep.mubr.f32.mxu0 %v1094
        %1800 = vmatmul.mubr.f32.gmra.mrb[0].mxu0 %v1093
        %v1801 = vpop.f32.mrb[0].mxu0
        %v1802 = vadd.f32 %v1557, %v1801
        %v1803 = vpop.f32.mrb[0].mxu0
        %1804 = vmatprep.mubr.f32.mxu0 %v1103
        %1805 = vmatmul.mubr.f32.gmra.mrb[0].mxu0 %v1102
        %v1806 = vpop.f32.mrb[0].mxu0
        %v1807 = vadd.f32 %v1562, %v1806
        %v1808 = vpop.f32.mrb[0].mxu0
        %1809 = vmatprep.mubr.f32.mxu0 %v1112
        %1810 = vmatmul.mubr.f32.gmra.mrb[0].mxu0 %v1111
        %v1811 = vpop.f32.mrb[0].mxu0
        %v1812 = vadd.f32 %v1567, %v1811
        %v1813 = vpop.f32.mrb[0].mxu0
        %1814 = vmatprep.mubr.f32.mxu0 %v1121
        %1815 = vmatmul.mubr.f32.gmra.mrb[0].mxu0 %v1120
        %v1816 = vpop.f32.mrb[0].mxu0
        %v1817 = vadd.f32 %v1572, %v1816
        %v1818 = vpop.f32.mrb[0].mxu0
        %1819 = vmatprep.mubr.f32.mxu0 %v1130
        %1820 = vmatmul.mubr.f32.gmra.mrb[0].mxu0 %v1129
        %v1821 = vpop.f32.mrb[0].mxu0
        %v1822 = vadd.f32 %v1577, %v1821
        %v1823 = vpop.f32.mrb[0].mxu0
        %1824 = vmatprep.mubr.f32.mxu0 %v1139
        %1825 = vmatmul.mubr.f32.gmra.mrb[0].mxu0 %v1138
        %v1826 = vpop.f32.mrb[0].mxu0
        %v1827 = vadd.f32 %v1582, %v1826
        %v1828 = vpop.f32.mrb[0].mxu0
        %1829 = vmatprep.mubr.f32.mxu0 %v1148
        %1830 = vmatmul.mubr.f32.gmra.mrb[0].mxu0 %v1147
        %v1831 = vpop.f32.mrb[0].mxu0
        %v1832 = vadd.f32 %v1587, %v1831
        %v1833 = vpop.f32.mrb[0].mxu0
        %1834 = vmatprep.mubr.f32.mxu0 %v1157
        %1835 = vmatmul.mubr.f32.gmra.mrb[0].mxu0 %v1156
        %v1836 = vpop.f32.mrb[0].mxu0
        %v1837 = vadd.f32 %v1592, %v1836
        %v1838 = vpop.f32.mrb[0].mxu0
        %1839 = vmatprep.mubr.f32.mxu0 %v1166
        %1840 = vmatmul.mubr.f32.gmra.mrb[0].mxu0 %v1165
        %v1841 = vpop.f32.mrb[0].mxu0
        %v1842 = vadd.f32 %v1597, %v1841
        %v1843 = vpop.f32.mrb[0].mxu0
        %1844 = vmatprep.mubr.f32.mxu0 %v1175
        %1845 = vmatmul.mubr.f32.gmra.mrb[0].mxu0 %v1174
        %v1846 = vpop.f32.mrb[0].mxu0
        %v1847 = vadd.f32 %v1602, %v1846
        %v1848 = vpop.f32.mrb[0].mxu0
        %1849 = vmatprep.mubr.f32.mxu0 %v1184
        %1850 = vmatmul.mubr.f32.gmra.mrb[0].mxu0 %v1183
        %v1851 = vpop.f32.mrb[0].mxu0
        %v1852 = vadd.f32 %v1607, %v1851
        %v1853 = vpop.f32.mrb[0].mxu0
        %1854 = vmatprep.mubr.f32.mxu0 %v1193
        %1855 = vmatmul.mubr.f32.gmra.mrb[0].mxu0 %v1192
        %v1856 = vpop.f32.mrb[0].mxu0
        %v1857 = vadd.f32 %v1612, %v1856
        %v1858 = vpop.f32.mrb[0].mxu0
        %1859 = vmatprep.mubr.f32.mxu0 %v1202
        %1860 = vmatmul.mubr.f32.gmra.mrb[0].mxu0 %v1201
        %v1861 = vpop.f32.mrb[0].mxu0
        %v1862 = vadd.f32 %v1617, %v1861
        %v1863 = vpop.f32.mrb[0].mxu0
        %1864 = vmatprep.mubr.f32.mxu0 %v1211
        %1865 = vmatmul.mubr.f32.gmra.mrb[0].mxu0 %v1210
        %v1866 = vpop.f32.mrb[0].mxu0
        %v1867 = vadd.f32 %v1622, %v1866
        %v1868 = vpop.f32.mrb[0].mxu0
        %1869 = vmatprep.mubr.f32.mxu0 %v1220
        %1870 = vmatmul.mubr.f32.gmra.mrb[0].mxu0 %v1219
        %v1871 = vpop.f32.mrb[0].mxu0
        %v1872 = vadd.f32 %v1627, %v1871
        %v1873 = vpop.f32.mrb[0].mxu0
        %1874 = vmatprep.mubr.f32.mxu0 %v1229
        %1875 = vmatmul.mubr.f32.gmra.mrb[0].mxu0 %v1228
        %v1876 = vpop.f32.mrb[0].mxu0
        %v1877 = vadd.f32 %v1632, %v1876
        %v1878 = vpop.f32.mrb[0].mxu0
        %1879 = vmatprep.mubr.f32.mxu0 %v1238
        %1880 = vmatmul.mubr.f32.gmra.mrb[0].mxu0 %v1237
        %v1881 = vpop.f32.mrb[0].mxu0
        %v1882 = vadd.f32 %v1637, %v1881
        %v1883 = vpop.f32.mrb[0].mxu0
        %1884 = vdwg.mxu0
        %1885 = vmatprep.subr.mxu0 0.0
        %1886 = vmatpush1.msra.mxu0 %v1308
        %1887 = vmatprep.subr.mxu0 0.0
        %1888 = vmatpush1.msra.mxu0 %v1309
        %1889 = vmatprep.subr.mxu0 0.0
        %1890 = vmatpush1.msra.mxu0 %v1310
        %1891 = vmatprep.subr.mxu0 0.0
        %1892 = vmatpush1.msra.mxu0 %v1311
        %1893 = vmatprep.subr.mxu0 0.0
        %1894 = vmatpush1.msra.mxu0 %v1312
        %1895 = vmatprep.subr.mxu0 0.0
        %1896 = vmatpush1.msra.mxu0 %v1313
        %1897 = vmatprep.subr.mxu0 0.0
        %1898 = vmatpush1.msra.mxu0 %v1314
        %1899 = vmatprep.subr.mxu0 0.0
        %1900 = vmatpush1.msra.mxu0 %v1315
        %1901 = vmatprep.subr.mxu0 0.0
        %1902 = vmatpush1.msra.mxu0 %v1316
        %1903 = vmatprep.subr.mxu0 0.0
        %1904 = vmatpush1.msra.mxu0 %v1317
        %1905 = vmatprep.subr.mxu0 0.0
        %1906 = vmatpush1.msra.mxu0 %v1318
        %1907 = vmatprep.subr.mxu0 0.0
        %1908 = vmatpush1.msra.mxu0 %v1319
        %1909 = vmatprep.subr.mxu0 0.0
        %1910 = vmatpush1.msra.mxu0 %v1320
        %1911 = vmatprep.subr.mxu0 0.0
        %1912 = vmatpush1.msra.mxu0 %v1321
        %1913 = vmatprep.subr.mxu0 0.0
        %1914 = vmatpush1.msra.mxu0 %v1322
        %1915 = vmatprep.subr.mxu0 0.0
        %1916 = vmatpush1.msra.mxu0 %v1323
        %1917 = vmatprep.subr.mxu0 0.0
        %1918 = vmatpush1.msra.mxu0 %v1324
        %1919 = vmatprep.subr.mxu0 0.0
        %1920 = vmatpush1.msra.mxu0 %v1325
        %1921 = vmatprep.subr.mxu0 0.0
        %1922 = vmatpush1.msra.mxu0 %v1326
        %1923 = vmatprep.subr.mxu0 0.0
        %1924 = vmatpush1.msra.mxu0 %v1327
        %1925 = vmatprep.subr.mxu0 0.0
        %1926 = vmatpush1.msra.mxu0 %v1328
        %1927 = vmatprep.subr.mxu0 0.0
        %1928 = vmatpush1.msra.mxu0 %v1329
        %1929 = vmatprep.subr.mxu0 0.0
        %1930 = vmatpush1.msra.mxu0 %v1330
        %1931 = vmatprep.subr.mxu0 0.0
        %1932 = vmatpush1.msra.mxu0 %v1331
        %1933 = vmatprep.subr.mxu0 0.0
        %1934 = vmatpush1.msra.mxu0 %v1332
        %1935 = vmatprep.subr.mxu0 0.0
        %1936 = vmatpush1.msra.mxu0 %v1333
        %1937 = vmatprep.subr.mxu0 0.0
        %1938 = vmatpush1.msra.mxu0 %v1334
        %1939 = vmatprep.subr.mxu0 0.0
        %1940 = vmatpush1.msra.mxu0 %v1335
        %1941 = vmatprep.subr.mxu0 0.0
        %1942 = vmatpush1.msra.mxu0 %v1336
        %1943 = vmatprep.subr.mxu0 0.0
        %1944 = vmatpush1.msra.mxu0 %v1337
        %1945 = vmatprep.subr.mxu0 0.0
        %1946 = vmatpush1.msra.mxu0 %v1338
        %1947 = vmatprep.subr.mxu0 0.0
        %1948 = vmatpush1.msra.mxu0 %v1339
        %1949 = vmatprep.mubr.f32.mxu0 %v925
        %1950 = vmatmul.mubr.f32.gmra.mrb[0].mxu0 %v924
        %v1951 = vpop.f32.mrb[0].mxu0
        %v1952 = vadd.f32 %v1707, %v1951
        %v1953 = vpop.f32.mrb[0].mxu0
        %1954 = vmatprep.mubr.f32.mxu0 %v934
        %1955 = vmatmul.mubr.f32.gmra.mrb[0].mxu0 %v933
        %v1956 = vpop.f32.mrb[0].mxu0
        %v1957 = vadd.f32 %v1712, %v1956
        %v1958 = vpop.f32.mrb[0].mxu0
        %1959 = vmatprep.mubr.f32.mxu0 %v943
        %1960 = vmatmul.mubr.f32.gmra.mrb[0].mxu0 %v942
        %v1961 = vpop.f32.mrb[0].mxu0
        %v1962 = vadd.f32 %v1717, %v1961
        %v1963 = vpop.f32.mrb[0].mxu0
        %1964 = vmatprep.mubr.f32.mxu0 %v952
        %1965 = vmatmul.mubr.f32.gmra.mrb[0].mxu0 %v951
        %v1966 = vpop.f32.mrb[0].mxu0
        %v1967 = vadd.f32 %v1722, %v1966
        %v1968 = vpop.f32.mrb[0].mxu0
        %1969 = vmatprep.mubr.f32.mxu0 %v961
        %1970 = vmatmul.mubr.f32.gmra.mrb[0].mxu0 %v960
        %v1971 = vpop.f32.mrb[0].mxu0
        %v1972 = vadd.f32 %v1727, %v1971
        %v1973 = vpop.f32.mrb[0].mxu0
        %1974 = vmatprep.mubr.f32.mxu0 %v970
        %1975 = vmatmul.mubr.f32.gmra.mrb[0].mxu0 %v969
        %v1976 = vpop.f32.mrb[0].mxu0
        %v1977 = vadd.f32 %v1732, %v1976
        %v1978 = vpop.f32.mrb[0].mxu0
        %1979 = vmatprep.mubr.f32.mxu0 %v979
        %1980 = vmatmul.mubr.f32.gmra.mrb[0].mxu0 %v978
        %v1981 = vpop.f32.mrb[0].mxu0
        %v1982 = vadd.f32 %v1737, %v1981
        %v1983 = vpop.f32.mrb[0].mxu0
        %1984 = vmatprep.mubr.f32.mxu0 %v988
        %1985 = vmatmul.mubr.f32.gmra.mrb[0].mxu0 %v987
        %v1986 = vpop.f32.mrb[0].mxu0
        %v1987 = vadd.f32 %v1742, %v1986
        %v1988 = vpop.f32.mrb[0].mxu0
        %1989 = vmatprep.mubr.f32.mxu0 %v997
        %1990 = vmatmul.mubr.f32.gmra.mrb[0].mxu0 %v996
        %v1991 = vpop.f32.mrb[0].mxu0
        %v1992 = vadd.f32 %v1747, %v1991
        %v1993 = vpop.f32.mrb[0].mxu0
        %1994 = vmatprep.mubr.f32.mxu0 %v1006
        %1995 = vmatmul.mubr.f32.gmra.mrb[0].mxu0 %v1005
        %v1996 = vpop.f32.mrb[0].mxu0
        %v1997 = vadd.f32 %v1752, %v1996
        %v1998 = vpop.f32.mrb[0].mxu0
        %1999 = vmatprep.mubr.f32.mxu0 %v1015
        %2000 = vmatmul.mubr.f32.gmra.mrb[0].mxu0 %v1014
        %v2001 = vpop.f32.mrb[0].mxu0
        %v2002 = vadd.f32 %v1757, %v2001
        %v2003 = vpop.f32.mrb[0].mxu0
        %2004 = vmatprep.mubr.f32.mxu0 %v1024
        %2005 = vmatmul.mubr.f32.gmra.mrb[0].mxu0 %v1023
        %v2006 = vpop.f32.mrb[0].mxu0
        %v2007 = vadd.f32 %v1762, %v2006
        %v2008 = vpop.f32.mrb[0].mxu0
        %2009 = vmatprep.mubr.f32.mxu0 %v1033
        %2010 = vmatmul.mubr.f32.gmra.mrb[0].mxu0 %v1032
        %v2011 = vpop.f32.mrb[0].mxu0
        %v2012 = vadd.f32 %v1767, %v2011
        %v2013 = vpop.f32.mrb[0].mxu0
        %2014 = vmatprep.mubr.f32.mxu0 %v1042
        %2015 = vmatmul.mubr.f32.gmra.mrb[0].mxu0 %v1041
        %v2016 = vpop.f32.mrb[0].mxu0
        %v2017 = vadd.f32 %v1772, %v2016
        %v2018 = vpop.f32.mrb[0].mxu0
        %2019 = vmatprep.mubr.f32.mxu0 %v1051
        %2020 = vmatmul.mubr.f32.gmra.mrb[0].mxu0 %v1050
        %v2021 = vpop.f32.mrb[0].mxu0
        %v2022 = vadd.f32 %v1777, %v2021
        %v2023 = vpop.f32.mrb[0].mxu0
        %2024 = vmatprep.mubr.f32.mxu0 %v1060
        %2025 = vmatmul.mubr.f32.gmra.mrb[0].mxu0 %v1059
        %v2026 = vpop.f32.mrb[0].mxu0
        %v2027 = vadd.f32 %v1782, %v2026
        %v2028 = vpop.f32.mrb[0].mxu0
        %2029 = vmatprep.mubr.f32.mxu0 %v1069
        %2030 = vmatmul.mubr.f32.gmra.mrb[0].mxu0 %v1068
        %v2031 = vpop.f32.mrb[0].mxu0
        %v2032 = vadd.f32 %v1787, %v2031
        %v2033 = vpop.f32.mrb[0].mxu0
        %2034 = vmatprep.mubr.f32.mxu0 %v1078
        %2035 = vmatmul.mubr.f32.gmra.mrb[0].mxu0 %v1077
        %v2036 = vpop.f32.mrb[0].mxu0
        %v2037 = vadd.f32 %v1792, %v2036
        %v2038 = vpop.f32.mrb[0].mxu0
        %2039 = vmatprep.mubr.f32.mxu0 %v1087
        %2040 = vmatmul.mubr.f32.gmra.mrb[0].mxu0 %v1086
        %v2041 = vpop.f32.mrb[0].mxu0
        %v2042 = vadd.f32 %v1797, %v2041
        %v2043 = vpop.f32.mrb[0].mxu0
        %2044 = vmatprep.mubr.f32.mxu0 %v1096
        %2045 = vmatmul.mubr.f32.gmra.mrb[0].mxu0 %v1095
        %v2046 = vpop.f32.mrb[0].mxu0
        %v2047 = vadd.f32 %v1802, %v2046
        %v2048 = vpop.f32.mrb[0].mxu0
        %2049 = vmatprep.mubr.f32.mxu0 %v1105
        %2050 = vmatmul.mubr.f32.gmra.mrb[0].mxu0 %v1104
        %v2051 = vpop.f32.mrb[0].mxu0
        %v2052 = vadd.f32 %v1807, %v2051
        %v2053 = vpop.f32.mrb[0].mxu0
        %2054 = vmatprep.mubr.f32.mxu0 %v1114
        %2055 = vmatmul.mubr.f32.gmra.mrb[0].mxu0 %v1113
        %v2056 = vpop.f32.mrb[0].mxu0
        %v2057 = vadd.f32 %v1812, %v2056
        %v2058 = vpop.f32.mrb[0].mxu0
        %2059 = vmatprep.mubr.f32.mxu0 %v1123
        %2060 = vmatmul.mubr.f32.gmra.mrb[0].mxu0 %v1122
        %v2061 = vpop.f32.mrb[0].mxu0
        %v2062 = vadd.f32 %v1817, %v2061
        %v2063 = vpop.f32.mrb[0].mxu0
        %2064 = vmatprep.mubr.f32.mxu0 %v1132
        %2065 = vmatmul.mubr.f32.gmra.mrb[0].mxu0 %v1131
        %v2066 = vpop.f32.mrb[0].mxu0
        %v2067 = vadd.f32 %v1822, %v2066
        %v2068 = vpop.f32.mrb[0].mxu0
        %2069 = vmatprep.mubr.f32.mxu0 %v1141
        %2070 = vmatmul.mubr.f32.gmra.mrb[0].mxu0 %v1140
        %v2071 = vpop.f32.mrb[0].mxu0
        %v2072 = vadd.f32 %v1827, %v2071
        %v2073 = vpop.f32.mrb[0].mxu0
        %2074 = vmatprep.mubr.f32.mxu0 %v1150
        %2075 = vmatmul.mubr.f32.gmra.mrb[0].mxu0 %v1149
        %v2076 = vpop.f32.mrb[0].mxu0
        %v2077 = vadd.f32 %v1832, %v2076
        %v2078 = vpop.f32.mrb[0].mxu0
        %2079 = vmatprep.mubr.f32.mxu0 %v1159
        %2080 = vmatmul.mubr.f32.gmra.mrb[0].mxu0 %v1158
        %v2081 = vpop.f32.mrb[0].mxu0
        %v2082 = vadd.f32 %v1837, %v2081
        %v2083 = vpop.f32.mrb[0].mxu0
        %2084 = vmatprep.mubr.f32.mxu0 %v1168
        %2085 = vmatmul.mubr.f32.gmra.mrb[0].mxu0 %v1167
        %v2086 = vpop.f32.mrb[0].mxu0
        %v2087 = vadd.f32 %v1842, %v2086
        %v2088 = vpop.f32.mrb[0].mxu0
        %2089 = vmatprep.mubr.f32.mxu0 %v1177
        %2090 = vmatmul.mubr.f32.gmra.mrb[0].mxu0 %v1176
        %v2091 = vpop.f32.mrb[0].mxu0
        %v2092 = vadd.f32 %v1847, %v2091
        %v2093 = vpop.f32.mrb[0].mxu0
        %2094 = vmatprep.mubr.f32.mxu0 %v1186
        %2095 = vmatmul.mubr.f32.gmra.mrb[0].mxu0 %v1185
        %v2096 = vpop.f32.mrb[0].mxu0
        %v2097 = vadd.f32 %v1852, %v2096
        %v2098 = vpop.f32.mrb[0].mxu0
        %2099 = vmatprep.mubr.f32.mxu0 %v1195
        %2100 = vmatmul.mubr.f32.gmra.mrb[0].mxu0 %v1194
        %v2101 = vpop.f32.mrb[0].mxu0
        %v2102 = vadd.f32 %v1857, %v2101
        %v2103 = vpop.f32.mrb[0].mxu0
        %2104 = vmatprep.mubr.f32.mxu0 %v1204
        %2105 = vmatmul.mubr.f32.gmra.mrb[0].mxu0 %v1203
        %v2106 = vpop.f32.mrb[0].mxu0
        %v2107 = vadd.f32 %v1862, %v2106
        %v2108 = vpop.f32.mrb[0].mxu0
        %2109 = vmatprep.mubr.f32.mxu0 %v1213
        %2110 = vmatmul.mubr.f32.gmra.mrb[0].mxu0 %v1212
        %v2111 = vpop.f32.mrb[0].mxu0
        %v2112 = vadd.f32 %v1867, %v2111
        %v2113 = vpop.f32.mrb[0].mxu0
        %2114 = vmatprep.mubr.f32.mxu0 %v1222
        %2115 = vmatmul.mubr.f32.gmra.mrb[0].mxu0 %v1221
        %v2116 = vpop.f32.mrb[0].mxu0
        %v2117 = vadd.f32 %v1872, %v2116
        %v2118 = vpop.f32.mrb[0].mxu0
        %2119 = vmatprep.mubr.f32.mxu0 %v1231
        %2120 = vmatmul.mubr.f32.gmra.mrb[0].mxu0 %v1230
        %v2121 = vpop.f32.mrb[0].mxu0
        %v2122 = vadd.f32 %v1877, %v2121
        %v2123 = vpop.f32.mrb[0].mxu0
        %2124 = vmatprep.mubr.f32.mxu0 %v1240
        %2125 = vmatmul.mubr.f32.gmra.mrb[0].mxu0 %v1239
        %v2126 = vpop.f32.mrb[0].mxu0
        %v2127 = vadd.f32 %v1882, %v2126
        %v2128 = vpop.f32.mrb[0].mxu0
        %2129 = vdwg.mxu0
        %2130 = vmatprep.subr.mxu0 0.0
        %2131 = vmatpush1.msra.mxu0 %v1340
        %2132 = vmatprep.subr.mxu0 0.0
        %2133 = vmatpush1.msra.mxu0 %v1341
        %2134 = vmatprep.subr.mxu0 0.0
        %2135 = vmatpush1.msra.mxu0 %v1342
        %2136 = vmatprep.subr.mxu0 0.0
        %2137 = vmatpush1.msra.mxu0 %v1343
        %2138 = vmatprep.subr.mxu0 0.0
        %2139 = vmatpush1.msra.mxu0 %v1344
        %2140 = vmatprep.subr.mxu0 0.0
        %2141 = vmatpush1.msra.mxu0 %v1345
        %2142 = vmatprep.subr.mxu0 0.0
        %2143 = vmatpush1.msra.mxu0 %v1346
        %2144 = vmatprep.subr.mxu0 0.0
        %2145 = vmatpush1.msra.mxu0 %v1347
        %2146 = vmatprep.subr.mxu0 0.0
        %2147 = vmatpush1.msra.mxu0 %v1348
        %2148 = vmatprep.subr.mxu0 0.0
        %2149 = vmatpush1.msra.mxu0 %v1349
        %2150 = vmatprep.subr.mxu0 0.0
        %2151 = vmatpush1.msra.mxu0 %v1350
        %2152 = vmatprep.subr.mxu0 0.0
        %2153 = vmatpush1.msra.mxu0 %v1351
        %2154 = vmatprep.subr.mxu0 0.0
        %2155 = vmatpush1.msra.mxu0 %v1352
        %2156 = vmatprep.subr.mxu0 0.0
        %2157 = vmatpush1.msra.mxu0 %v1353
        %2158 = vmatprep.subr.mxu0 0.0
        %2159 = vmatpush1.msra.mxu0 %v1354
        %2160 = vmatprep.subr.mxu0 0.0
        %2161 = vmatpush1.msra.mxu0 %v1355
        %2162 = vmatprep.subr.mxu0 0.0
        %2163 = vmatpush1.msra.mxu0 %v1356
        %2164 = vmatprep.subr.mxu0 0.0
        %2165 = vmatpush1.msra.mxu0 %v1357
        %2166 = vmatprep.subr.mxu0 0.0
        %2167 = vmatpush1.msra.mxu0 %v1358
        %2168 = vmatprep.subr.mxu0 0.0
        %2169 = vmatpush1.msra.mxu0 %v1359
        %2170 = vmatprep.subr.mxu0 0.0
        %2171 = vmatpush1.msra.mxu0 %v1360
        %2172 = vmatprep.subr.mxu0 0.0
        %2173 = vmatpush1.msra.mxu0 %v1361
        %2174 = vmatprep.subr.mxu0 0.0
        %2175 = vmatpush1.msra.mxu0 %v1362
        %2176 = vmatprep.subr.mxu0 0.0
        %2177 = vmatpush1.msra.mxu0 %v1363
        %2178 = vmatprep.subr.mxu0 0.0
        %2179 = vmatpush1.msra.mxu0 %v1364
        %2180 = vmatprep.subr.mxu0 0.0
        %2181 = vmatpush1.msra.mxu0 %v1365
        %2182 = vmatprep.subr.mxu0 0.0
        %2183 = vmatpush1.msra.mxu0 %v1366
        %2184 = vmatprep.subr.mxu0 0.0
        %2185 = vmatpush1.msra.mxu0 %v1367
        %2186 = vmatprep.subr.mxu0 0.0
        %2187 = vmatpush1.msra.mxu0 %v1368
        %2188 = vmatprep.subr.mxu0 0.0
        %2189 = vmatpush1.msra.mxu0 %v1369
        %2190 = vmatprep.subr.mxu0 0.0
        %2191 = vmatpush1.msra.mxu0 %v1370
        %2192 = vmatprep.subr.mxu0 0.0
        %2193 = vmatpush1.msra.mxu0 %v1371
        %2194 = vmatprep.mubr.f32.mxu0 %v927
        %2195 = vmatmul.mubr.f32.gmra.mrb[0].mxu0 %v926
        %v2196 = vpop.f32.mrb[0].mxu0
        %v2197 = vadd.f32 %v1952, %v2196
        %v2198 = vpop.f32.mrb[0].mxu0
        %2199 = vmatprep.mubr.f32.mxu0 %v936
        %2200 = vmatmul.mubr.f32.gmra.mrb[0].mxu0 %v935
        %v2201 = vpop.f32.mrb[0].mxu0
        %v2202 = vadd.f32 %v1957, %v2201
        %v2203 = vpop.f32.mrb[0].mxu0
        %2204 = vmatprep.mubr.f32.mxu0 %v945
        %2205 = vmatmul.mubr.f32.gmra.mrb[0].mxu0 %v944
        %v2206 = vpop.f32.mrb[0].mxu0
        %v2207 = vadd.f32 %v1962, %v2206
        %v2208 = vpop.f32.mrb[0].mxu0
        %2209 = vmatprep.mubr.f32.mxu0 %v954
        %2210 = vmatmul.mubr.f32.gmra.mrb[0].mxu0 %v953
        %v2211 = vpop.f32.mrb[0].mxu0
        %v2212 = vadd.f32 %v1967, %v2211
        %v2213 = vpop.f32.mrb[0].mxu0
        %2214 = vmatprep.mubr.f32.mxu0 %v963
        %2215 = vmatmul.mubr.f32.gmra.mrb[0].mxu0 %v962
        %v2216 = vpop.f32.mrb[0].mxu0
        %v2217 = vadd.f32 %v1972, %v2216
        %v2218 = vpop.f32.mrb[0].mxu0
        %2219 = vmatprep.mubr.f32.mxu0 %v972
        %2220 = vmatmul.mubr.f32.gmra.mrb[0].mxu0 %v971
        %v2221 = vpop.f32.mrb[0].mxu0
        %v2222 = vadd.f32 %v1977, %v2221
        %v2223 = vpop.f32.mrb[0].mxu0
        %2224 = vmatprep.mubr.f32.mxu0 %v981
        %2225 = vmatmul.mubr.f32.gmra.mrb[0].mxu0 %v980
        %v2226 = vpop.f32.mrb[0].mxu0
        %v2227 = vadd.f32 %v1982, %v2226
        %v2228 = vpop.f32.mrb[0].mxu0
        %2229 = vmatprep.mubr.f32.mxu0 %v990
        %2230 = vmatmul.mubr.f32.gmra.mrb[0].mxu0 %v989
        %v2231 = vpop.f32.mrb[0].mxu0
        %v2232 = vadd.f32 %v1987, %v2231
        %v2233 = vpop.f32.mrb[0].mxu0
        %2234 = vmatprep.mubr.f32.mxu0 %v999
        %2235 = vmatmul.mubr.f32.gmra.mrb[0].mxu0 %v998
        %v2236 = vpop.f32.mrb[0].mxu0
        %v2237 = vadd.f32 %v1992, %v2236
        %v2238 = vpop.f32.mrb[0].mxu0
        %2239 = vmatprep.mubr.f32.mxu0 %v1008
        %2240 = vmatmul.mubr.f32.gmra.mrb[0].mxu0 %v1007
        %v2241 = vpop.f32.mrb[0].mxu0
        %v2242 = vadd.f32 %v1997, %v2241
        %v2243 = vpop.f32.mrb[0].mxu0
        %2244 = vmatprep.mubr.f32.mxu0 %v1017
        %2245 = vmatmul.mubr.f32.gmra.mrb[0].mxu0 %v1016
        %v2246 = vpop.f32.mrb[0].mxu0
        %v2247 = vadd.f32 %v2002, %v2246
        %v2248 = vpop.f32.mrb[0].mxu0
        %2249 = vmatprep.mubr.f32.mxu0 %v1026
        %2250 = vmatmul.mubr.f32.gmra.mrb[0].mxu0 %v1025
        %v2251 = vpop.f32.mrb[0].mxu0
        %v2252 = vadd.f32 %v2007, %v2251
        %v2253 = vpop.f32.mrb[0].mxu0
        %2254 = vmatprep.mubr.f32.mxu0 %v1035
        %2255 = vmatmul.mubr.f32.gmra.mrb[0].mxu0 %v1034
        %v2256 = vpop.f32.mrb[0].mxu0
        %v2257 = vadd.f32 %v2012, %v2256
        %v2258 = vpop.f32.mrb[0].mxu0
        %2259 = vmatprep.mubr.f32.mxu0 %v1044
        %2260 = vmatmul.mubr.f32.gmra.mrb[0].mxu0 %v1043
        %v2261 = vpop.f32.mrb[0].mxu0
        %v2262 = vadd.f32 %v2017, %v2261
        %v2263 = vpop.f32.mrb[0].mxu0
        %2264 = vmatprep.mubr.f32.mxu0 %v1053
        %2265 = vmatmul.mubr.f32.gmra.mrb[0].mxu0 %v1052
        %v2266 = vpop.f32.mrb[0].mxu0
        %v2267 = vadd.f32 %v2022, %v2266
        %v2268 = vpop.f32.mrb[0].mxu0
        %2269 = vmatprep.mubr.f32.mxu0 %v1062
        %2270 = vmatmul.mubr.f32.gmra.mrb[0].mxu0 %v1061
        %v2271 = vpop.f32.mrb[0].mxu0
        %v2272 = vadd.f32 %v2027, %v2271
        %v2273 = vpop.f32.mrb[0].mxu0
        %2274 = vmatprep.mubr.f32.mxu0 %v1071
        %2275 = vmatmul.mubr.f32.gmra.mrb[0].mxu0 %v1070
        %v2276 = vpop.f32.mrb[0].mxu0
        %v2277 = vadd.f32 %v2032, %v2276
        %v2278 = vpop.f32.mrb[0].mxu0
        %2279 = vmatprep.mubr.f32.mxu0 %v1080
        %2280 = vmatmul.mubr.f32.gmra.mrb[0].mxu0 %v1079
        %v2281 = vpop.f32.mrb[0].mxu0
        %v2282 = vadd.f32 %v2037, %v2281
        %v2283 = vpop.f32.mrb[0].mxu0
        %2284 = vmatprep.mubr.f32.mxu0 %v1089
        %2285 = vmatmul.mubr.f32.gmra.mrb[0].mxu0 %v1088
        %v2286 = vpop.f32.mrb[0].mxu0
        %v2287 = vadd.f32 %v2042, %v2286
        %v2288 = vpop.f32.mrb[0].mxu0
        %2289 = vmatprep.mubr.f32.mxu0 %v1098
        %2290 = vmatmul.mubr.f32.gmra.mrb[0].mxu0 %v1097
        %v2291 = vpop.f32.mrb[0].mxu0
        %v2292 = vadd.f32 %v2047, %v2291
        %v2293 = vpop.f32.mrb[0].mxu0
        %2294 = vmatprep.mubr.f32.mxu0 %v1107
        %2295 = vmatmul.mubr.f32.gmra.mrb[0].mxu0 %v1106
        %v2296 = vpop.f32.mrb[0].mxu0
        %v2297 = vadd.f32 %v2052, %v2296
        %v2298 = vpop.f32.mrb[0].mxu0
        %2299 = vmatprep.mubr.f32.mxu0 %v1116
        %2300 = vmatmul.mubr.f32.gmra.mrb[0].mxu0 %v1115
        %v2301 = vpop.f32.mrb[0].mxu0
        %v2302 = vadd.f32 %v2057, %v2301
        %v2303 = vpop.f32.mrb[0].mxu0
        %2304 = vmatprep.mubr.f32.mxu0 %v1125
        %2305 = vmatmul.mubr.f32.gmra.mrb[0].mxu0 %v1124
        %v2306 = vpop.f32.mrb[0].mxu0
        %v2307 = vadd.f32 %v2062, %v2306
        %v2308 = vpop.f32.mrb[0].mxu0
        %2309 = vmatprep.mubr.f32.mxu0 %v1134
        %2310 = vmatmul.mubr.f32.gmra.mrb[0].mxu0 %v1133
        %v2311 = vpop.f32.mrb[0].mxu0
        %v2312 = vadd.f32 %v2067, %v2311
        %v2313 = vpop.f32.mrb[0].mxu0
        %2314 = vmatprep.mubr.f32.mxu0 %v1143
        %2315 = vmatmul.mubr.f32.gmra.mrb[0].mxu0 %v1142
        %v2316 = vpop.f32.mrb[0].mxu0
        %v2317 = vadd.f32 %v2072, %v2316
        %v2318 = vpop.f32.mrb[0].mxu0
        %2319 = vmatprep.mubr.f32.mxu0 %v1152
        %2320 = vmatmul.mubr.f32.gmra.mrb[0].mxu0 %v1151
        %v2321 = vpop.f32.mrb[0].mxu0
        %v2322 = vadd.f32 %v2077, %v2321
        %v2323 = vpop.f32.mrb[0].mxu0
        %2324 = vmatprep.mubr.f32.mxu0 %v1161
        %2325 = vmatmul.mubr.f32.gmra.mrb[0].mxu0 %v1160
        %v2326 = vpop.f32.mrb[0].mxu0
        %v2327 = vadd.f32 %v2082, %v2326
        %v2328 = vpop.f32.mrb[0].mxu0
        %2329 = vmatprep.mubr.f32.mxu0 %v1170
        %2330 = vmatmul.mubr.f32.gmra.mrb[0].mxu0 %v1169
        %v2331 = vpop.f32.mrb[0].mxu0
        %v2332 = vadd.f32 %v2087, %v2331
        %v2333 = vpop.f32.mrb[0].mxu0
        %2334 = vmatprep.mubr.f32.mxu0 %v1179
        %2335 = vmatmul.mubr.f32.gmra.mrb[0].mxu0 %v1178
        %v2336 = vpop.f32.mrb[0].mxu0
        %v2337 = vadd.f32 %v2092, %v2336
        %v2338 = vpop.f32.mrb[0].mxu0
        %2339 = vmatprep.mubr.f32.mxu0 %v1188
        %2340 = vmatmul.mubr.f32.gmra.mrb[0].mxu0 %v1187
        %v2341 = vpop.f32.mrb[0].mxu0
        %v2342 = vadd.f32 %v2097, %v2341
        %v2343 = vpop.f32.mrb[0].mxu0
        %2344 = vmatprep.mubr.f32.mxu0 %v1197
        %2345 = vmatmul.mubr.f32.gmra.mrb[0].mxu0 %v1196
        %v2346 = vpop.f32.mrb[0].mxu0
        %v2347 = vadd.f32 %v2102, %v2346
        %v2348 = vpop.f32.mrb[0].mxu0
        %2349 = vmatprep.mubr.f32.mxu0 %v1206
        %2350 = vmatmul.mubr.f32.gmra.mrb[0].mxu0 %v1205
        %v2351 = vpop.f32.mrb[0].mxu0
        %v2352 = vadd.f32 %v2107, %v2351
        %v2353 = vpop.f32.mrb[0].mxu0
        %2354 = vmatprep.mubr.f32.mxu0 %v1215
        %2355 = vmatmul.mubr.f32.gmra.mrb[0].mxu0 %v1214
        %v2356 = vpop.f32.mrb[0].mxu0
        %v2357 = vadd.f32 %v2112, %v2356
        %v2358 = vpop.f32.mrb[0].mxu0
        %2359 = vmatprep.mubr.f32.mxu0 %v1224
        %2360 = vmatmul.mubr.f32.gmra.mrb[0].mxu0 %v1223
        %v2361 = vpop.f32.mrb[0].mxu0
        %v2362 = vadd.f32 %v2117, %v2361
        %v2363 = vpop.f32.mrb[0].mxu0
        %2364 = vmatprep.mubr.f32.mxu0 %v1233
        %2365 = vmatmul.mubr.f32.gmra.mrb[0].mxu0 %v1232
        %v2366 = vpop.f32.mrb[0].mxu0
        %v2367 = vadd.f32 %v2122, %v2366
        %v2368 = vpop.f32.mrb[0].mxu0
        %2369 = vmatprep.mubr.f32.mxu0 %v1242
        %2370 = vmatmul.mubr.f32.gmra.mrb[0].mxu0 %v1241
        %v2371 = vpop.f32.mrb[0].mxu0
        %v2372 = vadd.f32 %v2127, %v2371
        %v2373 = vpop.f32.mrb[0].mxu0
        %2374 = vdwg.mxu0
        %2375 = vmatprep.subr.mxu0 0.0
        %2376 = vmatpush1.msra.mxu0 %v1372
        %2377 = vmatprep.subr.mxu0 0.0
        %2378 = vmatpush1.msra.mxu0 %v1373
        %2379 = vmatprep.subr.mxu0 0.0
        %2380 = vmatpush1.msra.mxu0 %v1374
        %2381 = vmatprep.subr.mxu0 0.0
        %2382 = vmatpush1.msra.mxu0 %v1375
        %2383 = vmatprep.subr.mxu0 0.0
        %2384 = vmatpush1.msra.mxu0 %v1376
        %2385 = vmatprep.subr.mxu0 0.0
        %2386 = vmatpush1.msra.mxu0 %v1377
        %2387 = vmatprep.subr.mxu0 0.0
        %2388 = vmatpush1.msra.mxu0 %v1378
        %2389 = vmatprep.subr.mxu0 0.0
        %2390 = vmatpush1.msra.mxu0 %v1379
        %2391 = vmatprep.subr.mxu0 0.0
        %2392 = vmatpush1.msra.mxu0 %v1380
        %2393 = vmatprep.subr.mxu0 0.0
        %2394 = vmatpush1.msra.mxu0 %v1381
        %2395 = vmatprep.subr.mxu0 0.0
        %2396 = vmatpush1.msra.mxu0 %v1382
        %2397 = vmatprep.subr.mxu0 0.0
        %2398 = vmatpush1.msra.mxu0 %v1383
        %2399 = vmatprep.subr.mxu0 0.0
        %2400 = vmatpush1.msra.mxu0 %v1384
        %2401 = vmatprep.subr.mxu0 0.0
        %2402 = vmatpush1.msra.mxu0 %v1385
        %2403 = vmatprep.subr.mxu0 0.0
        %2404 = vmatpush1.msra.mxu0 %v1386
        %2405 = vmatprep.subr.mxu0 0.0
        %2406 = vmatpush1.msra.mxu0 %v1387
        %2407 = vmatprep.subr.mxu0 0.0
        %2408 = vmatpush1.msra.mxu0 0.0
        %2409 = vmatprep.subr.mxu0 0.0
        %2410 = vmatpush1.msra.mxu0 0.0
        %2411 = vmatprep.subr.mxu0 0.0
        %2412 = vmatpush1.msra.mxu0 0.0
        %2413 = vmatprep.subr.mxu0 0.0
        %2414 = vmatpush1.msra.mxu0 0.0
        %2415 = vmatprep.subr.mxu0 0.0
        %2416 = vmatpush1.msra.mxu0 0.0
        %2417 = vmatprep.subr.mxu0 0.0
        %2418 = vmatpush1.msra.mxu0 0.0
        %2419 = vmatprep.subr.mxu0 0.0
        %2420 = vmatpush1.msra.mxu0 0.0
        %2421 = vmatprep.subr.mxu0 0.0
        %2422 = vmatpush1.msra.mxu0 0.0
        %2423 = vmatprep.subr.mxu0 0.0
        %2424 = vmatpush1.msra.mxu0 0.0
        %2425 = vmatprep.subr.mxu0 0.0
        %2426 = vmatpush1.msra.mxu0 0.0
        %2427 = vmatprep.subr.mxu0 0.0
        %2428 = vmatpush1.msra.mxu0 0.0
        %2429 = vmatprep.subr.mxu0 0.0
        %2430 = vmatpush1.msra.mxu0 0.0
        %2431 = vmatprep.subr.mxu0 0.0
        %2432 = vmatpush1.msra.mxu0 0.0
        %2433 = vmatprep.subr.mxu0 0.0
        %2434 = vmatpush1.msra.mxu0 0.0
        %2435 = vmatprep.subr.mxu0 0.0
        %2436 = vmatpush1.msra.mxu0 0.0
        %2437 = vmatprep.subr.mxu0 0.0
        %2438 = vmatpush1.msra.mxu0 0.0
        %2439 = vmatprep.mubr.f32.mxu0 0.0
        %2440 = vmatmul.mubr.f32.gmra.mrb[0].mxu0 %v928
        %v2441 = vpop.f32.mrb[0].mxu0
        %v2442 = vadd.f32 %v2197, %v2441
        %v2443 = vpop.f32.mrb[0].mxu0
        %2444 = vmatprep.mubr.f32.mxu0 0.0
        %2445 = vmatmul.mubr.f32.gmra.mrb[0].mxu0 %v937
        %v2446 = vpop.f32.mrb[0].mxu0
        %v2447 = vadd.f32 %v2202, %v2446
        %v2448 = vpop.f32.mrb[0].mxu0
        %2449 = vmatprep.mubr.f32.mxu0 0.0
        %2450 = vmatmul.mubr.f32.gmra.mrb[0].mxu0 %v946
        %v2451 = vpop.f32.mrb[0].mxu0
        %v2452 = vadd.f32 %v2207, %v2451
        %v2453 = vpop.f32.mrb[0].mxu0
        %2454 = vmatprep.mubr.f32.mxu0 0.0
        %2455 = vmatmul.mubr.f32.gmra.mrb[0].mxu0 %v955
        %v2456 = vpop.f32.mrb[0].mxu0
        %v2457 = vadd.f32 %v2212, %v2456
        %v2458 = vpop.f32.mrb[0].mxu0
        %2459 = vmatprep.mubr.f32.mxu0 0.0
        %2460 = vmatmul.mubr.f32.gmra.mrb[0].mxu0 %v964
        %v2461 = vpop.f32.mrb[0].mxu0
        %v2462 = vadd.f32 %v2217, %v2461
        %v2463 = vpop.f32.mrb[0].mxu0
        %2464 = vmatprep.mubr.f32.mxu0 0.0
        %2465 = vmatmul.mubr.f32.gmra.mrb[0].mxu0 %v973
        %v2466 = vpop.f32.mrb[0].mxu0
        %v2467 = vadd.f32 %v2222, %v2466
        %v2468 = vpop.f32.mrb[0].mxu0
        %2469 = vmatprep.mubr.f32.mxu0 0.0
        %2470 = vmatmul.mubr.f32.gmra.mrb[0].mxu0 %v982
        %v2471 = vpop.f32.mrb[0].mxu0
        %v2472 = vadd.f32 %v2227, %v2471
        %v2473 = vpop.f32.mrb[0].mxu0
        %2474 = vmatprep.mubr.f32.mxu0 0.0
        %2475 = vmatmul.mubr.f32.gmra.mrb[0].mxu0 %v991
        %v2476 = vpop.f32.mrb[0].mxu0
        %v2477 = vadd.f32 %v2232, %v2476
        %v2478 = vpop.f32.mrb[0].mxu0
        %2479 = vmatprep.mubr.f32.mxu0 0.0
        %2480 = vmatmul.mubr.f32.gmra.mrb[0].mxu0 %v1000
        %v2481 = vpop.f32.mrb[0].mxu0
        %v2482 = vadd.f32 %v2237, %v2481
        %v2483 = vpop.f32.mrb[0].mxu0
        %2484 = vmatprep.mubr.f32.mxu0 0.0
        %2485 = vmatmul.mubr.f32.gmra.mrb[0].mxu0 %v1009
        %v2486 = vpop.f32.mrb[0].mxu0
        %v2487 = vadd.f32 %v2242, %v2486
        %v2488 = vpop.f32.mrb[0].mxu0
        %2489 = vmatprep.mubr.f32.mxu0 0.0
        %2490 = vmatmul.mubr.f32.gmra.mrb[0].mxu0 %v1018
        %v2491 = vpop.f32.mrb[0].mxu0
        %v2492 = vadd.f32 %v2247, %v2491
        %v2493 = vpop.f32.mrb[0].mxu0
        %2494 = vmatprep.mubr.f32.mxu0 0.0
        %2495 = vmatmul.mubr.f32.gmra.mrb[0].mxu0 %v1027
        %v2496 = vpop.f32.mrb[0].mxu0
        %v2497 = vadd.f32 %v2252, %v2496
        %v2498 = vpop.f32.mrb[0].mxu0
        %2499 = vmatprep.mubr.f32.mxu0 0.0
        %2500 = vmatmul.mubr.f32.gmra.mrb[0].mxu0 %v1036
        %v2501 = vpop.f32.mrb[0].mxu0
        %v2502 = vadd.f32 %v2257, %v2501
        %v2503 = vpop.f32.mrb[0].mxu0
        %2504 = vmatprep.mubr.f32.mxu0 0.0
        %2505 = vmatmul.mubr.f32.gmra.mrb[0].mxu0 %v1045
        %v2506 = vpop.f32.mrb[0].mxu0
        %v2507 = vadd.f32 %v2262, %v2506
        %v2508 = vpop.f32.mrb[0].mxu0
        %2509 = vmatprep.mubr.f32.mxu0 0.0
        %2510 = vmatmul.mubr.f32.gmra.mrb[0].mxu0 %v1054
        %v2511 = vpop.f32.mrb[0].mxu0
        %v2512 = vadd.f32 %v2267, %v2511
        %v2513 = vpop.f32.mrb[0].mxu0
        %2514 = vmatprep.mubr.f32.mxu0 0.0
        %2515 = vmatmul.mubr.f32.gmra.mrb[0].mxu0 %v1063
        %v2516 = vpop.f32.mrb[0].mxu0
        %v2517 = vadd.f32 %v2272, %v2516
        %v2518 = vpop.f32.mrb[0].mxu0
        %2519 = vmatprep.mubr.f32.mxu0 0.0
        %2520 = vmatmul.mubr.f32.gmra.mrb[0].mxu0 %v1072
        %v2521 = vpop.f32.mrb[0].mxu0
        %v2522 = vadd.f32 %v2277, %v2521
        %v2523 = vpop.f32.mrb[0].mxu0
        %2524 = vmatprep.mubr.f32.mxu0 0.0
        %2525 = vmatmul.mubr.f32.gmra.mrb[0].mxu0 %v1081
        %v2526 = vpop.f32.mrb[0].mxu0
        %v2527 = vadd.f32 %v2282, %v2526
        %v2528 = vpop.f32.mrb[0].mxu0
        %2529 = vmatprep.mubr.f32.mxu0 0.0
        %2530 = vmatmul.mubr.f32.gmra.mrb[0].mxu0 %v1090
        %v2531 = vpop.f32.mrb[0].mxu0
        %v2532 = vadd.f32 %v2287, %v2531
        %v2533 = vpop.f32.mrb[0].mxu0
        %2534 = vmatprep.mubr.f32.mxu0 0.0
        %2535 = vmatmul.mubr.f32.gmra.mrb[0].mxu0 %v1099
        %v2536 = vpop.f32.mrb[0].mxu0
        %v2537 = vadd.f32 %v2292, %v2536
        %v2538 = vpop.f32.mrb[0].mxu0
        %2539 = vmatprep.mubr.f32.mxu0 0.0
        %2540 = vmatmul.mubr.f32.gmra.mrb[0].mxu0 %v1108
        %v2541 = vpop.f32.mrb[0].mxu0
        %v2542 = vadd.f32 %v2297, %v2541
        %v2543 = vpop.f32.mrb[0].mxu0
        %2544 = vmatprep.mubr.f32.mxu0 0.0
        %2545 = vmatmul.mubr.f32.gmra.mrb[0].mxu0 %v1117
        %v2546 = vpop.f32.mrb[0].mxu0
        %v2547 = vadd.f32 %v2302, %v2546
        %v2548 = vpop.f32.mrb[0].mxu0
        %2549 = vmatprep.mubr.f32.mxu0 0.0
        %2550 = vmatmul.mubr.f32.gmra.mrb[0].mxu0 %v1126
        %v2551 = vpop.f32.mrb[0].mxu0
        %v2552 = vadd.f32 %v2307, %v2551
        %v2553 = vpop.f32.mrb[0].mxu0
        %2554 = vmatprep.mubr.f32.mxu0 0.0
        %2555 = vmatmul.mubr.f32.gmra.mrb[0].mxu0 %v1135
        %v2556 = vpop.f32.mrb[0].mxu0
        %v2557 = vadd.f32 %v2312, %v2556
        %v2558 = vpop.f32.mrb[0].mxu0
        %2559 = vmatprep.mubr.f32.mxu0 0.0
        %2560 = vmatmul.mubr.f32.gmra.mrb[0].mxu0 %v1144
        %v2561 = vpop.f32.mrb[0].mxu0
        %v2562 = vadd.f32 %v2317, %v2561
        %v2563 = vpop.f32.mrb[0].mxu0
        %2564 = vmatprep.mubr.f32.mxu0 0.0
        %2565 = vmatmul.mubr.f32.gmra.mrb[0].mxu0 %v1153
        %v2566 = vpop.f32.mrb[0].mxu0
        %v2567 = vadd.f32 %v2322, %v2566
        %v2568 = vpop.f32.mrb[0].mxu0
        %2569 = vmatprep.mubr.f32.mxu0 0.0
        %2570 = vmatmul.mubr.f32.gmra.mrb[0].mxu0 %v1162
        %v2571 = vpop.f32.mrb[0].mxu0
        %v2572 = vadd.f32 %v2327, %v2571
        %v2573 = vpop.f32.mrb[0].mxu0
        %2574 = vmatprep.mubr.f32.mxu0 0.0
        %2575 = vmatmul.mubr.f32.gmra.mrb[0].mxu0 %v1171
        %v2576 = vpop.f32.mrb[0].mxu0
        %v2577 = vadd.f32 %v2332, %v2576
        %v2578 = vpop.f32.mrb[0].mxu0
        %2579 = vmatprep.mubr.f32.mxu0 0.0
        %2580 = vmatmul.mubr.f32.gmra.mrb[0].mxu0 %v1180
        %v2581 = vpop.f32.mrb[0].mxu0
        %v2582 = vadd.f32 %v2337, %v2581
        %v2583 = vpop.f32.mrb[0].mxu0
        %2584 = vmatprep.mubr.f32.mxu0 0.0
        %2585 = vmatmul.mubr.f32.gmra.mrb[0].mxu0 %v1189
        %v2586 = vpop.f32.mrb[0].mxu0
        %v2587 = vadd.f32 %v2342, %v2586
        %v2588 = vpop.f32.mrb[0].mxu0
        %2589 = vmatprep.mubr.f32.mxu0 0.0
        %2590 = vmatmul.mubr.f32.gmra.mrb[0].mxu0 %v1198
        %v2591 = vpop.f32.mrb[0].mxu0
        %v2592 = vadd.f32 %v2347, %v2591
        %v2593 = vpop.f32.mrb[0].mxu0
        %2594 = vmatprep.mubr.f32.mxu0 0.0
        %2595 = vmatmul.mubr.f32.gmra.mrb[0].mxu0 %v1207
        %v2596 = vpop.f32.mrb[0].mxu0
        %v2597 = vadd.f32 %v2352, %v2596
        %v2598 = vpop.f32.mrb[0].mxu0
        %2599 = vmatprep.mubr.f32.mxu0 0.0
        %2600 = vmatmul.mubr.f32.gmra.mrb[0].mxu0 %v1216
        %v2601 = vpop.f32.mrb[0].mxu0
        %v2602 = vadd.f32 %v2357, %v2601
        %v2603 = vpop.f32.mrb[0].mxu0
        %2604 = vmatprep.mubr.f32.mxu0 0.0
        %2605 = vmatmul.mubr.f32.gmra.mrb[0].mxu0 %v1225
        %v2606 = vpop.f32.mrb[0].mxu0
        %v2607 = vadd.f32 %v2362, %v2606
        %v2608 = vpop.f32.mrb[0].mxu0
        %2609 = vmatprep.mubr.f32.mxu0 0.0
        %2610 = vmatmul.mubr.f32.gmra.mrb[0].mxu0 %v1234
        %v2611 = vpop.f32.mrb[0].mxu0
        %v2612 = vadd.f32 %v2367, %v2611
        %v2613 = vpop.f32.mrb[0].mxu0
        %2614 = vmatprep.mubr.f32.mxu0 0.0
        %2615 = vmatmul.mubr.f32.gmra.mrb[0].mxu0 %v1243
        %v2616 = vpop.f32.mrb[0].mxu0
        %v2617 = vadd.f32 %v2372, %v2616
        %v2618 = vpop.f32.mrb[0].mxu0
        %2619 = vdwg.mxu0
        %v2620 = vmax.f32 %v2442, 0.0
        %v2621 = vmax.f32 %v2447, 0.0
        %v2622 = vmax.f32 %v2452, 0.0
        %v2623 = vmax.f32 %v2457, 0.0
        %v2624 = vmax.f32 %v2462, 0.0
        %v2625 = vmax.f32 %v2467, 0.0
        %v2626 = vmax.f32 %v2472, 0.0
        %v2627 = vmax.f32 %v2477, 0.0
        %v2628 = vmax.f32 %v2482, 0.0
        %v2629 = vmax.f32 %v2487, 0.0
        %v2630 = vmax.f32 %v2492, 0.0
        %v2631 = vmax.f32 %v2497, 0.0
        %v2632 = vmax.f32 %v2502, 0.0
        %v2633 = vmax.f32 %v2507, 0.0
        %v2634 = vmax.f32 %v2512, 0.0
        %v2635 = vmax.f32 %v2517, 0.0
        %v2636 = vmax.f32 %v2522, 0.0
        %v2637 = vmax.f32 %v2527, 0.0
        %v2638 = vmax.f32 %v2532, 0.0
        %v2639 = vmax.f32 %v2537, 0.0
        %v2640 = vmax.f32 %v2542, 0.0
        %v2641 = vmax.f32 %v2547, 0.0
        %v2642 = vmax.f32 %v2552, 0.0
        %v2643 = vmax.f32 %v2557, 0.0
        %v2644 = vmax.f32 %v2562, 0.0
        %v2645 = vmax.f32 %v2567, 0.0
        %v2646 = vmax.f32 %v2572, 0.0
        %v2647 = vmax.f32 %v2577, 0.0
        %v2648 = vmax.f32 %v2582, 0.0
        %v2649 = vmax.f32 %v2587, 0.0
        %v2650 = vmax.f32 %v2592, 0.0
        %v2651 = vmax.f32 %v2597, 0.0
        %v2652 = vmax.f32 %v2602, 0.0
        %v2653 = vmax.f32 %v2607, 0.0
        %v2654 = vmax.f32 %v2612, 0.0
        %v2655 = vmax.f32 %v2617, 0.0
        %v2656 = vlaneseq
        %v2657 = vshrl.u32 %v2656, 7
        %v2658 = vadd.s32 %v2657, 8
        %v2659 = vadd.s32 %v2657, 16
        %v2660 = vadd.s32 %v2657, 24
        %v2661 = vadd.s32 %v2657, 32
        %v2662 = vadd.s32 %v2657, 40
        %v2663 = vadd.s32 %v2657, 48
        %v2664 = vadd.s32 %v2657, 56
        %v2665 = vadd.s32 %v2657, 64
        %v2666 = vadd.s32 %v2657, 72
        %v2667 = vadd.s32 %v2657, 80
        %v2668 = vadd.s32 %v2657, 88
        %v2669 = vadd.s32 %v2657, 96
        %v2670 = vadd.s32 %v2657, 104
        %v2671 = vadd.s32 %v2657, 112
        %v2672 = vadd.s32 %v2657, 120
        %v2673 = vadd.s32 %v2657, 128
        %v2674 = vadd.s32 %v2657, 136
        %v2675 = vadd.s32 %v2657, 144
        %v2676 = vadd.s32 %v2657, 152
        %v2677 = vadd.s32 %v2657, 160
        %v2678 = vadd.s32 %v2657, 168
        %v2679 = vadd.s32 %v2657, 176
        %v2680 = vadd.s32 %v2657, 184
        %v2681 = vadd.s32 %v2657, 192
        %v2682 = vadd.s32 %v2657, 200
        %v2683 = vadd.s32 %v2657, 208
        %v2684 = vadd.s32 %v2657, 216
        %v2685 = vadd.s32 %v2657, 224
        %v2686 = vadd.s32 %v2657, 232
        %v2687 = vadd.s32 %v2657, 240
        %v2688 = vadd.s32 %v2657, 248
        %v2689 = vadd.s32 %v2657, 256
        %v2690 = vadd.s32 %v2657, 264
        %v2691 = vadd.s32 %v2657, 272
        %v2692 = vadd.s32 %v2657, 280
        %vm2693 = vcmp.lt.s32.totalorder %v2657, 0
        %v2694 = vsub.s32 0, %v2657
        %v2695 = vsel %vm2693, %v2694, %v2657
        %v2696 = vmul.u32.u64.compose %v2695, 3817748708
        %v2697 = vextract.low.u32 %v2696
        %v2698 = vextract.high.u32 %v2696
        %v2699 = vshrl.u32 %v2698, 4
        %v2700 = vmul.u32 %v2699, 18
        %v2701 = vsub.s32 %v2695, %v2700
        %v2702 = vsub.s32 0, %v2701
        %v2703 = vsel %vm2693, %v2702, %v2701
        %vm2704 = vcmp.lt.s32.totalorder %v2658, 0
        %v2705 = vsub.s32 0, %v2658
        %v2706 = vsel %vm2704, %v2705, %v2658
        %v2707 = vmul.u32.u64.compose %v2706, 3817748708
        %v2708 = vextract.low.u32 %v2707
        %v2709 = vextract.high.u32 %v2707
        %v2710 = vshrl.u32 %v2709, 4
        %v2711 = vmul.u32 %v2710, 18
        %v2712 = vsub.s32 %v2706, %v2711
        %v2713 = vsub.s32 0, %v2712
        %v2714 = vsel %vm2704, %v2713, %v2712
        %vm2715 = vcmp.lt.s32.totalorder %v2659, 0
        %v2716 = vsub.s32 0, %v2659
        %v2717 = vsel %vm2715, %v2716, %v2659
        %v2718 = vmul.u32.u64.compose %v2717, 3817748708
        %v2719 = vextract.low.u32 %v2718
        %v2720 = vextract.high.u32 %v2718
        %v2721 = vshrl.u32 %v2720, 4
        %v2722 = vmul.u32 %v2721, 18
        %v2723 = vsub.s32 %v2717, %v2722
        %v2724 = vsub.s32 0, %v2723
        %v2725 = vsel %vm2715, %v2724, %v2723
        %vm2726 = vcmp.lt.s32.totalorder %v2660, 0
        %v2727 = vsub.s32 0, %v2660
        %v2728 = vsel %vm2726, %v2727, %v2660
        %v2729 = vmul.u32.u64.compose %v2728, 3817748708
        %v2730 = vextract.low.u32 %v2729
        %v2731 = vextract.high.u32 %v2729
        %v2732 = vshrl.u32 %v2731, 4
        %v2733 = vmul.u32 %v2732, 18
        %v2734 = vsub.s32 %v2728, %v2733
        %v2735 = vsub.s32 0, %v2734
        %v2736 = vsel %vm2726, %v2735, %v2734
        %vm2737 = vcmp.lt.s32.totalorder %v2661, 0
        %v2738 = vsub.s32 0, %v2661
        %v2739 = vsel %vm2737, %v2738, %v2661
        %v2740 = vmul.u32.u64.compose %v2739, 3817748708
        %v2741 = vextract.low.u32 %v2740
        %v2742 = vextract.high.u32 %v2740
        %v2743 = vshrl.u32 %v2742, 4
        %v2744 = vmul.u32 %v2743, 18
        %v2745 = vsub.s32 %v2739, %v2744
        %v2746 = vsub.s32 0, %v2745
        %v2747 = vsel %vm2737, %v2746, %v2745
        %vm2748 = vcmp.lt.s32.totalorder %v2662, 0
        %v2749 = vsub.s32 0, %v2662
        %v2750 = vsel %vm2748, %v2749, %v2662
        %v2751 = vmul.u32.u64.compose %v2750, 3817748708
        %v2752 = vextract.low.u32 %v2751
        %v2753 = vextract.high.u32 %v2751
        %v2754 = vshrl.u32 %v2753, 4
        %v2755 = vmul.u32 %v2754, 18
        %v2756 = vsub.s32 %v2750, %v2755
        %v2757 = vsub.s32 0, %v2756
        %v2758 = vsel %vm2748, %v2757, %v2756
        %vm2759 = vcmp.lt.s32.totalorder %v2663, 0
        %v2760 = vsub.s32 0, %v2663
        %v2761 = vsel %vm2759, %v2760, %v2663
        %v2762 = vmul.u32.u64.compose %v2761, 3817748708
        %v2763 = vextract.low.u32 %v2762
        %v2764 = vextract.high.u32 %v2762
        %v2765 = vshrl.u32 %v2764, 4
        %v2766 = vmul.u32 %v2765, 18
        %v2767 = vsub.s32 %v2761, %v2766
        %v2768 = vsub.s32 0, %v2767
        %v2769 = vsel %vm2759, %v2768, %v2767
        %vm2770 = vcmp.lt.s32.totalorder %v2664, 0
        %v2771 = vsub.s32 0, %v2664
        %v2772 = vsel %vm2770, %v2771, %v2664
        %v2773 = vmul.u32.u64.compose %v2772, 3817748708
        %v2774 = vextract.low.u32 %v2773
        %v2775 = vextract.high.u32 %v2773
        %v2776 = vshrl.u32 %v2775, 4
        %v2777 = vmul.u32 %v2776, 18
        %v2778 = vsub.s32 %v2772, %v2777
        %v2779 = vsub.s32 0, %v2778
        %v2780 = vsel %vm2770, %v2779, %v2778
        %vm2781 = vcmp.lt.s32.totalorder %v2665, 0
        %v2782 = vsub.s32 0, %v2665
        %v2783 = vsel %vm2781, %v2782, %v2665
        %v2784 = vmul.u32.u64.compose %v2783, 3817748708
        %v2785 = vextract.low.u32 %v2784
        %v2786 = vextract.high.u32 %v2784
        %v2787 = vshrl.u32 %v2786, 4
        %v2788 = vmul.u32 %v2787, 18
        %v2789 = vsub.s32 %v2783, %v2788
        %v2790 = vsub.s32 0, %v2789
        %v2791 = vsel %vm2781, %v2790, %v2789
        %vm2792 = vcmp.lt.s32.totalorder %v2666, 0
        %v2793 = vsub.s32 0, %v2666
        %v2794 = vsel %vm2792, %v2793, %v2666
        %v2795 = vmul.u32.u64.compose %v2794, 3817748708
        %v2796 = vextract.low.u32 %v2795
        %v2797 = vextract.high.u32 %v2795
        %v2798 = vshrl.u32 %v2797, 4
        %v2799 = vmul.u32 %v2798, 18
        %v2800 = vsub.s32 %v2794, %v2799
        %v2801 = vsub.s32 0, %v2800
        %v2802 = vsel %vm2792, %v2801, %v2800
        %vm2803 = vcmp.lt.s32.totalorder %v2667, 0
        %v2804 = vsub.s32 0, %v2667
        %v2805 = vsel %vm2803, %v2804, %v2667
        %v2806 = vmul.u32.u64.compose %v2805, 3817748708
        %v2807 = vextract.low.u32 %v2806
        %v2808 = vextract.high.u32 %v2806
        %v2809 = vshrl.u32 %v2808, 4
        %v2810 = vmul.u32 %v2809, 18
        %v2811 = vsub.s32 %v2805, %v2810
        %v2812 = vsub.s32 0, %v2811
        %v2813 = vsel %vm2803, %v2812, %v2811
        %vm2814 = vcmp.lt.s32.totalorder %v2668, 0
        %v2815 = vsub.s32 0, %v2668
        %v2816 = vsel %vm2814, %v2815, %v2668
        %v2817 = vmul.u32.u64.compose %v2816, 3817748708
        %v2818 = vextract.low.u32 %v2817
        %v2819 = vextract.high.u32 %v2817
        %v2820 = vshrl.u32 %v2819, 4
        %v2821 = vmul.u32 %v2820, 18
        %v2822 = vsub.s32 %v2816, %v2821
        %v2823 = vsub.s32 0, %v2822
        %v2824 = vsel %vm2814, %v2823, %v2822
        %vm2825 = vcmp.lt.s32.totalorder %v2669, 0
        %v2826 = vsub.s32 0, %v2669
        %v2827 = vsel %vm2825, %v2826, %v2669
        %v2828 = vmul.u32.u64.compose %v2827, 3817748708
        %v2829 = vextract.low.u32 %v2828
        %v2830 = vextract.high.u32 %v2828
        %v2831 = vshrl.u32 %v2830, 4
        %v2832 = vmul.u32 %v2831, 18
        %v2833 = vsub.s32 %v2827, %v2832
        %v2834 = vsub.s32 0, %v2833
        %v2835 = vsel %vm2825, %v2834, %v2833
        %vm2836 = vcmp.lt.s32.totalorder %v2670, 0
        %v2837 = vsub.s32 0, %v2670
        %v2838 = vsel %vm2836, %v2837, %v2670
        %v2839 = vmul.u32.u64.compose %v2838, 3817748708
        %v2840 = vextract.low.u32 %v2839
        %v2841 = vextract.high.u32 %v2839
        %v2842 = vshrl.u32 %v2841, 4
        %v2843 = vmul.u32 %v2842, 18
        %v2844 = vsub.s32 %v2838, %v2843
        %v2845 = vsub.s32 0, %v2844
        %v2846 = vsel %vm2836, %v2845, %v2844
        %vm2847 = vcmp.lt.s32.totalorder %v2671, 0
        %v2848 = vsub.s32 0, %v2671
        %v2849 = vsel %vm2847, %v2848, %v2671
        %v2850 = vmul.u32.u64.compose %v2849, 3817748708
        %v2851 = vextract.low.u32 %v2850
        %v2852 = vextract.high.u32 %v2850
        %v2853 = vshrl.u32 %v2852, 4
        %v2854 = vmul.u32 %v2853, 18
        %v2855 = vsub.s32 %v2849, %v2854
        %v2856 = vsub.s32 0, %v2855
        %v2857 = vsel %vm2847, %v2856, %v2855
        %vm2858 = vcmp.lt.s32.totalorder %v2672, 0
        %v2859 = vsub.s32 0, %v2672
        %v2860 = vsel %vm2858, %v2859, %v2672
        %v2861 = vmul.u32.u64.compose %v2860, 3817748708
        %v2862 = vextract.low.u32 %v2861
        %v2863 = vextract.high.u32 %v2861
        %v2864 = vshrl.u32 %v2863, 4
        %v2865 = vmul.u32 %v2864, 18
        %v2866 = vsub.s32 %v2860, %v2865
        %v2867 = vsub.s32 0, %v2866
        %v2868 = vsel %vm2858, %v2867, %v2866
        %vm2869 = vcmp.lt.s32.totalorder %v2673, 0
        %v2870 = vsub.s32 0, %v2673
        %v2871 = vsel %vm2869, %v2870, %v2673
        %v2872 = vmul.u32.u64.compose %v2871, 3817748708
        %v2873 = vextract.low.u32 %v2872
        %v2874 = vextract.high.u32 %v2872
        %v2875 = vshrl.u32 %v2874, 4
        %v2876 = vmul.u32 %v2875, 18
        %v2877 = vsub.s32 %v2871, %v2876
        %v2878 = vsub.s32 0, %v2877
        %v2879 = vsel %vm2869, %v2878, %v2877
        %vm2880 = vcmp.lt.s32.totalorder %v2674, 0
        %v2881 = vsub.s32 0, %v2674
        %v2882 = vsel %vm2880, %v2881, %v2674
        %v2883 = vmul.u32.u64.compose %v2882, 3817748708
        %v2884 = vextract.low.u32 %v2883
        %v2885 = vextract.high.u32 %v2883
        %v2886 = vshrl.u32 %v2885, 4
        %v2887 = vmul.u32 %v2886, 18
        %v2888 = vsub.s32 %v2882, %v2887
        %v2889 = vsub.s32 0, %v2888
        %v2890 = vsel %vm2880, %v2889, %v2888
        %vm2891 = vcmp.lt.s32.totalorder %v2675, 0
        %v2892 = vsub.s32 0, %v2675
        %v2893 = vsel %vm2891, %v2892, %v2675
        %v2894 = vmul.u32.u64.compose %v2893, 3817748708
        %v2895 = vextract.low.u32 %v2894
        %v2896 = vextract.high.u32 %v2894
        %v2897 = vshrl.u32 %v2896, 4
        %v2898 = vmul.u32 %v2897, 18
        %v2899 = vsub.s32 %v2893, %v2898
        %v2900 = vsub.s32 0, %v2899
        %v2901 = vsel %vm2891, %v2900, %v2899
        %vm2902 = vcmp.lt.s32.totalorder %v2676, 0
        %v2903 = vsub.s32 0, %v2676
        %v2904 = vsel %vm2902, %v2903, %v2676
        %v2905 = vmul.u32.u64.compose %v2904, 3817748708
        %v2906 = vextract.low.u32 %v2905
        %v2907 = vextract.high.u32 %v2905
        %v2908 = vshrl.u32 %v2907, 4
        %v2909 = vmul.u32 %v2908, 18
        %v2910 = vsub.s32 %v2904, %v2909
        %v2911 = vsub.s32 0, %v2910
        %v2912 = vsel %vm2902, %v2911, %v2910
        %vm2913 = vcmp.lt.s32.totalorder %v2677, 0
        %v2914 = vsub.s32 0, %v2677
        %v2915 = vsel %vm2913, %v2914, %v2677
        %v2916 = vmul.u32.u64.compose %v2915, 3817748708
        %v2917 = vextract.low.u32 %v2916
        %v2918 = vextract.high.u32 %v2916
        %v2919 = vshrl.u32 %v2918, 4
        %v2920 = vmul.u32 %v2919, 18
        %v2921 = vsub.s32 %v2915, %v2920
        %v2922 = vsub.s32 0, %v2921
        %v2923 = vsel %vm2913, %v2922, %v2921
        %vm2924 = vcmp.lt.s32.totalorder %v2678, 0
        %v2925 = vsub.s32 0, %v2678
        %v2926 = vsel %vm2924, %v2925, %v2678
        %v2927 = vmul.u32.u64.compose %v2926, 3817748708
        %v2928 = vextract.low.u32 %v2927
        %v2929 = vextract.high.u32 %v2927
        %v2930 = vshrl.u32 %v2929, 4
        %v2931 = vmul.u32 %v2930, 18
        %v2932 = vsub.s32 %v2926, %v2931
        %v2933 = vsub.s32 0, %v2932
        %v2934 = vsel %vm2924, %v2933, %v2932
        %vm2935 = vcmp.lt.s32.totalorder %v2679, 0
        %v2936 = vsub.s32 0, %v2679
        %v2937 = vsel %vm2935, %v2936, %v2679
        %v2938 = vmul.u32.u64.compose %v2937, 3817748708
        %v2939 = vextract.low.u32 %v2938
        %v2940 = vextract.high.u32 %v2938
        %v2941 = vshrl.u32 %v2940, 4
        %v2942 = vmul.u32 %v2941, 18
        %v2943 = vsub.s32 %v2937, %v2942
        %v2944 = vsub.s32 0, %v2943
        %v2945 = vsel %vm2935, %v2944, %v2943
        %vm2946 = vcmp.lt.s32.totalorder %v2680, 0
        %v2947 = vsub.s32 0, %v2680
        %v2948 = vsel %vm2946, %v2947, %v2680
        %v2949 = vmul.u32.u64.compose %v2948, 3817748708
        %v2950 = vextract.low.u32 %v2949
        %v2951 = vextract.high.u32 %v2949
        %v2952 = vshrl.u32 %v2951, 4
        %v2953 = vmul.u32 %v2952, 18
        %v2954 = vsub.s32 %v2948, %v2953
        %v2955 = vsub.s32 0, %v2954
        %v2956 = vsel %vm2946, %v2955, %v2954
        %vm2957 = vcmp.lt.s32.totalorder %v2681, 0
        %v2958 = vsub.s32 0, %v2681
        %v2959 = vsel %vm2957, %v2958, %v2681
        %v2960 = vmul.u32.u64.compose %v2959, 3817748708
        %v2961 = vextract.low.u32 %v2960
        %v2962 = vextract.high.u32 %v2960
        %v2963 = vshrl.u32 %v2962, 4
        %v2964 = vmul.u32 %v2963, 18
        %v2965 = vsub.s32 %v2959, %v2964
        %v2966 = vsub.s32 0, %v2965
        %v2967 = vsel %vm2957, %v2966, %v2965
        %vm2968 = vcmp.lt.s32.totalorder %v2682, 0
        %v2969 = vsub.s32 0, %v2682
        %v2970 = vsel %vm2968, %v2969, %v2682
        %v2971 = vmul.u32.u64.compose %v2970, 3817748708
        %v2972 = vextract.low.u32 %v2971
        %v2973 = vextract.high.u32 %v2971
        %v2974 = vshrl.u32 %v2973, 4
        %v2975 = vmul.u32 %v2974, 18
        %v2976 = vsub.s32 %v2970, %v2975
        %v2977 = vsub.s32 0, %v2976
        %v2978 = vsel %vm2968, %v2977, %v2976
        %vm2979 = vcmp.lt.s32.totalorder %v2683, 0
        %v2980 = vsub.s32 0, %v2683
        %v2981 = vsel %vm2979, %v2980, %v2683
        %v2982 = vmul.u32.u64.compose %v2981, 3817748708
        %v2983 = vextract.low.u32 %v2982
        %v2984 = vextract.high.u32 %v2982
        %v2985 = vshrl.u32 %v2984, 4
        %v2986 = vmul.u32 %v2985, 18
        %v2987 = vsub.s32 %v2981, %v2986
        %v2988 = vsub.s32 0, %v2987
        %v2989 = vsel %vm2979, %v2988, %v2987
        %vm2990 = vcmp.lt.s32.totalorder %v2684, 0
        %v2991 = vsub.s32 0, %v2684
        %v2992 = vsel %vm2990, %v2991, %v2684
        %v2993 = vmul.u32.u64.compose %v2992, 3817748708
        %v2994 = vextract.low.u32 %v2993
        %v2995 = vextract.high.u32 %v2993
        %v2996 = vshrl.u32 %v2995, 4
        %v2997 = vmul.u32 %v2996, 18
        %v2998 = vsub.s32 %v2992, %v2997
        %v2999 = vsub.s32 0, %v2998
        %v3000 = vsel %vm2990, %v2999, %v2998
        %vm3001 = vcmp.lt.s32.totalorder %v2685, 0
        %v3002 = vsub.s32 0, %v2685
        %v3003 = vsel %vm3001, %v3002, %v2685
        %v3004 = vmul.u32.u64.compose %v3003, 3817748708
        %v3005 = vextract.low.u32 %v3004
        %v3006 = vextract.high.u32 %v3004
        %v3007 = vshrl.u32 %v3006, 4
        %v3008 = vmul.u32 %v3007, 18
        %v3009 = vsub.s32 %v3003, %v3008
        %v3010 = vsub.s32 0, %v3009
        %v3011 = vsel %vm3001, %v3010, %v3009
        %vm3012 = vcmp.lt.s32.totalorder %v2686, 0
        %v3013 = vsub.s32 0, %v2686
        %v3014 = vsel %vm3012, %v3013, %v2686
        %v3015 = vmul.u32.u64.compose %v3014, 3817748708
        %v3016 = vextract.low.u32 %v3015
        %v3017 = vextract.high.u32 %v3015
        %v3018 = vshrl.u32 %v3017, 4
        %v3019 = vmul.u32 %v3018, 18
        %v3020 = vsub.s32 %v3014, %v3019
        %v3021 = vsub.s32 0, %v3020
        %v3022 = vsel %vm3012, %v3021, %v3020
        %vm3023 = vcmp.lt.s32.totalorder %v2687, 0
        %v3024 = vsub.s32 0, %v2687
        %v3025 = vsel %vm3023, %v3024, %v2687
        %v3026 = vmul.u32.u64.compose %v3025, 3817748708
        %v3027 = vextract.low.u32 %v3026
        %v3028 = vextract.high.u32 %v3026
        %v3029 = vshrl.u32 %v3028, 4
        %v3030 = vmul.u32 %v3029, 18
        %v3031 = vsub.s32 %v3025, %v3030
        %v3032 = vsub.s32 0, %v3031
        %v3033 = vsel %vm3023, %v3032, %v3031
        %vm3034 = vcmp.lt.s32.totalorder %v2688, 0
        %v3035 = vsub.s32 0, %v2688
        %v3036 = vsel %vm3034, %v3035, %v2688
        %v3037 = vmul.u32.u64.compose %v3036, 3817748708
        %v3038 = vextract.low.u32 %v3037
        %v3039 = vextract.high.u32 %v3037
        %v3040 = vshrl.u32 %v3039, 4
        %v3041 = vmul.u32 %v3040, 18
        %v3042 = vsub.s32 %v3036, %v3041
        %v3043 = vsub.s32 0, %v3042
        %v3044 = vsel %vm3034, %v3043, %v3042
        %vm3045 = vcmp.lt.s32.totalorder %v2689, 0
        %v3046 = vsub.s32 0, %v2689
        %v3047 = vsel %vm3045, %v3046, %v2689
        %v3048 = vmul.u32.u64.compose %v3047, 3817748708
        %v3049 = vextract.low.u32 %v3048
        %v3050 = vextract.high.u32 %v3048
        %v3051 = vshrl.u32 %v3050, 4
        %v3052 = vmul.u32 %v3051, 18
        %v3053 = vsub.s32 %v3047, %v3052
        %v3054 = vsub.s32 0, %v3053
        %v3055 = vsel %vm3045, %v3054, %v3053
        %vm3056 = vcmp.lt.s32.totalorder %v2690, 0
        %v3057 = vsub.s32 0, %v2690
        %v3058 = vsel %vm3056, %v3057, %v2690
        %v3059 = vmul.u32.u64.compose %v3058, 3817748708
        %v3060 = vextract.low.u32 %v3059
        %v3061 = vextract.high.u32 %v3059
        %v3062 = vshrl.u32 %v3061, 4
        %v3063 = vmul.u32 %v3062, 18
        %v3064 = vsub.s32 %v3058, %v3063
        %v3065 = vsub.s32 0, %v3064
        %v3066 = vsel %vm3056, %v3065, %v3064
        %vm3067 = vcmp.lt.s32.totalorder %v2691, 0
        %v3068 = vsub.s32 0, %v2691
        %v3069 = vsel %vm3067, %v3068, %v2691
        %v3070 = vmul.u32.u64.compose %v3069, 3817748708
        %v3071 = vextract.low.u32 %v3070
        %v3072 = vextract.high.u32 %v3070
        %v3073 = vshrl.u32 %v3072, 4
        %v3074 = vmul.u32 %v3073, 18
        %v3075 = vsub.s32 %v3069, %v3074
        %v3076 = vsub.s32 0, %v3075
        %v3077 = vsel %vm3067, %v3076, %v3075
        %vm3078 = vcmp.lt.s32.totalorder %v2692, 0
        %v3079 = vsub.s32 0, %v2692
        %v3080 = vsel %vm3078, %v3079, %v2692
        %v3081 = vmul.u32.u64.compose %v3080, 3817748708
        %v3082 = vextract.low.u32 %v3081
        %v3083 = vextract.high.u32 %v3081
        %v3084 = vshrl.u32 %v3083, 4
        %v3085 = vmul.u32 %v3084, 18
        %v3086 = vsub.s32 %v3080, %v3085
        %v3087 = vsub.s32 0, %v3086
        %v3088 = vsel %vm3078, %v3087, %v3086
        %vm3089 = vcmp.ne.s32.totalorder %v2703, 0
        %vm3090 = vcmp.ne.s32.totalorder %v2714, 0
        %vm3091 = vcmp.ne.s32.totalorder %v2725, 0
        %vm3092 = vcmp.ne.s32.totalorder %v2736, 0
        %vm3093 = vcmp.ne.s32.totalorder %v2747, 0
        %vm3094 = vcmp.ne.s32.totalorder %v2758, 0
        %vm3095 = vcmp.ne.s32.totalorder %v2769, 0
        %vm3096 = vcmp.ne.s32.totalorder %v2780, 0
        %vm3097 = vcmp.ne.s32.totalorder %v2791, 0
        %vm3098 = vcmp.ne.s32.totalorder %v2802, 0
        %vm3099 = vcmp.ne.s32.totalorder %v2813, 0
        %vm3100 = vcmp.ne.s32.totalorder %v2824, 0
        %vm3101 = vcmp.ne.s32.totalorder %v2835, 0
        %vm3102 = vcmp.ne.s32.totalorder %v2846, 0
        %vm3103 = vcmp.ne.s32.totalorder %v2857, 0
        %vm3104 = vcmp.ne.s32.totalorder %v2868, 0
        %vm3105 = vcmp.ne.s32.totalorder %v2879, 0
        %vm3106 = vcmp.ne.s32.totalorder %v2890, 0
        %vm3107 = vcmp.ne.s32.totalorder %v2901, 0
        %vm3108 = vcmp.ne.s32.totalorder %v2912, 0
        %vm3109 = vcmp.ne.s32.totalorder %v2923, 0
        %vm3110 = vcmp.ne.s32.totalorder %v2934, 0
        %vm3111 = vcmp.ne.s32.totalorder %v2945, 0
        %vm3112 = vcmp.ne.s32.totalorder %v2956, 0
        %vm3113 = vcmp.ne.s32.totalorder %v2967, 0
        %vm3114 = vcmp.ne.s32.totalorder %v2978, 0
        %vm3115 = vcmp.ne.s32.totalorder %v2989, 0
        %vm3116 = vcmp.ne.s32.totalorder %v3000, 0
        %vm3117 = vcmp.ne.s32.totalorder %v3011, 0
        %vm3118 = vcmp.ne.s32.totalorder %v3022, 0
        %vm3119 = vcmp.ne.s32.totalorder %v3033, 0
        %vm3120 = vcmp.ne.s32.totalorder %v3044, 0
        %vm3121 = vcmp.ne.s32.totalorder %v3055, 0
        %vm3122 = vcmp.ne.s32.totalorder %v3066, 0
        %vm3123 = vcmp.ne.s32.totalorder %v3077, 0
        %vm3124 = vcmp.ne.s32.totalorder %v3088, 0
        %vm3125 = vcmp.lt.s32.totalorder %v2703, 0
        %vm3126 = vcmp.lt.s32.totalorder %v2714, 0
        %vm3127 = vcmp.lt.s32.totalorder %v2725, 0
        %vm3128 = vcmp.lt.s32.totalorder %v2736, 0
        %vm3129 = vcmp.lt.s32.totalorder %v2747, 0
        %vm3130 = vcmp.lt.s32.totalorder %v2758, 0
        %vm3131 = vcmp.lt.s32.totalorder %v2769, 0
        %vm3132 = vcmp.lt.s32.totalorder %v2780, 0
        %vm3133 = vcmp.lt.s32.totalorder %v2791, 0
        %vm3134 = vcmp.lt.s32.totalorder %v2802, 0
        %vm3135 = vcmp.lt.s32.totalorder %v2813, 0
        %vm3136 = vcmp.lt.s32.totalorder %v2824, 0
        %vm3137 = vcmp.lt.s32.totalorder %v2835, 0
        %vm3138 = vcmp.lt.s32.totalorder %v2846, 0
        %vm3139 = vcmp.lt.s32.totalorder %v2857, 0
        %vm3140 = vcmp.lt.s32.totalorder %v2868, 0
        %vm3141 = vcmp.lt.s32.totalorder %v2879, 0
        %vm3142 = vcmp.lt.s32.totalorder %v2890, 0
        %vm3143 = vcmp.lt.s32.totalorder %v2901, 0
        %vm3144 = vcmp.lt.s32.totalorder %v2912, 0
        %vm3145 = vcmp.lt.s32.totalorder %v2923, 0
        %vm3146 = vcmp.lt.s32.totalorder %v2934, 0
        %vm3147 = vcmp.lt.s32.totalorder %v2945, 0
        %vm3148 = vcmp.lt.s32.totalorder %v2956, 0
        %vm3149 = vcmp.lt.s32.totalorder %v2967, 0
        %vm3150 = vcmp.lt.s32.totalorder %v2978, 0
        %vm3151 = vcmp.lt.s32.totalorder %v2989, 0
        %vm3152 = vcmp.lt.s32.totalorder %v3000, 0
        %vm3153 = vcmp.lt.s32.totalorder %v3011, 0
        %vm3154 = vcmp.lt.s32.totalorder %v3022, 0
        %vm3155 = vcmp.lt.s32.totalorder %v3033, 0
        %vm3156 = vcmp.lt.s32.totalorder %v3044, 0
        %vm3157 = vcmp.lt.s32.totalorder %v3055, 0
        %vm3158 = vcmp.lt.s32.totalorder %v3066, 0
        %vm3159 = vcmp.lt.s32.totalorder %v3077, 0
        %vm3160 = vcmp.lt.s32.totalorder %v3088, 0
        %vm3161 = vmand %vm3125, %vm3089
        %vm3162 = vmand %vm3126, %vm3090
        %vm3163 = vmand %vm3127, %vm3091
        %vm3164 = vmand %vm3128, %vm3092
        %vm3165 = vmand %vm3129, %vm3093
        %vm3166 = vmand %vm3130, %vm3094
        %vm3167 = vmand %vm3131, %vm3095
        %vm3168 = vmand %vm3132, %vm3096
        %vm3169 = vmand %vm3133, %vm3097
        %vm3170 = vmand %vm3134, %vm3098
        %vm3171 = vmand %vm3135, %vm3099
        %vm3172 = vmand %vm3136, %vm3100
        %vm3173 = vmand %vm3137, %vm3101
        %vm3174 = vmand %vm3138, %vm3102
        %vm3175 = vmand %vm3139, %vm3103
        %vm3176 = vmand %vm3140, %vm3104
        %vm3177 = vmand %vm3141, %vm3105
        %vm3178 = vmand %vm3142, %vm3106
        %vm3179 = vmand %vm3143, %vm3107
        %vm3180 = vmand %vm3144, %vm3108
        %vm3181 = vmand %vm3145, %vm3109
        %vm3182 = vmand %vm3146, %vm3110
        %vm3183 = vmand %vm3147, %vm3111
        %vm3184 = vmand %vm3148, %vm3112
        %vm3185 = vmand %vm3149, %vm3113
        %vm3186 = vmand %vm3150, %vm3114
        %vm3187 = vmand %vm3151, %vm3115
        %vm3188 = vmand %vm3152, %vm3116
        %vm3189 = vmand %vm3153, %vm3117
        %vm3190 = vmand %vm3154, %vm3118
        %vm3191 = vmand %vm3155, %vm3119
        %vm3192 = vmand %vm3156, %vm3120
        %vm3193 = vmand %vm3157, %vm3121
        %vm3194 = vmand %vm3158, %vm3122
        %vm3195 = vmand %vm3159, %vm3123
        %vm3196 = vmand %vm3160, %vm3124
        %v3197 = vadd.s32 %v2703, 18
        %v3198 = vadd.s32 %v2714, 18
        %v3199 = vadd.s32 %v2725, 18
        %v3200 = vadd.s32 %v2736, 18
        %v3201 = vadd.s32 %v2747, 18
        %v3202 = vadd.s32 %v2758, 18
        %v3203 = vadd.s32 %v2769, 18
        %v3204 = vadd.s32 %v2780, 18
        %v3205 = vadd.s32 %v2791, 18
        %v3206 = vadd.s32 %v2802, 18
        %v3207 = vadd.s32 %v2813, 18
        %v3208 = vadd.s32 %v2824, 18
        %v3209 = vadd.s32 %v2835, 18
        %v3210 = vadd.s32 %v2846, 18
        %v3211 = vadd.s32 %v2857, 18
        %v3212 = vadd.s32 %v2868, 18
        %v3213 = vadd.s32 %v2879, 18
        %v3214 = vadd.s32 %v2890, 18
        %v3215 = vadd.s32 %v2901, 18
        %v3216 = vadd.s32 %v2912, 18
        %v3217 = vadd.s32 %v2923, 18
        %v3218 = vadd.s32 %v2934, 18
        %v3219 = vadd.s32 %v2945, 18
        %v3220 = vadd.s32 %v2956, 18
        %v3221 = vadd.s32 %v2967, 18
        %v3222 = vadd.s32 %v2978, 18
        %v3223 = vadd.s32 %v2989, 18
        %v3224 = vadd.s32 %v3000, 18
        %v3225 = vadd.s32 %v3011, 18
        %v3226 = vadd.s32 %v3022, 18
        %v3227 = vadd.s32 %v3033, 18
        %v3228 = vadd.s32 %v3044, 18
        %v3229 = vadd.s32 %v3055, 18
        %v3230 = vadd.s32 %v3066, 18
        %v3231 = vadd.s32 %v3077, 18
        %v3232 = vadd.s32 %v3088, 18
        %v3233 = vsel %vm3161, %v3197, %v2703
        %v3234 = vsel %vm3162, %v3198, %v2714
        %v3235 = vsel %vm3163, %v3199, %v2725
        %v3236 = vsel %vm3164, %v3200, %v2736
        %v3237 = vsel %vm3165, %v3201, %v2747
        %v3238 = vsel %vm3166, %v3202, %v2758
        %v3239 = vsel %vm3167, %v3203, %v2769
        %v3240 = vsel %vm3168, %v3204, %v2780
        %v3241 = vsel %vm3169, %v3205, %v2791
        %v3242 = vsel %vm3170, %v3206, %v2802
        %v3243 = vsel %vm3171, %v3207, %v2813
        %v3244 = vsel %vm3172, %v3208, %v2824
        %v3245 = vsel %vm3173, %v3209, %v2835
        %v3246 = vsel %vm3174, %v3210, %v2846
        %v3247 = vsel %vm3175, %v3211, %v2857
        %v3248 = vsel %vm3176, %v3212, %v2868
        %v3249 = vsel %vm3177, %v3213, %v2879
        %v3250 = vsel %vm3178, %v3214, %v2890
        %v3251 = vsel %vm3179, %v3215, %v2901
        %v3252 = vsel %vm3180, %v3216, %v2912
        %v3253 = vsel %vm3181, %v3217, %v2923
        %v3254 = vsel %vm3182, %v3218, %v2934
        %v3255 = vsel %vm3183, %v3219, %v2945
        %v3256 = vsel %vm3184, %v3220, %v2956
        %v3257 = vsel %vm3185, %v3221, %v2967
        %v3258 = vsel %vm3186, %v3222, %v2978
        %v3259 = vsel %vm3187, %v3223, %v2989
        %v3260 = vsel %vm3188, %v3224, %v3000
        %v3261 = vsel %vm3189, %v3225, %v3011
        %v3262 = vsel %vm3190, %v3226, %v3022
        %v3263 = vsel %vm3191, %v3227, %v3033
        %v3264 = vsel %vm3192, %v3228, %v3044
        %v3265 = vsel %vm3193, %v3229, %v3055
        %v3266 = vsel %vm3194, %v3230, %v3066
        %v3267 = vsel %vm3195, %v3231, %v3077
        %v3268 = vsel %vm3196, %v3232, %v3088
        %vm3269 = vcmp.lt.s32.totalorder %v3233, 16
        %vm3270 = vcmp.lt.s32.totalorder %v3234, 16
        %vm3271 = vcmp.lt.s32.totalorder %v3235, 16
        %vm3272 = vcmp.lt.s32.totalorder %v3236, 16
        %vm3273 = vcmp.lt.s32.totalorder %v3237, 16
        %vm3274 = vcmp.lt.s32.totalorder %v3238, 16
        %vm3275 = vcmp.lt.s32.totalorder %v3239, 16
        %vm3276 = vcmp.lt.s32.totalorder %v3240, 16
        %vm3277 = vcmp.lt.s32.totalorder %v3241, 16
        %vm3278 = vcmp.lt.s32.totalorder %v3242, 16
        %vm3279 = vcmp.lt.s32.totalorder %v3243, 16
        %vm3280 = vcmp.lt.s32.totalorder %v3244, 16
        %vm3281 = vcmp.lt.s32.totalorder %v3245, 16
        %vm3282 = vcmp.lt.s32.totalorder %v3246, 16
        %vm3283 = vcmp.lt.s32.totalorder %v3247, 16
        %vm3284 = vcmp.lt.s32.totalorder %v3248, 16
        %vm3285 = vcmp.lt.s32.totalorder %v3249, 16
        %vm3286 = vcmp.lt.s32.totalorder %v3250, 16
        %vm3287 = vcmp.lt.s32.totalorder %v3251, 16
        %vm3288 = vcmp.lt.s32.totalorder %v3252, 16
        %vm3289 = vcmp.lt.s32.totalorder %v3253, 16
        %vm3290 = vcmp.lt.s32.totalorder %v3254, 16
        %vm3291 = vcmp.lt.s32.totalorder %v3255, 16
        %vm3292 = vcmp.lt.s32.totalorder %v3256, 16
        %vm3293 = vcmp.lt.s32.totalorder %v3257, 16
        %vm3294 = vcmp.lt.s32.totalorder %v3258, 16
        %vm3295 = vcmp.lt.s32.totalorder %v3259, 16
        %vm3296 = vcmp.lt.s32.totalorder %v3260, 16
        %vm3297 = vcmp.lt.s32.totalorder %v3261, 16
        %vm3298 = vcmp.lt.s32.totalorder %v3262, 16
        %vm3299 = vcmp.lt.s32.totalorder %v3263, 16
        %vm3300 = vcmp.lt.s32.totalorder %v3264, 16
        %vm3301 = vcmp.lt.s32.totalorder %v3265, 16
        %vm3302 = vcmp.lt.s32.totalorder %v3266, 16
        %vm3303 = vcmp.lt.s32.totalorder %v3267, 16
        %vm3304 = vcmp.lt.s32.totalorder %v3268, 16
        %v3305 = vsel %vm3269, 1, 0
        %v3306 = vsel %vm3270, 1, 0
        %v3307 = vsel %vm3271, 1, 0
        %v3308 = vsel %vm3272, 1, 0
        %v3309 = vsel %vm3273, 1, 0
        %v3310 = vsel %vm3274, 1, 0
        %v3311 = vsel %vm3275, 1, 0
        %v3312 = vsel %vm3276, 1, 0
        %v3313 = vsel %vm3277, 1, 0
        %v3314 = vsel %vm3278, 1, 0
        %v3315 = vsel %vm3279, 1, 0
        %v3316 = vsel %vm3280, 1, 0
        %v3317 = vsel %vm3281, 1, 0
        %v3318 = vsel %vm3282, 1, 0
        %v3319 = vsel %vm3283, 1, 0
        %v3320 = vsel %vm3284, 1, 0
        %v3321 = vsel %vm3285, 1, 0
        %v3322 = vsel %vm3286, 1, 0
        %v3323 = vsel %vm3287, 1, 0
        %v3324 = vsel %vm3288, 1, 0
        %v3325 = vsel %vm3289, 1, 0
        %v3326 = vsel %vm3290, 1, 0
        %v3327 = vsel %vm3291, 1, 0
        %v3328 = vsel %vm3292, 1, 0
        %v3329 = vsel %vm3293, 1, 0
        %v3330 = vsel %vm3294, 1, 0
        %v3331 = vsel %vm3295, 1, 0
        %v3332 = vsel %vm3296, 1, 0
        %v3333 = vsel %vm3297, 1, 0
        %v3334 = vsel %vm3298, 1, 0
        %v3335 = vsel %vm3299, 1, 0
        %v3336 = vsel %vm3300, 1, 0
        %v3337 = vsel %vm3301, 1, 0
        %v3338 = vsel %vm3302, 1, 0
        %v3339 = vsel %vm3303, 1, 0
        %v3340 = vsel %vm3304, 1, 0
        %vm3341 = vcmp.eq.s32.totalorder %v3305, 1
        %vm3342 = vcmp.eq.s32.totalorder %v3306, 1
        %vm3343 = vcmp.eq.s32.totalorder %v3307, 1
        %vm3344 = vcmp.eq.s32.totalorder %v3308, 1
        %vm3345 = vcmp.eq.s32.totalorder %v3309, 1
        %vm3346 = vcmp.eq.s32.totalorder %v3310, 1
        %vm3347 = vcmp.eq.s32.totalorder %v3311, 1
        %vm3348 = vcmp.eq.s32.totalorder %v3312, 1
        %vm3349 = vcmp.eq.s32.totalorder %v3313, 1
        %vm3350 = vcmp.eq.s32.totalorder %v3314, 1
        %vm3351 = vcmp.eq.s32.totalorder %v3315, 1
        %vm3352 = vcmp.eq.s32.totalorder %v3316, 1
        %vm3353 = vcmp.eq.s32.totalorder %v3317, 1
        %vm3354 = vcmp.eq.s32.totalorder %v3318, 1
        %vm3355 = vcmp.eq.s32.totalorder %v3319, 1
        %vm3356 = vcmp.eq.s32.totalorder %v3320, 1
        %vm3357 = vcmp.eq.s32.totalorder %v3321, 1
        %vm3358 = vcmp.eq.s32.totalorder %v3322, 1
        %vm3359 = vcmp.eq.s32.totalorder %v3323, 1
        %vm3360 = vcmp.eq.s32.totalorder %v3324, 1
        %vm3361 = vcmp.eq.s32.totalorder %v3325, 1
        %vm3362 = vcmp.eq.s32.totalorder %v3326, 1
        %vm3363 = vcmp.eq.s32.totalorder %v3327, 1
        %vm3364 = vcmp.eq.s32.totalorder %v3328, 1
        %vm3365 = vcmp.eq.s32.totalorder %v3329, 1
        %vm3366 = vcmp.eq.s32.totalorder %v3330, 1
        %vm3367 = vcmp.eq.s32.totalorder %v3331, 1
        %vm3368 = vcmp.eq.s32.totalorder %v3332, 1
        %vm3369 = vcmp.eq.s32.totalorder %v3333, 1
        %vm3370 = vcmp.eq.s32.totalorder %v3334, 1
        %vm3371 = vcmp.eq.s32.totalorder %v3335, 1
        %vm3372 = vcmp.eq.s32.totalorder %v3336, 1
        %vm3373 = vcmp.eq.s32.totalorder %v3337, 1
        %vm3374 = vcmp.eq.s32.totalorder %v3338, 1
        %vm3375 = vcmp.eq.s32.totalorder %v3339, 1
        %vm3376 = vcmp.eq.s32.totalorder %v3340, 1
        %v3377 = vsel %vm3341, %v2620, 0.0
        %v3378 = vsel %vm3342, %v2621, 0.0
        %v3379 = vsel %vm3343, %v2622, 0.0
        %v3380 = vsel %vm3344, %v2623, 0.0
        %v3381 = vsel %vm3345, %v2624, 0.0
        %v3382 = vsel %vm3346, %v2625, 0.0
        %v3383 = vsel %vm3347, %v2626, 0.0
        %v3384 = vsel %vm3348, %v2627, 0.0
        %v3385 = vsel %vm3349, %v2628, 0.0
        %v3386 = vsel %vm3350, %v2629, 0.0
        %v3387 = vsel %vm3351, %v2630, 0.0
        %v3388 = vsel %vm3352, %v2631, 0.0
        %v3389 = vsel %vm3353, %v2632, 0.0
        %v3390 = vsel %vm3354, %v2633, 0.0
        %v3391 = vsel %vm3355, %v2634, 0.0
        %v3392 = vsel %vm3356, %v2635, 0.0
        %v3393 = vsel %vm3357, %v2636, 0.0
        %v3394 = vsel %vm3358, %v2637, 0.0
        %v3395 = vsel %vm3359, %v2638, 0.0
        %v3396 = vsel %vm3360, %v2639, 0.0
        %v3397 = vsel %vm3361, %v2640, 0.0
        %v3398 = vsel %vm3362, %v2641, 0.0
        %v3399 = vsel %vm3363, %v2642, 0.0
        %v3400 = vsel %vm3364, %v2643, 0.0
        %v3401 = vsel %vm3365, %v2644, 0.0
        %v3402 = vsel %vm3366, %v2645, 0.0
        %v3403 = vsel %vm3367, %v2646, 0.0
        %v3404 = vsel %vm3368, %v2647, 0.0
        %v3405 = vsel %vm3369, %v2648, 0.0
        %v3406 = vsel %vm3370, %v2649, 0.0
        %v3407 = vsel %vm3371, %v2650, 0.0
        %v3408 = vsel %vm3372, %v2651, 0.0
        %v3409 = vsel %vm3373, %v2652, 0.0
        %v3410 = vsel %vm3374, %v2653, 0.0
        %v3411 = vsel %vm3375, %v2654, 0.0
        %v3412 = vsel %vm3376, %v2655, 0.0
        %3413 = vst [vmem:[#allocation3] sm:$0xff] 0.0
        %3414 = vst [vmem:[#allocation3 + $0x8] sm:$0xff] 0.0
        %3415 = vst [vmem:[#allocation3 + $0x10] sm:$0x7] 0.0
        %3416 = vst [vmem:[#allocation3 + $0x13] sm:$0xff] %v3377
        %3417 = vst [vmem:[#allocation3 + $0x1b] sm:$0xff] %v3378
        %3418 = vst [vmem:[#allocation3 + $0x23] sm:$0xff] %v3379
        %3419 = vst [vmem:[#allocation3 + $0x2b] sm:$0xff] %v3380
        %3420 = vst [vmem:[#allocation3 + $0x33] sm:$0xff] %v3381
        %3421 = vst [vmem:[#allocation3 + $0x3b] sm:$0xff] %v3382
        %3422 = vst [vmem:[#allocation3 + $0x43] sm:$0xff] %v3383
        %3423 = vst [vmem:[#allocation3 + $0x4b] sm:$0xff] %v3384
        %3424 = vst [vmem:[#allocation3 + $0x53] sm:$0xff] %v3385
        %3425 = vst [vmem:[#allocation3 + $0x5b] sm:$0xff] %v3386
        %3426 = vst [vmem:[#allocation3 + $0x63] sm:$0xff] %v3387
        %3427 = vst [vmem:[#allocation3 + $0x6b] sm:$0xff] %v3388
        %3428 = vst [vmem:[#allocation3 + $0x73] sm:$0xff] %v3389
        %3429 = vst [vmem:[#allocation3 + $0x7b] sm:$0xff] %v3390
        %3430 = vst [vmem:[#allocation3 + $0x83] sm:$0xff] %v3391
        %3431 = vst [vmem:[#allocation3 + $0x8b] sm:$0xff] %v3392
        %3432 = vst [vmem:[#allocation3 + $0x93] sm:$0xff] %v3393
        %3433 = vst [vmem:[#allocation3 + $0x9b] sm:$0xff] %v3394
        %3434 = vst [vmem:[#allocation3 + $0xa3] sm:$0xff] %v3395
        %3435 = vst [vmem:[#allocation3 + $0xab] sm:$0xff] %v3396
        %3436 = vst [vmem:[#allocation3 + $0xb3] sm:$0xff] %v3397
        %3437 = vst [vmem:[#allocation3 + $0xbb] sm:$0xff] %v3398
        %3438 = vst [vmem:[#allocation3 + $0xc3] sm:$0xff] %v3399
        %3439 = vst [vmem:[#allocation3 + $0xcb] sm:$0xff] %v3400
        %3440 = vst [vmem:[#allocation3 + $0xd3] sm:$0xff] %v3401
        %3441 = vst [vmem:[#allocation3 + $0xdb] sm:$0xff] %v3402
        %3442 = vst [vmem:[#allocation3 + $0xe3] sm:$0xff] %v3403
        %3443 = vst [vmem:[#allocation3 + $0xeb] sm:$0xff] %v3404
        %3444 = vst [vmem:[#allocation3 + $0xf3] sm:$0xff] %v3405
        %3445 = vst [vmem:[#allocation3 + $0xfb] sm:$0xff] %v3406
        %3446 = vst [vmem:[#allocation3 + $0x103] sm:$0xff] %v3407
        %3447 = vst [vmem:[#allocation3 + $0x10b] sm:$0xff] %v3408
        %3448 = vst [vmem:[#allocation3 + $0x113] sm:$0xff] %v3409
        %3449 = vst [vmem:[#allocation3 + $0x11b] sm:$0xff] %v3410
        %3450 = vst [vmem:[#allocation3 + $0x123] sm:$0xff] %v3411
        %3451 = vst [vmem:[#allocation3 + $0x12b] sm:$0xff] %v3412
        %3452 = vst [vmem:[#allocation3 + $0x133] sm:$0xff] 0.0
        %3453 = vst [vmem:[#allocation3 + $0x13b] sm:$0xff] 0.0
        %3454 = vst [vmem:[#allocation3 + $0x143] sm:$0x1f] 0.0
        %v3455 = vld [vmem:[#allocation3] sm:$0xff]
        %v3456 = vld [vmem:[#allocation3 + $0x8] sm:$0xff]
        %v3457 = vld [vmem:[#allocation3 + $0x10] sm:$0xff]
        %v3458 = vld [vmem:[#allocation3 + $0x18] sm:$0xff]
        %v3459 = vld [vmem:[#allocation3 + $0x20] sm:$0xff]
        %v3460 = vld [vmem:[#allocation3 + $0x28] sm:$0xff]
        %v3461 = vld [vmem:[#allocation3 + $0x30] sm:$0xff]
        %v3462 = vld [vmem:[#allocation3 + $0x38] sm:$0xff]
        %v3463 = vld [vmem:[#allocation3 + $0x40] sm:$0xff]
        %v3464 = vld [vmem:[#allocation3 + $0x48] sm:$0xff]
        %v3465 = vld [vmem:[#allocation3 + $0x50] sm:$0xff]
        %v3466 = vld [vmem:[#allocation3 + $0x58] sm:$0xff]
        %v3467 = vld [vmem:[#allocation3 + $0x60] sm:$0xff]
        %v3468 = vld [vmem:[#allocation3 + $0x68] sm:$0xff]
        %v3469 = vld [vmem:[#allocation3 + $0x70] sm:$0xff]
        %v3470 = vld [vmem:[#allocation3 + $0x78] sm:$0xff]
        %v3471 = vld [vmem:[#allocation3 + $0x80] sm:$0xff]
        %v3472 = vld [vmem:[#allocation3 + $0x88] sm:$0xff]
        %v3473 = vld [vmem:[#allocation3 + $0x90] sm:$0xff]
        %v3474 = vld [vmem:[#allocation3 + $0x98] sm:$0xff]
        %v3475 = vld [vmem:[#allocation3 + $0xa0] sm:$0xff]
        %v3476 = vld [vmem:[#allocation3 + $0xa8] sm:$0xff]
        %v3477 = vld [vmem:[#allocation3 + $0xb0] sm:$0xff]
        %v3478 = vld [vmem:[#allocation3 + $0xb8] sm:$0xff]
        %v3479 = vld [vmem:[#allocation3 + $0xc0] sm:$0xff]
        %v3480 = vld [vmem:[#allocation3 + $0xc8] sm:$0xff]
        %v3481 = vld [vmem:[#allocation3 + $0xd0] sm:$0xff]
        %v3482 = vld [vmem:[#allocation3 + $0xd8] sm:$0xff]
        %v3483 = vld [vmem:[#allocation3 + $0xe0] sm:$0xff]
        %v3484 = vld [vmem:[#allocation3 + $0xe8] sm:$0xff]
        %v3485 = vld [vmem:[#allocation3 + $0xf0] sm:$0xff]
        %v3486 = vld [vmem:[#allocation3 + $0xf8] sm:$0xff]
        %v3487 = vld [vmem:[#allocation3 + $0x100] sm:$0xff]
        %v3488 = vld [vmem:[#allocation3 + $0x108] sm:$0xff]
        %v3489 = vld [vmem:[#allocation3 + $0x110] sm:$0xff]
        %v3490 = vld [vmem:[#allocation3 + $0x118] sm:$0xff]
        %3491 = vst [vmem:[#allocation2] sm:$0xff] %v3455
        %3492 = vst [vmem:[#allocation2 + $0x48] sm:$0xff] %v3456
        %3493 = vst [vmem:[#allocation2 + $0x90] sm:$0xff] %v3457
        %3494 = vst [vmem:[#allocation2 + $0xd8] sm:$0xff] %v3458
        %3495 = vst [vmem:[#allocation2 + $0x120] sm:$0xff] %v3459
        %3496 = vst [vmem:[#allocation2 + $0x168] sm:$0xff] %v3460
        %3497 = vst [vmem:[#allocation2 + $0x1b0] sm:$0xff] %v3461
        %3498 = vst [vmem:[#allocation2 + $0x1f8] sm:$0xff] %v3462
        %3499 = vst [vmem:[#allocation2 + $0x240] sm:$0xff] %v3463
        %3500 = vst [vmem:[#allocation2 + $0x288] sm:$0xff] %v3464
        %3501 = vst [vmem:[#allocation2 + $0x2d0] sm:$0xff] %v3465
        %3502 = vst [vmem:[#allocation2 + $0x318] sm:$0xff] %v3466
        %3503 = vst [vmem:[#allocation2 + $0x360] sm:$0xff] %v3467
        %3504 = vst [vmem:[#allocation2 + $0x3a8] sm:$0xff] %v3468
        %3505 = vst [vmem:[#allocation2 + $0x3f0] sm:$0xff] %v3469
        %3506 = vst [vmem:[#allocation2 + $0x438] sm:$0xff] %v3470
        %3507 = vst [vmem:[#allocation2 + $0x480] sm:$0xff] %v3471
        %3508 = vst [vmem:[#allocation2 + $0x4c8] sm:$0xff] %v3472
        %3509 = vst [vmem:[#allocation2 + $0x510] sm:$0xff] %v3473
        %3510 = vst [vmem:[#allocation2 + $0x558] sm:$0xff] %v3474
        %3511 = vst [vmem:[#allocation2 + $0x5a0] sm:$0xff] %v3475
        %3512 = vst [vmem:[#allocation2 + $0x5e8] sm:$0xff] %v3476
        %3513 = vst [vmem:[#allocation2 + $0x630] sm:$0xff] %v3477
        %3514 = vst [vmem:[#allocation2 + $0x678] sm:$0xff] %v3478
        %3515 = vst [vmem:[#allocation2 + $0x6c0] sm:$0xff] %v3479
        %3516 = vst [vmem:[#allocation2 + $0x708] sm:$0xff] %v3480
        %3517 = vst [vmem:[#allocation2 + $0x750] sm:$0xff] %v3481
        %3518 = vst [vmem:[#allocation2 + $0x798] sm:$0xff] %v3482
        %3519 = vst [vmem:[#allocation2 + $0x7e0] sm:$0xff] %v3483
        %3520 = vst [vmem:[#allocation2 + $0x828] sm:$0xff] %v3484
        %3521 = vst [vmem:[#allocation2 + $0x870] sm:$0xff] %v3485
        %3522 = vst [vmem:[#allocation2 + $0x8b8] sm:$0xff] %v3486
        %3523 = vst [vmem:[#allocation2 + $0x900] sm:$0xff] %v3487
        %3524 = vst [vmem:[#allocation2 + $0x948] sm:$0xff] %v3488
        %3525 = vst [vmem:[#allocation2 + $0x990] sm:$0xff] %v3489
        %3526 = vst [vmem:[#allocation2 + $0x9d8] sm:$0xff] %v3490
        %v3527 = vld [vmem:[#allocation3 + $0x1] sm:$0xff]
        %v3528 = vld [vmem:[#allocation3 + $0x9] sm:$0xff]
        %v3529 = vld [vmem:[#allocation3 + $0x11] sm:$0xff]
        %v3530 = vld [vmem:[#allocation3 + $0x19] sm:$0xff]
        %v3531 = vld [vmem:[#allocation3 + $0x21] sm:$0xff]
        %v3532 = vld [vmem:[#allocation3 + $0x29] sm:$0xff]
        %v3533 = vld [vmem:[#allocation3 + $0x31] sm:$0xff]
        %v3534 = vld [vmem:[#allocation3 + $0x39] sm:$0xff]
        %v3535 = vld [vmem:[#allocation3 + $0x41] sm:$0xff]
        %v3536 = vld [vmem:[#allocation3 + $0x49] sm:$0xff]
        %v3537 = vld [vmem:[#allocation3 + $0x51] sm:$0xff]
        %v3538 = vld [vmem:[#allocation3 + $0x59] sm:$0xff]
        %v3539 = vld [vmem:[#allocation3 + $0x61] sm:$0xff]
        %v3540 = vld [vmem:[#allocation3 + $0x69] sm:$0xff]
        %v3541 = vld [vmem:[#allocation3 + $0x71] sm:$0xff]
        %v3542 = vld [vmem:[#allocation3 + $0x79] sm:$0xff]
        %v3543 = vld [vmem:[#allocation3 + $0x81] sm:$0xff]
        %v3544 = vld [vmem:[#allocation3 + $0x89] sm:$0xff]
        %v3545 = vld [vmem:[#allocation3 + $0x91] sm:$0xff]
        %v3546 = vld [vmem:[#allocation3 + $0x99] sm:$0xff]
        %v3547 = vld [vmem:[#allocation3 + $0xa1] sm:$0xff]
        %v3548 = vld [vmem:[#allocation3 + $0xa9] sm:$0xff]
        %v3549 = vld [vmem:[#allocation3 + $0xb1] sm:$0xff]
        %v3550 = vld [vmem:[#allocation3 + $0xb9] sm:$0xff]
        %v3551 = vld [vmem:[#allocation3 + $0xc1] sm:$0xff]
        %v3552 = vld [vmem:[#allocation3 + $0xc9] sm:$0xff]
        %v3553 = vld [vmem:[#allocation3 + $0xd1] sm:$0xff]
        %v3554 = vld [vmem:[#allocation3 + $0xd9] sm:$0xff]
        %v3555 = vld [vmem:[#allocation3 + $0xe1] sm:$0xff]
        %v3556 = vld [vmem:[#allocation3 + $0xe9] sm:$0xff]
        %v3557 = vld [vmem:[#allocation3 + $0xf1] sm:$0xff]
        %v3558 = vld [vmem:[#allocation3 + $0xf9] sm:$0xff]
        %v3559 = vld [vmem:[#allocation3 + $0x101] sm:$0xff]
        %v3560 = vld [vmem:[#allocation3 + $0x109] sm:$0xff]
        %v3561 = vld [vmem:[#allocation3 + $0x111] sm:$0xff]
        %v3562 = vld [vmem:[#allocation3 + $0x119] sm:$0xff]
        %3563 = vst [vmem:[#allocation2 + $0x8] sm:$0xff] %v3527
        %3564 = vst [vmem:[#allocation2 + $0x50] sm:$0xff] %v3528
        %3565 = vst [vmem:[#allocation2 + $0x98] sm:$0xff] %v3529
        %3566 = vst [vmem:[#allocation2 + $0xe0] sm:$0xff] %v3530
        %3567 = vst [vmem:[#allocation2 + $0x128] sm:$0xff] %v3531
        %3568 = vst [vmem:[#allocation2 + $0x170] sm:$0xff] %v3532
        %3569 = vst [vmem:[#allocation2 + $0x1b8] sm:$0xff] %v3533
        %3570 = vst [vmem:[#allocation2 + $0x200] sm:$0xff] %v3534
        %3571 = vst [vmem:[#allocation2 + $0x248] sm:$0xff] %v3535
        %3572 = vst [vmem:[#allocation2 + $0x290] sm:$0xff] %v3536
        %3573 = vst [vmem:[#allocation2 + $0x2d8] sm:$0xff] %v3537
        %3574 = vst [vmem:[#allocation2 + $0x320] sm:$0xff] %v3538
        %3575 = vst [vmem:[#allocation2 + $0x368] sm:$0xff] %v3539
        %3576 = vst [vmem:[#allocation2 + $0x3b0] sm:$0xff] %v3540
        %3577 = vst [vmem:[#allocation2 + $0x3f8] sm:$0xff] %v3541
        %3578 = vst [vmem:[#allocation2 + $0x440] sm:$0xff] %v3542
        %3579 = vst [vmem:[#allocation2 + $0x488] sm:$0xff] %v3543
        %3580 = vst [vmem:[#allocation2 + $0x4d0] sm:$0xff] %v3544
        %3581 = vst [vmem:[#allocation2 + $0x518] sm:$0xff] %v3545
        %3582 = vst [vmem:[#allocation2 + $0x560] sm:$0xff] %v3546
        %3583 = vst [vmem:[#allocation2 + $0x5a8] sm:$0xff] %v3547
        %3584 = vst [vmem:[#allocation2 + $0x5f0] sm:$0xff] %v3548
        %3585 = vst [vmem:[#allocation2 + $0x638] sm:$0xff] %v3549
        %3586 = vst [vmem:[#allocation2 + $0x680] sm:$0xff] %v3550
        %3587 = vst [vmem:[#allocation2 + $0x6c8] sm:$0xff] %v3551
        %3588 = vst [vmem:[#allocation2 + $0x710] sm:$0xff] %v3552
        %3589 = vst [vmem:[#allocation2 + $0x758] sm:$0xff] %v3553
        %3590 = vst [vmem:[#allocation2 + $0x7a0] sm:$0xff] %v3554
        %3591 = vst [vmem:[#allocation2 + $0x7e8] sm:$0xff] %v3555
        %3592 = vst [vmem:[#allocation2 + $0x830] sm:$0xff] %v3556
        %3593 = vst [vmem:[#allocation2 + $0x878] sm:$0xff] %v3557
        %3594 = vst [vmem:[#allocation2 + $0x8c0] sm:$0xff] %v3558
        %3595 = vst [vmem:[#allocation2 + $0x908] sm:$0xff] %v3559
        %3596 = vst [vmem:[#allocation2 + $0x950] sm:$0xff] %v3560
        %3597 = vst [vmem:[#allocation2 + $0x998] sm:$0xff] %v3561
        %3598 = vst [vmem:[#allocation2 + $0x9e0] sm:$0xff] %v3562
        %v3599 = vld [vmem:[#allocation3 + $0x2] sm:$0xff]
        %v3600 = vld [vmem:[#allocation3 + $0xa] sm:$0xff]
        %v3601 = vld [vmem:[#allocation3 + $0x12] sm:$0xff]
        %v3602 = vld [vmem:[#allocation3 + $0x1a] sm:$0xff]
        %v3603 = vld [vmem:[#allocation3 + $0x22] sm:$0xff]
        %v3604 = vld [vmem:[#allocation3 + $0x2a] sm:$0xff]
        %v3605 = vld [vmem:[#allocation3 + $0x32] sm:$0xff]
        %v3606 = vld [vmem:[#allocation3 + $0x3a] sm:$0xff]
        %v3607 = vld [vmem:[#allocation3 + $0x42] sm:$0xff]
        %v3608 = vld [vmem:[#allocation3 + $0x4a] sm:$0xff]
        %v3609 = vld [vmem:[#allocation3 + $0x52] sm:$0xff]
        %v3610 = vld [vmem:[#allocation3 + $0x5a] sm:$0xff]
        %v3611 = vld [vmem:[#allocation3 + $0x62] sm:$0xff]
        %v3612 = vld [vmem:[#allocation3 + $0x6a] sm:$0xff]
        %v3613 = vld [vmem:[#allocation3 + $0x72] sm:$0xff]
        %v3614 = vld [vmem:[#allocation3 + $0x7a] sm:$0xff]
        %v3615 = vld [vmem:[#allocation3 + $0x82] sm:$0xff]
        %v3616 = vld [vmem:[#allocation3 + $0x8a] sm:$0xff]
        %v3617 = vld [vmem:[#allocation3 + $0x92] sm:$0xff]
        %v3618 = vld [vmem:[#allocation3 + $0x9a] sm:$0xff]
        %v3619 = vld [vmem:[#allocation3 + $0xa2] sm:$0xff]
        %v3620 = vld [vmem:[#allocation3 + $0xaa] sm:$0xff]
        %v3621 = vld [vmem:[#allocation3 + $0xb2] sm:$0xff]
        %v3622 = vld [vmem:[#allocation3 + $0xba] sm:$0xff]
        %v3623 = vld [vmem:[#allocation3 + $0xc2] sm:$0xff]
        %v3624 = vld [vmem:[#allocation3 + $0xca] sm:$0xff]
        %v3625 = vld [vmem:[#allocation3 + $0xd2] sm:$0xff]
        %v3626 = vld [vmem:[#allocation3 + $0xda] sm:$0xff]
        %v3627 = vld [vmem:[#allocation3 + $0xe2] sm:$0xff]
        %v3628 = vld [vmem:[#allocation3 + $0xea] sm:$0xff]
        %v3629 = vld [vmem:[#allocation3 + $0xf2] sm:$0xff]
        %v3630 = vld [vmem:[#allocation3 + $0xfa] sm:$0xff]
        %v3631 = vld [vmem:[#allocation3 + $0x102] sm:$0xff]
        %v3632 = vld [vmem:[#allocation3 + $0x10a] sm:$0xff]
        %v3633 = vld [vmem:[#allocation3 + $0x112] sm:$0xff]
        %v3634 = vld [vmem:[#allocation3 + $0x11a] sm:$0xff]
        %3635 = vst [vmem:[#allocation2 + $0x10] sm:$0xff] %v3599
        %3636 = vst [vmem:[#allocation2 + $0x58] sm:$0xff] %v3600
        %3637 = vst [vmem:[#allocation2 + $0xa0] sm:$0xff] %v3601
        %3638 = vst [vmem:[#allocation2 + $0xe8] sm:$0xff] %v3602
        %3639 = vst [vmem:[#allocation2 + $0x130] sm:$0xff] %v3603
        %3640 = vst [vmem:[#allocation2 + $0x178] sm:$0xff] %v3604
        %3641 = vst [vmem:[#allocation2 + $0x1c0] sm:$0xff] %v3605
        %3642 = vst [vmem:[#allocation2 + $0x208] sm:$0xff] %v3606
        %3643 = vst [vmem:[#allocation2 + $0x250] sm:$0xff] %v3607
        %3644 = vst [vmem:[#allocation2 + $0x298] sm:$0xff] %v3608
        %3645 = vst [vmem:[#allocation2 + $0x2e0] sm:$0xff] %v3609
        %3646 = vst [vmem:[#allocation2 + $0x328] sm:$0xff] %v3610
        %3647 = vst [vmem:[#allocation2 + $0x370] sm:$0xff] %v3611
        %3648 = vst [vmem:[#allocation2 + $0x3b8] sm:$0xff] %v3612
        %3649 = vst [vmem:[#allocation2 + $0x400] sm:$0xff] %v3613
        %3650 = vst [vmem:[#allocation2 + $0x448] sm:$0xff] %v3614
        %3651 = vst [vmem:[#allocation2 + $0x490] sm:$0xff] %v3615
        %3652 = vst [vmem:[#allocation2 + $0x4d8] sm:$0xff] %v3616
        %3653 = vst [vmem:[#allocation2 + $0x520] sm:$0xff] %v3617
        %3654 = vst [vmem:[#allocation2 + $0x568] sm:$0xff] %v3618
        %3655 = vst [vmem:[#allocation2 + $0x5b0] sm:$0xff] %v3619
        %3656 = vst [vmem:[#allocation2 + $0x5f8] sm:$0xff] %v3620
        %3657 = vst [vmem:[#allocation2 + $0x640] sm:$0xff] %v3621
        %3658 = vst [vmem:[#allocation2 + $0x688] sm:$0xff] %v3622
        %3659 = vst [vmem:[#allocation2 + $0x6d0] sm:$0xff] %v3623
        %3660 = vst [vmem:[#allocation2 + $0x718] sm:$0xff] %v3624
        %3661 = vst [vmem:[#allocation2 + $0x760] sm:$0xff] %v3625
        %3662 = vst [vmem:[#allocation2 + $0x7a8] sm:$0xff] %v3626
        %3663 = vst [vmem:[#allocation2 + $0x7f0] sm:$0xff] %v3627
        %3664 = vst [vmem:[#allocation2 + $0x838] sm:$0xff] %v3628
        %3665 = vst [vmem:[#allocation2 + $0x880] sm:$0xff] %v3629
        %3666 = vst [vmem:[#allocation2 + $0x8c8] sm:$0xff] %v3630
        %3667 = vst [vmem:[#allocation2 + $0x910] sm:$0xff] %v3631
        %3668 = vst [vmem:[#allocation2 + $0x958] sm:$0xff] %v3632
        %3669 = vst [vmem:[#allocation2 + $0x9a0] sm:$0xff] %v3633
        %3670 = vst [vmem:[#allocation2 + $0x9e8] sm:$0xff] %v3634
        %v3671 = vld [vmem:[#allocation3 + $0x12] sm:$0xff]
        %v3672 = vld [vmem:[#allocation3 + $0x1a] sm:$0xff]
        %v3673 = vld [vmem:[#allocation3 + $0x22] sm:$0xff]
        %v3674 = vld [vmem:[#allocation3 + $0x2a] sm:$0xff]
        %v3675 = vld [vmem:[#allocation3 + $0x32] sm:$0xff]
        %v3676 = vld [vmem:[#allocation3 + $0x3a] sm:$0xff]
        %v3677 = vld [vmem:[#allocation3 + $0x42] sm:$0xff]
        %v3678 = vld [vmem:[#allocation3 + $0x4a] sm:$0xff]
        %v3679 = vld [vmem:[#allocation3 + $0x52] sm:$0xff]
        %v3680 = vld [vmem:[#allocation3 + $0x5a] sm:$0xff]
        %v3681 = vld [vmem:[#allocation3 + $0x62] sm:$0xff]
        %v3682 = vld [vmem:[#allocation3 + $0x6a] sm:$0xff]
        %v3683 = vld [vmem:[#allocation3 + $0x72] sm:$0xff]
        %v3684 = vld [vmem:[#allocation3 + $0x7a] sm:$0xff]
        %v3685 = vld [vmem:[#allocation3 + $0x82] sm:$0xff]
        %v3686 = vld [vmem:[#allocation3 + $0x8a] sm:$0xff]
        %v3687 = vld [vmem:[#allocation3 + $0x92] sm:$0xff]
        %v3688 = vld [vmem:[#allocation3 + $0x9a] sm:$0xff]
        %v3689 = vld [vmem:[#allocation3 + $0xa2] sm:$0xff]
        %v3690 = vld [vmem:[#allocation3 + $0xaa] sm:$0xff]
        %v3691 = vld [vmem:[#allocation3 + $0xb2] sm:$0xff]
        %v3692 = vld [vmem:[#allocation3 + $0xba] sm:$0xff]
        %v3693 = vld [vmem:[#allocation3 + $0xc2] sm:$0xff]
        %v3694 = vld [vmem:[#allocation3 + $0xca] sm:$0xff]
        %v3695 = vld [vmem:[#allocation3 + $0xd2] sm:$0xff]
        %v3696 = vld [vmem:[#allocation3 + $0xda] sm:$0xff]
        %v3697 = vld [vmem:[#allocation3 + $0xe2] sm:$0xff]
        %v3698 = vld [vmem:[#allocation3 + $0xea] sm:$0xff]
        %v3699 = vld [vmem:[#allocation3 + $0xf2] sm:$0xff]
        %v3700 = vld [vmem:[#allocation3 + $0xfa] sm:$0xff]
        %v3701 = vld [vmem:[#allocation3 + $0x102] sm:$0xff]
        %v3702 = vld [vmem:[#allocation3 + $0x10a] sm:$0xff]
        %v3703 = vld [vmem:[#allocation3 + $0x112] sm:$0xff]
        %v3704 = vld [vmem:[#allocation3 + $0x11a] sm:$0xff]
        %v3705 = vld [vmem:[#allocation3 + $0x122] sm:$0xff]
        %v3706 = vld [vmem:[#allocation3 + $0x12a] sm:$0xff]
        %3707 = vst [vmem:[#allocation2 + $0x18] sm:$0xff] %v3671
        %3708 = vst [vmem:[#allocation2 + $0x60] sm:$0xff] %v3672
        %3709 = vst [vmem:[#allocation2 + $0xa8] sm:$0xff] %v3673
        %3710 = vst [vmem:[#allocation2 + $0xf0] sm:$0xff] %v3674
        %3711 = vst [vmem:[#allocation2 + $0x138] sm:$0xff] %v3675
        %3712 = vst [vmem:[#allocation2 + $0x180] sm:$0xff] %v3676
        %3713 = vst [vmem:[#allocation2 + $0x1c8] sm:$0xff] %v3677
        %3714 = vst [vmem:[#allocation2 + $0x210] sm:$0xff] %v3678
        %3715 = vst [vmem:[#allocation2 + $0x258] sm:$0xff] %v3679
        %3716 = vst [vmem:[#allocation2 + $0x2a0] sm:$0xff] %v3680
        %3717 = vst [vmem:[#allocation2 + $0x2e8] sm:$0xff] %v3681
        %3718 = vst [vmem:[#allocation2 + $0x330] sm:$0xff] %v3682
        %3719 = vst [vmem:[#allocation2 + $0x378] sm:$0xff] %v3683
        %3720 = vst [vmem:[#allocation2 + $0x3c0] sm:$0xff] %v3684
        %3721 = vst [vmem:[#allocation2 + $0x408] sm:$0xff] %v3685
        %3722 = vst [vmem:[#allocation2 + $0x450] sm:$0xff] %v3686
        %3723 = vst [vmem:[#allocation2 + $0x498] sm:$0xff] %v3687
        %3724 = vst [vmem:[#allocation2 + $0x4e0] sm:$0xff] %v3688
        %3725 = vst [vmem:[#allocation2 + $0x528] sm:$0xff] %v3689
        %3726 = vst [vmem:[#allocation2 + $0x570] sm:$0xff] %v3690
        %3727 = vst [vmem:[#allocation2 + $0x5b8] sm:$0xff] %v3691
        %3728 = vst [vmem:[#allocation2 + $0x600] sm:$0xff] %v3692
        %3729 = vst [vmem:[#allocation2 + $0x648] sm:$0xff] %v3693
        %3730 = vst [vmem:[#allocation2 + $0x690] sm:$0xff] %v3694
        %3731 = vst [vmem:[#allocation2 + $0x6d8] sm:$0xff] %v3695
        %3732 = vst [vmem:[#allocation2 + $0x720] sm:$0xff] %v3696
        %3733 = vst [vmem:[#allocation2 + $0x768] sm:$0xff] %v3697
        %3734 = vst [vmem:[#allocation2 + $0x7b0] sm:$0xff] %v3698
        %3735 = vst [vmem:[#allocation2 + $0x7f8] sm:$0xff] %v3699
        %3736 = vst [vmem:[#allocation2 + $0x840] sm:$0xff] %v3700
        %3737 = vst [vmem:[#allocation2 + $0x888] sm:$0xff] %v3701
        %3738 = vst [vmem:[#allocation2 + $0x8d0] sm:$0xff] %v3702
        %3739 = vst [vmem:[#allocation2 + $0x918] sm:$0xff] %v3703
        %3740 = vst [vmem:[#allocation2 + $0x960] sm:$0xff] %v3704
        %3741 = vst [vmem:[#allocation2 + $0x9a8] sm:$0xff] %v3705
        %3742 = vst [vmem:[#allocation2 + $0x9f0] sm:$0xff] %v3706
        %v3743 = vld [vmem:[#allocation3 + $0x13] sm:$0xff]
        %v3744 = vld [vmem:[#allocation3 + $0x1b] sm:$0xff]
        %v3745 = vld [vmem:[#allocation3 + $0x23] sm:$0xff]
        %v3746 = vld [vmem:[#allocation3 + $0x2b] sm:$0xff]
        %v3747 = vld [vmem:[#allocation3 + $0x33] sm:$0xff]
        %v3748 = vld [vmem:[#allocation3 + $0x3b] sm:$0xff]
        %v3749 = vld [vmem:[#allocation3 + $0x43] sm:$0xff]
        %v3750 = vld [vmem:[#allocation3 + $0x4b] sm:$0xff]
        %v3751 = vld [vmem:[#allocation3 + $0x53] sm:$0xff]
        %v3752 = vld [vmem:[#allocation3 + $0x5b] sm:$0xff]
        %v3753 = vld [vmem:[#allocation3 + $0x63] sm:$0xff]
        %v3754 = vld [vmem:[#allocation3 + $0x6b] sm:$0xff]
        %v3755 = vld [vmem:[#allocation3 + $0x73] sm:$0xff]
        %v3756 = vld [vmem:[#allocation3 + $0x7b] sm:$0xff]
        %v3757 = vld [vmem:[#allocation3 + $0x83] sm:$0xff]
        %v3758 = vld [vmem:[#allocation3 + $0x8b] sm:$0xff]
        %v3759 = vld [vmem:[#allocation3 + $0x93] sm:$0xff]
        %v3760 = vld [vmem:[#allocation3 + $0x9b] sm:$0xff]
        %v3761 = vld [vmem:[#allocation3 + $0xa3] sm:$0xff]
        %v3762 = vld [vmem:[#allocation3 + $0xab] sm:$0xff]
        %v3763 = vld [vmem:[#allocation3 + $0xb3] sm:$0xff]
        %v3764 = vld [vmem:[#allocation3 + $0xbb] sm:$0xff]
        %v3765 = vld [vmem:[#allocation3 + $0xc3] sm:$0xff]
        %v3766 = vld [vmem:[#allocation3 + $0xcb] sm:$0xff]
        %v3767 = vld [vmem:[#allocation3 + $0xd3] sm:$0xff]
        %v3768 = vld [vmem:[#allocation3 + $0xdb] sm:$0xff]
        %v3769 = vld [vmem:[#allocation3 + $0xe3] sm:$0xff]
        %v3770 = vld [vmem:[#allocation3 + $0xeb] sm:$0xff]
        %v3771 = vld [vmem:[#allocation3 + $0xf3] sm:$0xff]
        %v3772 = vld [vmem:[#allocation3 + $0xfb] sm:$0xff]
        %v3773 = vld [vmem:[#allocation3 + $0x103] sm:$0xff]
        %v3774 = vld [vmem:[#allocation3 + $0x10b] sm:$0xff]
        %v3775 = vld [vmem:[#allocation3 + $0x113] sm:$0xff]
        %v3776 = vld [vmem:[#allocation3 + $0x11b] sm:$0xff]
        %v3777 = vld [vmem:[#allocation3 + $0x123] sm:$0xff]
        %v3778 = vld [vmem:[#allocation3 + $0x12b] sm:$0xff]
        %3779 = vst [vmem:[#allocation2 + $0x20] sm:$0xff] %v3743
        %3780 = vst [vmem:[#allocation2 + $0x68] sm:$0xff] %v3744
        %3781 = vst [vmem:[#allocation2 + $0xb0] sm:$0xff] %v3745
        %3782 = vst [vmem:[#allocation2 + $0xf8] sm:$0xff] %v3746
        %3783 = vst [vmem:[#allocation2 + $0x140] sm:$0xff] %v3747
        %3784 = vst [vmem:[#allocation2 + $0x188] sm:$0xff] %v3748
        %3785 = vst [vmem:[#allocation2 + $0x1d0] sm:$0xff] %v3749
        %3786 = vst [vmem:[#allocation2 + $0x218] sm:$0xff] %v3750
        %3787 = vst [vmem:[#allocation2 + $0x260] sm:$0xff] %v3751
        %3788 = vst [vmem:[#allocation2 + $0x2a8] sm:$0xff] %v3752
        %3789 = vst [vmem:[#allocation2 + $0x2f0] sm:$0xff] %v3753
        %3790 = vst [vmem:[#allocation2 + $0x338] sm:$0xff] %v3754
        %3791 = vst [vmem:[#allocation2 + $0x380] sm:$0xff] %v3755
        %3792 = vst [vmem:[#allocation2 + $0x3c8] sm:$0xff] %v3756
        %3793 = vst [vmem:[#allocation2 + $0x410] sm:$0xff] %v3757
        %3794 = vst [vmem:[#allocation2 + $0x458] sm:$0xff] %v3758
        %3795 = vst [vmem:[#allocation2 + $0x4a0] sm:$0xff] %v3759
        %3796 = vst [vmem:[#allocation2 + $0x4e8] sm:$0xff] %v3760
        %3797 = vst [vmem:[#allocation2 + $0x530] sm:$0xff] %v3761
        %3798 = vst [vmem:[#allocation2 + $0x578] sm:$0xff] %v3762
        %3799 = vst [vmem:[#allocation2 + $0x5c0] sm:$0xff] %v3763
        %3800 = vst [vmem:[#allocation2 + $0x608] sm:$0xff] %v3764
        %3801 = vst [vmem:[#allocation2 + $0x650] sm:$0xff] %v3765
        %3802 = vst [vmem:[#allocation2 + $0x698] sm:$0xff] %v3766
        %3803 = vst [vmem:[#allocation2 + $0x6e0] sm:$0xff] %v3767
        %3804 = vst [vmem:[#allocation2 + $0x728] sm:$0xff] %v3768
        %3805 = vst [vmem:[#allocation2 + $0x770] sm:$0xff] %v3769
        %3806 = vst [vmem:[#allocation2 + $0x7b8] sm:$0xff] %v3770
        %3807 = vst [vmem:[#allocation2 + $0x800] sm:$0xff] %v3771
        %3808 = vst [vmem:[#allocation2 + $0x848] sm:$0xff] %v3772
        %3809 = vst [vmem:[#allocation2 + $0x890] sm:$0xff] %v3773
        %3810 = vst [vmem:[#allocation2 + $0x8d8] sm:$0xff] %v3774
        %3811 = vst [vmem:[#allocation2 + $0x920] sm:$0xff] %v3775
        %3812 = vst [vmem:[#allocation2 + $0x968] sm:$0xff] %v3776
        %3813 = vst [vmem:[#allocation2 + $0x9b0] sm:$0xff] %v3777
        %3814 = vst [vmem:[#allocation2 + $0x9f8] sm:$0xff] %v3778
        %v3815 = vld [vmem:[#allocation3 + $0x14] sm:$0xff]
        %v3816 = vld [vmem:[#allocation3 + $0x1c] sm:$0xff]
        %v3817 = vld [vmem:[#allocation3 + $0x24] sm:$0xff]
        %v3818 = vld [vmem:[#allocation3 + $0x2c] sm:$0xff]
        %v3819 = vld [vmem:[#allocation3 + $0x34] sm:$0xff]
        %v3820 = vld [vmem:[#allocation3 + $0x3c] sm:$0xff]
        %v3821 = vld [vmem:[#allocation3 + $0x44] sm:$0xff]
        %v3822 = vld [vmem:[#allocation3 + $0x4c] sm:$0xff]
        %v3823 = vld [vmem:[#allocation3 + $0x54] sm:$0xff]
        %v3824 = vld [vmem:[#allocation3 + $0x5c] sm:$0xff]
        %v3825 = vld [vmem:[#allocation3 + $0x64] sm:$0xff]
        %v3826 = vld [vmem:[#allocation3 + $0x6c] sm:$0xff]
        %v3827 = vld [vmem:[#allocation3 + $0x74] sm:$0xff]
        %v3828 = vld [vmem:[#allocation3 + $0x7c] sm:$0xff]
        %v3829 = vld [vmem:[#allocation3 + $0x84] sm:$0xff]
        %v3830 = vld [vmem:[#allocation3 + $0x8c] sm:$0xff]
        %v3831 = vld [vmem:[#allocation3 + $0x94] sm:$0xff]
        %v3832 = vld [vmem:[#allocation3 + $0x9c] sm:$0xff]
        %v3833 = vld [vmem:[#allocation3 + $0xa4] sm:$0xff]
        %v3834 = vld [vmem:[#allocation3 + $0xac] sm:$0xff]
        %v3835 = vld [vmem:[#allocation3 + $0xb4] sm:$0xff]
        %v3836 = vld [vmem:[#allocation3 + $0xbc] sm:$0xff]
        %v3837 = vld [vmem:[#allocation3 + $0xc4] sm:$0xff]
        %v3838 = vld [vmem:[#allocation3 + $0xcc] sm:$0xff]
        %v3839 = vld [vmem:[#allocation3 + $0xd4] sm:$0xff]
        %v3840 = vld [vmem:[#allocation3 + $0xdc] sm:$0xff]
        %v3841 = vld [vmem:[#allocation3 + $0xe4] sm:$0xff]
        %v3842 = vld [vmem:[#allocation3 + $0xec] sm:$0xff]
        %v3843 = vld [vmem:[#allocation3 + $0xf4] sm:$0xff]
        %v3844 = vld [vmem:[#allocation3 + $0xfc] sm:$0xff]
        %v3845 = vld [vmem:[#allocation3 + $0x104] sm:$0xff]
        %v3846 = vld [vmem:[#allocation3 + $0x10c] sm:$0xff]
        %v3847 = vld [vmem:[#allocation3 + $0x114] sm:$0xff]
        %v3848 = vld [vmem:[#allocation3 + $0x11c] sm:$0xff]
        %v3849 = vld [vmem:[#allocation3 + $0x124] sm:$0xff]
        %v3850 = vld [vmem:[#allocation3 + $0x12c] sm:$0xff]
        %3851 = vst [vmem:[#allocation2 + $0x28] sm:$0xff] %v3815
        %3852 = vst [vmem:[#allocation2 + $0x70] sm:$0xff] %v3816
        %3853 = vst [vmem:[#allocation2 + $0xb8] sm:$0xff] %v3817
        %3854 = vst [vmem:[#allocation2 + $0x100] sm:$0xff] %v3818
        %3855 = vst [vmem:[#allocation2 + $0x148] sm:$0xff] %v3819
        %3856 = vst [vmem:[#allocation2 + $0x190] sm:$0xff] %v3820
        %3857 = vst [vmem:[#allocation2 + $0x1d8] sm:$0xff] %v3821
        %3858 = vst [vmem:[#allocation2 + $0x220] sm:$0xff] %v3822
        %3859 = vst [vmem:[#allocation2 + $0x268] sm:$0xff] %v3823
        %3860 = vst [vmem:[#allocation2 + $0x2b0] sm:$0xff] %v3824
        %3861 = vst [vmem:[#allocation2 + $0x2f8] sm:$0xff] %v3825
        %3862 = vst [vmem:[#allocation2 + $0x340] sm:$0xff] %v3826
        %3863 = vst [vmem:[#allocation2 + $0x388] sm:$0xff] %v3827
        %3864 = vst [vmem:[#allocation2 + $0x3d0] sm:$0xff] %v3828
        %3865 = vst [vmem:[#allocation2 + $0x418] sm:$0xff] %v3829
        %3866 = vst [vmem:[#allocation2 + $0x460] sm:$0xff] %v3830
        %3867 = vst [vmem:[#allocation2 + $0x4a8] sm:$0xff] %v3831
        %3868 = vst [vmem:[#allocation2 + $0x4f0] sm:$0xff] %v3832
        %3869 = vst [vmem:[#allocation2 + $0x538] sm:$0xff] %v3833
        %3870 = vst [vmem:[#allocation2 + $0x580] sm:$0xff] %v3834
        %3871 = vst [vmem:[#allocation2 + $0x5c8] sm:$0xff] %v3835
        %3872 = vst [vmem:[#allocation2 + $0x610] sm:$0xff] %v3836
        %3873 = vst [vmem:[#allocation2 + $0x658] sm:$0xff] %v3837
        %3874 = vst [vmem:[#allocation2 + $0x6a0] sm:$0xff] %v3838
        %3875 = vst [vmem:[#allocation2 + $0x6e8] sm:$0xff] %v3839
        %3876 = vst [vmem:[#allocation2 + $0x730] sm:$0xff] %v3840
        %3877 = vst [vmem:[#allocation2 + $0x778] sm:$0xff] %v3841
        %3878 = vst [vmem:[#allocation2 + $0x7c0] sm:$0xff] %v3842
        %3879 = vst [vmem:[#allocation2 + $0x808] sm:$0xff] %v3843
        %3880 = vst [vmem:[#allocation2 + $0x850] sm:$0xff] %v3844
        %3881 = vst [vmem:[#allocation2 + $0x898] sm:$0xff] %v3845
        %3882 = vst [vmem:[#allocation2 + $0x8e0] sm:$0xff] %v3846
        %3883 = vst [vmem:[#allocation2 + $0x928] sm:$0xff] %v3847
        %3884 = vst [vmem:[#allocation2 + $0x970] sm:$0xff] %v3848
        %3885 = vst [vmem:[#allocation2 + $0x9b8] sm:$0xff] %v3849
        %3886 = vst [vmem:[#allocation2 + $0xa00] sm:$0xff] %v3850
        %v3887 = vld [vmem:[#allocation3 + $0x24] sm:$0xff]
        %v3888 = vld [vmem:[#allocation3 + $0x2c] sm:$0xff]
        %v3889 = vld [vmem:[#allocation3 + $0x34] sm:$0xff]
        %v3890 = vld [vmem:[#allocation3 + $0x3c] sm:$0xff]
        %v3891 = vld [vmem:[#allocation3 + $0x44] sm:$0xff]
        %v3892 = vld [vmem:[#allocation3 + $0x4c] sm:$0xff]
        %v3893 = vld [vmem:[#allocation3 + $0x54] sm:$0xff]
        %v3894 = vld [vmem:[#allocation3 + $0x5c] sm:$0xff]
        %v3895 = vld [vmem:[#allocation3 + $0x64] sm:$0xff]
        %v3896 = vld [vmem:[#allocation3 + $0x6c] sm:$0xff]
        %v3897 = vld [vmem:[#allocation3 + $0x74] sm:$0xff]
        %v3898 = vld [vmem:[#allocation3 + $0x7c] sm:$0xff]
        %v3899 = vld [vmem:[#allocation3 + $0x84] sm:$0xff]
        %v3900 = vld [vmem:[#allocation3 + $0x8c] sm:$0xff]
        %v3901 = vld [vmem:[#allocation3 + $0x94] sm:$0xff]
        %v3902 = vld [vmem:[#allocation3 + $0x9c] sm:$0xff]
        %v3903 = vld [vmem:[#allocation3 + $0xa4] sm:$0xff]
        %v3904 = vld [vmem:[#allocation3 + $0xac] sm:$0xff]
        %v3905 = vld [vmem:[#allocation3 + $0xb4] sm:$0xff]
        %v3906 = vld [vmem:[#allocation3 + $0xbc] sm:$0xff]
        %v3907 = vld [vmem:[#allocation3 + $0xc4] sm:$0xff]
        %v3908 = vld [vmem:[#allocation3 + $0xcc] sm:$0xff]
        %v3909 = vld [vmem:[#allocation3 + $0xd4] sm:$0xff]
        %v3910 = vld [vmem:[#allocation3 + $0xdc] sm:$0xff]
        %v3911 = vld [vmem:[#allocation3 + $0xe4] sm:$0xff]
        %v3912 = vld [vmem:[#allocation3 + $0xec] sm:$0xff]
        %v3913 = vld [vmem:[#allocation3 + $0xf4] sm:$0xff]
        %v3914 = vld [vmem:[#allocation3 + $0xfc] sm:$0xff]
        %v3915 = vld [vmem:[#allocation3 + $0x104] sm:$0xff]
        %v3916 = vld [vmem:[#allocation3 + $0x10c] sm:$0xff]
        %v3917 = vld [vmem:[#allocation3 + $0x114] sm:$0xff]
        %v3918 = vld [vmem:[#allocation3 + $0x11c] sm:$0xff]
        %v3919 = vld [vmem:[#allocation3 + $0x124] sm:$0xff]
        %v3920 = vld [vmem:[#allocation3 + $0x12c] sm:$0xff]
        %v3921 = vld [vmem:[#allocation3 + $0x134] sm:$0xff]
        %v3922 = vld [vmem:[#allocation3 + $0x13c] sm:$0xff]
        %3923 = vst [vmem:[#allocation2 + $0x30] sm:$0xff] %v3887
        %3924 = vst [vmem:[#allocation2 + $0x78] sm:$0xff] %v3888
        %3925 = vst [vmem:[#allocation2 + $0xc0] sm:$0xff] %v3889
        %3926 = vst [vmem:[#allocation2 + $0x108] sm:$0xff] %v3890
        %3927 = vst [vmem:[#allocation2 + $0x150] sm:$0xff] %v3891
        %3928 = vst [vmem:[#allocation2 + $0x198] sm:$0xff] %v3892
        %3929 = vst [vmem:[#allocation2 + $0x1e0] sm:$0xff] %v3893
        %3930 = vst [vmem:[#allocation2 + $0x228] sm:$0xff] %v3894
        %3931 = vst [vmem:[#allocation2 + $0x270] sm:$0xff] %v3895
        %3932 = vst [vmem:[#allocation2 + $0x2b8] sm:$0xff] %v3896
        %3933 = vst [vmem:[#allocation2 + $0x300] sm:$0xff] %v3897
        %3934 = vst [vmem:[#allocation2 + $0x348] sm:$0xff] %v3898
        %3935 = vst [vmem:[#allocation2 + $0x390] sm:$0xff] %v3899
        %3936 = vst [vmem:[#allocation2 + $0x3d8] sm:$0xff] %v3900
        %3937 = vst [vmem:[#allocation2 + $0x420] sm:$0xff] %v3901
        %3938 = vst [vmem:[#allocation2 + $0x468] sm:$0xff] %v3902
        %3939 = vst [vmem:[#allocation2 + $0x4b0] sm:$0xff] %v3903
        %3940 = vst [vmem:[#allocation2 + $0x4f8] sm:$0xff] %v3904
        %3941 = vst [vmem:[#allocation2 + $0x540] sm:$0xff] %v3905
        %3942 = vst [vmem:[#allocation2 + $0x588] sm:$0xff] %v3906
        %3943 = vst [vmem:[#allocation2 + $0x5d0] sm:$0xff] %v3907
        %3944 = vst [vmem:[#allocation2 + $0x618] sm:$0xff] %v3908
        %3945 = vst [vmem:[#allocation2 + $0x660] sm:$0xff] %v3909
        %3946 = vst [vmem:[#allocation2 + $0x6a8] sm:$0xff] %v3910
        %3947 = vst [vmem:[#allocation2 + $0x6f0] sm:$0xff] %v3911
        %3948 = vst [vmem:[#allocation2 + $0x738] sm:$0xff] %v3912
        %3949 = vst [vmem:[#allocation2 + $0x780] sm:$0xff] %v3913
        %3950 = vst [vmem:[#allocation2 + $0x7c8] sm:$0xff] %v3914
        %3951 = vst [vmem:[#allocation2 + $0x810] sm:$0xff] %v3915
        %3952 = vst [vmem:[#allocation2 + $0x858] sm:$0xff] %v3916
        %3953 = vst [vmem:[#allocation2 + $0x8a0] sm:$0xff] %v3917
        %3954 = vst [vmem:[#allocation2 + $0x8e8] sm:$0xff] %v3918
        %3955 = vst [vmem:[#allocation2 + $0x930] sm:$0xff] %v3919
        %3956 = vst [vmem:[#allocation2 + $0x978] sm:$0xff] %v3920
        %3957 = vst [vmem:[#allocation2 + $0x9c0] sm:$0xff] %v3921
        %3958 = vst [vmem:[#allocation2 + $0xa08] sm:$0xff] %v3922
        %v3959 = vld [vmem:[#allocation3 + $0x25] sm:$0xff]
        %v3960 = vld [vmem:[#allocation3 + $0x2d] sm:$0xff]
        %v3961 = vld [vmem:[#allocation3 + $0x35] sm:$0xff]
        %v3962 = vld [vmem:[#allocation3 + $0x3d] sm:$0xff]
        %v3963 = vld [vmem:[#allocation3 + $0x45] sm:$0xff]
        %v3964 = vld [vmem:[#allocation3 + $0x4d] sm:$0xff]
        %v3965 = vld [vmem:[#allocation3 + $0x55] sm:$0xff]
        %v3966 = vld [vmem:[#allocation3 + $0x5d] sm:$0xff]
        %v3967 = vld [vmem:[#allocation3 + $0x65] sm:$0xff]
        %v3968 = vld [vmem:[#allocation3 + $0x6d] sm:$0xff]
        %v3969 = vld [vmem:[#allocation3 + $0x75] sm:$0xff]
        %v3970 = vld [vmem:[#allocation3 + $0x7d] sm:$0xff]
        %v3971 = vld [vmem:[#allocation3 + $0x85] sm:$0xff]
        %v3972 = vld [vmem:[#allocation3 + $0x8d] sm:$0xff]
        %v3973 = vld [vmem:[#allocation3 + $0x95] sm:$0xff]
        %v3974 = vld [vmem:[#allocation3 + $0x9d] sm:$0xff]
        %v3975 = vld [vmem:[#allocation3 + $0xa5] sm:$0xff]
        %v3976 = vld [vmem:[#allocation3 + $0xad] sm:$0xff]
        %v3977 = vld [vmem:[#allocation3 + $0xb5] sm:$0xff]
        %v3978 = vld [vmem:[#allocation3 + $0xbd] sm:$0xff]
        %v3979 = vld [vmem:[#allocation3 + $0xc5] sm:$0xff]
        %v3980 = vld [vmem:[#allocation3 + $0xcd] sm:$0xff]
        %v3981 = vld [vmem:[#allocation3 + $0xd5] sm:$0xff]
        %v3982 = vld [vmem:[#allocation3 + $0xdd] sm:$0xff]
        %v3983 = vld [vmem:[#allocation3 + $0xe5] sm:$0xff]
        %v3984 = vld [vmem:[#allocation3 + $0xed] sm:$0xff]
        %v3985 = vld [vmem:[#allocation3 + $0xf5] sm:$0xff]
        %v3986 = vld [vmem:[#allocation3 + $0xfd] sm:$0xff]
        %v3987 = vld [vmem:[#allocation3 + $0x105] sm:$0xff]
        %v3988 = vld [vmem:[#allocation3 + $0x10d] sm:$0xff]
        %v3989 = vld [vmem:[#allocation3 + $0x115] sm:$0xff]
        %v3990 = vld [vmem:[#allocation3 + $0x11d] sm:$0xff]
        %v3991 = vld [vmem:[#allocation3 + $0x125] sm:$0xff]
        %v3992 = vld [vmem:[#allocation3 + $0x12d] sm:$0xff]
        %v3993 = vld [vmem:[#allocation3 + $0x135] sm:$0xff]
        %v3994 = vld [vmem:[#allocation3 + $0x13d] sm:$0xff]
        %3995 = vst [vmem:[#allocation2 + $0x38] sm:$0xff] %v3959
        %3996 = vst [vmem:[#allocation2 + $0x80] sm:$0xff] %v3960
        %3997 = vst [vmem:[#allocation2 + $0xc8] sm:$0xff] %v3961
        %3998 = vst [vmem:[#allocation2 + $0x110] sm:$0xff] %v3962
        %3999 = vst [vmem:[#allocation2 + $0x158] sm:$0xff] %v3963
        %4000 = vst [vmem:[#allocation2 + $0x1a0] sm:$0xff] %v3964
        %4001 = vst [vmem:[#allocation2 + $0x1e8] sm:$0xff] %v3965
        %4002 = vst [vmem:[#allocation2 + $0x230] sm:$0xff] %v3966
        %4003 = vst [vmem:[#allocation2 + $0x278] sm:$0xff] %v3967
        %4004 = vst [vmem:[#allocation2 + $0x2c0] sm:$0xff] %v3968
        %4005 = vst [vmem:[#allocation2 + $0x308] sm:$0xff] %v3969
        %4006 = vst [vmem:[#allocation2 + $0x350] sm:$0xff] %v3970
        %4007 = vst [vmem:[#allocation2 + $0x398] sm:$0xff] %v3971
        %4008 = vst [vmem:[#allocation2 + $0x3e0] sm:$0xff] %v3972
        %4009 = vst [vmem:[#allocation2 + $0x428] sm:$0xff] %v3973
        %4010 = vst [vmem:[#allocation2 + $0x470] sm:$0xff] %v3974
        %4011 = vst [vmem:[#allocation2 + $0x4b8] sm:$0xff] %v3975
        %4012 = vst [vmem:[#allocation2 + $0x500] sm:$0xff] %v3976
        %4013 = vst [vmem:[#allocation2 + $0x548] sm:$0xff] %v3977
        %4014 = vst [vmem:[#allocation2 + $0x590] sm:$0xff] %v3978
        %4015 = vst [vmem:[#allocation2 + $0x5d8] sm:$0xff] %v3979
        %4016 = vst [vmem:[#allocation2 + $0x620] sm:$0xff] %v3980
        %4017 = vst [vmem:[#allocation2 + $0x668] sm:$0xff] %v3981
        %4018 = vst [vmem:[#allocation2 + $0x6b0] sm:$0xff] %v3982
        %4019 = vst [vmem:[#allocation2 + $0x6f8] sm:$0xff] %v3983
        %4020 = vst [vmem:[#allocation2 + $0x740] sm:$0xff] %v3984
        %4021 = vst [vmem:[#allocation2 + $0x788] sm:$0xff] %v3985
        %4022 = vst [vmem:[#allocation2 + $0x7d0] sm:$0xff] %v3986
        %4023 = vst [vmem:[#allocation2 + $0x818] sm:$0xff] %v3987
        %4024 = vst [vmem:[#allocation2 + $0x860] sm:$0xff] %v3988
        %4025 = vst [vmem:[#allocation2 + $0x8a8] sm:$0xff] %v3989
        %4026 = vst [vmem:[#allocation2 + $0x8f0] sm:$0xff] %v3990
        %4027 = vst [vmem:[#allocation2 + $0x938] sm:$0xff] %v3991
        %4028 = vst [vmem:[#allocation2 + $0x980] sm:$0xff] %v3992
        %4029 = vst [vmem:[#allocation2 + $0x9c8] sm:$0xff] %v3993
        %4030 = vst [vmem:[#allocation2 + $0xa10] sm:$0xff] %v3994
        %v4031 = vld [vmem:[#allocation3 + $0x26] sm:$0xff]
        %v4032 = vld [vmem:[#allocation3 + $0x2e] sm:$0xff]
        %v4033 = vld [vmem:[#allocation3 + $0x36] sm:$0xff]
        %v4034 = vld [vmem:[#allocation3 + $0x3e] sm:$0xff]
        %v4035 = vld [vmem:[#allocation3 + $0x46] sm:$0xff]
        %v4036 = vld [vmem:[#allocation3 + $0x4e] sm:$0xff]
        %v4037 = vld [vmem:[#allocation3 + $0x56] sm:$0xff]
        %v4038 = vld [vmem:[#allocation3 + $0x5e] sm:$0xff]
        %v4039 = vld [vmem:[#allocation3 + $0x66] sm:$0xff]
        %v4040 = vld [vmem:[#allocation3 + $0x6e] sm:$0xff]
        %v4041 = vld [vmem:[#allocation3 + $0x76] sm:$0xff]
        %v4042 = vld [vmem:[#allocation3 + $0x7e] sm:$0xff]
        %v4043 = vld [vmem:[#allocation3 + $0x86] sm:$0xff]
        %v4044 = vld [vmem:[#allocation3 + $0x8e] sm:$0xff]
        %v4045 = vld [vmem:[#allocation3 + $0x96] sm:$0xff]
        %v4046 = vld [vmem:[#allocation3 + $0x9e] sm:$0xff]
        %v4047 = vld [vmem:[#allocation3 + $0xa6] sm:$0xff]
        %v4048 = vld [vmem:[#allocation3 + $0xae] sm:$0xff]
        %v4049 = vld [vmem:[#allocation3 + $0xb6] sm:$0xff]
        %v4050 = vld [vmem:[#allocation3 + $0xbe] sm:$0xff]
        %v4051 = vld [vmem:[#allocation3 + $0xc6] sm:$0xff]
        %v4052 = vld [vmem:[#allocation3 + $0xce] sm:$0xff]
        %v4053 = vld [vmem:[#allocation3 + $0xd6] sm:$0xff]
        %v4054 = vld [vmem:[#allocation3 + $0xde] sm:$0xff]
        %v4055 = vld [vmem:[#allocation3 + $0xe6] sm:$0xff]
        %v4056 = vld [vmem:[#allocation3 + $0xee] sm:$0xff]
        %v4057 = vld [vmem:[#allocation3 + $0xf6] sm:$0xff]
        %v4058 = vld [vmem:[#allocation3 + $0xfe] sm:$0xff]
        %v4059 = vld [vmem:[#allocation3 + $0x106] sm:$0xff]
        %v4060 = vld [vmem:[#allocation3 + $0x10e] sm:$0xff]
        %v4061 = vld [vmem:[#allocation3 + $0x116] sm:$0xff]
        %v4062 = vld [vmem:[#allocation3 + $0x11e] sm:$0xff]
        %v4063 = vld [vmem:[#allocation3 + $0x126] sm:$0xff]
        %v4064 = vld [vmem:[#allocation3 + $0x12e] sm:$0xff]
        %v4065 = vld [vmem:[#allocation3 + $0x136] sm:$0xff]
        %v4066 = vld [vmem:[#allocation3 + $0x13e] sm:$0xff]
        %4067 = vst [vmem:[#allocation2 + $0x40] sm:$0xff] %v4031
        %4068 = vst [vmem:[#allocation2 + $0x88] sm:$0xff] %v4032
        %4069 = vst [vmem:[#allocation2 + $0xd0] sm:$0xff] %v4033
        %4070 = vst [vmem:[#allocation2 + $0x118] sm:$0xff] %v4034
        %4071 = vst [vmem:[#allocation2 + $0x160] sm:$0xff] %v4035
        %4072 = vst [vmem:[#allocation2 + $0x1a8] sm:$0xff] %v4036
        %4073 = vst [vmem:[#allocation2 + $0x1f0] sm:$0xff] %v4037
        %4074 = vst [vmem:[#allocation2 + $0x238] sm:$0xff] %v4038
        %4075 = vst [vmem:[#allocation2 + $0x280] sm:$0xff] %v4039
        %4076 = vst [vmem:[#allocation2 + $0x2c8] sm:$0xff] %v4040
        %4077 = vst [vmem:[#allocation2 + $0x310] sm:$0xff] %v4041
        %4078 = vst [vmem:[#allocation2 + $0x358] sm:$0xff] %v4042
        %4079 = vst [vmem:[#allocation2 + $0x3a0] sm:$0xff] %v4043
        %4080 = vst [vmem:[#allocation2 + $0x3e8] sm:$0xff] %v4044
        %4081 = vst [vmem:[#allocation2 + $0x430] sm:$0xff] %v4045
        %4082 = vst [vmem:[#allocation2 + $0x478] sm:$0xff] %v4046
        %4083 = vst [vmem:[#allocation2 + $0x4c0] sm:$0xff] %v4047
        %4084 = vst [vmem:[#allocation2 + $0x508] sm:$0xff] %v4048
        %4085 = vst [vmem:[#allocation2 + $0x550] sm:$0xff] %v4049
        %4086 = vst [vmem:[#allocation2 + $0x598] sm:$0xff] %v4050
        %4087 = vst [vmem:[#allocation2 + $0x5e0] sm:$0xff] %v4051
        %4088 = vst [vmem:[#allocation2 + $0x628] sm:$0xff] %v4052
        %4089 = vst [vmem:[#allocation2 + $0x670] sm:$0xff] %v4053
        %4090 = vst [vmem:[#allocation2 + $0x6b8] sm:$0xff] %v4054
        %4091 = vst [vmem:[#allocation2 + $0x700] sm:$0xff] %v4055
        %4092 = vst [vmem:[#allocation2 + $0x748] sm:$0xff] %v4056
        %4093 = vst [vmem:[#allocation2 + $0x790] sm:$0xff] %v4057
        %4094 = vst [vmem:[#allocation2 + $0x7d8] sm:$0xff] %v4058
        %4095 = vst [vmem:[#allocation2 + $0x820] sm:$0xff] %v4059
        %4096 = vst [vmem:[#allocation2 + $0x868] sm:$0xff] %v4060
        %4097 = vst [vmem:[#allocation2 + $0x8b0] sm:$0xff] %v4061
        %4098 = vst [vmem:[#allocation2 + $0x8f8] sm:$0xff] %v4062
        %4099 = vst [vmem:[#allocation2 + $0x940] sm:$0xff] %v4063
        %4100 = vst [vmem:[#allocation2 + $0x988] sm:$0xff] %v4064
        %4101 = vst [vmem:[#allocation2 + $0x9d0] sm:$0xff] %v4065
        %4102 = vst [vmem:[#allocation2 + $0xa18] sm:$0xff] %v4066
        %v4103 = vld [vmem:[#allocation2] sm:$0xff]
        %v4104 = vld [vmem:[#allocation2 + $0x8] sm:$0xff]
        %v4105 = vld [vmem:[#allocation2 + $0x10] sm:$0xff]
        %v4106 = vld [vmem:[#allocation2 + $0x18] sm:$0xff]
        %v4107 = vld [vmem:[#allocation2 + $0x20] sm:$0xff]
        %v4108 = vld [vmem:[#allocation2 + $0x28] sm:$0xff]
        %v4109 = vld [vmem:[#allocation2 + $0x30] sm:$0xff]
        %v4110 = vld [vmem:[#allocation2 + $0x38] sm:$0xff]
        %v4111 = vld [vmem:[#allocation2 + $0x40] sm:$0xff]
        %v4112 = vld [vmem:[#allocation2 + $0x48] sm:$0xff]
        %v4113 = vld [vmem:[#allocation2 + $0x50] sm:$0xff]
        %v4114 = vld [vmem:[#allocation2 + $0x58] sm:$0xff]
        %v4115 = vld [vmem:[#allocation2 + $0x60] sm:$0xff]
        %v4116 = vld [vmem:[#allocation2 + $0x68] sm:$0xff]
        %v4117 = vld [vmem:[#allocation2 + $0x70] sm:$0xff]
        %v4118 = vld [vmem:[#allocation2 + $0x78] sm:$0xff]
        %v4119 = vld [vmem:[#allocation2 + $0x80] sm:$0xff]
        %v4120 = vld [vmem:[#allocation2 + $0x88] sm:$0xff]
        %v4121 = vld [vmem:[#allocation2 + $0x90] sm:$0xff]
        %v4122 = vld [vmem:[#allocation2 + $0x98] sm:$0xff]
        %v4123 = vld [vmem:[#allocation2 + $0xa0] sm:$0xff]
        %v4124 = vld [vmem:[#allocation2 + $0xa8] sm:$0xff]
        %v4125 = vld [vmem:[#allocation2 + $0xb0] sm:$0xff]
        %v4126 = vld [vmem:[#allocation2 + $0xb8] sm:$0xff]
        %v4127 = vld [vmem:[#allocation2 + $0xc0] sm:$0xff]
        %v4128 = vld [vmem:[#allocation2 + $0xc8] sm:$0xff]
        %v4129 = vld [vmem:[#allocation2 + $0xd0] sm:$0xff]
        %v4130 = vld [vmem:[#allocation2 + $0xd8] sm:$0xff]
        %v4131 = vld [vmem:[#allocation2 + $0xe0] sm:$0xff]
        %v4132 = vld [vmem:[#allocation2 + $0xe8] sm:$0xff]
        %v4133 = vld [vmem:[#allocation2 + $0xf0] sm:$0xff]
        %v4134 = vld [vmem:[#allocation2 + $0xf8] sm:$0xff]
        %v4135 = vld [vmem:[#allocation2 + $0x100] sm:$0xff]
        %v4136 = vld [vmem:[#allocation2 + $0x108] sm:$0xff]
        %v4137 = vld [vmem:[#allocation2 + $0x110] sm:$0xff]
        %v4138 = vld [vmem:[#allocation2 + $0x118] sm:$0xff]
        %v4139 = vld [vmem:[#allocation2 + $0x120] sm:$0xff]
        %v4140 = vld [vmem:[#allocation2 + $0x128] sm:$0xff]
        %v4141 = vld [vmem:[#allocation2 + $0x130] sm:$0xff]
        %v4142 = vld [vmem:[#allocation2 + $0x138] sm:$0xff]
        %v4143 = vld [vmem:[#allocation2 + $0x140] sm:$0xff]
        %v4144 = vld [vmem:[#allocation2 + $0x148] sm:$0xff]
        %v4145 = vld [vmem:[#allocation2 + $0x150] sm:$0xff]
        %v4146 = vld [vmem:[#allocation2 + $0x158] sm:$0xff]
        %v4147 = vld [vmem:[#allocation2 + $0x160] sm:$0xff]
        %v4148 = vld [vmem:[#allocation2 + $0x168] sm:$0xff]
        %v4149 = vld [vmem:[#allocation2 + $0x170] sm:$0xff]
        %v4150 = vld [vmem:[#allocation2 + $0x178] sm:$0xff]
        %v4151 = vld [vmem:[#allocation2 + $0x180] sm:$0xff]
        %v4152 = vld [vmem:[#allocation2 + $0x188] sm:$0xff]
        %v4153 = vld [vmem:[#allocation2 + $0x190] sm:$0xff]
        %v4154 = vld [vmem:[#allocation2 + $0x198] sm:$0xff]
        %v4155 = vld [vmem:[#allocation2 + $0x1a0] sm:$0xff]
        %v4156 = vld [vmem:[#allocation2 + $0x1a8] sm:$0xff]
        %v4157 = vld [vmem:[#allocation2 + $0x1b0] sm:$0xff]
        %v4158 = vld [vmem:[#allocation2 + $0x1b8] sm:$0xff]
        %v4159 = vld [vmem:[#allocation2 + $0x1c0] sm:$0xff]
        %v4160 = vld [vmem:[#allocation2 + $0x1c8] sm:$0xff]
        %v4161 = vld [vmem:[#allocation2 + $0x1d0] sm:$0xff]
        %v4162 = vld [vmem:[#allocation2 + $0x1d8] sm:$0xff]
        %v4163 = vld [vmem:[#allocation2 + $0x1e0] sm:$0xff]
        %v4164 = vld [vmem:[#allocation2 + $0x1e8] sm:$0xff]
        %v4165 = vld [vmem:[#allocation2 + $0x1f0] sm:$0xff]
        %v4166 = vld [vmem:[#allocation2 + $0x1f8] sm:$0xff]
        %v4167 = vld [vmem:[#allocation2 + $0x200] sm:$0xff]
        %v4168 = vld [vmem:[#allocation2 + $0x208] sm:$0xff]
        %v4169 = vld [vmem:[#allocation2 + $0x210] sm:$0xff]
        %v4170 = vld [vmem:[#allocation2 + $0x218] sm:$0xff]
        %v4171 = vld [vmem:[#allocation2 + $0x220] sm:$0xff]
        %v4172 = vld [vmem:[#allocation2 + $0x228] sm:$0xff]
        %v4173 = vld [vmem:[#allocation2 + $0x230] sm:$0xff]
        %v4174 = vld [vmem:[#allocation2 + $0x238] sm:$0xff]
        %v4175 = vld [vmem:[#allocation2 + $0x240] sm:$0xff]
        %v4176 = vld [vmem:[#allocation2 + $0x248] sm:$0xff]
        %v4177 = vld [vmem:[#allocation2 + $0x250] sm:$0xff]
        %v4178 = vld [vmem:[#allocation2 + $0x258] sm:$0xff]
        %v4179 = vld [vmem:[#allocation2 + $0x260] sm:$0xff]
        %v4180 = vld [vmem:[#allocation2 + $0x268] sm:$0xff]
        %v4181 = vld [vmem:[#allocation2 + $0x270] sm:$0xff]
        %v4182 = vld [vmem:[#allocation2 + $0x278] sm:$0xff]
        %v4183 = vld [vmem:[#allocation2 + $0x280] sm:$0xff]
        %v4184 = vld [vmem:[#allocation2 + $0x288] sm:$0xff]
        %v4185 = vld [vmem:[#allocation2 + $0x290] sm:$0xff]
        %v4186 = vld [vmem:[#allocation2 + $0x298] sm:$0xff]
        %v4187 = vld [vmem:[#allocation2 + $0x2a0] sm:$0xff]
        %v4188 = vld [vmem:[#allocation2 + $0x2a8] sm:$0xff]
        %v4189 = vld [vmem:[#allocation2 + $0x2b0] sm:$0xff]
        %v4190 = vld [vmem:[#allocation2 + $0x2b8] sm:$0xff]
        %v4191 = vld [vmem:[#allocation2 + $0x2c0] sm:$0xff]
        %v4192 = vld [vmem:[#allocation2 + $0x2c8] sm:$0xff]
        %v4193 = vld [vmem:[#allocation2 + $0x2d0] sm:$0xff]
        %v4194 = vld [vmem:[#allocation2 + $0x2d8] sm:$0xff]
        %v4195 = vld [vmem:[#allocation2 + $0x2e0] sm:$0xff]
        %v4196 = vld [vmem:[#allocation2 + $0x2e8] sm:$0xff]
        %v4197 = vld [vmem:[#allocation2 + $0x2f0] sm:$0xff]
        %v4198 = vld [vmem:[#allocation2 + $0x2f8] sm:$0xff]
        %v4199 = vld [vmem:[#allocation2 + $0x300] sm:$0xff]
        %v4200 = vld [vmem:[#allocation2 + $0x308] sm:$0xff]
        %v4201 = vld [vmem:[#allocation2 + $0x310] sm:$0xff]
        %v4202 = vld [vmem:[#allocation2 + $0x318] sm:$0xff]
        %v4203 = vld [vmem:[#allocation2 + $0x320] sm:$0xff]
        %v4204 = vld [vmem:[#allocation2 + $0x328] sm:$0xff]
        %v4205 = vld [vmem:[#allocation2 + $0x330] sm:$0xff]
        %v4206 = vld [vmem:[#allocation2 + $0x338] sm:$0xff]
        %v4207 = vld [vmem:[#allocation2 + $0x340] sm:$0xff]
        %v4208 = vld [vmem:[#allocation2 + $0x348] sm:$0xff]
        %v4209 = vld [vmem:[#allocation2 + $0x350] sm:$0xff]
        %v4210 = vld [vmem:[#allocation2 + $0x358] sm:$0xff]
        %v4211 = vld [vmem:[#allocation2 + $0x360] sm:$0xff]
        %v4212 = vld [vmem:[#allocation2 + $0x368] sm:$0xff]
        %v4213 = vld [vmem:[#allocation2 + $0x370] sm:$0xff]
        %v4214 = vld [vmem:[#allocation2 + $0x378] sm:$0xff]
        %v4215 = vld [vmem:[#allocation2 + $0x380] sm:$0xff]
        %v4216 = vld [vmem:[#allocation2 + $0x388] sm:$0xff]
        %v4217 = vld [vmem:[#allocation2 + $0x390] sm:$0xff]
        %v4218 = vld [vmem:[#allocation2 + $0x398] sm:$0xff]
        %v4219 = vld [vmem:[#allocation2 + $0x3a0] sm:$0xff]
        %v4220 = vld [vmem:[#allocation2 + $0x3a8] sm:$0xff]
        %v4221 = vld [vmem:[#allocation2 + $0x3b0] sm:$0xff]
        %v4222 = vld [vmem:[#allocation2 + $0x3b8] sm:$0xff]
        %v4223 = vld [vmem:[#allocation2 + $0x3c0] sm:$0xff]
        %v4224 = vld [vmem:[#allocation2 + $0x3c8] sm:$0xff]
        %v4225 = vld [vmem:[#allocation2 + $0x3d0] sm:$0xff]
        %v4226 = vld [vmem:[#allocation2 + $0x3d8] sm:$0xff]
        %v4227 = vld [vmem:[#allocation2 + $0x3e0] sm:$0xff]
        %v4228 = vld [vmem:[#allocation2 + $0x3e8] sm:$0xff]
        %v4229 = vld [vmem:[#allocation2 + $0x3f0] sm:$0xff]
        %v4230 = vld [vmem:[#allocation2 + $0x3f8] sm:$0xff]
        %v4231 = vld [vmem:[#allocation2 + $0x400] sm:$0xff]
        %v4232 = vld [vmem:[#allocation2 + $0x408] sm:$0xff]
        %v4233 = vld [vmem:[#allocation2 + $0x410] sm:$0xff]
        %v4234 = vld [vmem:[#allocation2 + $0x418] sm:$0xff]
        %v4235 = vld [vmem:[#allocation2 + $0x420] sm:$0xff]
        %v4236 = vld [vmem:[#allocation2 + $0x428] sm:$0xff]
        %v4237 = vld [vmem:[#allocation2 + $0x430] sm:$0xff]
        %v4238 = vld [vmem:[#allocation2 + $0x438] sm:$0xff]
        %v4239 = vld [vmem:[#allocation2 + $0x440] sm:$0xff]
        %v4240 = vld [vmem:[#allocation2 + $0x448] sm:$0xff]
        %v4241 = vld [vmem:[#allocation2 + $0x450] sm:$0xff]
        %v4242 = vld [vmem:[#allocation2 + $0x458] sm:$0xff]
        %v4243 = vld [vmem:[#allocation2 + $0x460] sm:$0xff]
        %v4244 = vld [vmem:[#allocation2 + $0x468] sm:$0xff]
        %v4245 = vld [vmem:[#allocation2 + $0x470] sm:$0xff]
        %v4246 = vld [vmem:[#allocation2 + $0x478] sm:$0xff]
        %v4247 = vld [vmem:[#allocation2 + $0x480] sm:$0xff]
        %v4248 = vld [vmem:[#allocation2 + $0x488] sm:$0xff]
        %v4249 = vld [vmem:[#allocation2 + $0x490] sm:$0xff]
        %v4250 = vld [vmem:[#allocation2 + $0x498] sm:$0xff]
        %v4251 = vld [vmem:[#allocation2 + $0x4a0] sm:$0xff]
        %v4252 = vld [vmem:[#allocation2 + $0x4a8] sm:$0xff]
        %v4253 = vld [vmem:[#allocation2 + $0x4b0] sm:$0xff]
        %v4254 = vld [vmem:[#allocation2 + $0x4b8] sm:$0xff]
        %v4255 = vld [vmem:[#allocation2 + $0x4c0] sm:$0xff]
        %v4256 = vld [vmem:[#allocation2 + $0x4c8] sm:$0xff]
        %v4257 = vld [vmem:[#allocation2 + $0x4d0] sm:$0xff]
        %v4258 = vld [vmem:[#allocation2 + $0x4d8] sm:$0xff]
        %v4259 = vld [vmem:[#allocation2 + $0x4e0] sm:$0xff]
        %v4260 = vld [vmem:[#allocation2 + $0x4e8] sm:$0xff]
        %v4261 = vld [vmem:[#allocation2 + $0x4f0] sm:$0xff]
        %v4262 = vld [vmem:[#allocation2 + $0x4f8] sm:$0xff]
        %v4263 = vld [vmem:[#allocation2 + $0x500] sm:$0xff]
        %v4264 = vld [vmem:[#allocation2 + $0x508] sm:$0xff]
        %v4265 = vld [vmem:[#allocation2 + $0x510] sm:$0xff]
        %v4266 = vld [vmem:[#allocation2 + $0x518] sm:$0xff]
        %v4267 = vld [vmem:[#allocation2 + $0x520] sm:$0xff]
        %v4268 = vld [vmem:[#allocation2 + $0x528] sm:$0xff]
        %v4269 = vld [vmem:[#allocation2 + $0x530] sm:$0xff]
        %v4270 = vld [vmem:[#allocation2 + $0x538] sm:$0xff]
        %v4271 = vld [vmem:[#allocation2 + $0x540] sm:$0xff]
        %v4272 = vld [vmem:[#allocation2 + $0x548] sm:$0xff]
        %v4273 = vld [vmem:[#allocation2 + $0x550] sm:$0xff]
        %v4274 = vld [vmem:[#allocation2 + $0x558] sm:$0xff]
        %v4275 = vld [vmem:[#allocation2 + $0x560] sm:$0xff]
        %v4276 = vld [vmem:[#allocation2 + $0x568] sm:$0xff]
        %v4277 = vld [vmem:[#allocation2 + $0x570] sm:$0xff]
        %v4278 = vld [vmem:[#allocation2 + $0x578] sm:$0xff]
        %v4279 = vld [vmem:[#allocation2 + $0x580] sm:$0xff]
        %v4280 = vld [vmem:[#allocation2 + $0x588] sm:$0xff]
        %v4281 = vld [vmem:[#allocation2 + $0x590] sm:$0xff]
        %v4282 = vld [vmem:[#allocation2 + $0x598] sm:$0xff]
        %v4283 = vld [vmem:[#allocation2 + $0x5a0] sm:$0xff]
        %v4284 = vld [vmem:[#allocation2 + $0x5a8] sm:$0xff]
        %v4285 = vld [vmem:[#allocation2 + $0x5b0] sm:$0xff]
        %v4286 = vld [vmem:[#allocation2 + $0x5b8] sm:$0xff]
        %v4287 = vld [vmem:[#allocation2 + $0x5c0] sm:$0xff]
        %v4288 = vld [vmem:[#allocation2 + $0x5c8] sm:$0xff]
        %v4289 = vld [vmem:[#allocation2 + $0x5d0] sm:$0xff]
        %v4290 = vld [vmem:[#allocation2 + $0x5d8] sm:$0xff]
        %v4291 = vld [vmem:[#allocation2 + $0x5e0] sm:$0xff]
        %v4292 = vld [vmem:[#allocation2 + $0x5e8] sm:$0xff]
        %v4293 = vld [vmem:[#allocation2 + $0x5f0] sm:$0xff]
        %v4294 = vld [vmem:[#allocation2 + $0x5f8] sm:$0xff]
        %v4295 = vld [vmem:[#allocation2 + $0x600] sm:$0xff]
        %v4296 = vld [vmem:[#allocation2 + $0x608] sm:$0xff]
        %v4297 = vld [vmem:[#allocation2 + $0x610] sm:$0xff]
        %v4298 = vld [vmem:[#allocation2 + $0x618] sm:$0xff]
        %v4299 = vld [vmem:[#allocation2 + $0x620] sm:$0xff]
        %v4300 = vld [vmem:[#allocation2 + $0x628] sm:$0xff]
        %v4301 = vld [vmem:[#allocation2 + $0x630] sm:$0xff]
        %v4302 = vld [vmem:[#allocation2 + $0x638] sm:$0xff]
        %v4303 = vld [vmem:[#allocation2 + $0x640] sm:$0xff]
        %v4304 = vld [vmem:[#allocation2 + $0x648] sm:$0xff]
        %v4305 = vld [vmem:[#allocation2 + $0x650] sm:$0xff]
        %v4306 = vld [vmem:[#allocation2 + $0x658] sm:$0xff]
        %v4307 = vld [vmem:[#allocation2 + $0x660] sm:$0xff]
        %v4308 = vld [vmem:[#allocation2 + $0x668] sm:$0xff]
        %v4309 = vld [vmem:[#allocation2 + $0x670] sm:$0xff]
        %v4310 = vld [vmem:[#allocation2 + $0x678] sm:$0xff]
        %v4311 = vld [vmem:[#allocation2 + $0x680] sm:$0xff]
        %v4312 = vld [vmem:[#allocation2 + $0x688] sm:$0xff]
        %v4313 = vld [vmem:[#allocation2 + $0x690] sm:$0xff]
        %v4314 = vld [vmem:[#allocation2 + $0x698] sm:$0xff]
        %v4315 = vld [vmem:[#allocation2 + $0x6a0] sm:$0xff]
        %v4316 = vld [vmem:[#allocation2 + $0x6a8] sm:$0xff]
        %v4317 = vld [vmem:[#allocation2 + $0x6b0] sm:$0xff]
        %v4318 = vld [vmem:[#allocation2 + $0x6b8] sm:$0xff]
        %v4319 = vld [vmem:[#allocation2 + $0x6c0] sm:$0xff]
        %v4320 = vld [vmem:[#allocation2 + $0x6c8] sm:$0xff]
        %v4321 = vld [vmem:[#allocation2 + $0x6d0] sm:$0xff]
        %v4322 = vld [vmem:[#allocation2 + $0x6d8] sm:$0xff]
        %v4323 = vld [vmem:[#allocation2 + $0x6e0] sm:$0xff]
        %v4324 = vld [vmem:[#allocation2 + $0x6e8] sm:$0xff]
        %v4325 = vld [vmem:[#allocation2 + $0x6f0] sm:$0xff]
        %v4326 = vld [vmem:[#allocation2 + $0x6f8] sm:$0xff]
        %v4327 = vld [vmem:[#allocation2 + $0x700] sm:$0xff]
        %v4328 = vld [vmem:[#allocation2 + $0x708] sm:$0xff]
        %v4329 = vld [vmem:[#allocation2 + $0x710] sm:$0xff]
        %v4330 = vld [vmem:[#allocation2 + $0x718] sm:$0xff]
        %v4331 = vld [vmem:[#allocation2 + $0x720] sm:$0xff]
        %v4332 = vld [vmem:[#allocation2 + $0x728] sm:$0xff]
        %v4333 = vld [vmem:[#allocation2 + $0x730] sm:$0xff]
        %v4334 = vld [vmem:[#allocation2 + $0x738] sm:$0xff]
        %v4335 = vld [vmem:[#allocation2 + $0x740] sm:$0xff]
        %v4336 = vld [vmem:[#allocation2 + $0x748] sm:$0xff]
        %v4337 = vld [vmem:[#allocation2 + $0x750] sm:$0xff]
        %v4338 = vld [vmem:[#allocation2 + $0x758] sm:$0xff]
        %v4339 = vld [vmem:[#allocation2 + $0x760] sm:$0xff]
        %v4340 = vld [vmem:[#allocation2 + $0x768] sm:$0xff]
        %v4341 = vld [vmem:[#allocation2 + $0x770] sm:$0xff]
        %v4342 = vld [vmem:[#allocation2 + $0x778] sm:$0xff]
        %v4343 = vld [vmem:[#allocation2 + $0x780] sm:$0xff]
        %v4344 = vld [vmem:[#allocation2 + $0x788] sm:$0xff]
        %v4345 = vld [vmem:[#allocation2 + $0x790] sm:$0xff]
        %v4346 = vld [vmem:[#allocation2 + $0x798] sm:$0xff]
        %v4347 = vld [vmem:[#allocation2 + $0x7a0] sm:$0xff]
        %v4348 = vld [vmem:[#allocation2 + $0x7a8] sm:$0xff]
        %v4349 = vld [vmem:[#allocation2 + $0x7b0] sm:$0xff]
        %v4350 = vld [vmem:[#allocation2 + $0x7b8] sm:$0xff]
        %v4351 = vld [vmem:[#allocation2 + $0x7c0] sm:$0xff]
        %v4352 = vld [vmem:[#allocation2 + $0x7c8] sm:$0xff]
        %v4353 = vld [vmem:[#allocation2 + $0x7d0] sm:$0xff]
        %v4354 = vld [vmem:[#allocation2 + $0x7d8] sm:$0xff]
        %v4355 = vld [vmem:[#allocation2 + $0x7e0] sm:$0xff]
        %v4356 = vld [vmem:[#allocation2 + $0x7e8] sm:$0xff]
        %v4357 = vld [vmem:[#allocation2 + $0x7f0] sm:$0xff]
        %v4358 = vld [vmem:[#allocation2 + $0x7f8] sm:$0xff]
        %v4359 = vld [vmem:[#allocation2 + $0x800] sm:$0xff]
        %v4360 = vld [vmem:[#allocation2 + $0x808] sm:$0xff]
        %v4361 = vld [vmem:[#allocation2 + $0x810] sm:$0xff]
        %v4362 = vld [vmem:[#allocation2 + $0x818] sm:$0xff]
        %v4363 = vld [vmem:[#allocation2 + $0x820] sm:$0xff]
        %v4364 = vld [vmem:[#allocation2 + $0x828] sm:$0xff]
        %v4365 = vld [vmem:[#allocation2 + $0x830] sm:$0xff]
        %v4366 = vld [vmem:[#allocation2 + $0x838] sm:$0xff]
        %v4367 = vld [vmem:[#allocation2 + $0x840] sm:$0xff]
        %v4368 = vld [vmem:[#allocation2 + $0x848] sm:$0xff]
        %v4369 = vld [vmem:[#allocation2 + $0x850] sm:$0xff]
        %v4370 = vld [vmem:[#allocation2 + $0x858] sm:$0xff]
        %v4371 = vld [vmem:[#allocation2 + $0x860] sm:$0xff]
        %v4372 = vld [vmem:[#allocation2 + $0x868] sm:$0xff]
        %v4373 = vld [vmem:[#allocation2 + $0x870] sm:$0xff]
        %v4374 = vld [vmem:[#allocation2 + $0x878] sm:$0xff]
        %v4375 = vld [vmem:[#allocation2 + $0x880] sm:$0xff]
        %v4376 = vld [vmem:[#allocation2 + $0x888] sm:$0xff]
        %v4377 = vld [vmem:[#allocation2 + $0x890] sm:$0xff]
        %v4378 = vld [vmem:[#allocation2 + $0x898] sm:$0xff]
        %v4379 = vld [vmem:[#allocation2 + $0x8a0] sm:$0xff]
        %v4380 = vld [vmem:[#allocation2 + $0x8a8] sm:$0xff]
        %v4381 = vld [vmem:[#allocation2 + $0x8b0] sm:$0xff]
        %v4382 = vld [vmem:[#allocation2 + $0x8b8] sm:$0xff]
        %v4383 = vld [vmem:[#allocation2 + $0x8c0] sm:$0xff]
        %v4384 = vld [vmem:[#allocation2 + $0x8c8] sm:$0xff]
        %v4385 = vld [vmem:[#allocation2 + $0x8d0] sm:$0xff]
        %v4386 = vld [vmem:[#allocation2 + $0x8d8] sm:$0xff]
        %v4387 = vld [vmem:[#allocation2 + $0x8e0] sm:$0xff]
        %v4388 = vld [vmem:[#allocation2 + $0x8e8] sm:$0xff]
        %v4389 = vld [vmem:[#allocation2 + $0x8f0] sm:$0xff]
        %v4390 = vld [vmem:[#allocation2 + $0x8f8] sm:$0xff]
        %v4391 = vld [vmem:[#allocation2 + $0x900] sm:$0xff]
        %v4392 = vld [vmem:[#allocation2 + $0x908] sm:$0xff]
        %v4393 = vld [vmem:[#allocation2 + $0x910] sm:$0xff]
        %v4394 = vld [vmem:[#allocation2 + $0x918] sm:$0xff]
        %v4395 = vld [vmem:[#allocation2 + $0x920] sm:$0xff]
        %v4396 = vld [vmem:[#allocation2 + $0x928] sm:$0xff]
        %v4397 = vld [vmem:[#allocation2 + $0x930] sm:$0xff]
        %v4398 = vld [vmem:[#allocation2 + $0x938] sm:$0xff]
        %v4399 = vld [vmem:[#allocation2 + $0x940] sm:$0xff]
        %v4400 = vld [vmem:[#allocation2 + $0x948] sm:$0xff]
        %v4401 = vld [vmem:[#allocation2 + $0x950] sm:$0xff]
        %v4402 = vld [vmem:[#allocation2 + $0x958] sm:$0xff]
        %v4403 = vld [vmem:[#allocation2 + $0x960] sm:$0xff]
        %v4404 = vld [vmem:[#allocation2 + $0x968] sm:$0xff]
        %v4405 = vld [vmem:[#allocation2 + $0x970] sm:$0xff]
        %v4406 = vld [vmem:[#allocation2 + $0x978] sm:$0xff]
        %v4407 = vld [vmem:[#allocation2 + $0x980] sm:$0xff]
        %v4408 = vld [vmem:[#allocation2 + $0x988] sm:$0xff]
        %v4409 = vld [vmem:[#allocation2 + $0x990] sm:$0xff]
        %v4410 = vld [vmem:[#allocation2 + $0x998] sm:$0xff]
        %v4411 = vld [vmem:[#allocation2 + $0x9a0] sm:$0xff]
        %v4412 = vld [vmem:[#allocation2 + $0x9a8] sm:$0xff]
        %v4413 = vld [vmem:[#allocation2 + $0x9b0] sm:$0xff]
        %v4414 = vld [vmem:[#allocation2 + $0x9b8] sm:$0xff]
        %v4415 = vld [vmem:[#allocation2 + $0x9c0] sm:$0xff]
        %v4416 = vld [vmem:[#allocation2 + $0x9c8] sm:$0xff]
        %v4417 = vld [vmem:[#allocation2 + $0x9d0] sm:$0xff]
        %v4418 = vld [vmem:[#allocation2 + $0x9d8] sm:$0xff]
        %v4419 = vld [vmem:[#allocation2 + $0x9e0] sm:$0xff]
        %v4420 = vld [vmem:[#allocation2 + $0x9e8] sm:$0xff]
        %v4421 = vld [vmem:[#allocation2 + $0x9f0] sm:$0xff]
        %v4422 = vld [vmem:[#allocation2 + $0x9f8] sm:$0xff]
        %v4423 = vld [vmem:[#allocation2 + $0xa00] sm:$0xff]
        %v4424 = vld [vmem:[#allocation2 + $0xa08] sm:$0xff]
        %v4425 = vld [vmem:[#allocation2 + $0xa10] sm:$0xff]
        %v4426 = vld [vmem:[#allocation2 + $0xa18] sm:$0xff]
        %v4427 = vld [vmem:[#allocation9] sm:$0xff]
        %v4428 = vld [vmem:[#allocation9 + $0x8] sm:$0xff]
        %v4429 = vld [vmem:[#allocation9 + $0x10] sm:$0xff]
        %v4430 = vld [vmem:[#allocation9 + $0x18] sm:$0xff]
        %v4431 = vld [vmem:[#allocation9 + $0x20] sm:$0xff]
        %v4432 = vld [vmem:[#allocation9 + $0x28] sm:$0xff]
        %v4433 = vld [vmem:[#allocation9 + $0x30] sm:$0xff]
        %v4434 = vld [vmem:[#allocation9 + $0x38] sm:$0xff]
        %v4435 = vld [vmem:[#allocation9 + $0x40] sm:$0xff]
        %v4436 = vld [vmem:[#allocation9 + $0x48] sm:$0xff]
        %v4437 = vld [vmem:[#allocation9 + $0x50] sm:$0xff]
        %v4438 = vld [vmem:[#allocation9 + $0x58] sm:$0xff]
        %v4439 = vld [vmem:[#allocation9 + $0x60] sm:$0xff]
        %v4440 = vld [vmem:[#allocation9 + $0x68] sm:$0xff]
        %v4441 = vld [vmem:[#allocation9 + $0x70] sm:$0xff]
        %v4442 = vld [vmem:[#allocation9 + $0x78] sm:$0xff]
        %v4443 = vld [vmem:[#allocation9 + $0x80] sm:$0xff]
        %v4444 = vld [vmem:[#allocation9 + $0x88] sm:$0xff]
        %v4445 = vld [vmem:[#allocation9 + $0x90] sm:$0xff]
        %v4446 = vld [vmem:[#allocation9 + $0x98] sm:$0xff]
        %v4447 = vld [vmem:[#allocation9 + $0xa0] sm:$0xff]
        %v4448 = vld [vmem:[#allocation9 + $0xa8] sm:$0xff]
        %v4449 = vld [vmem:[#allocation9 + $0xb0] sm:$0xff]
        %v4450 = vld [vmem:[#allocation9 + $0xb8] sm:$0xff]
        %v4451 = vld [vmem:[#allocation9 + $0xc0] sm:$0xff]
        %v4452 = vld [vmem:[#allocation9 + $0xc8] sm:$0xff]
        %v4453 = vld [vmem:[#allocation9 + $0xd0] sm:$0xff]
        %v4454 = vld [vmem:[#allocation9 + $0xd8] sm:$0xff]
        %v4455 = vld [vmem:[#allocation9 + $0xe0] sm:$0xff]
        %v4456 = vld [vmem:[#allocation9 + $0xe8] sm:$0xff]
        %v4457 = vld [vmem:[#allocation9 + $0xf0] sm:$0xff]
        %v4458 = vld [vmem:[#allocation9 + $0xf8] sm:$0xff]
        %v4459 = vld [vmem:[#allocation9 + $0x100] sm:$0xff]
        %v4460 = vld [vmem:[#allocation9 + $0x108] sm:$0xff]
        %v4461 = vld [vmem:[#allocation9 + $0x110] sm:$0xff]
        %v4462 = vld [vmem:[#allocation9 + $0x118] sm:$0xff]
        %v4463 = vld [vmem:[#allocation9 + $0x120] sm:$0xff]
        %v4464 = vld [vmem:[#allocation9 + $0x128] sm:$0xff]
        %v4465 = vld [vmem:[#allocation9 + $0x130] sm:$0xff]
        %v4466 = vld [vmem:[#allocation9 + $0x138] sm:$0xff]
        %v4467 = vld [vmem:[#allocation9 + $0x140] sm:$0xff]
        %v4468 = vld [vmem:[#allocation9 + $0x148] sm:$0xff]
        %v4469 = vld [vmem:[#allocation9 + $0x150] sm:$0xff]
        %v4470 = vld [vmem:[#allocation9 + $0x158] sm:$0xff]
        %v4471 = vld [vmem:[#allocation9 + $0x160] sm:$0xff]
        %v4472 = vld [vmem:[#allocation9 + $0x168] sm:$0xff]
        %v4473 = vld [vmem:[#allocation9 + $0x170] sm:$0xff]
        %v4474 = vld [vmem:[#allocation9 + $0x178] sm:$0xff]
        %v4475 = vld [vmem:[#allocation9 + $0x180] sm:$0xff]
        %v4476 = vld [vmem:[#allocation9 + $0x188] sm:$0xff]
        %v4477 = vld [vmem:[#allocation9 + $0x190] sm:$0xff]
        %v4478 = vld [vmem:[#allocation9 + $0x198] sm:$0xff]
        %v4479 = vld [vmem:[#allocation9 + $0x1a0] sm:$0xff]
        %v4480 = vld [vmem:[#allocation9 + $0x1a8] sm:$0xff]
        %v4481 = vld [vmem:[#allocation9 + $0x1b0] sm:$0xff]
        %v4482 = vld [vmem:[#allocation9 + $0x1b8] sm:$0xff]
        %v4483 = vld [vmem:[#allocation9 + $0x1c0] sm:$0xff]
        %v4484 = vld [vmem:[#allocation9 + $0x1c8] sm:$0xff]
        %v4485 = vld [vmem:[#allocation9 + $0x1d0] sm:$0xff]
        %v4486 = vld [vmem:[#allocation9 + $0x1d8] sm:$0xff]
        %v4487 = vld [vmem:[#allocation9 + $0x1e0] sm:$0xff]
        %v4488 = vld [vmem:[#allocation9 + $0x1e8] sm:$0xff]
        %v4489 = vld [vmem:[#allocation9 + $0x1f0] sm:$0xff]
        %v4490 = vld [vmem:[#allocation9 + $0x1f8] sm:$0xff]
        %v4491 = vld [vmem:[#allocation9 + $0x200] sm:$0xff]
        %v4492 = vld [vmem:[#allocation9 + $0x208] sm:$0xff]
        %v4493 = vld [vmem:[#allocation9 + $0x210] sm:$0xff]
        %v4494 = vld [vmem:[#allocation9 + $0x218] sm:$0xff]
        %v4495 = vld [vmem:[#allocation9 + $0x220] sm:$0xff]
        %v4496 = vld [vmem:[#allocation9 + $0x228] sm:$0xff]
        %v4497 = vld [vmem:[#allocation9 + $0x230] sm:$0xff]
        %v4498 = vld [vmem:[#allocation9 + $0x238] sm:$0xff]
        %v4499 = vld [vmem:[#allocation9 + $0x240] sm:$0xff]
        %v4500 = vld [vmem:[#allocation9 + $0x248] sm:$0xff]
        %v4501 = vld [vmem:[#allocation9 + $0x250] sm:$0xff]
        %v4502 = vld [vmem:[#allocation9 + $0x258] sm:$0xff]
        %v4503 = vld [vmem:[#allocation9 + $0x260] sm:$0xff]
        %v4504 = vld [vmem:[#allocation9 + $0x268] sm:$0xff]
        %v4505 = vld [vmem:[#allocation9 + $0x270] sm:$0xff]
        %v4506 = vld [vmem:[#allocation9 + $0x278] sm:$0xff]
        %v4507 = vld [vmem:[#allocation9 + $0x280] sm:$0xff]
        %v4508 = vld [vmem:[#allocation9 + $0x288] sm:$0xff]
        %v4509 = vld [vmem:[#allocation9 + $0x290] sm:$0xff]
        %v4510 = vld [vmem:[#allocation9 + $0x298] sm:$0xff]
        %v4511 = vld [vmem:[#allocation9 + $0x2a0] sm:$0xff]
        %v4512 = vld [vmem:[#allocation9 + $0x2a8] sm:$0xff]
        %v4513 = vld [vmem:[#allocation9 + $0x2b0] sm:$0xff]
        %v4514 = vld [vmem:[#allocation9 + $0x2b8] sm:$0xff]
        %v4515 = vld [vmem:[#allocation9 + $0x2c0] sm:$0xff]
        %v4516 = vld [vmem:[#allocation9 + $0x2c8] sm:$0xff]
        %v4517 = vld [vmem:[#allocation9 + $0x2d0] sm:$0xff]
        %v4518 = vld [vmem:[#allocation9 + $0x2d8] sm:$0xff]
        %v4519 = vld [vmem:[#allocation9 + $0x2e0] sm:$0xff]
        %v4520 = vld [vmem:[#allocation9 + $0x2e8] sm:$0xff]
        %v4521 = vld [vmem:[#allocation9 + $0x2f0] sm:$0xff]
        %v4522 = vld [vmem:[#allocation9 + $0x2f8] sm:$0xff]
        %v4523 = vld [vmem:[#allocation9 + $0x300] sm:$0xff]
        %v4524 = vld [vmem:[#allocation9 + $0x308] sm:$0xff]
        %v4525 = vld [vmem:[#allocation9 + $0x310] sm:$0xff]
        %v4526 = vld [vmem:[#allocation9 + $0x318] sm:$0xff]
        %v4527 = vld [vmem:[#allocation9 + $0x320] sm:$0xff]
        %v4528 = vld [vmem:[#allocation9 + $0x328] sm:$0xff]
        %v4529 = vld [vmem:[#allocation9 + $0x330] sm:$0xff]
        %v4530 = vld [vmem:[#allocation9 + $0x338] sm:$0xff]
        %v4531 = vld [vmem:[#allocation9 + $0x340] sm:$0xff]
        %v4532 = vld [vmem:[#allocation9 + $0x348] sm:$0xff]
        %v4533 = vld [vmem:[#allocation9 + $0x350] sm:$0xff]
        %v4534 = vld [vmem:[#allocation9 + $0x358] sm:$0xff]
        %v4535 = vld [vmem:[#allocation9 + $0x360] sm:$0xff]
        %v4536 = vld [vmem:[#allocation9 + $0x368] sm:$0xff]
        %v4537 = vld [vmem:[#allocation9 + $0x370] sm:$0xff]
        %v4538 = vld [vmem:[#allocation9 + $0x378] sm:$0xff]
        %v4539 = vld [vmem:[#allocation9 + $0x380] sm:$0xff]
        %v4540 = vld [vmem:[#allocation9 + $0x388] sm:$0xff]
        %v4541 = vld [vmem:[#allocation9 + $0x390] sm:$0xff]
        %v4542 = vld [vmem:[#allocation9 + $0x398] sm:$0xff]
        %v4543 = vld [vmem:[#allocation9 + $0x3a0] sm:$0xff]
        %v4544 = vld [vmem:[#allocation9 + $0x3a8] sm:$0xff]
        %v4545 = vld [vmem:[#allocation9 + $0x3b0] sm:$0xff]
        %v4546 = vld [vmem:[#allocation9 + $0x3b8] sm:$0xff]
        %v4547 = vld [vmem:[#allocation9 + $0x3c0] sm:$0xff]
        %v4548 = vld [vmem:[#allocation9 + $0x3c8] sm:$0xff]
        %v4549 = vld [vmem:[#allocation9 + $0x3d0] sm:$0xff]
        %v4550 = vld [vmem:[#allocation9 + $0x3d8] sm:$0xff]
        %v4551 = vld [vmem:[#allocation9 + $0x3e0] sm:$0xff]
        %v4552 = vld [vmem:[#allocation9 + $0x3e8] sm:$0xff]
        %v4553 = vld [vmem:[#allocation9 + $0x3f0] sm:$0xff]
        %v4554 = vld [vmem:[#allocation9 + $0x3f8] sm:$0xff]
        %v4555 = vld [vmem:[#allocation9 + $0x400] sm:$0xff]
        %v4556 = vld [vmem:[#allocation9 + $0x408] sm:$0xff]
        %v4557 = vld [vmem:[#allocation9 + $0x410] sm:$0xff]
        %v4558 = vld [vmem:[#allocation9 + $0x418] sm:$0xff]
        %v4559 = vld [vmem:[#allocation9 + $0x420] sm:$0xff]
        %v4560 = vld [vmem:[#allocation9 + $0x428] sm:$0xff]
        %v4561 = vld [vmem:[#allocation9 + $0x430] sm:$0xff]
        %v4562 = vld [vmem:[#allocation9 + $0x438] sm:$0xff]
        %v4563 = vld [vmem:[#allocation9 + $0x440] sm:$0xff]
        %v4564 = vld [vmem:[#allocation9 + $0x448] sm:$0xff]
        %v4565 = vld [vmem:[#allocation9 + $0x450] sm:$0xff]
        %v4566 = vld [vmem:[#allocation9 + $0x458] sm:$0xff]
        %v4567 = vld [vmem:[#allocation9 + $0x460] sm:$0xff]
        %v4568 = vld [vmem:[#allocation9 + $0x468] sm:$0xff]
        %v4569 = vld [vmem:[#allocation9 + $0x470] sm:$0xff]
        %v4570 = vld [vmem:[#allocation9 + $0x478] sm:$0xff]
        %v4571 = vld [vmem:[%s4] sm:$0x1]
        %v4573 = vlaneseq
        %v4574 = vshrl.u32 %v4573, 7
        %v4575 = vsub.s32 0, %v4574
        %v4576 = vrot.slane %v4571, %v4575
        %4578 = vmatprep.subr.mxu0 0.0
        %4579 = vmatpush1.msra.mxu0 %v4427
        %4580 = vmatprep.subr.mxu0 0.0
        %4581 = vmatpush1.msra.mxu0 %v4428
        %4582 = vmatprep.subr.mxu0 0.0
        %4583 = vmatpush1.msra.mxu0 %v4429
        %4584 = vmatprep.subr.mxu0 0.0
        %4585 = vmatpush1.msra.mxu0 %v4430
        %4586 = vmatprep.subr.mxu0 0.0
        %4587 = vmatpush1.msra.mxu0 %v4431
        %4588 = vmatprep.subr.mxu0 0.0
        %4589 = vmatpush1.msra.mxu0 %v4432
        %4590 = vmatprep.subr.mxu0 0.0
        %4591 = vmatpush1.msra.mxu0 %v4433
        %4592 = vmatprep.subr.mxu0 0.0
        %4593 = vmatpush1.msra.mxu0 %v4434
        %4594 = vmatprep.subr.mxu0 0.0
        %4595 = vmatpush1.msra.mxu0 %v4435
        %4596 = vmatprep.subr.mxu0 0.0
        %4597 = vmatpush1.msra.mxu0 %v4436
        %4598 = vmatprep.subr.mxu0 0.0
        %4599 = vmatpush1.msra.mxu0 %v4437
        %4600 = vmatprep.subr.mxu0 0.0
        %4601 = vmatpush1.msra.mxu0 %v4438
        %4602 = vmatprep.subr.mxu0 0.0
        %4603 = vmatpush1.msra.mxu0 %v4439
        %4604 = vmatprep.subr.mxu0 0.0
        %4605 = vmatpush1.msra.mxu0 %v4440
        %4606 = vmatprep.subr.mxu0 0.0
        %4607 = vmatpush1.msra.mxu0 %v4441
        %4608 = vmatprep.subr.mxu0 0.0
        %4609 = vmatpush1.msra.mxu0 %v4442
        %4610 = vmatprep.subr.mxu0 0.0
        %4611 = vmatpush1.msra.mxu0 %v4443
        %4612 = vmatprep.subr.mxu0 0.0
        %4613 = vmatpush1.msra.mxu0 %v4444
        %4614 = vmatprep.subr.mxu0 0.0
        %4615 = vmatpush1.msra.mxu0 %v4445
        %4616 = vmatprep.subr.mxu0 0.0
        %4617 = vmatpush1.msra.mxu0 %v4446
        %4618 = vmatprep.subr.mxu0 0.0
        %4619 = vmatpush1.msra.mxu0 %v4447
        %4620 = vmatprep.subr.mxu0 0.0
        %4621 = vmatpush1.msra.mxu0 %v4448
        %4622 = vmatprep.subr.mxu0 0.0
        %4623 = vmatpush1.msra.mxu0 %v4449
        %4624 = vmatprep.subr.mxu0 0.0
        %4625 = vmatpush1.msra.mxu0 %v4450
        %4626 = vmatprep.subr.mxu0 0.0
        %4627 = vmatpush1.msra.mxu0 %v4451
        %4628 = vmatprep.subr.mxu0 0.0
        %4629 = vmatpush1.msra.mxu0 %v4452
        %4630 = vmatprep.subr.mxu0 0.0
        %4631 = vmatpush1.msra.mxu0 %v4453
        %4632 = vmatprep.subr.mxu0 0.0
        %4633 = vmatpush1.msra.mxu0 %v4454
        %4634 = vmatprep.subr.mxu0 0.0
        %4635 = vmatpush1.msra.mxu0 %v4455
        %4636 = vmatprep.subr.mxu0 0.0
        %4637 = vmatpush1.msra.mxu0 %v4456
        %4638 = vmatprep.subr.mxu0 0.0
        %4639 = vmatpush1.msra.mxu0 %v4457
        %4640 = vmatprep.subr.mxu0 0.0
        %4641 = vmatpush1.msra.mxu0 %v4458
        %4642 = vmatprep.mubr.f32.mxu0 %v4104
        %4643 = vmatmul.mubr.f32.gmra.mrb[0].mxu0 %v4103
        %v4644 = vpop.f32.mrb[0].mxu0
        %v4645 = vadd.f32 %v4576, %v4644
        %v4646 = vpop.f32.mrb[0].mxu0
        %4647 = vmatprep.mubr.f32.mxu0 %v4113
        %4648 = vmatmul.mubr.f32.gmra.mrb[0].mxu0 %v4112
        %v4649 = vpop.f32.mrb[0].mxu0
        %v4650 = vadd.f32 %v4576, %v4649
        %v4651 = vpop.f32.mrb[0].mxu0
        %4652 = vmatprep.mubr.f32.mxu0 %v4122
        %4653 = vmatmul.mubr.f32.gmra.mrb[0].mxu0 %v4121
        %v4654 = vpop.f32.mrb[0].mxu0
        %v4655 = vadd.f32 %v4576, %v4654
        %v4656 = vpop.f32.mrb[0].mxu0
        %4657 = vmatprep.mubr.f32.mxu0 %v4131
        %4658 = vmatmul.mubr.f32.gmra.mrb[0].mxu0 %v4130
        %v4659 = vpop.f32.mrb[0].mxu0
        %v4660 = vadd.f32 %v4576, %v4659
        %v4661 = vpop.f32.mrb[0].mxu0
        %4662 = vmatprep.mubr.f32.mxu0 %v4140
        %4663 = vmatmul.mubr.f32.gmra.mrb[0].mxu0 %v4139
        %v4664 = vpop.f32.mrb[0].mxu0
        %v4665 = vadd.f32 %v4576, %v4664
        %v4666 = vpop.f32.mrb[0].mxu0
        %4667 = vmatprep.mubr.f32.mxu0 %v4149
        %4668 = vmatmul.mubr.f32.gmra.mrb[0].mxu0 %v4148
        %v4669 = vpop.f32.mrb[0].mxu0
        %v4670 = vadd.f32 %v4576, %v4669
        %v4671 = vpop.f32.mrb[0].mxu0
        %4672 = vmatprep.mubr.f32.mxu0 %v4158
        %4673 = vmatmul.mubr.f32.gmra.mrb[0].mxu0 %v4157
        %v4674 = vpop.f32.mrb[0].mxu0
        %v4675 = vadd.f32 %v4576, %v4674
        %v4676 = vpop.f32.mrb[0].mxu0
        %4677 = vmatprep.mubr.f32.mxu0 %v4167
        %4678 = vmatmul.mubr.f32.gmra.mrb[0].mxu0 %v4166
        %v4679 = vpop.f32.mrb[0].mxu0
        %v4680 = vadd.f32 %v4576, %v4679
        %v4681 = vpop.f32.mrb[0].mxu0
        %4682 = vmatprep.mubr.f32.mxu0 %v4176
        %4683 = vmatmul.mubr.f32.gmra.mrb[0].mxu0 %v4175
        %v4684 = vpop.f32.mrb[0].mxu0
        %v4685 = vadd.f32 %v4576, %v4684
        %v4686 = vpop.f32.mrb[0].mxu0
        %4687 = vmatprep.mubr.f32.mxu0 %v4185
        %4688 = vmatmul.mubr.f32.gmra.mrb[0].mxu0 %v4184
        %v4689 = vpop.f32.mrb[0].mxu0
        %v4690 = vadd.f32 %v4576, %v4689
        %v4691 = vpop.f32.mrb[0].mxu0
        %4692 = vmatprep.mubr.f32.mxu0 %v4194
        %4693 = vmatmul.mubr.f32.gmra.mrb[0].mxu0 %v4193
        %v4694 = vpop.f32.mrb[0].mxu0
        %v4695 = vadd.f32 %v4576, %v4694
        %v4696 = vpop.f32.mrb[0].mxu0
        %4697 = vmatprep.mubr.f32.mxu0 %v4203
        %4698 = vmatmul.mubr.f32.gmra.mrb[0].mxu0 %v4202
        %v4699 = vpop.f32.mrb[0].mxu0
        %v4700 = vadd.f32 %v4576, %v4699
        %v4701 = vpop.f32.mrb[0].mxu0
        %4702 = vmatprep.mubr.f32.mxu0 %v4212
        %4703 = vmatmul.mubr.f32.gmra.mrb[0].mxu0 %v4211
        %v4704 = vpop.f32.mrb[0].mxu0
        %v4705 = vadd.f32 %v4576, %v4704
        %v4706 = vpop.f32.mrb[0].mxu0
        %4707 = vmatprep.mubr.f32.mxu0 %v4221
        %4708 = vmatmul.mubr.f32.gmra.mrb[0].mxu0 %v4220
        %v4709 = vpop.f32.mrb[0].mxu0
        %v4710 = vadd.f32 %v4576, %v4709
        %v4711 = vpop.f32.mrb[0].mxu0
        %4712 = vmatprep.mubr.f32.mxu0 %v4230
        %4713 = vmatmul.mubr.f32.gmra.mrb[0].mxu0 %v4229
        %v4714 = vpop.f32.mrb[0].mxu0
        %v4715 = vadd.f32 %v4576, %v4714
        %v4716 = vpop.f32.mrb[0].mxu0
        %4717 = vmatprep.mubr.f32.mxu0 %v4239
        %4718 = vmatmul.mubr.f32.gmra.mrb[0].mxu0 %v4238
        %v4719 = vpop.f32.mrb[0].mxu0
        %v4720 = vadd.f32 %v4576, %v4719
        %v4721 = vpop.f32.mrb[0].mxu0
        %4722 = vmatprep.mubr.f32.mxu0 %v4248
        %4723 = vmatmul.mubr.f32.gmra.mrb[0].mxu0 %v4247
        %v4724 = vpop.f32.mrb[0].mxu0
        %v4725 = vadd.f32 %v4576, %v4724
        %v4726 = vpop.f32.mrb[0].mxu0
        %4727 = vmatprep.mubr.f32.mxu0 %v4257
        %4728 = vmatmul.mubr.f32.gmra.mrb[0].mxu0 %v4256
        %v4729 = vpop.f32.mrb[0].mxu0
        %v4730 = vadd.f32 %v4576, %v4729
        %v4731 = vpop.f32.mrb[0].mxu0
        %4732 = vmatprep.mubr.f32.mxu0 %v4266
        %4733 = vmatmul.mubr.f32.gmra.mrb[0].mxu0 %v4265
        %v4734 = vpop.f32.mrb[0].mxu0
        %v4735 = vadd.f32 %v4576, %v4734
        %v4736 = vpop.f32.mrb[0].mxu0
        %4737 = vmatprep.mubr.f32.mxu0 %v4275
        %4738 = vmatmul.mubr.f32.gmra.mrb[0].mxu0 %v4274
        %v4739 = vpop.f32.mrb[0].mxu0
        %v4740 = vadd.f32 %v4576, %v4739
        %v4741 = vpop.f32.mrb[0].mxu0
        %4742 = vmatprep.mubr.f32.mxu0 %v4284
        %4743 = vmatmul.mubr.f32.gmra.mrb[0].mxu0 %v4283
        %v4744 = vpop.f32.mrb[0].mxu0
        %v4745 = vadd.f32 %v4576, %v4744
        %v4746 = vpop.f32.mrb[0].mxu0
        %4747 = vmatprep.mubr.f32.mxu0 %v4293
        %4748 = vmatmul.mubr.f32.gmra.mrb[0].mxu0 %v4292
        %v4749 = vpop.f32.mrb[0].mxu0
        %v4750 = vadd.f32 %v4576, %v4749
        %v4751 = vpop.f32.mrb[0].mxu0
        %4752 = vmatprep.mubr.f32.mxu0 %v4302
        %4753 = vmatmul.mubr.f32.gmra.mrb[0].mxu0 %v4301
        %v4754 = vpop.f32.mrb[0].mxu0
        %v4755 = vadd.f32 %v4576, %v4754
        %v4756 = vpop.f32.mrb[0].mxu0
        %4757 = vmatprep.mubr.f32.mxu0 %v4311
        %4758 = vmatmul.mubr.f32.gmra.mrb[0].mxu0 %v4310
        %v4759 = vpop.f32.mrb[0].mxu0
        %v4760 = vadd.f32 %v4576, %v4759
        %v4761 = vpop.f32.mrb[0].mxu0
        %4762 = vmatprep.mubr.f32.mxu0 %v4320
        %4763 = vmatmul.mubr.f32.gmra.mrb[0].mxu0 %v4319
        %v4764 = vpop.f32.mrb[0].mxu0
        %v4765 = vadd.f32 %v4576, %v4764
        %v4766 = vpop.f32.mrb[0].mxu0
        %4767 = vmatprep.mubr.f32.mxu0 %v4329
        %4768 = vmatmul.mubr.f32.gmra.mrb[0].mxu0 %v4328
        %v4769 = vpop.f32.mrb[0].mxu0
        %v4770 = vadd.f32 %v4576, %v4769
        %v4771 = vpop.f32.mrb[0].mxu0
        %4772 = vmatprep.mubr.f32.mxu0 %v4338
        %4773 = vmatmul.mubr.f32.gmra.mrb[0].mxu0 %v4337
        %v4774 = vpop.f32.mrb[0].mxu0
        %v4775 = vadd.f32 %v4576, %v4774
        %v4776 = vpop.f32.mrb[0].mxu0
        %4777 = vmatprep.mubr.f32.mxu0 %v4347
        %4778 = vmatmul.mubr.f32.gmra.mrb[0].mxu0 %v4346
        %v4779 = vpop.f32.mrb[0].mxu0
        %v4780 = vadd.f32 %v4576, %v4779
        %v4781 = vpop.f32.mrb[0].mxu0
        %4782 = vmatprep.mubr.f32.mxu0 %v4356
        %4783 = vmatmul.mubr.f32.gmra.mrb[0].mxu0 %v4355
        %v4784 = vpop.f32.mrb[0].mxu0
        %v4785 = vadd.f32 %v4576, %v4784
        %v4786 = vpop.f32.mrb[0].mxu0
        %4787 = vmatprep.mubr.f32.mxu0 %v4365
        %4788 = vmatmul.mubr.f32.gmra.mrb[0].mxu0 %v4364
        %v4789 = vpop.f32.mrb[0].mxu0
        %v4790 = vadd.f32 %v4576, %v4789
        %v4791 = vpop.f32.mrb[0].mxu0
        %4792 = vmatprep.mubr.f32.mxu0 %v4374
        %4793 = vmatmul.mubr.f32.gmra.mrb[0].mxu0 %v4373
        %v4794 = vpop.f32.mrb[0].mxu0
        %v4795 = vadd.f32 %v4576, %v4794
        %v4796 = vpop.f32.mrb[0].mxu0
        %4797 = vmatprep.mubr.f32.mxu0 %v4383
        %4798 = vmatmul.mubr.f32.gmra.mrb[0].mxu0 %v4382
        %v4799 = vpop.f32.mrb[0].mxu0
        %v4800 = vadd.f32 %v4576, %v4799
        %v4801 = vpop.f32.mrb[0].mxu0
        %4802 = vmatprep.mubr.f32.mxu0 %v4392
        %4803 = vmatmul.mubr.f32.gmra.mrb[0].mxu0 %v4391
        %v4804 = vpop.f32.mrb[0].mxu0
        %v4805 = vadd.f32 %v4576, %v4804
        %v4806 = vpop.f32.mrb[0].mxu0
        %4807 = vmatprep.mubr.f32.mxu0 %v4401
        %4808 = vmatmul.mubr.f32.gmra.mrb[0].mxu0 %v4400
        %v4809 = vpop.f32.mrb[0].mxu0
        %v4810 = vadd.f32 %v4576, %v4809
        %v4811 = vpop.f32.mrb[0].mxu0
        %4812 = vmatprep.mubr.f32.mxu0 %v4410
        %4813 = vmatmul.mubr.f32.gmra.mrb[0].mxu0 %v4409
        %v4814 = vpop.f32.mrb[0].mxu0
        %v4815 = vadd.f32 %v4576, %v4814
        %v4816 = vpop.f32.mrb[0].mxu0
        %4817 = vmatprep.mubr.f32.mxu0 %v4419
        %4818 = vmatmul.mubr.f32.gmra.mrb[0].mxu0 %v4418
        %v4819 = vpop.f32.mrb[0].mxu0
        %v4820 = vadd.f32 %v4576, %v4819
        %v4821 = vpop.f32.mrb[0].mxu0
        %4822 = vdwg.mxu0
        %4823 = vmatprep.subr.mxu0 0.0
        %4824 = vmatpush1.msra.mxu0 %v4459
        %4825 = vmatprep.subr.mxu0 0.0
        %4826 = vmatpush1.msra.mxu0 %v4460
        %4827 = vmatprep.subr.mxu0 0.0
        %4828 = vmatpush1.msra.mxu0 %v4461
        %4829 = vmatprep.subr.mxu0 0.0
        %4830 = vmatpush1.msra.mxu0 %v4462
        %4831 = vmatprep.subr.mxu0 0.0
        %4832 = vmatpush1.msra.mxu0 %v4463
        %4833 = vmatprep.subr.mxu0 0.0
        %4834 = vmatpush1.msra.mxu0 %v4464
        %4835 = vmatprep.subr.mxu0 0.0
        %4836 = vmatpush1.msra.mxu0 %v4465
        %4837 = vmatprep.subr.mxu0 0.0
        %4838 = vmatpush1.msra.mxu0 %v4466
        %4839 = vmatprep.subr.mxu0 0.0
        %4840 = vmatpush1.msra.mxu0 %v4467
        %4841 = vmatprep.subr.mxu0 0.0
        %4842 = vmatpush1.msra.mxu0 %v4468
        %4843 = vmatprep.subr.mxu0 0.0
        %4844 = vmatpush1.msra.mxu0 %v4469
        %4845 = vmatprep.subr.mxu0 0.0
        %4846 = vmatpush1.msra.mxu0 %v4470
        %4847 = vmatprep.subr.mxu0 0.0
        %4848 = vmatpush1.msra.mxu0 %v4471
        %4849 = vmatprep.subr.mxu0 0.0
        %4850 = vmatpush1.msra.mxu0 %v4472
        %4851 = vmatprep.subr.mxu0 0.0
        %4852 = vmatpush1.msra.mxu0 %v4473
        %4853 = vmatprep.subr.mxu0 0.0
        %4854 = vmatpush1.msra.mxu0 %v4474
        %4855 = vmatprep.subr.mxu0 0.0
        %4856 = vmatpush1.msra.mxu0 %v4475
        %4857 = vmatprep.subr.mxu0 0.0
        %4858 = vmatpush1.msra.mxu0 %v4476
        %4859 = vmatprep.subr.mxu0 0.0
        %4860 = vmatpush1.msra.mxu0 %v4477
        %4861 = vmatprep.subr.mxu0 0.0
        %4862 = vmatpush1.msra.mxu0 %v4478
        %4863 = vmatprep.subr.mxu0 0.0
        %4864 = vmatpush1.msra.mxu0 %v4479
        %4865 = vmatprep.subr.mxu0 0.0
        %4866 = vmatpush1.msra.mxu0 %v4480
        %4867 = vmatprep.subr.mxu0 0.0
        %4868 = vmatpush1.msra.mxu0 %v4481
        %4869 = vmatprep.subr.mxu0 0.0
        %4870 = vmatpush1.msra.mxu0 %v4482
        %4871 = vmatprep.subr.mxu0 0.0
        %4872 = vmatpush1.msra.mxu0 %v4483
        %4873 = vmatprep.subr.mxu0 0.0
        %4874 = vmatpush1.msra.mxu0 %v4484
        %4875 = vmatprep.subr.mxu0 0.0
        %4876 = vmatpush1.msra.mxu0 %v4485
        %4877 = vmatprep.subr.mxu0 0.0
        %4878 = vmatpush1.msra.mxu0 %v4486
        %4879 = vmatprep.subr.mxu0 0.0
        %4880 = vmatpush1.msra.mxu0 %v4487
        %4881 = vmatprep.subr.mxu0 0.0
        %4882 = vmatpush1.msra.mxu0 %v4488
        %4883 = vmatprep.subr.mxu0 0.0
        %4884 = vmatpush1.msra.mxu0 %v4489
        %4885 = vmatprep.subr.mxu0 0.0
        %4886 = vmatpush1.msra.mxu0 %v4490
        %4887 = vmatprep.mubr.f32.mxu0 %v4106
        %4888 = vmatmul.mubr.f32.gmra.mrb[0].mxu0 %v4105
        %v4889 = vpop.f32.mrb[0].mxu0
        %v4890 = vadd.f32 %v4645, %v4889
        %v4891 = vpop.f32.mrb[0].mxu0
        %4892 = vmatprep.mubr.f32.mxu0 %v4115
        %4893 = vmatmul.mubr.f32.gmra.mrb[0].mxu0 %v4114
        %v4894 = vpop.f32.mrb[0].mxu0
        %v4895 = vadd.f32 %v4650, %v4894
        %v4896 = vpop.f32.mrb[0].mxu0
        %4897 = vmatprep.mubr.f32.mxu0 %v4124
        %4898 = vmatmul.mubr.f32.gmra.mrb[0].mxu0 %v4123
        %v4899 = vpop.f32.mrb[0].mxu0
        %v4900 = vadd.f32 %v4655, %v4899
        %v4901 = vpop.f32.mrb[0].mxu0
        %4902 = vmatprep.mubr.f32.mxu0 %v4133
        %4903 = vmatmul.mubr.f32.gmra.mrb[0].mxu0 %v4132
        %v4904 = vpop.f32.mrb[0].mxu0
        %v4905 = vadd.f32 %v4660, %v4904
        %v4906 = vpop.f32.mrb[0].mxu0
        %4907 = vmatprep.mubr.f32.mxu0 %v4142
        %4908 = vmatmul.mubr.f32.gmra.mrb[0].mxu0 %v4141
        %v4909 = vpop.f32.mrb[0].mxu0
        %v4910 = vadd.f32 %v4665, %v4909
        %v4911 = vpop.f32.mrb[0].mxu0
        %4912 = vmatprep.mubr.f32.mxu0 %v4151
        %4913 = vmatmul.mubr.f32.gmra.mrb[0].mxu0 %v4150
        %v4914 = vpop.f32.mrb[0].mxu0
        %v4915 = vadd.f32 %v4670, %v4914
        %v4916 = vpop.f32.mrb[0].mxu0
        %4917 = vmatprep.mubr.f32.mxu0 %v4160
        %4918 = vmatmul.mubr.f32.gmra.mrb[0].mxu0 %v4159
        %v4919 = vpop.f32.mrb[0].mxu0
        %v4920 = vadd.f32 %v4675, %v4919
        %v4921 = vpop.f32.mrb[0].mxu0
        %4922 = vmatprep.mubr.f32.mxu0 %v4169
        %4923 = vmatmul.mubr.f32.gmra.mrb[0].mxu0 %v4168
        %v4924 = vpop.f32.mrb[0].mxu0
        %v4925 = vadd.f32 %v4680, %v4924
        %v4926 = vpop.f32.mrb[0].mxu0
        %4927 = vmatprep.mubr.f32.mxu0 %v4178
        %4928 = vmatmul.mubr.f32.gmra.mrb[0].mxu0 %v4177
        %v4929 = vpop.f32.mrb[0].mxu0
        %v4930 = vadd.f32 %v4685, %v4929
        %v4931 = vpop.f32.mrb[0].mxu0
        %4932 = vmatprep.mubr.f32.mxu0 %v4187
        %4933 = vmatmul.mubr.f32.gmra.mrb[0].mxu0 %v4186
        %v4934 = vpop.f32.mrb[0].mxu0
        %v4935 = vadd.f32 %v4690, %v4934
        %v4936 = vpop.f32.mrb[0].mxu0
        %4937 = vmatprep.mubr.f32.mxu0 %v4196
        %4938 = vmatmul.mubr.f32.gmra.mrb[0].mxu0 %v4195
        %v4939 = vpop.f32.mrb[0].mxu0
        %v4940 = vadd.f32 %v4695, %v4939
        %v4941 = vpop.f32.mrb[0].mxu0
        %4942 = vmatprep.mubr.f32.mxu0 %v4205
        %4943 = vmatmul.mubr.f32.gmra.mrb[0].mxu0 %v4204
        %v4944 = vpop.f32.mrb[0].mxu0
        %v4945 = vadd.f32 %v4700, %v4944
        %v4946 = vpop.f32.mrb[0].mxu0
        %4947 = vmatprep.mubr.f32.mxu0 %v4214
        %4948 = vmatmul.mubr.f32.gmra.mrb[0].mxu0 %v4213
        %v4949 = vpop.f32.mrb[0].mxu0
        %v4950 = vadd.f32 %v4705, %v4949
        %v4951 = vpop.f32.mrb[0].mxu0
        %4952 = vmatprep.mubr.f32.mxu0 %v4223
        %4953 = vmatmul.mubr.f32.gmra.mrb[0].mxu0 %v4222
        %v4954 = vpop.f32.mrb[0].mxu0
        %v4955 = vadd.f32 %v4710, %v4954
        %v4956 = vpop.f32.mrb[0].mxu0
        %4957 = vmatprep.mubr.f32.mxu0 %v4232
        %4958 = vmatmul.mubr.f32.gmra.mrb[0].mxu0 %v4231
        %v4959 = vpop.f32.mrb[0].mxu0
        %v4960 = vadd.f32 %v4715, %v4959
        %v4961 = vpop.f32.mrb[0].mxu0
        %4962 = vmatprep.mubr.f32.mxu0 %v4241
        %4963 = vmatmul.mubr.f32.gmra.mrb[0].mxu0 %v4240
        %v4964 = vpop.f32.mrb[0].mxu0
        %v4965 = vadd.f32 %v4720, %v4964
        %v4966 = vpop.f32.mrb[0].mxu0
        %4967 = vmatprep.mubr.f32.mxu0 %v4250
        %4968 = vmatmul.mubr.f32.gmra.mrb[0].mxu0 %v4249
        %v4969 = vpop.f32.mrb[0].mxu0
        %v4970 = vadd.f32 %v4725, %v4969
        %v4971 = vpop.f32.mrb[0].mxu0
        %4972 = vmatprep.mubr.f32.mxu0 %v4259
        %4973 = vmatmul.mubr.f32.gmra.mrb[0].mxu0 %v4258
        %v4974 = vpop.f32.mrb[0].mxu0
        %v4975 = vadd.f32 %v4730, %v4974
        %v4976 = vpop.f32.mrb[0].mxu0
        %4977 = vmatprep.mubr.f32.mxu0 %v4268
        %4978 = vmatmul.mubr.f32.gmra.mrb[0].mxu0 %v4267
        %v4979 = vpop.f32.mrb[0].mxu0
        %v4980 = vadd.f32 %v4735, %v4979
        %v4981 = vpop.f32.mrb[0].mxu0
        %4982 = vmatprep.mubr.f32.mxu0 %v4277
        %4983 = vmatmul.mubr.f32.gmra.mrb[0].mxu0 %v4276
        %v4984 = vpop.f32.mrb[0].mxu0
        %v4985 = vadd.f32 %v4740, %v4984
        %v4986 = vpop.f32.mrb[0].mxu0
        %4987 = vmatprep.mubr.f32.mxu0 %v4286
        %4988 = vmatmul.mubr.f32.gmra.mrb[0].mxu0 %v4285
        %v4989 = vpop.f32.mrb[0].mxu0
        %v4990 = vadd.f32 %v4745, %v4989
        %v4991 = vpop.f32.mrb[0].mxu0
        %4992 = vmatprep.mubr.f32.mxu0 %v4295
        %4993 = vmatmul.mubr.f32.gmra.mrb[0].mxu0 %v4294
        %v4994 = vpop.f32.mrb[0].mxu0
        %v4995 = vadd.f32 %v4750, %v4994
        %v4996 = vpop.f32.mrb[0].mxu0
        %4997 = vmatprep.mubr.f32.mxu0 %v4304
        %4998 = vmatmul.mubr.f32.gmra.mrb[0].mxu0 %v4303
        %v4999 = vpop.f32.mrb[0].mxu0
        %v5000 = vadd.f32 %v4755, %v4999
        %v5001 = vpop.f32.mrb[0].mxu0
        %5002 = vmatprep.mubr.f32.mxu0 %v4313
        %5003 = vmatmul.mubr.f32.gmra.mrb[0].mxu0 %v4312
        %v5004 = vpop.f32.mrb[0].mxu0
        %v5005 = vadd.f32 %v4760, %v5004
        %v5006 = vpop.f32.mrb[0].mxu0
        %5007 = vmatprep.mubr.f32.mxu0 %v4322
        %5008 = vmatmul.mubr.f32.gmra.mrb[0].mxu0 %v4321
        %v5009 = vpop.f32.mrb[0].mxu0
        %v5010 = vadd.f32 %v4765, %v5009
        %v5011 = vpop.f32.mrb[0].mxu0
        %5012 = vmatprep.mubr.f32.mxu0 %v4331
        %5013 = vmatmul.mubr.f32.gmra.mrb[0].mxu0 %v4330
        %v5014 = vpop.f32.mrb[0].mxu0
        %v5015 = vadd.f32 %v4770, %v5014
        %v5016 = vpop.f32.mrb[0].mxu0
        %5017 = vmatprep.mubr.f32.mxu0 %v4340
        %5018 = vmatmul.mubr.f32.gmra.mrb[0].mxu0 %v4339
        %v5019 = vpop.f32.mrb[0].mxu0
        %v5020 = vadd.f32 %v4775, %v5019
        %v5021 = vpop.f32.mrb[0].mxu0
        %5022 = vmatprep.mubr.f32.mxu0 %v4349
        %5023 = vmatmul.mubr.f32.gmra.mrb[0].mxu0 %v4348
        %v5024 = vpop.f32.mrb[0].mxu0
        %v5025 = vadd.f32 %v4780, %v5024
        %v5026 = vpop.f32.mrb[0].mxu0
        %5027 = vmatprep.mubr.f32.mxu0 %v4358
        %5028 = vmatmul.mubr.f32.gmra.mrb[0].mxu0 %v4357
        %v5029 = vpop.f32.mrb[0].mxu0
        %v5030 = vadd.f32 %v4785, %v5029
        %v5031 = vpop.f32.mrb[0].mxu0
        %5032 = vmatprep.mubr.f32.mxu0 %v4367
        %5033 = vmatmul.mubr.f32.gmra.mrb[0].mxu0 %v4366
        %v5034 = vpop.f32.mrb[0].mxu0
        %v5035 = vadd.f32 %v4790, %v5034
        %v5036 = vpop.f32.mrb[0].mxu0
        %5037 = vmatprep.mubr.f32.mxu0 %v4376
        %5038 = vmatmul.mubr.f32.gmra.mrb[0].mxu0 %v4375
        %v5039 = vpop.f32.mrb[0].mxu0
        %v5040 = vadd.f32 %v4795, %v5039
        %v5041 = vpop.f32.mrb[0].mxu0
        %5042 = vmatprep.mubr.f32.mxu0 %v4385
        %5043 = vmatmul.mubr.f32.gmra.mrb[0].mxu0 %v4384
        %v5044 = vpop.f32.mrb[0].mxu0
        %v5045 = vadd.f32 %v4800, %v5044
        %v5046 = vpop.f32.mrb[0].mxu0
        %5047 = vmatprep.mubr.f32.mxu0 %v4394
        %5048 = vmatmul.mubr.f32.gmra.mrb[0].mxu0 %v4393
        %v5049 = vpop.f32.mrb[0].mxu0
        %v5050 = vadd.f32 %v4805, %v5049
        %v5051 = vpop.f32.mrb[0].mxu0
        %5052 = vmatprep.mubr.f32.mxu0 %v4403
        %5053 = vmatmul.mubr.f32.gmra.mrb[0].mxu0 %v4402
        %v5054 = vpop.f32.mrb[0].mxu0
        %v5055 = vadd.f32 %v4810, %v5054
        %v5056 = vpop.f32.mrb[0].mxu0
        %5057 = vmatprep.mubr.f32.mxu0 %v4412
        %5058 = vmatmul.mubr.f32.gmra.mrb[0].mxu0 %v4411
        %v5059 = vpop.f32.mrb[0].mxu0
        %v5060 = vadd.f32 %v4815, %v5059
        %v5061 = vpop.f32.mrb[0].mxu0
        %5062 = vmatprep.mubr.f32.mxu0 %v4421
        %5063 = vmatmul.mubr.f32.gmra.mrb[0].mxu0 %v4420
        %v5064 = vpop.f32.mrb[0].mxu0
        %v5065 = vadd.f32 %v4820, %v5064
        %v5066 = vpop.f32.mrb[0].mxu0
        %5067 = vdwg.mxu0
        %5068 = vmatprep.subr.mxu0 0.0
        %5069 = vmatpush1.msra.mxu0 %v4491
        %5070 = vmatprep.subr.mxu0 0.0
        %5071 = vmatpush1.msra.mxu0 %v4492
        %5072 = vmatprep.subr.mxu0 0.0
        %5073 = vmatpush1.msra.mxu0 %v4493
        %5074 = vmatprep.subr.mxu0 0.0
        %5075 = vmatpush1.msra.mxu0 %v4494
        %5076 = vmatprep.subr.mxu0 0.0
        %5077 = vmatpush1.msra.mxu0 %v4495
        %5078 = vmatprep.subr.mxu0 0.0
        %5079 = vmatpush1.msra.mxu0 %v4496
        %5080 = vmatprep.subr.mxu0 0.0
        %5081 = vmatpush1.msra.mxu0 %v4497
        %5082 = vmatprep.subr.mxu0 0.0
        %5083 = vmatpush1.msra.mxu0 %v4498
        %5084 = vmatprep.subr.mxu0 0.0
        %5085 = vmatpush1.msra.mxu0 %v4499
        %5086 = vmatprep.subr.mxu0 0.0
        %5087 = vmatpush1.msra.mxu0 %v4500
        %5088 = vmatprep.subr.mxu0 0.0
        %5089 = vmatpush1.msra.mxu0 %v4501
        %5090 = vmatprep.subr.mxu0 0.0
        %5091 = vmatpush1.msra.mxu0 %v4502
        %5092 = vmatprep.subr.mxu0 0.0
        %5093 = vmatpush1.msra.mxu0 %v4503
        %5094 = vmatprep.subr.mxu0 0.0
        %5095 = vmatpush1.msra.mxu0 %v4504
        %5096 = vmatprep.subr.mxu0 0.0
        %5097 = vmatpush1.msra.mxu0 %v4505
        %5098 = vmatprep.subr.mxu0 0.0
        %5099 = vmatpush1.msra.mxu0 %v4506
        %5100 = vmatprep.subr.mxu0 0.0
        %5101 = vmatpush1.msra.mxu0 %v4507
        %5102 = vmatprep.subr.mxu0 0.0
        %5103 = vmatpush1.msra.mxu0 %v4508
        %5104 = vmatprep.subr.mxu0 0.0
        %5105 = vmatpush1.msra.mxu0 %v4509
        %5106 = vmatprep.subr.mxu0 0.0
        %5107 = vmatpush1.msra.mxu0 %v4510
        %5108 = vmatprep.subr.mxu0 0.0
        %5109 = vmatpush1.msra.mxu0 %v4511
        %5110 = vmatprep.subr.mxu0 0.0
        %5111 = vmatpush1.msra.mxu0 %v4512
        %5112 = vmatprep.subr.mxu0 0.0
        %5113 = vmatpush1.msra.mxu0 %v4513
        %5114 = vmatprep.subr.mxu0 0.0
        %5115 = vmatpush1.msra.mxu0 %v4514
        %5116 = vmatprep.subr.mxu0 0.0
        %5117 = vmatpush1.msra.mxu0 %v4515
        %5118 = vmatprep.subr.mxu0 0.0
        %5119 = vmatpush1.msra.mxu0 %v4516
        %5120 = vmatprep.subr.mxu0 0.0
        %5121 = vmatpush1.msra.mxu0 %v4517
        %5122 = vmatprep.subr.mxu0 0.0
        %5123 = vmatpush1.msra.mxu0 %v4518
        %5124 = vmatprep.subr.mxu0 0.0
        %5125 = vmatpush1.msra.mxu0 %v4519
        %5126 = vmatprep.subr.mxu0 0.0
        %5127 = vmatpush1.msra.mxu0 %v4520
        %5128 = vmatprep.subr.mxu0 0.0
        %5129 = vmatpush1.msra.mxu0 %v4521
        %5130 = vmatprep.subr.mxu0 0.0
        %5131 = vmatpush1.msra.mxu0 %v4522
        %5132 = vmatprep.mubr.f32.mxu0 %v4108
        %5133 = vmatmul.mubr.f32.gmra.mrb[0].mxu0 %v4107
        %v5134 = vpop.f32.mrb[0].mxu0
        %v5135 = vadd.f32 %v4890, %v5134
        %v5136 = vpop.f32.mrb[0].mxu0
        %5137 = vmatprep.mubr.f32.mxu0 %v4117
        %5138 = vmatmul.mubr.f32.gmra.mrb[0].mxu0 %v4116
        %v5139 = vpop.f32.mrb[0].mxu0
        %v5140 = vadd.f32 %v4895, %v5139
        %v5141 = vpop.f32.mrb[0].mxu0
        %5142 = vmatprep.mubr.f32.mxu0 %v4126
        %5143 = vmatmul.mubr.f32.gmra.mrb[0].mxu0 %v4125
        %v5144 = vpop.f32.mrb[0].mxu0
        %v5145 = vadd.f32 %v4900, %v5144
        %v5146 = vpop.f32.mrb[0].mxu0
        %5147 = vmatprep.mubr.f32.mxu0 %v4135
        %5148 = vmatmul.mubr.f32.gmra.mrb[0].mxu0 %v4134
        %v5149 = vpop.f32.mrb[0].mxu0
        %v5150 = vadd.f32 %v4905, %v5149
        %v5151 = vpop.f32.mrb[0].mxu0
        %5152 = vmatprep.mubr.f32.mxu0 %v4144
        %5153 = vmatmul.mubr.f32.gmra.mrb[0].mxu0 %v4143
        %v5154 = vpop.f32.mrb[0].mxu0
        %v5155 = vadd.f32 %v4910, %v5154
        %v5156 = vpop.f32.mrb[0].mxu0
        %5157 = vmatprep.mubr.f32.mxu0 %v4153
        %5158 = vmatmul.mubr.f32.gmra.mrb[0].mxu0 %v4152
        %v5159 = vpop.f32.mrb[0].mxu0
        %v5160 = vadd.f32 %v4915, %v5159
        %v5161 = vpop.f32.mrb[0].mxu0
        %5162 = vmatprep.mubr.f32.mxu0 %v4162
        %5163 = vmatmul.mubr.f32.gmra.mrb[0].mxu0 %v4161
        %v5164 = vpop.f32.mrb[0].mxu0
        %v5165 = vadd.f32 %v4920, %v5164
        %v5166 = vpop.f32.mrb[0].mxu0
        %5167 = vmatprep.mubr.f32.mxu0 %v4171
        %5168 = vmatmul.mubr.f32.gmra.mrb[0].mxu0 %v4170
        %v5169 = vpop.f32.mrb[0].mxu0
        %v5170 = vadd.f32 %v4925, %v5169
        %v5171 = vpop.f32.mrb[0].mxu0
        %5172 = vmatprep.mubr.f32.mxu0 %v4180
        %5173 = vmatmul.mubr.f32.gmra.mrb[0].mxu0 %v4179
        %v5174 = vpop.f32.mrb[0].mxu0
        %v5175 = vadd.f32 %v4930, %v5174
        %v5176 = vpop.f32.mrb[0].mxu0
        %5177 = vmatprep.mubr.f32.mxu0 %v4189
        %5178 = vmatmul.mubr.f32.gmra.mrb[0].mxu0 %v4188
        %v5179 = vpop.f32.mrb[0].mxu0
        %v5180 = vadd.f32 %v4935, %v5179
        %v5181 = vpop.f32.mrb[0].mxu0
        %5182 = vmatprep.mubr.f32.mxu0 %v4198
        %5183 = vmatmul.mubr.f32.gmra.mrb[0].mxu0 %v4197
        %v5184 = vpop.f32.mrb[0].mxu0
        %v5185 = vadd.f32 %v4940, %v5184
        %v5186 = vpop.f32.mrb[0].mxu0
        %5187 = vmatprep.mubr.f32.mxu0 %v4207
        %5188 = vmatmul.mubr.f32.gmra.mrb[0].mxu0 %v4206
        %v5189 = vpop.f32.mrb[0].mxu0
        %v5190 = vadd.f32 %v4945, %v5189
        %v5191 = vpop.f32.mrb[0].mxu0
        %5192 = vmatprep.mubr.f32.mxu0 %v4216
        %5193 = vmatmul.mubr.f32.gmra.mrb[0].mxu0 %v4215
        %v5194 = vpop.f32.mrb[0].mxu0
        %v5195 = vadd.f32 %v4950, %v5194
        %v5196 = vpop.f32.mrb[0].mxu0
        %5197 = vmatprep.mubr.f32.mxu0 %v4225
        %5198 = vmatmul.mubr.f32.gmra.mrb[0].mxu0 %v4224
        %v5199 = vpop.f32.mrb[0].mxu0
        %v5200 = vadd.f32 %v4955, %v5199
        %v5201 = vpop.f32.mrb[0].mxu0
        %5202 = vmatprep.mubr.f32.mxu0 %v4234
        %5203 = vmatmul.mubr.f32.gmra.mrb[0].mxu0 %v4233
        %v5204 = vpop.f32.mrb[0].mxu0
        %v5205 = vadd.f32 %v4960, %v5204
        %v5206 = vpop.f32.mrb[0].mxu0
        %5207 = vmatprep.mubr.f32.mxu0 %v4243
        %5208 = vmatmul.mubr.f32.gmra.mrb[0].mxu0 %v4242
        %v5209 = vpop.f32.mrb[0].mxu0
        %v5210 = vadd.f32 %v4965, %v5209
        %v5211 = vpop.f32.mrb[0].mxu0
        %5212 = vmatprep.mubr.f32.mxu0 %v4252
        %5213 = vmatmul.mubr.f32.gmra.mrb[0].mxu0 %v4251
        %v5214 = vpop.f32.mrb[0].mxu0
        %v5215 = vadd.f32 %v4970, %v5214
        %v5216 = vpop.f32.mrb[0].mxu0
        %5217 = vmatprep.mubr.f32.mxu0 %v4261
        %5218 = vmatmul.mubr.f32.gmra.mrb[0].mxu0 %v4260
        %v5219 = vpop.f32.mrb[0].mxu0
        %v5220 = vadd.f32 %v4975, %v5219
        %v5221 = vpop.f32.mrb[0].mxu0
        %5222 = vmatprep.mubr.f32.mxu0 %v4270
        %5223 = vmatmul.mubr.f32.gmra.mrb[0].mxu0 %v4269
        %v5224 = vpop.f32.mrb[0].mxu0
        %v5225 = vadd.f32 %v4980, %v5224
        %v5226 = vpop.f32.mrb[0].mxu0
        %5227 = vmatprep.mubr.f32.mxu0 %v4279
        %5228 = vmatmul.mubr.f32.gmra.mrb[0].mxu0 %v4278
        %v5229 = vpop.f32.mrb[0].mxu0
        %v5230 = vadd.f32 %v4985, %v5229
        %v5231 = vpop.f32.mrb[0].mxu0
        %5232 = vmatprep.mubr.f32.mxu0 %v4288
        %5233 = vmatmul.mubr.f32.gmra.mrb[0].mxu0 %v4287
        %v5234 = vpop.f32.mrb[0].mxu0
        %v5235 = vadd.f32 %v4990, %v5234
        %v5236 = vpop.f32.mrb[0].mxu0
        %5237 = vmatprep.mubr.f32.mxu0 %v4297
        %5238 = vmatmul.mubr.f32.gmra.mrb[0].mxu0 %v4296
        %v5239 = vpop.f32.mrb[0].mxu0
        %v5240 = vadd.f32 %v4995, %v5239
        %v5241 = vpop.f32.mrb[0].mxu0
        %5242 = vmatprep.mubr.f32.mxu0 %v4306
        %5243 = vmatmul.mubr.f32.gmra.mrb[0].mxu0 %v4305
        %v5244 = vpop.f32.mrb[0].mxu0
        %v5245 = vadd.f32 %v5000, %v5244
        %v5246 = vpop.f32.mrb[0].mxu0
        %5247 = vmatprep.mubr.f32.mxu0 %v4315
        %5248 = vmatmul.mubr.f32.gmra.mrb[0].mxu0 %v4314
        %v5249 = vpop.f32.mrb[0].mxu0
        %v5250 = vadd.f32 %v5005, %v5249
        %v5251 = vpop.f32.mrb[0].mxu0
        %5252 = vmatprep.mubr.f32.mxu0 %v4324
        %5253 = vmatmul.mubr.f32.gmra.mrb[0].mxu0 %v4323
        %v5254 = vpop.f32.mrb[0].mxu0
        %v5255 = vadd.f32 %v5010, %v5254
        %v5256 = vpop.f32.mrb[0].mxu0
        %5257 = vmatprep.mubr.f32.mxu0 %v4333
        %5258 = vmatmul.mubr.f32.gmra.mrb[0].mxu0 %v4332
        %v5259 = vpop.f32.mrb[0].mxu0
        %v5260 = vadd.f32 %v5015, %v5259
        %v5261 = vpop.f32.mrb[0].mxu0
        %5262 = vmatprep.mubr.f32.mxu0 %v4342
        %5263 = vmatmul.mubr.f32.gmra.mrb[0].mxu0 %v4341
        %v5264 = vpop.f32.mrb[0].mxu0
        %v5265 = vadd.f32 %v5020, %v5264
        %v5266 = vpop.f32.mrb[0].mxu0
        %5267 = vmatprep.mubr.f32.mxu0 %v4351
        %5268 = vmatmul.mubr.f32.gmra.mrb[0].mxu0 %v4350
        %v5269 = vpop.f32.mrb[0].mxu0
        %v5270 = vadd.f32 %v5025, %v5269
        %v5271 = vpop.f32.mrb[0].mxu0
        %5272 = vmatprep.mubr.f32.mxu0 %v4360
        %5273 = vmatmul.mubr.f32.gmra.mrb[0].mxu0 %v4359
        %v5274 = vpop.f32.mrb[0].mxu0
        %v5275 = vadd.f32 %v5030, %v5274
        %v5276 = vpop.f32.mrb[0].mxu0
        %5277 = vmatprep.mubr.f32.mxu0 %v4369
        %5278 = vmatmul.mubr.f32.gmra.mrb[0].mxu0 %v4368
        %v5279 = vpop.f32.mrb[0].mxu0
        %v5280 = vadd.f32 %v5035, %v5279
        %v5281 = vpop.f32.mrb[0].mxu0
        %5282 = vmatprep.mubr.f32.mxu0 %v4378
        %5283 = vmatmul.mubr.f32.gmra.mrb[0].mxu0 %v4377
        %v5284 = vpop.f32.mrb[0].mxu0
        %v5285 = vadd.f32 %v5040, %v5284
        %v5286 = vpop.f32.mrb[0].mxu0
        %5287 = vmatprep.mubr.f32.mxu0 %v4387
        %5288 = vmatmul.mubr.f32.gmra.mrb[0].mxu0 %v4386
        %v5289 = vpop.f32.mrb[0].mxu0
        %v5290 = vadd.f32 %v5045, %v5289
        %v5291 = vpop.f32.mrb[0].mxu0
        %5292 = vmatprep.mubr.f32.mxu0 %v4396
        %5293 = vmatmul.mubr.f32.gmra.mrb[0].mxu0 %v4395
        %v5294 = vpop.f32.mrb[0].mxu0
        %v5295 = vadd.f32 %v5050, %v5294
        %v5296 = vpop.f32.mrb[0].mxu0
        %5297 = vmatprep.mubr.f32.mxu0 %v4405
        %5298 = vmatmul.mubr.f32.gmra.mrb[0].mxu0 %v4404
        %v5299 = vpop.f32.mrb[0].mxu0
        %v5300 = vadd.f32 %v5055, %v5299
        %v5301 = vpop.f32.mrb[0].mxu0
        %5302 = vmatprep.mubr.f32.mxu0 %v4414
        %5303 = vmatmul.mubr.f32.gmra.mrb[0].mxu0 %v4413
        %v5304 = vpop.f32.mrb[0].mxu0
        %v5305 = vadd.f32 %v5060, %v5304
        %v5306 = vpop.f32.mrb[0].mxu0
        %5307 = vmatprep.mubr.f32.mxu0 %v4423
        %5308 = vmatmul.mubr.f32.gmra.mrb[0].mxu0 %v4422
        %v5309 = vpop.f32.mrb[0].mxu0
        %v5310 = vadd.f32 %v5065, %v5309
        %v5311 = vpop.f32.mrb[0].mxu0
        %5312 = vdwg.mxu0
        %5313 = vmatprep.subr.mxu0 0.0
        %5314 = vmatpush1.msra.mxu0 %v4523
        %5315 = vmatprep.subr.mxu0 0.0
        %5316 = vmatpush1.msra.mxu0 %v4524
        %5317 = vmatprep.subr.mxu0 0.0
        %5318 = vmatpush1.msra.mxu0 %v4525
        %5319 = vmatprep.subr.mxu0 0.0
        %5320 = vmatpush1.msra.mxu0 %v4526
        %5321 = vmatprep.subr.mxu0 0.0
        %5322 = vmatpush1.msra.mxu0 %v4527
        %5323 = vmatprep.subr.mxu0 0.0
        %5324 = vmatpush1.msra.mxu0 %v4528
        %5325 = vmatprep.subr.mxu0 0.0
        %5326 = vmatpush1.msra.mxu0 %v4529
        %5327 = vmatprep.subr.mxu0 0.0
        %5328 = vmatpush1.msra.mxu0 %v4530
        %5329 = vmatprep.subr.mxu0 0.0
        %5330 = vmatpush1.msra.mxu0 %v4531
        %5331 = vmatprep.subr.mxu0 0.0
        %5332 = vmatpush1.msra.mxu0 %v4532
        %5333 = vmatprep.subr.mxu0 0.0
        %5334 = vmatpush1.msra.mxu0 %v4533
        %5335 = vmatprep.subr.mxu0 0.0
        %5336 = vmatpush1.msra.mxu0 %v4534
        %5337 = vmatprep.subr.mxu0 0.0
        %5338 = vmatpush1.msra.mxu0 %v4535
        %5339 = vmatprep.subr.mxu0 0.0
        %5340 = vmatpush1.msra.mxu0 %v4536
        %5341 = vmatprep.subr.mxu0 0.0
        %5342 = vmatpush1.msra.mxu0 %v4537
        %5343 = vmatprep.subr.mxu0 0.0
        %5344 = vmatpush1.msra.mxu0 %v4538
        %5345 = vmatprep.subr.mxu0 0.0
        %5346 = vmatpush1.msra.mxu0 %v4539
        %5347 = vmatprep.subr.mxu0 0.0
        %5348 = vmatpush1.msra.mxu0 %v4540
        %5349 = vmatprep.subr.mxu0 0.0
        %5350 = vmatpush1.msra.mxu0 %v4541
        %5351 = vmatprep.subr.mxu0 0.0
        %5352 = vmatpush1.msra.mxu0 %v4542
        %5353 = vmatprep.subr.mxu0 0.0
        %5354 = vmatpush1.msra.mxu0 %v4543
        %5355 = vmatprep.subr.mxu0 0.0
        %5356 = vmatpush1.msra.mxu0 %v4544
        %5357 = vmatprep.subr.mxu0 0.0
        %5358 = vmatpush1.msra.mxu0 %v4545
        %5359 = vmatprep.subr.mxu0 0.0
        %5360 = vmatpush1.msra.mxu0 %v4546
        %5361 = vmatprep.subr.mxu0 0.0
        %5362 = vmatpush1.msra.mxu0 %v4547
        %5363 = vmatprep.subr.mxu0 0.0
        %5364 = vmatpush1.msra.mxu0 %v4548
        %5365 = vmatprep.subr.mxu0 0.0
        %5366 = vmatpush1.msra.mxu0 %v4549
        %5367 = vmatprep.subr.mxu0 0.0
        %5368 = vmatpush1.msra.mxu0 %v4550
        %5369 = vmatprep.subr.mxu0 0.0
        %5370 = vmatpush1.msra.mxu0 %v4551
        %5371 = vmatprep.subr.mxu0 0.0
        %5372 = vmatpush1.msra.mxu0 %v4552
        %5373 = vmatprep.subr.mxu0 0.0
        %5374 = vmatpush1.msra.mxu0 %v4553
        %5375 = vmatprep.subr.mxu0 0.0
        %5376 = vmatpush1.msra.mxu0 %v4554
        %5377 = vmatprep.mubr.f32.mxu0 %v4110
        %5378 = vmatmul.mubr.f32.gmra.mrb[0].mxu0 %v4109
        %v5379 = vpop.f32.mrb[0].mxu0
        %v5380 = vadd.f32 %v5135, %v5379
        %v5381 = vpop.f32.mrb[0].mxu0
        %5382 = vmatprep.mubr.f32.mxu0 %v4119
        %5383 = vmatmul.mubr.f32.gmra.mrb[0].mxu0 %v4118
        %v5384 = vpop.f32.mrb[0].mxu0
        %v5385 = vadd.f32 %v5140, %v5384
        %v5386 = vpop.f32.mrb[0].mxu0
        %5387 = vmatprep.mubr.f32.mxu0 %v4128
        %5388 = vmatmul.mubr.f32.gmra.mrb[0].mxu0 %v4127
        %v5389 = vpop.f32.mrb[0].mxu0
        %v5390 = vadd.f32 %v5145, %v5389
        %v5391 = vpop.f32.mrb[0].mxu0
        %5392 = vmatprep.mubr.f32.mxu0 %v4137
        %5393 = vmatmul.mubr.f32.gmra.mrb[0].mxu0 %v4136
        %v5394 = vpop.f32.mrb[0].mxu0
        %v5395 = vadd.f32 %v5150, %v5394
        %v5396 = vpop.f32.mrb[0].mxu0
        %5397 = vmatprep.mubr.f32.mxu0 %v4146
        %5398 = vmatmul.mubr.f32.gmra.mrb[0].mxu0 %v4145
        %v5399 = vpop.f32.mrb[0].mxu0
        %v5400 = vadd.f32 %v5155, %v5399
        %v5401 = vpop.f32.mrb[0].mxu0
        %5402 = vmatprep.mubr.f32.mxu0 %v4155
        %5403 = vmatmul.mubr.f32.gmra.mrb[0].mxu0 %v4154
        %v5404 = vpop.f32.mrb[0].mxu0
        %v5405 = vadd.f32 %v5160, %v5404
        %v5406 = vpop.f32.mrb[0].mxu0
        %5407 = vmatprep.mubr.f32.mxu0 %v4164
        %5408 = vmatmul.mubr.f32.gmra.mrb[0].mxu0 %v4163
        %v5409 = vpop.f32.mrb[0].mxu0
        %v5410 = vadd.f32 %v5165, %v5409
        %v5411 = vpop.f32.mrb[0].mxu0
        %5412 = vmatprep.mubr.f32.mxu0 %v4173
        %5413 = vmatmul.mubr.f32.gmra.mrb[0].mxu0 %v4172
        %v5414 = vpop.f32.mrb[0].mxu0
        %v5415 = vadd.f32 %v5170, %v5414
        %v5416 = vpop.f32.mrb[0].mxu0
        %5417 = vmatprep.mubr.f32.mxu0 %v4182
        %5418 = vmatmul.mubr.f32.gmra.mrb[0].mxu0 %v4181
        %v5419 = vpop.f32.mrb[0].mxu0
        %v5420 = vadd.f32 %v5175, %v5419
        %v5421 = vpop.f32.mrb[0].mxu0
        %5422 = vmatprep.mubr.f32.mxu0 %v4191
        %5423 = vmatmul.mubr.f32.gmra.mrb[0].mxu0 %v4190
        %v5424 = vpop.f32.mrb[0].mxu0
        %v5425 = vadd.f32 %v5180, %v5424
        %v5426 = vpop.f32.mrb[0].mxu0
        %5427 = vmatprep.mubr.f32.mxu0 %v4200
        %5428 = vmatmul.mubr.f32.gmra.mrb[0].mxu0 %v4199
        %v5429 = vpop.f32.mrb[0].mxu0
        %v5430 = vadd.f32 %v5185, %v5429
        %v5431 = vpop.f32.mrb[0].mxu0
        %5432 = vmatprep.mubr.f32.mxu0 %v4209
        %5433 = vmatmul.mubr.f32.gmra.mrb[0].mxu0 %v4208
        %v5434 = vpop.f32.mrb[0].mxu0
        %v5435 = vadd.f32 %v5190, %v5434
        %v5436 = vpop.f32.mrb[0].mxu0
        %5437 = vmatprep.mubr.f32.mxu0 %v4218
        %5438 = vmatmul.mubr.f32.gmra.mrb[0].mxu0 %v4217
        %v5439 = vpop.f32.mrb[0].mxu0
        %v5440 = vadd.f32 %v5195, %v5439
        %v5441 = vpop.f32.mrb[0].mxu0
        %5442 = vmatprep.mubr.f32.mxu0 %v4227
        %5443 = vmatmul.mubr.f32.gmra.mrb[0].mxu0 %v4226
        %v5444 = vpop.f32.mrb[0].mxu0
        %v5445 = vadd.f32 %v5200, %v5444
        %v5446 = vpop.f32.mrb[0].mxu0
        %5447 = vmatprep.mubr.f32.mxu0 %v4236
        %5448 = vmatmul.mubr.f32.gmra.mrb[0].mxu0 %v4235
        %v5449 = vpop.f32.mrb[0].mxu0
        %v5450 = vadd.f32 %v5205, %v5449
        %v5451 = vpop.f32.mrb[0].mxu0
        %5452 = vmatprep.mubr.f32.mxu0 %v4245
        %5453 = vmatmul.mubr.f32.gmra.mrb[0].mxu0 %v4244
        %v5454 = vpop.f32.mrb[0].mxu0
        %v5455 = vadd.f32 %v5210, %v5454
        %v5456 = vpop.f32.mrb[0].mxu0
        %5457 = vmatprep.mubr.f32.mxu0 %v4254
        %5458 = vmatmul.mubr.f32.gmra.mrb[0].mxu0 %v4253
        %v5459 = vpop.f32.mrb[0].mxu0
        %v5460 = vadd.f32 %v5215, %v5459
        %v5461 = vpop.f32.mrb[0].mxu0
        %5462 = vmatprep.mubr.f32.mxu0 %v4263
        %5463 = vmatmul.mubr.f32.gmra.mrb[0].mxu0 %v4262
        %v5464 = vpop.f32.mrb[0].mxu0
        %v5465 = vadd.f32 %v5220, %v5464
        %v5466 = vpop.f32.mrb[0].mxu0
        %5467 = vmatprep.mubr.f32.mxu0 %v4272
        %5468 = vmatmul.mubr.f32.gmra.mrb[0].mxu0 %v4271
        %v5469 = vpop.f32.mrb[0].mxu0
        %v5470 = vadd.f32 %v5225, %v5469
        %v5471 = vpop.f32.mrb[0].mxu0
        %5472 = vmatprep.mubr.f32.mxu0 %v4281
        %5473 = vmatmul.mubr.f32.gmra.mrb[0].mxu0 %v4280
        %v5474 = vpop.f32.mrb[0].mxu0
        %v5475 = vadd.f32 %v5230, %v5474
        %v5476 = vpop.f32.mrb[0].mxu0
        %5477 = vmatprep.mubr.f32.mxu0 %v4290
        %5478 = vmatmul.mubr.f32.gmra.mrb[0].mxu0 %v4289
        %v5479 = vpop.f32.mrb[0].mxu0
        %v5480 = vadd.f32 %v5235, %v5479
        %v5481 = vpop.f32.mrb[0].mxu0
        %5482 = vmatprep.mubr.f32.mxu0 %v4299
        %5483 = vmatmul.mubr.f32.gmra.mrb[0].mxu0 %v4298
        %v5484 = vpop.f32.mrb[0].mxu0
        %v5485 = vadd.f32 %v5240, %v5484
        %v5486 = vpop.f32.mrb[0].mxu0
        %5487 = vmatprep.mubr.f32.mxu0 %v4308
        %5488 = vmatmul.mubr.f32.gmra.mrb[0].mxu0 %v4307
        %v5489 = vpop.f32.mrb[0].mxu0
        %v5490 = vadd.f32 %v5245, %v5489
        %v5491 = vpop.f32.mrb[0].mxu0
        %5492 = vmatprep.mubr.f32.mxu0 %v4317
        %5493 = vmatmul.mubr.f32.gmra.mrb[0].mxu0 %v4316
        %v5494 = vpop.f32.mrb[0].mxu0
        %v5495 = vadd.f32 %v5250, %v5494
        %v5496 = vpop.f32.mrb[0].mxu0
        %5497 = vmatprep.mubr.f32.mxu0 %v4326
        %5498 = vmatmul.mubr.f32.gmra.mrb[0].mxu0 %v4325
        %v5499 = vpop.f32.mrb[0].mxu0
        %v5500 = vadd.f32 %v5255, %v5499
        %v5501 = vpop.f32.mrb[0].mxu0
        %5502 = vmatprep.mubr.f32.mxu0 %v4335
        %5503 = vmatmul.mubr.f32.gmra.mrb[0].mxu0 %v4334
        %v5504 = vpop.f32.mrb[0].mxu0
        %v5505 = vadd.f32 %v5260, %v5504
        %v5506 = vpop.f32.mrb[0].mxu0
        %5507 = vmatprep.mubr.f32.mxu0 %v4344
        %5508 = vmatmul.mubr.f32.gmra.mrb[0].mxu0 %v4343
        %v5509 = vpop.f32.mrb[0].mxu0
        %v5510 = vadd.f32 %v5265, %v5509
        %v5511 = vpop.f32.mrb[0].mxu0
        %5512 = vmatprep.mubr.f32.mxu0 %v4353
        %5513 = vmatmul.mubr.f32.gmra.mrb[0].mxu0 %v4352
        %v5514 = vpop.f32.mrb[0].mxu0
        %v5515 = vadd.f32 %v5270, %v5514
        %v5516 = vpop.f32.mrb[0].mxu0
        %5517 = vmatprep.mubr.f32.mxu0 %v4362
        %5518 = vmatmul.mubr.f32.gmra.mrb[0].mxu0 %v4361
        %v5519 = vpop.f32.mrb[0].mxu0
        %v5520 = vadd.f32 %v5275, %v5519
        %v5521 = vpop.f32.mrb[0].mxu0
        %5522 = vmatprep.mubr.f32.mxu0 %v4371
        %5523 = vmatmul.mubr.f32.gmra.mrb[0].mxu0 %v4370
        %v5524 = vpop.f32.mrb[0].mxu0
        %v5525 = vadd.f32 %v5280, %v5524
        %v5526 = vpop.f32.mrb[0].mxu0
        %5527 = vmatprep.mubr.f32.mxu0 %v4380
        %5528 = vmatmul.mubr.f32.gmra.mrb[0].mxu0 %v4379
        %v5529 = vpop.f32.mrb[0].mxu0
        %v5530 = vadd.f32 %v5285, %v5529
        %v5531 = vpop.f32.mrb[0].mxu0
        %5532 = vmatprep.mubr.f32.mxu0 %v4389
        %5533 = vmatmul.mubr.f32.gmra.mrb[0].mxu0 %v4388
        %v5534 = vpop.f32.mrb[0].mxu0
        %v5535 = vadd.f32 %v5290, %v5534
        %v5536 = vpop.f32.mrb[0].mxu0
        %5537 = vmatprep.mubr.f32.mxu0 %v4398
        %5538 = vmatmul.mubr.f32.gmra.mrb[0].mxu0 %v4397
        %v5539 = vpop.f32.mrb[0].mxu0
        %v5540 = vadd.f32 %v5295, %v5539
        %v5541 = vpop.f32.mrb[0].mxu0
        %5542 = vmatprep.mubr.f32.mxu0 %v4407
        %5543 = vmatmul.mubr.f32.gmra.mrb[0].mxu0 %v4406
        %v5544 = vpop.f32.mrb[0].mxu0
        %v5545 = vadd.f32 %v5300, %v5544
        %v5546 = vpop.f32.mrb[0].mxu0
        %5547 = vmatprep.mubr.f32.mxu0 %v4416
        %5548 = vmatmul.mubr.f32.gmra.mrb[0].mxu0 %v4415
        %v5549 = vpop.f32.mrb[0].mxu0
        %v5550 = vadd.f32 %v5305, %v5549
        %v5551 = vpop.f32.mrb[0].mxu0
        %5552 = vmatprep.mubr.f32.mxu0 %v4425
        %5553 = vmatmul.mubr.f32.gmra.mrb[0].mxu0 %v4424
        %v5554 = vpop.f32.mrb[0].mxu0
        %v5555 = vadd.f32 %v5310, %v5554
        %v5556 = vpop.f32.mrb[0].mxu0
        %5557 = vdwg.mxu0
        %5558 = vmatprep.subr.mxu0 0.0
        %5559 = vmatpush1.msra.mxu0 %v4555
        %5560 = vmatprep.subr.mxu0 0.0
        %5561 = vmatpush1.msra.mxu0 %v4556
        %5562 = vmatprep.subr.mxu0 0.0
        %5563 = vmatpush1.msra.mxu0 %v4557
        %5564 = vmatprep.subr.mxu0 0.0
        %5565 = vmatpush1.msra.mxu0 %v4558
        %5566 = vmatprep.subr.mxu0 0.0
        %5567 = vmatpush1.msra.mxu0 %v4559
        %5568 = vmatprep.subr.mxu0 0.0
        %5569 = vmatpush1.msra.mxu0 %v4560
        %5570 = vmatprep.subr.mxu0 0.0
        %5571 = vmatpush1.msra.mxu0 %v4561
        %5572 = vmatprep.subr.mxu0 0.0
        %5573 = vmatpush1.msra.mxu0 %v4562
        %5574 = vmatprep.subr.mxu0 0.0
        %5575 = vmatpush1.msra.mxu0 %v4563
        %5576 = vmatprep.subr.mxu0 0.0
        %5577 = vmatpush1.msra.mxu0 %v4564
        %5578 = vmatprep.subr.mxu0 0.0
        %5579 = vmatpush1.msra.mxu0 %v4565
        %5580 = vmatprep.subr.mxu0 0.0
        %5581 = vmatpush1.msra.mxu0 %v4566
        %5582 = vmatprep.subr.mxu0 0.0
        %5583 = vmatpush1.msra.mxu0 %v4567
        %5584 = vmatprep.subr.mxu0 0.0
        %5585 = vmatpush1.msra.mxu0 %v4568
        %5586 = vmatprep.subr.mxu0 0.0
        %5587 = vmatpush1.msra.mxu0 %v4569
        %5588 = vmatprep.subr.mxu0 0.0
        %5589 = vmatpush1.msra.mxu0 %v4570
        %5590 = vmatprep.subr.mxu0 0.0
        %5591 = vmatpush1.msra.mxu0 0.0
        %5592 = vmatprep.subr.mxu0 0.0
        %5593 = vmatpush1.msra.mxu0 0.0
        %5594 = vmatprep.subr.mxu0 0.0
        %5595 = vmatpush1.msra.mxu0 0.0
        %5596 = vmatprep.subr.mxu0 0.0
        %5597 = vmatpush1.msra.mxu0 0.0
        %5598 = vmatprep.subr.mxu0 0.0
        %5599 = vmatpush1.msra.mxu0 0.0
        %5600 = vmatprep.subr.mxu0 0.0
        %5601 = vmatpush1.msra.mxu0 0.0
        %5602 = vmatprep.subr.mxu0 0.0
        %5603 = vmatpush1.msra.mxu0 0.0
        %5604 = vmatprep.subr.mxu0 0.0
        %5605 = vmatpush1.msra.mxu0 0.0
        %5606 = vmatprep.subr.mxu0 0.0
        %5607 = vmatpush1.msra.mxu0 0.0
        %5608 = vmatprep.subr.mxu0 0.0
        %5609 = vmatpush1.msra.mxu0 0.0
        %5610 = vmatprep.subr.mxu0 0.0
        %5611 = vmatpush1.msra.mxu0 0.0
        %5612 = vmatprep.subr.mxu0 0.0
        %5613 = vmatpush1.msra.mxu0 0.0
        %5614 = vmatprep.subr.mxu0 0.0
        %5615 = vmatpush1.msra.mxu0 0.0
        %5616 = vmatprep.subr.mxu0 0.0
        %5617 = vmatpush1.msra.mxu0 0.0
        %5618 = vmatprep.subr.mxu0 0.0
        %5619 = vmatpush1.msra.mxu0 0.0
        %5620 = vmatprep.subr.mxu0 0.0
        %5621 = vmatpush1.msra.mxu0 0.0
        %5622 = vmatprep.mubr.f32.mxu0 0.0
        %5623 = vmatmul.mubr.f32.gmra.mrb[0].mxu0 %v4111
        %v5624 = vpop.f32.mrb[0].mxu0
        %v5625 = vadd.f32 %v5380, %v5624
        %v5626 = vpop.f32.mrb[0].mxu0
        %5627 = vmatprep.mubr.f32.mxu0 0.0
        %5628 = vmatmul.mubr.f32.gmra.mrb[0].mxu0 %v4120
        %v5629 = vpop.f32.mrb[0].mxu0
        %v5630 = vadd.f32 %v5385, %v5629
        %v5631 = vpop.f32.mrb[0].mxu0
        %5632 = vmatprep.mubr.f32.mxu0 0.0
        %5633 = vmatmul.mubr.f32.gmra.mrb[0].mxu0 %v4129
        %v5634 = vpop.f32.mrb[0].mxu0
        %v5635 = vadd.f32 %v5390, %v5634
        %v5636 = vpop.f32.mrb[0].mxu0
        %5637 = vmatprep.mubr.f32.mxu0 0.0
        %5638 = vmatmul.mubr.f32.gmra.mrb[0].mxu0 %v4138
        %v5639 = vpop.f32.mrb[0].mxu0
        %v5640 = vadd.f32 %v5395, %v5639
        %v5641 = vpop.f32.mrb[0].mxu0
        %5642 = vmatprep.mubr.f32.mxu0 0.0
        %5643 = vmatmul.mubr.f32.gmra.mrb[0].mxu0 %v4147
        %v5644 = vpop.f32.mrb[0].mxu0
        %v5645 = vadd.f32 %v5400, %v5644
        %v5646 = vpop.f32.mrb[0].mxu0
        %5647 = vmatprep.mubr.f32.mxu0 0.0
        %5648 = vmatmul.mubr.f32.gmra.mrb[0].mxu0 %v4156
        %v5649 = vpop.f32.mrb[0].mxu0
        %v5650 = vadd.f32 %v5405, %v5649
        %v5651 = vpop.f32.mrb[0].mxu0
        %5652 = vmatprep.mubr.f32.mxu0 0.0
        %5653 = vmatmul.mubr.f32.gmra.mrb[0].mxu0 %v4165
        %v5654 = vpop.f32.mrb[0].mxu0
        %v5655 = vadd.f32 %v5410, %v5654
        %v5656 = vpop.f32.mrb[0].mxu0
        %5657 = vmatprep.mubr.f32.mxu0 0.0
        %5658 = vmatmul.mubr.f32.gmra.mrb[0].mxu0 %v4174
        %v5659 = vpop.f32.mrb[0].mxu0
        %v5660 = vadd.f32 %v5415, %v5659
        %v5661 = vpop.f32.mrb[0].mxu0
        %5662 = vmatprep.mubr.f32.mxu0 0.0
        %5663 = vmatmul.mubr.f32.gmra.mrb[0].mxu0 %v4183
        %v5664 = vpop.f32.mrb[0].mxu0
        %v5665 = vadd.f32 %v5420, %v5664
        %v5666 = vpop.f32.mrb[0].mxu0
        %5667 = vmatprep.mubr.f32.mxu0 0.0
        %5668 = vmatmul.mubr.f32.gmra.mrb[0].mxu0 %v4192
        %v5669 = vpop.f32.mrb[0].mxu0
        %v5670 = vadd.f32 %v5425, %v5669
        %v5671 = vpop.f32.mrb[0].mxu0
        %5672 = vmatprep.mubr.f32.mxu0 0.0
        %5673 = vmatmul.mubr.f32.gmra.mrb[0].mxu0 %v4201
        %v5674 = vpop.f32.mrb[0].mxu0
        %v5675 = vadd.f32 %v5430, %v5674
        %v5676 = vpop.f32.mrb[0].mxu0
        %5677 = vmatprep.mubr.f32.mxu0 0.0
        %5678 = vmatmul.mubr.f32.gmra.mrb[0].mxu0 %v4210
        %v5679 = vpop.f32.mrb[0].mxu0
        %v5680 = vadd.f32 %v5435, %v5679
        %v5681 = vpop.f32.mrb[0].mxu0
        %5682 = vmatprep.mubr.f32.mxu0 0.0
        %5683 = vmatmul.mubr.f32.gmra.mrb[0].mxu0 %v4219
        %v5684 = vpop.f32.mrb[0].mxu0
        %v5685 = vadd.f32 %v5440, %v5684
        %v5686 = vpop.f32.mrb[0].mxu0
        %5687 = vmatprep.mubr.f32.mxu0 0.0
        %5688 = vmatmul.mubr.f32.gmra.mrb[0].mxu0 %v4228
        %v5689 = vpop.f32.mrb[0].mxu0
        %v5690 = vadd.f32 %v5445, %v5689
        %v5691 = vpop.f32.mrb[0].mxu0
        %5692 = vmatprep.mubr.f32.mxu0 0.0
        %5693 = vmatmul.mubr.f32.gmra.mrb[0].mxu0 %v4237
        %v5694 = vpop.f32.mrb[0].mxu0
        %v5695 = vadd.f32 %v5450, %v5694
        %v5696 = vpop.f32.mrb[0].mxu0
        %5697 = vmatprep.mubr.f32.mxu0 0.0
        %5698 = vmatmul.mubr.f32.gmra.mrb[0].mxu0 %v4246
        %v5699 = vpop.f32.mrb[0].mxu0
        %v5700 = vadd.f32 %v5455, %v5699
        %v5701 = vpop.f32.mrb[0].mxu0
        %5702 = vmatprep.mubr.f32.mxu0 0.0
        %5703 = vmatmul.mubr.f32.gmra.mrb[0].mxu0 %v4255
        %v5704 = vpop.f32.mrb[0].mxu0
        %v5705 = vadd.f32 %v5460, %v5704
        %v5706 = vpop.f32.mrb[0].mxu0
        %5707 = vmatprep.mubr.f32.mxu0 0.0
        %5708 = vmatmul.mubr.f32.gmra.mrb[0].mxu0 %v4264
        %v5709 = vpop.f32.mrb[0].mxu0
        %v5710 = vadd.f32 %v5465, %v5709
        %v5711 = vpop.f32.mrb[0].mxu0
        %5712 = vmatprep.mubr.f32.mxu0 0.0
        %5713 = vmatmul.mubr.f32.gmra.mrb[0].mxu0 %v4273
        %v5714 = vpop.f32.mrb[0].mxu0
        %v5715 = vadd.f32 %v5470, %v5714
        %v5716 = vpop.f32.mrb[0].mxu0
        %5717 = vmatprep.mubr.f32.mxu0 0.0
        %5718 = vmatmul.mubr.f32.gmra.mrb[0].mxu0 %v4282
        %v5719 = vpop.f32.mrb[0].mxu0
        %v5720 = vadd.f32 %v5475, %v5719
        %v5721 = vpop.f32.mrb[0].mxu0
        %5722 = vmatprep.mubr.f32.mxu0 0.0
        %5723 = vmatmul.mubr.f32.gmra.mrb[0].mxu0 %v4291
        %v5724 = vpop.f32.mrb[0].mxu0
        %v5725 = vadd.f32 %v5480, %v5724
        %v5726 = vpop.f32.mrb[0].mxu0
        %5727 = vmatprep.mubr.f32.mxu0 0.0
        %5728 = vmatmul.mubr.f32.gmra.mrb[0].mxu0 %v4300
        %v5729 = vpop.f32.mrb[0].mxu0
        %v5730 = vadd.f32 %v5485, %v5729
        %v5731 = vpop.f32.mrb[0].mxu0
        %5732 = vmatprep.mubr.f32.mxu0 0.0
        %5733 = vmatmul.mubr.f32.gmra.mrb[0].mxu0 %v4309
        %v5734 = vpop.f32.mrb[0].mxu0
        %v5735 = vadd.f32 %v5490, %v5734
        %v5736 = vpop.f32.mrb[0].mxu0
        %5737 = vmatprep.mubr.f32.mxu0 0.0
        %5738 = vmatmul.mubr.f32.gmra.mrb[0].mxu0 %v4318
        %v5739 = vpop.f32.mrb[0].mxu0
        %v5740 = vadd.f32 %v5495, %v5739
        %v5741 = vpop.f32.mrb[0].mxu0
        %5742 = vmatprep.mubr.f32.mxu0 0.0
        %5743 = vmatmul.mubr.f32.gmra.mrb[0].mxu0 %v4327
        %v5744 = vpop.f32.mrb[0].mxu0
        %v5745 = vadd.f32 %v5500, %v5744
        %v5746 = vpop.f32.mrb[0].mxu0
        %5747 = vmatprep.mubr.f32.mxu0 0.0
        %5748 = vmatmul.mubr.f32.gmra.mrb[0].mxu0 %v4336
        %v5749 = vpop.f32.mrb[0].mxu0
        %v5750 = vadd.f32 %v5505, %v5749
        %v5751 = vpop.f32.mrb[0].mxu0
        %5752 = vmatprep.mubr.f32.mxu0 0.0
        %5753 = vmatmul.mubr.f32.gmra.mrb[0].mxu0 %v4345
        %v5754 = vpop.f32.mrb[0].mxu0
        %v5755 = vadd.f32 %v5510, %v5754
        %v5756 = vpop.f32.mrb[0].mxu0
        %5757 = vmatprep.mubr.f32.mxu0 0.0
        %5758 = vmatmul.mubr.f32.gmra.mrb[0].mxu0 %v4354
        %v5759 = vpop.f32.mrb[0].mxu0
        %v5760 = vadd.f32 %v5515, %v5759
        %v5761 = vpop.f32.mrb[0].mxu0
        %5762 = vmatprep.mubr.f32.mxu0 0.0
        %5763 = vmatmul.mubr.f32.gmra.mrb[0].mxu0 %v4363
        %v5764 = vpop.f32.mrb[0].mxu0
        %v5765 = vadd.f32 %v5520, %v5764
        %v5766 = vpop.f32.mrb[0].mxu0
        %5767 = vmatprep.mubr.f32.mxu0 0.0
        %5768 = vmatmul.mubr.f32.gmra.mrb[0].mxu0 %v4372
        %v5769 = vpop.f32.mrb[0].mxu0
        %v5770 = vadd.f32 %v5525, %v5769
        %v5771 = vpop.f32.mrb[0].mxu0
        %5772 = vmatprep.mubr.f32.mxu0 0.0
        %5773 = vmatmul.mubr.f32.gmra.mrb[0].mxu0 %v4381
        %v5774 = vpop.f32.mrb[0].mxu0
        %v5775 = vadd.f32 %v5530, %v5774
        %v5776 = vpop.f32.mrb[0].mxu0
        %5777 = vmatprep.mubr.f32.mxu0 0.0
        %5778 = vmatmul.mubr.f32.gmra.mrb[0].mxu0 %v4390
        %v5779 = vpop.f32.mrb[0].mxu0
        %v5780 = vadd.f32 %v5535, %v5779
        %v5781 = vpop.f32.mrb[0].mxu0
        %5782 = vmatprep.mubr.f32.mxu0 0.0
        %5783 = vmatmul.mubr.f32.gmra.mrb[0].mxu0 %v4399
        %v5784 = vpop.f32.mrb[0].mxu0
        %v5785 = vadd.f32 %v5540, %v5784
        %v5786 = vpop.f32.mrb[0].mxu0
        %5787 = vmatprep.mubr.f32.mxu0 0.0
        %5788 = vmatmul.mubr.f32.gmra.mrb[0].mxu0 %v4408
        %v5789 = vpop.f32.mrb[0].mxu0
        %v5790 = vadd.f32 %v5545, %v5789
        %v5791 = vpop.f32.mrb[0].mxu0
        %5792 = vmatprep.mubr.f32.mxu0 0.0
        %5793 = vmatmul.mubr.f32.gmra.mrb[0].mxu0 %v4417
        %v5794 = vpop.f32.mrb[0].mxu0
        %v5795 = vadd.f32 %v5550, %v5794
        %v5796 = vpop.f32.mrb[0].mxu0
        %5797 = vmatprep.mubr.f32.mxu0 0.0
        %5798 = vmatmul.mubr.f32.gmra.mrb[0].mxu0 %v4426
        %v5799 = vpop.f32.mrb[0].mxu0
        %v5800 = vadd.f32 %v5555, %v5799
        %v5801 = vpop.f32.mrb[0].mxu0
        %5802 = vdwg.mxu0
        %v5803 = vld [vmem:[%s237 + $0x13] sm:$0xff]
        %v5804 = vld [vmem:[%s237 + $0x1b] sm:$0xff]
        %v5805 = vld [vmem:[%s237 + $0x23] sm:$0xff]
        %v5806 = vld [vmem:[%s237 + $0x2b] sm:$0xff]
        %v5807 = vld [vmem:[%s237 + $0x33] sm:$0xff]
        %v5808 = vld [vmem:[%s237 + $0x3b] sm:$0xff]
        %v5809 = vld [vmem:[%s237 + $0x43] sm:$0xff]
        %v5810 = vld [vmem:[%s237 + $0x4b] sm:$0xff]
        %v5811 = vld [vmem:[%s237 + $0x53] sm:$0xff]
        %v5812 = vld [vmem:[%s237 + $0x5b] sm:$0xff]
        %v5813 = vld [vmem:[%s237 + $0x63] sm:$0xff]
        %v5814 = vld [vmem:[%s237 + $0x6b] sm:$0xff]
        %v5815 = vld [vmem:[%s237 + $0x73] sm:$0xff]
        %v5816 = vld [vmem:[%s237 + $0x7b] sm:$0xff]
        %v5817 = vld [vmem:[%s237 + $0x83] sm:$0xff]
        %v5818 = vld [vmem:[%s237 + $0x8b] sm:$0xff]
        %v5819 = vld [vmem:[%s237 + $0x93] sm:$0xff]
        %v5820 = vld [vmem:[%s237 + $0x9b] sm:$0xff]
        %v5821 = vld [vmem:[%s237 + $0xa3] sm:$0xff]
        %v5822 = vld [vmem:[%s237 + $0xab] sm:$0xff]
        %v5823 = vld [vmem:[%s237 + $0xb3] sm:$0xff]
        %v5824 = vld [vmem:[%s237 + $0xbb] sm:$0xff]
        %v5825 = vld [vmem:[%s237 + $0xc3] sm:$0xff]
        %v5826 = vld [vmem:[%s237 + $0xcb] sm:$0xff]
        %v5827 = vld [vmem:[%s237 + $0xd3] sm:$0xff]
        %v5828 = vld [vmem:[%s237 + $0xdb] sm:$0xff]
        %v5829 = vld [vmem:[%s237 + $0xe3] sm:$0xff]
        %v5830 = vld [vmem:[%s237 + $0xeb] sm:$0xff]
        %v5831 = vld [vmem:[%s237 + $0xf3] sm:$0xff]
        %v5832 = vld [vmem:[%s237 + $0xfb] sm:$0xff]
        %v5833 = vld [vmem:[%s237 + $0x103] sm:$0xff]
        %v5834 = vld [vmem:[%s237 + $0x10b] sm:$0xff]
        %v5835 = vld [vmem:[%s237 + $0x113] sm:$0xff]
        %v5836 = vld [vmem:[%s237 + $0x11b] sm:$0xff]
        %v5837 = vld [vmem:[%s237 + $0x123] sm:$0xff]
        %v5838 = vld [vmem:[%s237 + $0x12b] sm:$0xff]
        %v5839 = vadd.f32 %v5625, %v5803
        %v5840 = vadd.f32 %v5630, %v5804
        %v5841 = vadd.f32 %v5635, %v5805
        %v5842 = vadd.f32 %v5640, %v5806
        %v5843 = vadd.f32 %v5645, %v5807
        %v5844 = vadd.f32 %v5650, %v5808
        %v5845 = vadd.f32 %v5655, %v5809
        %v5846 = vadd.f32 %v5660, %v5810
        %v5847 = vadd.f32 %v5665, %v5811
        %v5848 = vadd.f32 %v5670, %v5812
        %v5849 = vadd.f32 %v5675, %v5813
        %v5850 = vadd.f32 %v5680, %v5814
        %v5851 = vadd.f32 %v5685, %v5815
        %v5852 = vadd.f32 %v5690, %v5816
        %v5853 = vadd.f32 %v5695, %v5817
        %v5854 = vadd.f32 %v5700, %v5818
        %v5855 = vadd.f32 %v5705, %v5819
        %v5856 = vadd.f32 %v5710, %v5820
        %v5857 = vadd.f32 %v5715, %v5821
        %v5858 = vadd.f32 %v5720, %v5822
        %v5859 = vadd.f32 %v5725, %v5823
        %v5860 = vadd.f32 %v5730, %v5824
        %v5861 = vadd.f32 %v5735, %v5825
        %v5862 = vadd.f32 %v5740, %v5826
        %v5863 = vadd.f32 %v5745, %v5827
        %v5864 = vadd.f32 %v5750, %v5828
        %v5865 = vadd.f32 %v5755, %v5829
        %v5866 = vadd.f32 %v5760, %v5830
        %v5867 = vadd.f32 %v5765, %v5831
        %v5868 = vadd.f32 %v5770, %v5832
        %v5869 = vadd.f32 %v5775, %v5833
        %v5870 = vadd.f32 %v5780, %v5834
        %v5871 = vadd.f32 %v5785, %v5835
        %v5872 = vadd.f32 %v5790, %v5836
        %v5873 = vadd.f32 %v5795, %v5837
        %v5874 = vadd.f32 %v5800, %v5838
        %v5875 = vmax.f32 %v5839, 0.0
        %v5876 = vmax.f32 %v5840, 0.0
        %v5877 = vmax.f32 %v5841, 0.0
        %v5878 = vmax.f32 %v5842, 0.0
        %v5879 = vmax.f32 %v5843, 0.0
        %v5880 = vmax.f32 %v5844, 0.0
        %v5881 = vmax.f32 %v5845, 0.0
        %v5882 = vmax.f32 %v5846, 0.0
        %v5883 = vmax.f32 %v5847, 0.0
        %v5884 = vmax.f32 %v5848, 0.0
        %v5885 = vmax.f32 %v5849, 0.0
        %v5886 = vmax.f32 %v5850, 0.0
        %v5887 = vmax.f32 %v5851, 0.0
        %v5888 = vmax.f32 %v5852, 0.0
        %v5889 = vmax.f32 %v5853, 0.0
        %v5890 = vmax.f32 %v5854, 0.0
        %v5891 = vmax.f32 %v5855, 0.0
        %v5892 = vmax.f32 %v5856, 0.0
        %v5893 = vmax.f32 %v5857, 0.0
        %v5894 = vmax.f32 %v5858, 0.0
        %v5895 = vmax.f32 %v5859, 0.0
        %v5896 = vmax.f32 %v5860, 0.0
        %v5897 = vmax.f32 %v5861, 0.0
        %v5898 = vmax.f32 %v5862, 0.0
        %v5899 = vmax.f32 %v5863, 0.0
        %v5900 = vmax.f32 %v5864, 0.0
        %v5901 = vmax.f32 %v5865, 0.0
        %v5902 = vmax.f32 %v5866, 0.0
        %v5903 = vmax.f32 %v5867, 0.0
        %v5904 = vmax.f32 %v5868, 0.0
        %v5905 = vmax.f32 %v5869, 0.0
        %v5906 = vmax.f32 %v5870, 0.0
        %v5907 = vmax.f32 %v5871, 0.0
        %v5908 = vmax.f32 %v5872, 0.0
        %v5909 = vmax.f32 %v5873, 0.0
        %v5910 = vmax.f32 %v5874, 0.0
        %5911 = vst [vmem:[%s271] sm:$0xff] %v5875
        %5912 = vst [vmem:[%s271 + $0x8] sm:$0xff] %v5876
        %5913 = vst [vmem:[%s271 + $0x10] sm:$0xff] %v5877
        %5914 = vst [vmem:[%s271 + $0x18] sm:$0xff] %v5878
        %5915 = vst [vmem:[%s271 + $0x20] sm:$0xff] %v5879
        %5916 = vst [vmem:[%s271 + $0x28] sm:$0xff] %v5880
        %5917 = vst [vmem:[%s271 + $0x30] sm:$0xff] %v5881
        %5918 = vst [vmem:[%s271 + $0x38] sm:$0xff] %v5882
        %5919 = vst [vmem:[%s271 + $0x40] sm:$0xff] %v5883
        %5920 = vst [vmem:[%s271 + $0x48] sm:$0xff] %v5884
        %5921 = vst [vmem:[%s271 + $0x50] sm:$0xff] %v5885
        %5922 = vst [vmem:[%s271 + $0x58] sm:$0xff] %v5886
        %5923 = vst [vmem:[%s271 + $0x60] sm:$0xff] %v5887
        %5924 = vst [vmem:[%s271 + $0x68] sm:$0xff] %v5888
        %5925 = vst [vmem:[%s271 + $0x70] sm:$0xff] %v5889
        %5926 = vst [vmem:[%s271 + $0x78] sm:$0xff] %v5890
        %5927 = vst [vmem:[%s271 + $0x80] sm:$0xff] %v5891
        %5928 = vst [vmem:[%s271 + $0x88] sm:$0xff] %v5892
        %5929 = vst [vmem:[%s271 + $0x90] sm:$0xff] %v5893
        %5930 = vst [vmem:[%s271 + $0x98] sm:$0xff] %v5894
        %5931 = vst [vmem:[%s271 + $0xa0] sm:$0xff] %v5895
        %5932 = vst [vmem:[%s271 + $0xa8] sm:$0xff] %v5896
        %5933 = vst [vmem:[%s271 + $0xb0] sm:$0xff] %v5897
        %5934 = vst [vmem:[%s271 + $0xb8] sm:$0xff] %v5898
        %5935 = vst [vmem:[%s271 + $0xc0] sm:$0xff] %v5899
        %5936 = vst [vmem:[%s271 + $0xc8] sm:$0xff] %v5900
        %5937 = vst [vmem:[%s271 + $0xd0] sm:$0xff] %v5901
        %5938 = vst [vmem:[%s271 + $0xd8] sm:$0xff] %v5902
        %5939 = vst [vmem:[%s271 + $0xe0] sm:$0xff] %v5903
        %5940 = vst [vmem:[%s271 + $0xe8] sm:$0xff] %v5904
        %5941 = vst [vmem:[%s271 + $0xf0] sm:$0xff] %v5905
        %5942 = vst [vmem:[%s271 + $0xf8] sm:$0xff] %v5906
        %5943 = vst [vmem:[%s271 + $0x100] sm:$0xff] %v5907
        %5944 = vst [vmem:[%s271 + $0x108] sm:$0xff] %v5908
        %5945 = vst [vmem:[%s271 + $0x110] sm:$0xff] %v5909
        %5946 = vst [vmem:[%s271 + $0x118] sm:$0xff] %v5910
        %s5947 = sand.u32 %s141, 1
        %s5948 = scalar_lea.sflag [#allocation6], %s5947
        %s5949 = sand.u32 %s141, 1
        %s5950 = smul.addr %s5949, 288
        %s5951 = scalar_lea.vmem [#allocation10], %s5950
        // Predicated region
        $region53: #{tpu_custom_call.1} parent=39 // pred_check
          %p5952 = pneg %p151
        $region54: #{tpu_custom_call.1} parent=39 // pred_check_branch
          %5954 = sbr.rel (%p5952) target = $region56
        $region55: #{tpu_custom_call.1} parent=39 // pred_region
          %s5956 = ssub.s32 4608, 4608
          %5957 = vsyncadd %s5948, %s5956
          %s5958 = smul.addr %s23, 36
          %s5959 = smul.addr %s5958, 128
          %s5960 = scalar_lea.hbm %s5, %s5959
          %s5961 = sshll.u32 %s5951, 4
          %s5962 = int_to_ptr.vmem [resolvable:$true] %s5961
          %5967 = dma.vmem_to_hbm [thread:$0]  %s5962, 4608, %s5960, %s5948, 128, 128, 8
        $region56: #{tpu_custom_call.1} parent=39 // pred_fallthru
          _
      $region40: #{tpu_custom_call.1} parent=5 // pred_fallthru
        _
      %p5968 = scmp.le.s32.totalorder 2, %s18
      // Predicated region
      $region57: #{tpu_custom_call.1} parent=5 // pred_check
        %p5969 = pneg %p5968
      $region58: #{tpu_custom_call.1} parent=5 // pred_check_branch
        %5971 = sbr.rel (%p5969) target = $region60
      $region59: #{tpu_custom_call.1} parent=5 // pred_region
        %s5972 = ssub.s32 %s18, 2
        // Predicated region
        $region61: #{tpu_custom_call.1} parent=59 // pred_check
          %p5973 = pneg %p157
        $region62: #{tpu_custom_call.1} parent=59 // pred_check_branch
          %5975 = sbr.rel (%p5973) target = $region64
        $region63: #{tpu_custom_call.1} parent=59 // pred_region
          %s5976 = sand.u32 %s142, 1
          %s5977 = scalar_lea.sflag [#allocation6], %s5976
          %s5978 = sand.u32 %s142, 1
          %s5979 = smul.addr %s5978, 288
          %s5980 = scalar_lea.vmem [#allocation10], %s5979
          %5981 = dma.done %s5977, 4608
        $region64: #{tpu_custom_call.1} parent=59 // pred_fallthru
          _
      $region60: #{tpu_custom_call.1} parent=5 // pred_fallthru
        _
    $region6: #{tpu_custom_call.1} parent=1 // loop_footer
      %s22 = sadd.s32 1, %s18
    $region7: #{tpu_custom_call.1} parent=1 // loop_footer_branch
      %17 = sbr.rel target = $region3
    $region8: #{tpu_custom_call.1} parent=1 // loop_exit
      _
    %5982 = vsyncpa [#allocation5], 1
    %s5983 = scalar_lea.sflag [#allocation5], 1
    %5984 = vsyncpa %s5983, 1
    %5985 = vsyncpa [#allocation8], 1
    %5986 = vsyncpa [#allocation6], 1
    %s5987 = scalar_lea.sflag [#allocation6], 1
    %5988 = vsyncpa %s5987, 1

</llo_original>
